<compile_context>
chip_gen: v5e
topology: v5e:2x2
jax: 0.10.0
libtpu: 0.0.40
codegen_flags: <defaults>
</compile_context>

<pallas_src>
import jax
import jax.numpy as jnp
import numpy as np
from jax import lax
from jax.experimental import pallas as pl
from jax.experimental.pallas import tpu as pltpu

LANES = 128


def _round_up(x, m):
    return (x + m - 1) // m * m


def _make_kernel(H, W, CP, PAD):
    """Build the fused block kernel for a (H, W) image, CP padded channels,
    PAD halo rows (PAD >= W + 1, multiple of 8)."""
    HW = H * W

    def kernel(x_ref, s1_ref, b1_ref, w1_ref, b2_ref, w2_ref, out_ref,
               pbuf_ref, patch_ref):
        # ---- zero ONLY the halo rows of the row-padded activation buffer ----
        # (interior writes below never touch the halo; done per step because
        #  each core has its own scratch when the grid axis is "parallel")
        zero_halo = jnp.zeros((PAD, CP), jnp.float32)
        pbuf_ref[0:PAD, :] = zero_halo
        pbuf_ref[PAD + HW:PAD + HW + PAD, :] = zero_halo

        # ---- width-edge validity masks (height edges handled by zero halo) --
        w_pos = lax.broadcasted_iota(jnp.int32, (HW, CP), 0) % W
        left_ok = w_pos > 0           # taps shifted by dw = -1
        right_ok = w_pos < (W - 1)    # taps shifted by dw = +1

        def conv3x3(act_f32, w_ref):
            """3x3 / stride-1 / pad-1 conv as a single im2col matmul."""
            # write activation into the interior rows (halo stays zero)
            pbuf_ref[PAD:PAD + HW, :] = act_f32
            for kh in range(3):
                for kw in range(3):
                    t = kh * 3 + kw
                    delta = (kh - 1) * W + (kw - 1)   # static row offset
                    start = PAD + delta
                    tap = pbuf_ref[start:start + HW, :]          # (HW, CP) f32
                    if kw == 0:
                        tap = jnp.where(left_ok, tap, 0.0)
                    elif kw == 2:
                        tap = jnp.where(right_ok, tap, 0.0)
                    # lane-aligned 128-wide column block of the patch matrix
                    patch_ref[:, t * CP:(t + 1) * CP] = tap.astype(jnp.bfloat16)
            # one (HW, 9*CP) @ (9*CP, CP) bf16 matmul, f32 accumulation
            return jnp.dot(patch_ref[...], w_ref[...],
                           preferred_element_type=jnp.float32)

        # ---- BN1 (folded scale/shift) + ReLU, conv1 (BN2 scale folded in) ----
        a1 = jnp.maximum(x_ref[0] * s1_ref[...] + b1_ref[...], 0.0)
        o1 = conv3x3(a1, w1_ref)

        # ---- BN2 shift + ReLU (scale already folded into w1), conv2 ----------
        a2 = jnp.maximum(o1 + b2_ref[...], 0.0)
        o2 = conv3x3(a2, w2_ref)

        # ---- identity residual, lane-dense f32 store --------------------------
        out_ref[0] = o2 + x_ref[0]

    return kernel


def preact_basic_block(x_nchw, conv1_w, bn1, conv2_w, bn2, eps=1e-5):
    """PreActBasicBlock forward (stride=1, identity shortcut).

    x_nchw : (N, C, H, W) float32
    conv*_w: (P, C, 3, 3) PyTorch OIHW weights (bias-free)
    bn*    : (gamma, beta, running_mean, running_var)   -- inference-mode BN
    """
    N, C, H, W = x_nchw.shape
    P = conv2_w.shape[0]
    assert conv1_w.shape == (P, C, 3, 3) and conv2_w.shape == (P, P, 3, 3)
    assert C == P, "identity shortcut requires matching in/out channels"

    HW = H * W
    CP = _round_up(max(C, P), LANES)   # lane-dense channel padding (128)
    PAD = _round_up(W + 1, 8)          # halo rows, covers all 9 tap offsets

    g1, be1, m1, v1 = bn1
    g2, be2, m2, v2 = bn2
    s1 = g1 / jnp.sqrt(v1 + eps)
    b1 = be1 - m1 * s1
    s2 = g2 / jnp.sqrt(v2 + eps)
    b2 = be2 - m2 * s2

    # NCHW -> (N, H*W, CP): flattened pixels on sublanes, channels on lanes.
    x = jnp.transpose(x_nchw, (0, 2, 3, 1)).astype(jnp.float32).reshape(N, HW, C)
    x = jnp.pad(x, ((0, 0), (0, 0), (0, CP - C)))

    def prep_weight(w_oihw, out_scale=None):
        # OIHW -> HWIO, optionally fold the following BN's per-output-channel
        # scale, then lay out matmul-ready as (9*CP, CP) bf16 matching the
        # im2col patch layout [tap-major, input-channel].
        p_out, c_in = w_oihw.shape[0], w_oihw.shape[1]
        w = jnp.transpose(w_oihw, (2, 3, 1, 0)).astype(jnp.float32)  # (3,3,C,P)
        if out_scale is not None:
            w = w * out_scale[None, None, None, :]
        w = w.reshape(9, c_in, p_out)
        w = jnp.pad(w, ((0, 0), (0, CP - c_in), (0, CP - p_out)))
        return w.reshape(9 * CP, CP).astype(jnp.bfloat16)

    w1_mat = prep_weight(conv1_w, out_scale=s2)   # BN2 scale folded into conv1
    w2_mat = prep_weight(conv2_w)

    def pad_vec(v):
        return jnp.pad(v.astype(jnp.float32), (0, CP - v.shape[0])).reshape(1, CP)

    s1p, b1p, b2p = pad_vec(s1), pad_vec(b1), pad_vec(b2)

    kernel = _make_kernel(H, W, CP, PAD)
    out = pl.pallas_call(
        kernel,
        out_shape=jax.ShapeDtypeStruct((N, HW, CP), jnp.float32),
        grid=(N,),
        in_specs=[
            pl.BlockSpec((1, HW, CP), lambda n: (n, 0, 0)),   # x (lane-dense)
            pl.BlockSpec((1, CP), lambda n: (0, 0)),          # bn1 scale
            pl.BlockSpec((1, CP), lambda n: (0, 0)),          # bn1 shift
            pl.BlockSpec((9 * CP, CP), lambda n: (0, 0)),     # conv1 W (im2col, bf16)
            pl.BlockSpec((1, CP), lambda n: (0, 0)),          # bn2 shift
            pl.BlockSpec((9 * CP, CP), lambda n: (0, 0)),     # conv2 W (im2col, bf16)
        ],
        out_specs=pl.BlockSpec((1, HW, CP), lambda n: (n, 0, 0)),
        scratch_shapes=[
            pltpu.VMEM((HW + 2 * PAD, CP), jnp.float32),      # row-padded activations
            pltpu.VMEM((HW, 9 * CP), jnp.bfloat16),           # im2col patch matrix
        ],
        compiler_params=pltpu.CompilerParams(
            dimension_semantics=("parallel",),     # N >= 2 -> both v7x TCs busy
            vmem_limit_bytes=32 * 1024 * 1024,     # ~2.5 MiB actually used
        ),
    )(x, s1p, b1p, w1_mat, b2p, w2_mat)

    out = out[:, :, :P].reshape(N, H, W, P)
    return jnp.transpose(out, (0, 3, 1, 2))       # back to NCHW


if __name__ == "__main__":
    key = jax.random.PRNGKey(0)
    N, C, H, W = 2, 4, 16, 16
    planes = C            # expansion=1, stride=1, no downsample => identity residual
    eps = 1e-5
    ks = jax.random.split(key, 11)

    x = jax.random.normal(ks[0], (N, C, H, W), jnp.float32)

    # BatchNorm params + running stats (deterministic, inference mode)
    g1 = 1.0 + 0.1 * jax.random.normal(ks[1], (C,), jnp.float32)
    be1 = 0.1 * jax.random.normal(ks[2], (C,), jnp.float32)
    m1 = 0.1 * jax.random.normal(ks[3], (C,), jnp.float32)
    v1 = jax.random.uniform(ks[4], (C,), jnp.float32, minval=0.5, maxval=1.5)
    g2 = 1.0 + 0.1 * jax.random.normal(ks[5], (planes,), jnp.float32)
    be2 = 0.1 * jax.random.normal(ks[6], (planes,), jnp.float32)
    m2 = 0.1 * jax.random.normal(ks[7], (planes,), jnp.float32)
    v2 = jax.random.uniform(ks[8], (planes,), jnp.float32, minval=0.5, maxval=1.5)

    # Conv weights in PyTorch layout (O, I, kH, kW), bias=False, He init
    w1 = jax.random.normal(ks[9], (planes, C, 3, 3), jnp.float32) * np.sqrt(2.0 / (9 * planes))
    w2 = jax.random.normal(ks[10], (planes, planes, 3, 3), jnp.float32) * np.sqrt(2.0 / (9 * planes))

    out = preact_basic_block(x, w1, (g1, be1, m1, v1), w2, (g2, be2, m2, v2), eps=eps)
    out = jax.block_until_ready(out)

    # Pure-JAX reference (NCHW, matching the PyTorch PreActBasicBlock forward)
    def bn(t, g, b, m, v):
        sc = (g / jnp.sqrt(v + eps))[None, :, None, None]
        return (t - m[None, :, None, None]) * sc + b[None, :, None, None]

    o = jax.nn.relu(bn(x, g1, be1, m1, v1))
    o = lax.conv_general_dilated(o, w1, (1, 1), "SAME",
                                 dimension_numbers=("NCHW", "OIHW", "NCHW"))
    o = jax.nn.relu(bn(o, g2, be2, m2, v2))
    o = lax.conv_general_dilated(o, w2, (1, 1), "SAME",
                                 dimension_numbers=("NCHW", "OIHW", "NCHW"))
    ref = o + x

    assert out.shape == (N, planes, H, W)
    # bf16 matmul operands vs f32 reference -> modest tolerances
    np.testing.assert_allclose(np.asarray(out), np.asarray(ref), rtol=2e-2, atol=5e-2)
    print("KERNEL_OK")
</pallas_src>

<mosaic_0001>
module attributes {stable_mosaic.version = 11 : i64} {
  func.func @kernel(%arg0: i32, %arg1: memref<1x256x128xf32, #tpu.memory_space<vmem>>, %arg2: memref<1x128xf32, #tpu.memory_space<vmem>>, %arg3: memref<1x128xf32, #tpu.memory_space<vmem>>, %arg4: memref<1152x128xbf16, #tpu.memory_space<vmem>>, %arg5: memref<1x128xf32, #tpu.memory_space<vmem>>, %arg6: memref<1152x128xbf16, #tpu.memory_space<vmem>>, %arg7: memref<1x256x128xf32, #tpu.memory_space<vmem>>, %arg8: memref<304x128xf32, #tpu.memory_space<vmem>>, %arg9: memref<256x1152xbf16, #tpu.memory_space<vmem>>) attributes {dimension_semantics = [#tpu.dimension_semantics<parallel>], iteration_bounds = array<i64: 2>, scalar_prefetch = 0 : i64, scratch_operands = 2 : i64, tpu.core_type = #tpu.core_type<tc>, window_params = [{transform_indices = @transform_0, window_bounds = array<i64: 1, 256, 128>}, {pipeline_mode = #tpu.pipeline_mode<synchronous>, transform_indices = @transform_1, window_bounds = array<i64: 1, 128>}, {pipeline_mode = #tpu.pipeline_mode<synchronous>, transform_indices = @transform_2, window_bounds = array<i64: 1, 128>}, {pipeline_mode = #tpu.pipeline_mode<synchronous>, transform_indices = @transform_3, window_bounds = array<i64: 1152, 128>}, {pipeline_mode = #tpu.pipeline_mode<synchronous>, transform_indices = @transform_4, window_bounds = array<i64: 1, 128>}, {pipeline_mode = #tpu.pipeline_mode<synchronous>, transform_indices = @transform_5, window_bounds = array<i64: 1152, 128>}, {transform_indices = @transform_6, window_bounds = array<i64: 1, 256, 128>}]} {
    %cst = arith.constant 0.000000e+00 : f32
    %0 = vector.broadcast %cst : f32 to vector<24x128xf32>
    %c0 = arith.constant 0 : index
    %c0_0 = arith.constant 0 : index
    %1 = vector.load %arg8[%c0, %c0_0] : memref<304x128xf32, #tpu.memory_space<vmem>>, vector<24x128xf32>
    tpu.vector_store %arg8[%c0, %c0_0], %0 {strides = array<i32>} : memref<304x128xf32, #tpu.memory_space<vmem>>, vector<24x128xf32>,
    %c280 = arith.constant 280 : index
    %c0_1 = arith.constant 0 : index
    %2 = vector.load %arg8[%c280, %c0_1] : memref<304x128xf32, #tpu.memory_space<vmem>>, vector<24x128xf32>
    tpu.vector_store %arg8[%c280, %c0_1], %0 {strides = array<i32>} : memref<304x128xf32, #tpu.memory_space<vmem>>, vector<24x128xf32>,
    %3 = tpu.iota {dimensions = array<i32: 0>} : vector<256x128xi32>
    %c16_i32 = arith.constant 16 : i32
    %c0_i32 = arith.constant 0 : i32
    %4 = arith.cmpi eq, %c16_i32, %c0_i32 : i32
    %c1_i32 = arith.constant 1 : i32
    %5 = arith.select %4, %c1_i32, %c16_i32 : i32
    %6 = vector.broadcast %5 : i32 to vector<256x128xi32>
    %7 = arith.remsi %3, %6 : vector<256x128xi32>
    %c0_i32_2 = arith.constant 0 : i32
    %8 = vector.broadcast %c0_i32_2 : i32 to vector<256x128xi32>
    %9 = arith.cmpi ne, %7, %8 : vector<256x128xi32>
    %c0_i32_3 = arith.constant 0 : i32
    %10 = vector.broadcast %c0_i32_3 : i32 to vector<256x128xi32>
    %11 = arith.cmpi slt, %7, %10 : vector<256x128xi32>
    %c0_i32_4 = arith.constant 0 : i32
    %12 = arith.cmpi slt, %5, %c0_i32_4 : i32
    %13 = vector.broadcast %12 : i1 to vector<256x128xi1>
    %14 = vector.broadcast %13 : vector<256x128xi1> to vector<256x128xi1>
    %15 = arith.xori %11, %14 : vector<256x128xi1>
    %16 = arith.andi %15, %9 : vector<256x128xi1>
    %17 = vector.broadcast %5 : i32 to vector<256x128xi32>
    %18 = arith.addi %7, %17 : vector<256x128xi32>
    %19 = arith.select %16, %18, %7 : vector<256x128xi1>, vector<256x128xi32>
    %c0_i32_5 = arith.constant 0 : i32
    %20 = vector.broadcast %c0_i32_5 : i32 to vector<256x128xi32>
    %21 = arith.cmpi sgt, %19, %20 : vector<256x128xi32>
    %c15_i32 = arith.constant 15 : i32
    %22 = vector.broadcast %c15_i32 : i32 to vector<256x128xi32>
    %23 = arith.cmpi slt, %19, %22 : vector<256x128xi32>
    %c0_6 = arith.constant 0 : index
    %c0_7 = arith.constant 0 : index
    %c0_8 = arith.constant 0 : index
    %24 = vector.load %arg1[%c0_6, %c0_7, %c0_8] : memref<1x256x128xf32, #tpu.memory_space<vmem>>, vector<1x256x128xf32>
    %25 = vector.shape_cast %24 : vector<1x256x128xf32> to vector<256x128xf32>
    %c0_9 = arith.constant 0 : index
    %c0_10 = arith.constant 0 : index
    %26 = vector.load %arg2[%c0_9, %c0_10] : memref<1x128xf32, #tpu.memory_space<vmem>>, vector<1x128xf32>
    %27 = vector.broadcast %26 : vector<1x128xf32> to vector<256x128xf32>
    %28 = arith.mulf %25, %27 : vector<256x128xf32>
    %c0_11 = arith.constant 0 : index
    %c0_12 = arith.constant 0 : index
    %29 = vector.load %arg3[%c0_11, %c0_12] : memref<1x128xf32, #tpu.memory_space<vmem>>, vector<1x128xf32>
    %30 = vector.broadcast %29 : vector<1x128xf32> to vector<256x128xf32>
    %31 = arith.addf %28, %30 : vector<256x128xf32>
    %cst_13 = arith.constant 0.000000e+00 : f32
    %32 = vector.broadcast %cst_13 : f32 to vector<256x128xf32>
    %33 = arith.maximumf %31, %32 : vector<256x128xf32>
    %c24 = arith.constant 24 : index
    %c0_14 = arith.constant 0 : index
    %34 = vector.load %arg8[%c24, %c0_14] : memref<304x128xf32, #tpu.memory_space<vmem>>, vector<256x128xf32>
    tpu.vector_store %arg8[%c24, %c0_14], %33 {strides = array<i32>} : memref<304x128xf32, #tpu.memory_space<vmem>>, vector<256x128xf32>,
    %c7 = arith.constant 7 : index
    %c0_15 = arith.constant 0 : index
    %35 = vector.load %arg8[%c7, %c0_15] : memref<304x128xf32, #tpu.memory_space<vmem>>, vector<256x128xf32>
    %cst_16 = arith.constant 0.000000e+00 : f32
    %36 = vector.broadcast %cst_16 : f32 to vector<256x128xf32>
    %37 = arith.select %21, %35, %36 : vector<256x128xi1>, vector<256x128xf32>
    %38 = arith.truncf %37 : vector<256x128xf32> to vector<256x128xbf16>
    %c0_17 = arith.constant 0 : index
    %c0_18 = arith.constant 0 : index
    %39 = vector.load %arg9[%c0_17, %c0_18] : memref<256x1152xbf16, #tpu.memory_space<vmem>>, vector<256x128xbf16>
    tpu.vector_store %arg9[%c0_17, %c0_18], %38 {strides = array<i32>} : memref<256x1152xbf16, #tpu.memory_space<vmem>>, vector<256x128xbf16>,
    %c8 = arith.constant 8 : index
    %c0_19 = arith.constant 0 : index
    %40 = vector.load %arg8[%c8, %c0_19] : memref<304x128xf32, #tpu.memory_space<vmem>>, vector<256x128xf32>
    %41 = arith.truncf %40 : vector<256x128xf32> to vector<256x128xbf16>
    %c0_20 = arith.constant 0 : index
    %c128 = arith.constant 128 : index
    %42 = vector.load %arg9[%c0_20, %c128] : memref<256x1152xbf16, #tpu.memory_space<vmem>>, vector<256x128xbf16>
    tpu.vector_store %arg9[%c0_20, %c128], %41 {strides = array<i32>} : memref<256x1152xbf16, #tpu.memory_space<vmem>>, vector<256x128xbf16>,
    %c9 = arith.constant 9 : index
    %c0_21 = arith.constant 0 : index
    %43 = vector.load %arg8[%c9, %c0_21] : memref<304x128xf32, #tpu.memory_space<vmem>>, vector<256x128xf32>
    %cst_22 = arith.constant 0.000000e+00 : f32
    %44 = vector.broadcast %cst_22 : f32 to vector<256x128xf32>
    %45 = arith.select %23, %43, %44 : vector<256x128xi1>, vector<256x128xf32>
    %46 = arith.truncf %45 : vector<256x128xf32> to vector<256x128xbf16>
    %c0_23 = arith.constant 0 : index
    %c256 = arith.constant 256 : index
    %47 = vector.load %arg9[%c0_23, %c256] : memref<256x1152xbf16, #tpu.memory_space<vmem>>, vector<256x128xbf16>
    tpu.vector_store %arg9[%c0_23, %c256], %46 {strides = array<i32>} : memref<256x1152xbf16, #tpu.memory_space<vmem>>, vector<256x128xbf16>,
    %c23 = arith.constant 23 : index
    %c0_24 = arith.constant 0 : index
    %48 = vector.load %arg8[%c23, %c0_24] : memref<304x128xf32, #tpu.memory_space<vmem>>, vector<256x128xf32>
    %cst_25 = arith.constant 0.000000e+00 : f32
    %49 = vector.broadcast %cst_25 : f32 to vector<256x128xf32>
    %50 = arith.select %21, %48, %49 : vector<256x128xi1>, vector<256x128xf32>
    %51 = arith.truncf %50 : vector<256x128xf32> to vector<256x128xbf16>
    %c0_26 = arith.constant 0 : index
    %c384 = arith.constant 384 : index
    %52 = vector.load %arg9[%c0_26, %c384] : memref<256x1152xbf16, #tpu.memory_space<vmem>>, vector<256x128xbf16>
    tpu.vector_store %arg9[%c0_26, %c384], %51 {strides = array<i32>} : memref<256x1152xbf16, #tpu.memory_space<vmem>>, vector<256x128xbf16>,
    %c24_27 = arith.constant 24 : index
    %c0_28 = arith.constant 0 : index
    %53 = vector.load %arg8[%c24_27, %c0_28] : memref<304x128xf32, #tpu.memory_space<vmem>>, vector<256x128xf32>
    %54 = arith.truncf %53 : vector<256x128xf32> to vector<256x128xbf16>
    %c0_29 = arith.constant 0 : index
    %c512 = arith.constant 512 : index
    %55 = vector.load %arg9[%c0_29, %c512] : memref<256x1152xbf16, #tpu.memory_space<vmem>>, vector<256x128xbf16>
    tpu.vector_store %arg9[%c0_29, %c512], %54 {strides = array<i32>} : memref<256x1152xbf16, #tpu.memory_space<vmem>>, vector<256x128xbf16>,
    %c25 = arith.constant 25 : index
    %c0_30 = arith.constant 0 : index
    %56 = vector.load %arg8[%c25, %c0_30] : memref<304x128xf32, #tpu.memory_space<vmem>>, vector<256x128xf32>
    %cst_31 = arith.constant 0.000000e+00 : f32
    %57 = vector.broadcast %cst_31 : f32 to vector<256x128xf32>
    %58 = arith.select %23, %56, %57 : vector<256x128xi1>, vector<256x128xf32>
    %59 = arith.truncf %58 : vector<256x128xf32> to vector<256x128xbf16>
    %c0_32 = arith.constant 0 : index
    %c640 = arith.constant 640 : index
    %60 = vector.load %arg9[%c0_32, %c640] : memref<256x1152xbf16, #tpu.memory_space<vmem>>, vector<256x128xbf16>
    tpu.vector_store %arg9[%c0_32, %c640], %59 {strides = array<i32>} : memref<256x1152xbf16, #tpu.memory_space<vmem>>, vector<256x128xbf16>,
    %c39 = arith.constant 39 : index
    %c0_33 = arith.constant 0 : index
    %61 = vector.load %arg8[%c39, %c0_33] : memref<304x128xf32, #tpu.memory_space<vmem>>, vector<256x128xf32>
    %cst_34 = arith.constant 0.000000e+00 : f32
    %62 = vector.broadcast %cst_34 : f32 to vector<256x128xf32>
    %63 = arith.select %21, %61, %62 : vector<256x128xi1>, vector<256x128xf32>
    %64 = arith.truncf %63 : vector<256x128xf32> to vector<256x128xbf16>
    %c0_35 = arith.constant 0 : index
    %c768 = arith.constant 768 : index
    %65 = vector.load %arg9[%c0_35, %c768] : memref<256x1152xbf16, #tpu.memory_space<vmem>>, vector<256x128xbf16>
    tpu.vector_store %arg9[%c0_35, %c768], %64 {strides = array<i32>} : memref<256x1152xbf16, #tpu.memory_space<vmem>>, vector<256x128xbf16>,
    %c40 = arith.constant 40 : index
    %c0_36 = arith.constant 0 : index
    %66 = vector.load %arg8[%c40, %c0_36] : memref<304x128xf32, #tpu.memory_space<vmem>>, vector<256x128xf32>
    %67 = arith.truncf %66 : vector<256x128xf32> to vector<256x128xbf16>
    %c0_37 = arith.constant 0 : index
    %c896 = arith.constant 896 : index
    %68 = vector.load %arg9[%c0_37, %c896] : memref<256x1152xbf16, #tpu.memory_space<vmem>>, vector<256x128xbf16>
    tpu.vector_store %arg9[%c0_37, %c896], %67 {strides = array<i32>} : memref<256x1152xbf16, #tpu.memory_space<vmem>>, vector<256x128xbf16>,
    %c41 = arith.constant 41 : index
    %c0_38 = arith.constant 0 : index
    %69 = vector.load %arg8[%c41, %c0_38] : memref<304x128xf32, #tpu.memory_space<vmem>>, vector<256x128xf32>
    %cst_39 = arith.constant 0.000000e+00 : f32
    %70 = vector.broadcast %cst_39 : f32 to vector<256x128xf32>
    %71 = arith.select %23, %69, %70 : vector<256x128xi1>, vector<256x128xf32>
    %72 = arith.truncf %71 : vector<256x128xf32> to vector<256x128xbf16>
    %c0_40 = arith.constant 0 : index
    %c1024 = arith.constant 1024 : index
    %73 = vector.load %arg9[%c0_40, %c1024] : memref<256x1152xbf16, #tpu.memory_space<vmem>>, vector<256x128xbf16>
    tpu.vector_store %arg9[%c0_40, %c1024], %72 {strides = array<i32>} : memref<256x1152xbf16, #tpu.memory_space<vmem>>, vector<256x128xbf16>,
    %c0_41 = arith.constant 0 : index
    %c0_42 = arith.constant 0 : index
    %74 = vector.load %arg9[%c0_41, %c0_42] : memref<256x1152xbf16, #tpu.memory_space<vmem>>, vector<256x1152xbf16>
    %c0_43 = arith.constant 0 : index
    %c0_44 = arith.constant 0 : index
    %75 = vector.load %arg4[%c0_43, %c0_44] : memref<1152x128xbf16, #tpu.memory_space<vmem>>, vector<1152x128xbf16>
    %cst_45 = arith.constant dense<0.000000e+00> : vector<256x128xf32>
    %76 = tpu.matmul %74, %75, %cst_45 {dimension_numbers = #tpu.dot_dimension_numbers<[1], [0], [0], [1], [0, 0, 1, 1], [], []>} : vector<256x1152xbf16>, vector<1152x128xbf16>, vector<256x128xf32> -> vector<256x128xf32>
    %c0_46 = arith.constant 0 : index
    %c0_47 = arith.constant 0 : index
    %77 = vector.load %arg5[%c0_46, %c0_47] : memref<1x128xf32, #tpu.memory_space<vmem>>, vector<1x128xf32>
    %78 = vector.broadcast %77 : vector<1x128xf32> to vector<256x128xf32>
    %79 = arith.addf %76, %78 : vector<256x128xf32>
    %cst_48 = arith.constant 0.000000e+00 : f32
    %80 = vector.broadcast %cst_48 : f32 to vector<256x128xf32>
    %81 = arith.maximumf %79, %80 : vector<256x128xf32>
    %c24_49 = arith.constant 24 : index
    %c0_50 = arith.constant 0 : index
    %82 = vector.load %arg8[%c24_49, %c0_50] : memref<304x128xf32, #tpu.memory_space<vmem>>, vector<256x128xf32>
    tpu.vector_store %arg8[%c24_49, %c0_50], %81 {strides = array<i32>} : memref<304x128xf32, #tpu.memory_space<vmem>>, vector<256x128xf32>,
    %c7_51 = arith.constant 7 : index
    %c0_52 = arith.constant 0 : index
    %83 = vector.load %arg8[%c7_51, %c0_52] : memref<304x128xf32, #tpu.memory_space<vmem>>, vector<256x128xf32>
    %cst_53 = arith.constant 0.000000e+00 : f32
    %84 = vector.broadcast %cst_53 : f32 to vector<256x128xf32>
    %85 = arith.select %21, %83, %84 : vector<256x128xi1>, vector<256x128xf32>
    %86 = arith.truncf %85 : vector<256x128xf32> to vector<256x128xbf16>
    %c0_54 = arith.constant 0 : index
    %c0_55 = arith.constant 0 : index
    %87 = vector.load %arg9[%c0_54, %c0_55] : memref<256x1152xbf16, #tpu.memory_space<vmem>>, vector<256x128xbf16>
    tpu.vector_store %arg9[%c0_54, %c0_55], %86 {strides = array<i32>} : memref<256x1152xbf16, #tpu.memory_space<vmem>>, vector<256x128xbf16>,
    %c8_56 = arith.constant 8 : index
    %c0_57 = arith.constant 0 : index
    %88 = vector.load %arg8[%c8_56, %c0_57] : memref<304x128xf32, #tpu.memory_space<vmem>>, vector<256x128xf32>
    %89 = arith.truncf %88 : vector<256x128xf32> to vector<256x128xbf16>
    %c0_58 = arith.constant 0 : index
    %c128_59 = arith.constant 128 : index
    %90 = vector.load %arg9[%c0_58, %c128_59] : memref<256x1152xbf16, #tpu.memory_space<vmem>>, vector<256x128xbf16>
    tpu.vector_store %arg9[%c0_58, %c128_59], %89 {strides = array<i32>} : memref<256x1152xbf16, #tpu.memory_space<vmem>>, vector<256x128xbf16>,
    %c9_60 = arith.constant 9 : index
    %c0_61 = arith.constant 0 : index
    %91 = vector.load %arg8[%c9_60, %c0_61] : memref<304x128xf32, #tpu.memory_space<vmem>>, vector<256x128xf32>
    %cst_62 = arith.constant 0.000000e+00 : f32
    %92 = vector.broadcast %cst_62 : f32 to vector<256x128xf32>
    %93 = arith.select %23, %91, %92 : vector<256x128xi1>, vector<256x128xf32>
    %94 = arith.truncf %93 : vector<256x128xf32> to vector<256x128xbf16>
    %c0_63 = arith.constant 0 : index
    %c256_64 = arith.constant 256 : index
    %95 = vector.load %arg9[%c0_63, %c256_64] : memref<256x1152xbf16, #tpu.memory_space<vmem>>, vector<256x128xbf16>
    tpu.vector_store %arg9[%c0_63, %c256_64], %94 {strides = array<i32>} : memref<256x1152xbf16, #tpu.memory_space<vmem>>, vector<256x128xbf16>,
    %c23_65 = arith.constant 23 : index
    %c0_66 = arith.constant 0 : index
    %96 = vector.load %arg8[%c23_65, %c0_66] : memref<304x128xf32, #tpu.memory_space<vmem>>, vector<256x128xf32>
    %cst_67 = arith.constant 0.000000e+00 : f32
    %97 = vector.broadcast %cst_67 : f32 to vector<256x128xf32>
    %98 = arith.select %21, %96, %97 : vector<256x128xi1>, vector<256x128xf32>
    %99 = arith.truncf %98 : vector<256x128xf32> to vector<256x128xbf16>
    %c0_68 = arith.constant 0 : index
    %c384_69 = arith.constant 384 : index
    %100 = vector.load %arg9[%c0_68, %c384_69] : memref<256x1152xbf16, #tpu.memory_space<vmem>>, vector<256x128xbf16>
    tpu.vector_store %arg9[%c0_68, %c384_69], %99 {strides = array<i32>} : memref<256x1152xbf16, #tpu.memory_space<vmem>>, vector<256x128xbf16>,
    %c24_70 = arith.constant 24 : index
    %c0_71 = arith.constant 0 : index
    %101 = vector.load %arg8[%c24_70, %c0_71] : memref<304x128xf32, #tpu.memory_space<vmem>>, vector<256x128xf32>
    %102 = arith.truncf %101 : vector<256x128xf32> to vector<256x128xbf16>
    %c0_72 = arith.constant 0 : index
    %c512_73 = arith.constant 512 : index
    %103 = vector.load %arg9[%c0_72, %c512_73] : memref<256x1152xbf16, #tpu.memory_space<vmem>>, vector<256x128xbf16>
    tpu.vector_store %arg9[%c0_72, %c512_73], %102 {strides = array<i32>} : memref<256x1152xbf16, #tpu.memory_space<vmem>>, vector<256x128xbf16>,
    %c25_74 = arith.constant 25 : index
    %c0_75 = arith.constant 0 : index
    %104 = vector.load %arg8[%c25_74, %c0_75] : memref<304x128xf32, #tpu.memory_space<vmem>>, vector<256x128xf32>
    %cst_76 = arith.constant 0.000000e+00 : f32
    %105 = vector.broadcast %cst_76 : f32 to vector<256x128xf32>
    %106 = arith.select %23, %104, %105 : vector<256x128xi1>, vector<256x128xf32>
    %107 = arith.truncf %106 : vector<256x128xf32> to vector<256x128xbf16>
    %c0_77 = arith.constant 0 : index
    %c640_78 = arith.constant 640 : index
    %108 = vector.load %arg9[%c0_77, %c640_78] : memref<256x1152xbf16, #tpu.memory_space<vmem>>, vector<256x128xbf16>
    tpu.vector_store %arg9[%c0_77, %c640_78], %107 {strides = array<i32>} : memref<256x1152xbf16, #tpu.memory_space<vmem>>, vector<256x128xbf16>,
    %c39_79 = arith.constant 39 : index
    %c0_80 = arith.constant 0 : index
    %109 = vector.load %arg8[%c39_79, %c0_80] : memref<304x128xf32, #tpu.memory_space<vmem>>, vector<256x128xf32>
    %cst_81 = arith.constant 0.000000e+00 : f32
    %110 = vector.broadcast %cst_81 : f32 to vector<256x128xf32>
    %111 = arith.select %21, %109, %110 : vector<256x128xi1>, vector<256x128xf32>
    %112 = arith.truncf %111 : vector<256x128xf32> to vector<256x128xbf16>
    %c0_82 = arith.constant 0 : index
    %c768_83 = arith.constant 768 : index
    %113 = vector.load %arg9[%c0_82, %c768_83] : memref<256x1152xbf16, #tpu.memory_space<vmem>>, vector<256x128xbf16>
    tpu.vector_store %arg9[%c0_82, %c768_83], %112 {strides = array<i32>} : memref<256x1152xbf16, #tpu.memory_space<vmem>>, vector<256x128xbf16>,
    %c40_84 = arith.constant 40 : index
    %c0_85 = arith.constant 0 : index
    %114 = vector.load %arg8[%c40_84, %c0_85] : memref<304x128xf32, #tpu.memory_space<vmem>>, vector<256x128xf32>
    %115 = arith.truncf %114 : vector<256x128xf32> to vector<256x128xbf16>
    %c0_86 = arith.constant 0 : index
    %c896_87 = arith.constant 896 : index
    %116 = vector.load %arg9[%c0_86, %c896_87] : memref<256x1152xbf16, #tpu.memory_space<vmem>>, vector<256x128xbf16>
    tpu.vector_store %arg9[%c0_86, %c896_87], %115 {strides = array<i32>} : memref<256x1152xbf16, #tpu.memory_space<vmem>>, vector<256x128xbf16>,
    %c41_88 = arith.constant 41 : index
    %c0_89 = arith.constant 0 : index
    %117 = vector.load %arg8[%c41_88, %c0_89] : memref<304x128xf32, #tpu.memory_space<vmem>>, vector<256x128xf32>
    %cst_90 = arith.constant 0.000000e+00 : f32
    %118 = vector.broadcast %cst_90 : f32 to vector<256x128xf32>
    %119 = arith.select %23, %117, %118 : vector<256x128xi1>, vector<256x128xf32>
    %120 = arith.truncf %119 : vector<256x128xf32> to vector<256x128xbf16>
    %c0_91 = arith.constant 0 : index
    %c1024_92 = arith.constant 1024 : index
    %121 = vector.load %arg9[%c0_91, %c1024_92] : memref<256x1152xbf16, #tpu.memory_space<vmem>>, vector<256x128xbf16>
    tpu.vector_store %arg9[%c0_91, %c1024_92], %120 {strides = array<i32>} : memref<256x1152xbf16, #tpu.memory_space<vmem>>, vector<256x128xbf16>,
    %c0_93 = arith.constant 0 : index
    %c0_94 = arith.constant 0 : index
    %122 = vector.load %arg9[%c0_93, %c0_94] : memref<256x1152xbf16, #tpu.memory_space<vmem>>, vector<256x1152xbf16>
    %c0_95 = arith.constant 0 : index
    %c0_96 = arith.constant 0 : index
    %123 = vector.load %arg6[%c0_95, %c0_96] : memref<1152x128xbf16, #tpu.memory_space<vmem>>, vector<1152x128xbf16>
    %cst_97 = arith.constant dense<0.000000e+00> : vector<256x128xf32>
    %124 = tpu.matmul %122, %123, %cst_97 {dimension_numbers = #tpu.dot_dimension_numbers<[1], [0], [0], [1], [0, 0, 1, 1], [], []>} : vector<256x1152xbf16>, vector<1152x128xbf16>, vector<256x128xf32> -> vector<256x128xf32>
    %c0_98 = arith.constant 0 : index
    %c0_99 = arith.constant 0 : index
    %c0_100 = arith.constant 0 : index
    %125 = vector.load %arg1[%c0_98, %c0_99, %c0_100] : memref<1x256x128xf32, #tpu.memory_space<vmem>>, vector<1x256x128xf32>
    %126 = vector.shape_cast %125 : vector<1x256x128xf32> to vector<256x128xf32>
    %127 = arith.addf %124, %126 : vector<256x128xf32>
    %c0_101 = arith.constant 0 : index
    %c0_102 = arith.constant 0 : index
    %c0_103 = arith.constant 0 : index
    %128 = vector.load %arg7[%c0_101, %c0_102, %c0_103] : memref<1x256x128xf32, #tpu.memory_space<vmem>>, vector<1x256x128xf32>
    %129 = vector.shape_cast %128 : vector<1x256x128xf32> to vector<256x128xf32>
    %130 = vector.shape_cast %127 : vector<256x128xf32> to vector<1x256x128xf32>
    tpu.vector_store %arg7[%c0_101, %c0_102, %c0_103], %130 {strides = array<i32>} : memref<1x256x128xf32, #tpu.memory_space<vmem>>, vector<1x256x128xf32>,
    return
  }
  func.func @transform_0(%arg0: i32) -> (i32, i32, i32) {
    %c0_i32 = arith.constant 0 : i32
    %c0_i32_0 = arith.constant 0 : i32
    %c0_i32_1 = arith.constant 0 : i32
    return %arg0, %c0_i32, %c0_i32_0 : i32, i32, i32
  }
  func.func @transform_1(%arg0: i32) -> (i32, i32) {
    %c0_i32 = arith.constant 0 : i32
    %c0_i32_0 = arith.constant 0 : i32
    %c0_i32_1 = arith.constant 0 : i32
    return %c0_i32, %c0_i32_0 : i32, i32
  }
  func.func @transform_2(%arg0: i32) -> (i32, i32) {
    %c0_i32 = arith.constant 0 : i32
    %c0_i32_0 = arith.constant 0 : i32
    %c0_i32_1 = arith.constant 0 : i32
    return %c0_i32, %c0_i32_0 : i32, i32
  }
  func.func @transform_3(%arg0: i32) -> (i32, i32) {
    %c0_i32 = arith.constant 0 : i32
    %c0_i32_0 = arith.constant 0 : i32
    %c0_i32_1 = arith.constant 0 : i32
    return %c0_i32, %c0_i32_0 : i32, i32
  }
  func.func @transform_4(%arg0: i32) -> (i32, i32) {
    %c0_i32 = arith.constant 0 : i32
    %c0_i32_0 = arith.constant 0 : i32
    %c0_i32_1 = arith.constant 0 : i32
    return %c0_i32, %c0_i32_0 : i32, i32
  }
  func.func @transform_5(%arg0: i32) -> (i32, i32) {
    %c0_i32 = arith.constant 0 : i32
    %c0_i32_0 = arith.constant 0 : i32
    %c0_i32_1 = arith.constant 0 : i32
    return %c0_i32, %c0_i32_0 : i32, i32
  }
  func.func @transform_6(%arg0: i32) -> (i32, i32, i32) {
    %c0_i32 = arith.constant 0 : i32
    %c0_i32_0 = arith.constant 0 : i32
    %c0_i32_1 = arith.constant 0 : i32
    return %arg0, %c0_i32, %c0_i32_0 : i32, i32, i32
  }
}

</mosaic_0001>

<llo_original>
// kernel: tpu_custom_call.1
$region0: #{tpu_custom_call.1}
  #allocation0 [shape = 'u32[]', space=smem, size = 0x4, offset = 0x4, fixed_abs, tag = 'smem constant byte address 0x4 - core index']
  #allocation1 [shape = 'u32[72,128]{1,0:T(1,128)}', space=vmem, size = 0x9000, scoped, tag = 'internal scratch']
  #allocation2 [shape = 'f32[304,128]{1,0:T(8,128)}', space=vmem, size = 0x26000, scoped, tag = 'scratch operand']
  #allocation3 [shape = 'bf16[256,1152]{1,0:T(8,128)(2,1)}', space=vmem, size = 0x90000, scoped, tag = 'scratch operand']
  %s0 = inlined_call_operand.hbm [shape: f32[2,256,128], index: 0, kind: input, shape index: {}]
  %s1 = inlined_call_operand.hbm [shape: f32[1,128], index: 1, kind: input, shape index: {}]
  %s2 = inlined_call_operand.vmem [shape: f32[1,128], index: 2, kind: input, shape index: {}]
  %s3 = inlined_call_operand.hbm [shape: bf16[1152,128], index: 3, kind: input, shape index: {}]
  %s4 = inlined_call_operand.vmem [shape: f32[1,128], index: 4, kind: input, shape index: {}]
  %s5 = inlined_call_operand.hbm [shape: bf16[1152,128], index: 5, kind: input, shape index: {}]
  %s6 = inlined_call_operand.hbm [shape: f32[2,256,128], index: 6, kind: output, shape index: {}]
  %s7 = sld [smem:[#allocation0]]
  $region73: #{tpu_custom_call.1} parent=0
    _
  %s9 = ssub.s32 1, %s7
  %s10 = scalar_select 0, %s9, %s7
  $region1: #{tpu_custom_call.1} parent=0
    #allocation4 [shape = 'u8[262144]{0}', space=vmem, size = 0x40000, scoped, tag = 'input window, operand 0']
    #allocation5 [shape = 's32[2]{0}', space=sflag, size = 0x8, scoped, tag = 'scoped memory for tpu_custom_call.1']
    #allocation6 [shape = 's32[2]{0}', space=sflag, size = 0x8, scoped, tag = 'scoped memory for tpu_custom_call.1']
    #allocation7 [shape = 'u8[512]{0}', space=vmem, size = 0x400, scoped, tag = 'input window, operand 1, single buffered']
    #allocation8 [shape = 's32[1]{0}', space=sflag, size = 0x4, scoped, tag = 'scoped memory for tpu_custom_call.1']
    #allocation9 [shape = 'u8[294912]{0}', space=vmem, size = 0x48000, scoped, tag = 'input window, operand 3, single buffered']
    #allocation10 [shape = 'u8[294912]{0}', space=vmem, size = 0x48000, scoped, tag = 'input window, operand 5, single buffered']
    #allocation11 [shape = 's32[1]{0}', space=sflag, size = 0x4, scoped, tag = 'scoped memory for tpu_custom_call.1']
    #allocation12 [shape = 'u8[262144]{0}', space=vmem, size = 0x40000, scoped, tag = 'output window, operand 0']
    %11 = vsyncpa [#allocation5], 0
    %s12 = scalar_lea.sflag [#allocation5], 1
    %13 = vsyncpa %s12, 0
    %14 = vsyncpa [#allocation8], 0
    %15 = vsyncpa [#allocation11], 0
    %16 = vsyncpa [#allocation6], 0
    %s17 = scalar_lea.sflag [#allocation6], 1
    %18 = vsyncpa %s17, 0
    loop: start=0, step=1, limit=4
    $region2: #{tpu_custom_call.1} parent=1 // loop_pre_header
      _
    $region3: #{tpu_custom_call.1} parent=1 // loop_header
      %s20 = sphi 0, %s24
      %p21 = scmp.ge.s32.totalorder %s20, 4
      %s30 = sphi 0, %s32
      %s33 = sphi 0, %s30
      %s34 = sphi 0, %s33
      %s50 = sphi 0, %s34
      %s54 = sphi 0, %s54
      %s56 = sphi 0, %s54
      %s57 = sphi 0, %s56
      %s71 = sphi 0, %s57
      %s75 = sphi 0, %s75
      %s77 = sphi 0, %s75
      %s78 = sphi 0, %s77
      %s92 = sphi 0, %s78
      %s96 = sphi 0, %s96
      %s98 = sphi 0, %s96
      %s99 = sphi 0, %s98
      %s113 = sphi 0, %s99
      %s117 = sphi 0, %s117
      %s119 = sphi 0, %s117
      %s120 = sphi 0, %s119
      %s134 = sphi 0, %s120
      %s138 = sphi 0, %s138
      %s140 = sphi 0, %s138
      %s141 = sphi 0, %s140
      %s155 = sphi 0, %s141
      %s161 = sphi 0, %s163
      %s164 = sphi 0, %s161
      %s165 = sphi 0, %s164
      %s181 = sphi 0, %s165
    $region4: #{tpu_custom_call.1} parent=1 // loop_header_branch
      %23 = sbr.rel (%p21) target = $region8
    $region5: #{tpu_custom_call.1} parent=1 // loop_body
      %s25 = ssub.s32 %s20, 1
      %s26 = ssub.s32 %s20, 2
      %s27 = sadd.s32 %s20, 1
      %s28 = ssub.s32 %s20, %s27
      %p29 = scmp.eq.s32.totalorder %s28, 0
      %s31 = sadd.s32 %s30, 1
      %s32 = scalar_select %p29, %s30, %s31
      %p35 = pneg %p29
      %p36 = scmp.eq.s32.totalorder %s20, 1
      %p37 = por %p35, %p36
      %p38 = scmp.ne.s32.totalorder %s30, %s33
      %p39 = scmp.eq.s32.totalorder %s20, 0
      %p40 = por %p38, %p39
      %p41 = scmp.ne.s32.totalorder %s30, %s33
      %p42 = scmp.eq.s32.totalorder %s25, 1
      %p43 = por %p41, %p42
      %p44 = scmp.ne.s32.totalorder %s33, %s34
      %p45 = scmp.eq.s32.totalorder %s25, 0
      %p46 = por %p44, %p45
      %p47 = scmp.ne.s32.totalorder %s33, %s34
      %p48 = scmp.eq.s32.totalorder %s26, 1
      %p49 = por %p47, %p48
      %p51 = scmp.ne.s32.totalorder %s34, %s50
      %p52 = scmp.eq.s32.totalorder %s26, 0
      %p53 = por %p51, %p52
      %s55 = sadd.s32 %s54, 1
      %p58 = scmp.eq.s32.totalorder %s20, 1
      %p59 = scmp.ne.s32.totalorder %s54, %s56
      %p60 = scmp.eq.s32.totalorder %s20, 0
      %p61 = por %p59, %p60
      %p62 = scmp.ne.s32.totalorder %s54, %s56
      %p63 = scmp.eq.s32.totalorder %s25, 1
      %p64 = por %p62, %p63
      %p65 = scmp.ne.s32.totalorder %s56, %s57
      %p66 = scmp.eq.s32.totalorder %s25, 0
      %p67 = por %p65, %p66
      %p68 = scmp.ne.s32.totalorder %s56, %s57
      %p69 = scmp.eq.s32.totalorder %s26, 1
      %p70 = por %p68, %p69
      %p72 = scmp.ne.s32.totalorder %s57, %s71
      %p73 = scmp.eq.s32.totalorder %s26, 0
      %p74 = por %p72, %p73
      %s76 = sadd.s32 %s75, 1
      %p79 = scmp.eq.s32.totalorder %s20, 1
      %p80 = scmp.ne.s32.totalorder %s75, %s77
      %p81 = scmp.eq.s32.totalorder %s20, 0
      %p82 = por %p80, %p81
      %p83 = scmp.ne.s32.totalorder %s75, %s77
      %p84 = scmp.eq.s32.totalorder %s25, 1
      %p85 = por %p83, %p84
      %p86 = scmp.ne.s32.totalorder %s77, %s78
      %p87 = scmp.eq.s32.totalorder %s25, 0
      %p88 = por %p86, %p87
      %p89 = scmp.ne.s32.totalorder %s77, %s78
      %p90 = scmp.eq.s32.totalorder %s26, 1
      %p91 = por %p89, %p90
      %p93 = scmp.ne.s32.totalorder %s78, %s92
      %p94 = scmp.eq.s32.totalorder %s26, 0
      %p95 = por %p93, %p94
      %s97 = sadd.s32 %s96, 1
      %p100 = scmp.eq.s32.totalorder %s20, 1
      %p101 = scmp.ne.s32.totalorder %s96, %s98
      %p102 = scmp.eq.s32.totalorder %s20, 0
      %p103 = por %p101, %p102
      %p104 = scmp.ne.s32.totalorder %s96, %s98
      %p105 = scmp.eq.s32.totalorder %s25, 1
      %p106 = por %p104, %p105
      %p107 = scmp.ne.s32.totalorder %s98, %s99
      %p108 = scmp.eq.s32.totalorder %s25, 0
      %p109 = por %p107, %p108
      %p110 = scmp.ne.s32.totalorder %s98, %s99
      %p111 = scmp.eq.s32.totalorder %s26, 1
      %p112 = por %p110, %p111
      %p114 = scmp.ne.s32.totalorder %s99, %s113
      %p115 = scmp.eq.s32.totalorder %s26, 0
      %p116 = por %p114, %p115
      %s118 = sadd.s32 %s117, 1
      %p121 = scmp.eq.s32.totalorder %s20, 1
      %p122 = scmp.ne.s32.totalorder %s117, %s119
      %p123 = scmp.eq.s32.totalorder %s20, 0
      %p124 = por %p122, %p123
      %p125 = scmp.ne.s32.totalorder %s117, %s119
      %p126 = scmp.eq.s32.totalorder %s25, 1
      %p127 = por %p125, %p126
      %p128 = scmp.ne.s32.totalorder %s119, %s120
      %p129 = scmp.eq.s32.totalorder %s25, 0
      %p130 = por %p128, %p129
      %p131 = scmp.ne.s32.totalorder %s119, %s120
      %p132 = scmp.eq.s32.totalorder %s26, 1
      %p133 = por %p131, %p132
      %p135 = scmp.ne.s32.totalorder %s120, %s134
      %p136 = scmp.eq.s32.totalorder %s26, 0
      %p137 = por %p135, %p136
      %s139 = sadd.s32 %s138, 1
      %p142 = scmp.eq.s32.totalorder %s20, 1
      %p143 = scmp.ne.s32.totalorder %s138, %s140
      %p144 = scmp.eq.s32.totalorder %s20, 0
      %p145 = por %p143, %p144
      %p146 = scmp.ne.s32.totalorder %s138, %s140
      %p147 = scmp.eq.s32.totalorder %s25, 1
      %p148 = por %p146, %p147
      %p149 = scmp.ne.s32.totalorder %s140, %s141
      %p150 = scmp.eq.s32.totalorder %s25, 0
      %p151 = por %p149, %p150
      %p152 = scmp.ne.s32.totalorder %s140, %s141
      %p153 = scmp.eq.s32.totalorder %s26, 1
      %p154 = por %p152, %p153
      %p156 = scmp.ne.s32.totalorder %s141, %s155
      %p157 = scmp.eq.s32.totalorder %s26, 0
      %p158 = por %p156, %p157
      %s159 = ssub.s32 %s20, %s27
      %p160 = scmp.eq.s32.totalorder %s159, 0
      %s162 = sadd.s32 %s161, 1
      %s163 = scalar_select %p160, %s161, %s162
      %p166 = pneg %p160
      %p167 = scmp.eq.s32.totalorder %s20, 1
      %p168 = por %p166, %p167
      %p169 = scmp.ne.s32.totalorder %s161, %s164
      %p170 = scmp.eq.s32.totalorder %s20, 0
      %p171 = por %p169, %p170
      %p172 = scmp.ne.s32.totalorder %s161, %s164
      %p173 = scmp.eq.s32.totalorder %s25, 1
      %p174 = por %p172, %p173
      %p175 = scmp.ne.s32.totalorder %s164, %s165
      %p176 = scmp.eq.s32.totalorder %s25, 0
      %p177 = por %p175, %p176
      %p178 = scmp.ne.s32.totalorder %s164, %s165
      %p179 = scmp.eq.s32.totalorder %s26, 1
      %p180 = por %p178, %p179
      %p182 = scmp.ne.s32.totalorder %s165, %s181
      %p183 = scmp.eq.s32.totalorder %s26, 0
      %p184 = por %p182, %p183
      %p185 = scmp.le.s32.totalorder 1, %s20
      %p186 = scmp.lt.s32.totalorder %s20, 3
      %p187 = pnand %p185, %p186
      %p188 = pneg %p187
      // Predicated region
      $region9: #{tpu_custom_call.1} parent=5 // pred_check
        _
      $region10: #{tpu_custom_call.1} parent=5 // pred_check_branch
        %190 = sbr.rel (%p187) target = $region12
      $region11: #{tpu_custom_call.1} parent=5 // pred_region
        %s191 = ssub.s32 %s20, 1
        // Predicated region
        $region13: #{tpu_custom_call.1} parent=11 // pred_check
          %p192 = pneg %p67
        $region14: #{tpu_custom_call.1} parent=11 // pred_check_branch
          %194 = sbr.rel (%p192) target = $region16
        $region15: #{tpu_custom_call.1} parent=11 // pred_region
          %196 = vsyncadd [#allocation8], 0
          %s198 = sshll.u32 %s1, 4
          %s199 = int_to_ptr.hbm [resolvable:$true] %s198
          %s200 = sshll.u32 [#allocation7], 4
          %s201 = int_to_ptr.vmem [resolvable:$true] %s200
          %203 = dma.hbm_to_vmem [thread:$0]  %s199, 16, %s201, [#allocation8]
        $region16: #{tpu_custom_call.1} parent=11 // pred_fallthru
          _
        // Predicated region
        $region17: #{tpu_custom_call.1} parent=11 // pred_check
          %p204 = pneg %p88
        $region18: #{tpu_custom_call.1} parent=11 // pred_check_branch
          %206 = sbr.rel (%p204) target = $region20
        $region19: #{tpu_custom_call.1} parent=11 // pred_region
          _
        $region20: #{tpu_custom_call.1} parent=11 // pred_fallthru
          _
        // Predicated region
        $region21: #{tpu_custom_call.1} parent=11 // pred_check
          %p207 = pneg %p109
        $region22: #{tpu_custom_call.1} parent=11 // pred_check_branch
          %209 = sbr.rel (%p207) target = $region24
        $region23: #{tpu_custom_call.1} parent=11 // pred_region
          %211 = vsyncadd [#allocation8], 0
          %s212 = sshll.u32 %s3, 4
          %s213 = int_to_ptr.hbm [resolvable:$true] %s212
          %s214 = sshll.u32 [#allocation9], 4
          %s215 = int_to_ptr.vmem [resolvable:$true] %s214
          %220 = dma.hbm_to_vmem [thread:$0]  %s213, 9216, %s215, [#allocation8], 64, 64, 4
        $region24: #{tpu_custom_call.1} parent=11 // pred_fallthru
          _
        // Predicated region
        $region25: #{tpu_custom_call.1} parent=11 // pred_check
          %p221 = pneg %p130
        $region26: #{tpu_custom_call.1} parent=11 // pred_check_branch
          %223 = sbr.rel (%p221) target = $region28
        $region27: #{tpu_custom_call.1} parent=11 // pred_region
          _
        $region28: #{tpu_custom_call.1} parent=11 // pred_fallthru
          _
        // Predicated region
        $region29: #{tpu_custom_call.1} parent=11 // pred_check
          %p224 = pneg %p151
        $region30: #{tpu_custom_call.1} parent=11 // pred_check_branch
          %226 = sbr.rel (%p224) target = $region32
        $region31: #{tpu_custom_call.1} parent=11 // pred_region
          %228 = vsyncadd [#allocation11], 0
          %s229 = sshll.u32 %s5, 4
          %s230 = int_to_ptr.hbm [resolvable:$true] %s229
          %s231 = sshll.u32 [#allocation10], 4
          %s232 = int_to_ptr.vmem [resolvable:$true] %s231
          %237 = dma.hbm_to_vmem [thread:$0]  %s230, 9216, %s232, [#allocation11], 64, 64, 4
        $region32: #{tpu_custom_call.1} parent=11 // pred_fallthru
          _
      $region12: #{tpu_custom_call.1} parent=5 // pred_fallthru
        _
      %p238 = scmp.lt.s32.totalorder %s20, 2
      // Predicated region
      $region33: #{tpu_custom_call.1} parent=5 // pred_check
        %p239 = pneg %p238
      $region34: #{tpu_custom_call.1} parent=5 // pred_check_branch
        %241 = sbr.rel (%p239) target = $region36
      $region35: #{tpu_custom_call.1} parent=5 // pred_region
        // Predicated region
        $region37: #{tpu_custom_call.1} parent=35 // pred_check
          %p242 = pneg %p40
        $region38: #{tpu_custom_call.1} parent=35 // pred_check_branch
          %244 = sbr.rel (%p242) target = $region40
        $region39: #{tpu_custom_call.1} parent=35 // pred_region
          %s245 = sand.u32 %s30, 1
          %s246 = scalar_lea.sflag [#allocation5], %s245
          %s247 = sand.u32 %s30, 1
          %s248 = smul.addr %s247, 256
          %s249 = scalar_lea.vmem [#allocation4], %s248
          %251 = vsyncadd %s246, 0
          %s252 = smul.addr %s20, 32
          %s253 = smul.addr %s252, 8
          %s254 = scalar_lea.hbm %s0, %s253
          %s255 = sshll.u32 %s254, 4
          %s256 = int_to_ptr.hbm [resolvable:$true] %s255
          %s257 = sshll.u32 %s249, 4
          %s258 = int_to_ptr.vmem [resolvable:$true] %s257
          %263 = dma.hbm_to_vmem [thread:$0]  %s256, 4096, %s258, %s246, 128, 128, 8
        $region40: #{tpu_custom_call.1} parent=35 // pred_fallthru
          _
      $region36: #{tpu_custom_call.1} parent=5 // pred_fallthru
        _
      %p264 = scmp.le.s32.totalorder 1, %s20
      %p265 = scmp.lt.s32.totalorder %s20, 3
      %p266 = pnand %p264, %p265
      %p267 = pneg %p266
      // Predicated region
      $region41: #{tpu_custom_call.1} parent=5 // pred_check
        _
      $region42: #{tpu_custom_call.1} parent=5 // pred_check_branch
        %269 = sbr.rel (%p266) target = $region44
      $region43: #{tpu_custom_call.1} parent=5 // pred_region
        %s270 = ssub.s32 %s20, 1
        %s271 = sand.u32 %s33, 1
        %s272 = scalar_lea.sflag [#allocation5], %s271
        %s273 = sand.u32 %s33, 1
        %s274 = smul.addr %s273, 256
        %s275 = scalar_lea.vmem [#allocation4], %s274
        // Predicated region
        $region45: #{tpu_custom_call.1} parent=43 // pred_check
          %p276 = pneg %p46
        $region46: #{tpu_custom_call.1} parent=43 // pred_check_branch
          %278 = sbr.rel (%p276) target = $region48
        $region47: #{tpu_custom_call.1} parent=43 // pred_region
          %280 = dma.done %s272, 4096
        $region48: #{tpu_custom_call.1} parent=43 // pred_fallthru
          _
        // Predicated region
        $region49: #{tpu_custom_call.1} parent=43 // pred_check
          %p281 = pneg %p67
        $region50: #{tpu_custom_call.1} parent=43 // pred_check_branch
          %283 = sbr.rel (%p281) target = $region52
        $region51: #{tpu_custom_call.1} parent=43 // pred_region
          %285 = dma.done [#allocation8], 16
        $region52: #{tpu_custom_call.1} parent=43 // pred_fallthru
          _
        // Predicated region
        $region53: #{tpu_custom_call.1} parent=43 // pred_check
          %p286 = pneg %p109
        $region54: #{tpu_custom_call.1} parent=43 // pred_check_branch
          %288 = sbr.rel (%p286) target = $region56
        $region55: #{tpu_custom_call.1} parent=43 // pred_region
          %290 = dma.done [#allocation8], 9216
        $region56: #{tpu_custom_call.1} parent=43 // pred_fallthru
          _
        // Predicated region
        $region57: #{tpu_custom_call.1} parent=43 // pred_check
          %p291 = pneg %p151
        $region58: #{tpu_custom_call.1} parent=43 // pred_check_branch
          %293 = sbr.rel (%p291) target = $region60
        $region59: #{tpu_custom_call.1} parent=43 // pred_region
          %295 = dma.done [#allocation11], 9216
        $region60: #{tpu_custom_call.1} parent=43 // pred_fallthru
          _
        %s296 = sand.u32 %s33, 1
        %s297 = scalar_lea.sflag [#allocation5], %s296
        %s298 = sand.u32 %s33, 1
        %s299 = smul.addr %s298, 256
        %s300 = scalar_lea.vmem [#allocation4], %s299
        %p301 = pneg %p46
        %p302 = pneg %p43
        %p303 = pneg %p67
        %p304 = pneg %p64
        %p305 = pneg %p88
        %p306 = pneg %p85
        %p307 = pneg %p109
        %p308 = pneg %p106
        %p309 = pneg %p130
        %p310 = pneg %p127
        %p311 = pneg %p151
        %p312 = pneg %p148
        %p313 = pneg %p177
        %p314 = pneg %p174
        %s315 = sand.u32 %s164, 1
        %s316 = scalar_lea.sflag [#allocation6], %s315
        %s317 = sand.u32 %s164, 1
        %s318 = smul.addr %s317, 256
        %s319 = scalar_lea.vmem [#allocation12], %s318
        %320 = vst [vmem:[#allocation2] sm:$0xff] 0.0
        %321 = vst [vmem:[#allocation2 + $0x8] sm:$0xff] 0.0
        %322 = vst [vmem:[#allocation2 + $0x10] sm:$0xff] 0.0
        %323 = vst [vmem:[#allocation2 + $0x118] sm:$0xff] 0.0
        %324 = vst [vmem:[#allocation2 + $0x120] sm:$0xff] 0.0
        %325 = vst [vmem:[#allocation2 + $0x128] sm:$0xff] 0.0
        %v326 = vlaneseq
        %v327 = vshrl.u32 %v326, 7
        %v328 = vadd.s32 %v327, 8
        %v329 = vadd.s32 %v327, 16
        %v330 = vadd.s32 %v327, 24
        %v331 = vadd.s32 %v327, 32
        %v332 = vadd.s32 %v327, 40
        %v333 = vadd.s32 %v327, 48
        %v334 = vadd.s32 %v327, 56
        %v335 = vadd.s32 %v327, 64
        %v336 = vadd.s32 %v327, 72
        %v337 = vadd.s32 %v327, 80
        %v338 = vadd.s32 %v327, 88
        %v339 = vadd.s32 %v327, 96
        %v340 = vadd.s32 %v327, 104
        %v341 = vadd.s32 %v327, 112
        %v342 = vadd.s32 %v327, 120
        %v343 = vadd.s32 %v327, 128
        %v344 = vadd.s32 %v327, 136
        %v345 = vadd.s32 %v327, 144
        %v346 = vadd.s32 %v327, 152
        %v347 = vadd.s32 %v327, 160
        %v348 = vadd.s32 %v327, 168
        %v349 = vadd.s32 %v327, 176
        %v350 = vadd.s32 %v327, 184
        %v351 = vadd.s32 %v327, 192
        %v352 = vadd.s32 %v327, 200
        %v353 = vadd.s32 %v327, 208
        %v354 = vadd.s32 %v327, 216
        %v355 = vadd.s32 %v327, 224
        %v356 = vadd.s32 %v327, 232
        %v357 = vadd.s32 %v327, 240
        %v358 = vadd.s32 %v327, 248
        %vm359 = vcmp.lt.s32.totalorder %v327, 0
        %v360 = vsub.s32 0, %v327
        %v361 = vsel %vm359, %v360, %v327
        %v362 = vshrl.u32 %v361, 4
        %v363 = vand.u32 %v361, 15
        %v364 = vsub.s32 0, %v363
        %v365 = vsel %vm359, %v364, %v363
        %vm366 = vcmp.lt.s32.totalorder %v328, 0
        %v367 = vsub.s32 0, %v328
        %v368 = vsel %vm366, %v367, %v328
        %v369 = vshrl.u32 %v368, 4
        %v370 = vand.u32 %v368, 15
        %v371 = vsub.s32 0, %v370
        %v372 = vsel %vm366, %v371, %v370
        %vm373 = vcmp.lt.s32.totalorder %v329, 0
        %v374 = vsub.s32 0, %v329
        %v375 = vsel %vm373, %v374, %v329
        %v376 = vshrl.u32 %v375, 4
        %v377 = vand.u32 %v375, 15
        %v378 = vsub.s32 0, %v377
        %v379 = vsel %vm373, %v378, %v377
        %vm380 = vcmp.lt.s32.totalorder %v330, 0
        %v381 = vsub.s32 0, %v330
        %v382 = vsel %vm380, %v381, %v330
        %v383 = vshrl.u32 %v382, 4
        %v384 = vand.u32 %v382, 15
        %v385 = vsub.s32 0, %v384
        %v386 = vsel %vm380, %v385, %v384
        %vm387 = vcmp.lt.s32.totalorder %v331, 0
        %v388 = vsub.s32 0, %v331
        %v389 = vsel %vm387, %v388, %v331
        %v390 = vshrl.u32 %v389, 4
        %v391 = vand.u32 %v389, 15
        %v392 = vsub.s32 0, %v391
        %v393 = vsel %vm387, %v392, %v391
        %vm394 = vcmp.lt.s32.totalorder %v332, 0
        %v395 = vsub.s32 0, %v332
        %v396 = vsel %vm394, %v395, %v332
        %v397 = vshrl.u32 %v396, 4
        %v398 = vand.u32 %v396, 15
        %v399 = vsub.s32 0, %v398
        %v400 = vsel %vm394, %v399, %v398
        %vm401 = vcmp.lt.s32.totalorder %v333, 0
        %v402 = vsub.s32 0, %v333
        %v403 = vsel %vm401, %v402, %v333
        %v404 = vshrl.u32 %v403, 4
        %v405 = vand.u32 %v403, 15
        %v406 = vsub.s32 0, %v405
        %v407 = vsel %vm401, %v406, %v405
        %vm408 = vcmp.lt.s32.totalorder %v334, 0
        %v409 = vsub.s32 0, %v334
        %v410 = vsel %vm408, %v409, %v334
        %v411 = vshrl.u32 %v410, 4
        %v412 = vand.u32 %v410, 15
        %v413 = vsub.s32 0, %v412
        %v414 = vsel %vm408, %v413, %v412
        %vm415 = vcmp.lt.s32.totalorder %v335, 0
        %v416 = vsub.s32 0, %v335
        %v417 = vsel %vm415, %v416, %v335
        %v418 = vshrl.u32 %v417, 4
        %v419 = vand.u32 %v417, 15
        %v420 = vsub.s32 0, %v419
        %v421 = vsel %vm415, %v420, %v419
        %vm422 = vcmp.lt.s32.totalorder %v336, 0
        %v423 = vsub.s32 0, %v336
        %v424 = vsel %vm422, %v423, %v336
        %v425 = vshrl.u32 %v424, 4
        %v426 = vand.u32 %v424, 15
        %v427 = vsub.s32 0, %v426
        %v428 = vsel %vm422, %v427, %v426
        %vm429 = vcmp.lt.s32.totalorder %v337, 0
        %v430 = vsub.s32 0, %v337
        %v431 = vsel %vm429, %v430, %v337
        %v432 = vshrl.u32 %v431, 4
        %v433 = vand.u32 %v431, 15
        %v434 = vsub.s32 0, %v433
        %v435 = vsel %vm429, %v434, %v433
        %vm436 = vcmp.lt.s32.totalorder %v338, 0
        %v437 = vsub.s32 0, %v338
        %v438 = vsel %vm436, %v437, %v338
        %v439 = vshrl.u32 %v438, 4
        %v440 = vand.u32 %v438, 15
        %v441 = vsub.s32 0, %v440
        %v442 = vsel %vm436, %v441, %v440
        %vm443 = vcmp.lt.s32.totalorder %v339, 0
        %v444 = vsub.s32 0, %v339
        %v445 = vsel %vm443, %v444, %v339
        %v446 = vshrl.u32 %v445, 4
        %v447 = vand.u32 %v445, 15
        %v448 = vsub.s32 0, %v447
        %v449 = vsel %vm443, %v448, %v447
        %vm450 = vcmp.lt.s32.totalorder %v340, 0
        %v451 = vsub.s32 0, %v340
        %v452 = vsel %vm450, %v451, %v340
        %v453 = vshrl.u32 %v452, 4
        %v454 = vand.u32 %v452, 15
        %v455 = vsub.s32 0, %v454
        %v456 = vsel %vm450, %v455, %v454
        %vm457 = vcmp.lt.s32.totalorder %v341, 0
        %v458 = vsub.s32 0, %v341
        %v459 = vsel %vm457, %v458, %v341
        %v460 = vshrl.u32 %v459, 4
        %v461 = vand.u32 %v459, 15
        %v462 = vsub.s32 0, %v461
        %v463 = vsel %vm457, %v462, %v461
        %vm464 = vcmp.lt.s32.totalorder %v342, 0
        %v465 = vsub.s32 0, %v342
        %v466 = vsel %vm464, %v465, %v342
        %v467 = vshrl.u32 %v466, 4
        %v468 = vand.u32 %v466, 15
        %v469 = vsub.s32 0, %v468
        %v470 = vsel %vm464, %v469, %v468
        %vm471 = vcmp.lt.s32.totalorder %v343, 0
        %v472 = vsub.s32 0, %v343
        %v473 = vsel %vm471, %v472, %v343
        %v474 = vshrl.u32 %v473, 4
        %v475 = vand.u32 %v473, 15
        %v476 = vsub.s32 0, %v475
        %v477 = vsel %vm471, %v476, %v475
        %vm478 = vcmp.lt.s32.totalorder %v344, 0
        %v479 = vsub.s32 0, %v344
        %v480 = vsel %vm478, %v479, %v344
        %v481 = vshrl.u32 %v480, 4
        %v482 = vand.u32 %v480, 15
        %v483 = vsub.s32 0, %v482
        %v484 = vsel %vm478, %v483, %v482
        %vm485 = vcmp.lt.s32.totalorder %v345, 0
        %v486 = vsub.s32 0, %v345
        %v487 = vsel %vm485, %v486, %v345
        %v488 = vshrl.u32 %v487, 4
        %v489 = vand.u32 %v487, 15
        %v490 = vsub.s32 0, %v489
        %v491 = vsel %vm485, %v490, %v489
        %vm492 = vcmp.lt.s32.totalorder %v346, 0
        %v493 = vsub.s32 0, %v346
        %v494 = vsel %vm492, %v493, %v346
        %v495 = vshrl.u32 %v494, 4
        %v496 = vand.u32 %v494, 15
        %v497 = vsub.s32 0, %v496
        %v498 = vsel %vm492, %v497, %v496
        %vm499 = vcmp.lt.s32.totalorder %v347, 0
        %v500 = vsub.s32 0, %v347
        %v501 = vsel %vm499, %v500, %v347
        %v502 = vshrl.u32 %v501, 4
        %v503 = vand.u32 %v501, 15
        %v504 = vsub.s32 0, %v503
        %v505 = vsel %vm499, %v504, %v503
        %vm506 = vcmp.lt.s32.totalorder %v348, 0
        %v507 = vsub.s32 0, %v348
        %v508 = vsel %vm506, %v507, %v348
        %v509 = vshrl.u32 %v508, 4
        %v510 = vand.u32 %v508, 15
        %v511 = vsub.s32 0, %v510
        %v512 = vsel %vm506, %v511, %v510
        %vm513 = vcmp.lt.s32.totalorder %v349, 0
        %v514 = vsub.s32 0, %v349
        %v515 = vsel %vm513, %v514, %v349
        %v516 = vshrl.u32 %v515, 4
        %v517 = vand.u32 %v515, 15
        %v518 = vsub.s32 0, %v517
        %v519 = vsel %vm513, %v518, %v517
        %vm520 = vcmp.lt.s32.totalorder %v350, 0
        %v521 = vsub.s32 0, %v350
        %v522 = vsel %vm520, %v521, %v350
        %v523 = vshrl.u32 %v522, 4
        %v524 = vand.u32 %v522, 15
        %v525 = vsub.s32 0, %v524
        %v526 = vsel %vm520, %v525, %v524
        %vm527 = vcmp.lt.s32.totalorder %v351, 0
        %v528 = vsub.s32 0, %v351
        %v529 = vsel %vm527, %v528, %v351
        %v530 = vshrl.u32 %v529, 4
        %v531 = vand.u32 %v529, 15
        %v532 = vsub.s32 0, %v531
        %v533 = vsel %vm527, %v532, %v531
        %vm534 = vcmp.lt.s32.totalorder %v352, 0
        %v535 = vsub.s32 0, %v352
        %v536 = vsel %vm534, %v535, %v352
        %v537 = vshrl.u32 %v536, 4
        %v538 = vand.u32 %v536, 15
        %v539 = vsub.s32 0, %v538
        %v540 = vsel %vm534, %v539, %v538
        %vm541 = vcmp.lt.s32.totalorder %v353, 0
        %v542 = vsub.s32 0, %v353
        %v543 = vsel %vm541, %v542, %v353
        %v544 = vshrl.u32 %v543, 4
        %v545 = vand.u32 %v543, 15
        %v546 = vsub.s32 0, %v545
        %v547 = vsel %vm541, %v546, %v545
        %vm548 = vcmp.lt.s32.totalorder %v354, 0
        %v549 = vsub.s32 0, %v354
        %v550 = vsel %vm548, %v549, %v354
        %v551 = vshrl.u32 %v550, 4
        %v552 = vand.u32 %v550, 15
        %v553 = vsub.s32 0, %v552
        %v554 = vsel %vm548, %v553, %v552
        %vm555 = vcmp.lt.s32.totalorder %v355, 0
        %v556 = vsub.s32 0, %v355
        %v557 = vsel %vm555, %v556, %v355
        %v558 = vshrl.u32 %v557, 4
        %v559 = vand.u32 %v557, 15
        %v560 = vsub.s32 0, %v559
        %v561 = vsel %vm555, %v560, %v559
        %vm562 = vcmp.lt.s32.totalorder %v356, 0
        %v563 = vsub.s32 0, %v356
        %v564 = vsel %vm562, %v563, %v356
        %v565 = vshrl.u32 %v564, 4
        %v566 = vand.u32 %v564, 15
        %v567 = vsub.s32 0, %v566
        %v568 = vsel %vm562, %v567, %v566
        %vm569 = vcmp.lt.s32.totalorder %v357, 0
        %v570 = vsub.s32 0, %v357
        %v571 = vsel %vm569, %v570, %v357
        %v572 = vshrl.u32 %v571, 4
        %v573 = vand.u32 %v571, 15
        %v574 = vsub.s32 0, %v573
        %v575 = vsel %vm569, %v574, %v573
        %vm576 = vcmp.lt.s32.totalorder %v358, 0
        %v577 = vsub.s32 0, %v358
        %v578 = vsel %vm576, %v577, %v358
        %v579 = vshrl.u32 %v578, 4
        %v580 = vand.u32 %v578, 15
        %v581 = vsub.s32 0, %v580
        %v582 = vsel %vm576, %v581, %v580
        %vm583 = vcmp.ne.s32.totalorder %v365, 0
        %vm584 = vcmp.ne.s32.totalorder %v372, 0
        %vm585 = vcmp.ne.s32.totalorder %v379, 0
        %vm586 = vcmp.ne.s32.totalorder %v386, 0
        %vm587 = vcmp.ne.s32.totalorder %v393, 0
        %vm588 = vcmp.ne.s32.totalorder %v400, 0
        %vm589 = vcmp.ne.s32.totalorder %v407, 0
        %vm590 = vcmp.ne.s32.totalorder %v414, 0
        %vm591 = vcmp.ne.s32.totalorder %v421, 0
        %vm592 = vcmp.ne.s32.totalorder %v428, 0
        %vm593 = vcmp.ne.s32.totalorder %v435, 0
        %vm594 = vcmp.ne.s32.totalorder %v442, 0
        %vm595 = vcmp.ne.s32.totalorder %v449, 0
        %vm596 = vcmp.ne.s32.totalorder %v456, 0
        %vm597 = vcmp.ne.s32.totalorder %v463, 0
        %vm598 = vcmp.ne.s32.totalorder %v470, 0
        %vm599 = vcmp.ne.s32.totalorder %v477, 0
        %vm600 = vcmp.ne.s32.totalorder %v484, 0
        %vm601 = vcmp.ne.s32.totalorder %v491, 0
        %vm602 = vcmp.ne.s32.totalorder %v498, 0
        %vm603 = vcmp.ne.s32.totalorder %v505, 0
        %vm604 = vcmp.ne.s32.totalorder %v512, 0
        %vm605 = vcmp.ne.s32.totalorder %v519, 0
        %vm606 = vcmp.ne.s32.totalorder %v526, 0
        %vm607 = vcmp.ne.s32.totalorder %v533, 0
        %vm608 = vcmp.ne.s32.totalorder %v540, 0
        %vm609 = vcmp.ne.s32.totalorder %v547, 0
        %vm610 = vcmp.ne.s32.totalorder %v554, 0
        %vm611 = vcmp.ne.s32.totalorder %v561, 0
        %vm612 = vcmp.ne.s32.totalorder %v568, 0
        %vm613 = vcmp.ne.s32.totalorder %v575, 0
        %vm614 = vcmp.ne.s32.totalorder %v582, 0
        %vm615 = vcmp.lt.s32.totalorder %v365, 0
        %vm616 = vcmp.lt.s32.totalorder %v372, 0
        %vm617 = vcmp.lt.s32.totalorder %v379, 0
        %vm618 = vcmp.lt.s32.totalorder %v386, 0
        %vm619 = vcmp.lt.s32.totalorder %v393, 0
        %vm620 = vcmp.lt.s32.totalorder %v400, 0
        %vm621 = vcmp.lt.s32.totalorder %v407, 0
        %vm622 = vcmp.lt.s32.totalorder %v414, 0
        %vm623 = vcmp.lt.s32.totalorder %v421, 0
        %vm624 = vcmp.lt.s32.totalorder %v428, 0
        %vm625 = vcmp.lt.s32.totalorder %v435, 0
        %vm626 = vcmp.lt.s32.totalorder %v442, 0
        %vm627 = vcmp.lt.s32.totalorder %v449, 0
        %vm628 = vcmp.lt.s32.totalorder %v456, 0
        %vm629 = vcmp.lt.s32.totalorder %v463, 0
        %vm630 = vcmp.lt.s32.totalorder %v470, 0
        %vm631 = vcmp.lt.s32.totalorder %v477, 0
        %vm632 = vcmp.lt.s32.totalorder %v484, 0
        %vm633 = vcmp.lt.s32.totalorder %v491, 0
        %vm634 = vcmp.lt.s32.totalorder %v498, 0
        %vm635 = vcmp.lt.s32.totalorder %v505, 0
        %vm636 = vcmp.lt.s32.totalorder %v512, 0
        %vm637 = vcmp.lt.s32.totalorder %v519, 0
        %vm638 = vcmp.lt.s32.totalorder %v526, 0
        %vm639 = vcmp.lt.s32.totalorder %v533, 0
        %vm640 = vcmp.lt.s32.totalorder %v540, 0
        %vm641 = vcmp.lt.s32.totalorder %v547, 0
        %vm642 = vcmp.lt.s32.totalorder %v554, 0
        %vm643 = vcmp.lt.s32.totalorder %v561, 0
        %vm644 = vcmp.lt.s32.totalorder %v568, 0
        %vm645 = vcmp.lt.s32.totalorder %v575, 0
        %vm646 = vcmp.lt.s32.totalorder %v582, 0
        %vm647 = vmand %vm615, %vm583
        %vm648 = vmand %vm616, %vm584
        %vm649 = vmand %vm617, %vm585
        %vm650 = vmand %vm618, %vm586
        %vm651 = vmand %vm619, %vm587
        %vm652 = vmand %vm620, %vm588
        %vm653 = vmand %vm621, %vm589
        %vm654 = vmand %vm622, %vm590
        %vm655 = vmand %vm623, %vm591
        %vm656 = vmand %vm624, %vm592
        %vm657 = vmand %vm625, %vm593
        %vm658 = vmand %vm626, %vm594
        %vm659 = vmand %vm627, %vm595
        %vm660 = vmand %vm628, %vm596
        %vm661 = vmand %vm629, %vm597
        %vm662 = vmand %vm630, %vm598
        %vm663 = vmand %vm631, %vm599
        %vm664 = vmand %vm632, %vm600
        %vm665 = vmand %vm633, %vm601
        %vm666 = vmand %vm634, %vm602
        %vm667 = vmand %vm635, %vm603
        %vm668 = vmand %vm636, %vm604
        %vm669 = vmand %vm637, %vm605
        %vm670 = vmand %vm638, %vm606
        %vm671 = vmand %vm639, %vm607
        %vm672 = vmand %vm640, %vm608
        %vm673 = vmand %vm641, %vm609
        %vm674 = vmand %vm642, %vm610
        %vm675 = vmand %vm643, %vm611
        %vm676 = vmand %vm644, %vm612
        %vm677 = vmand %vm645, %vm613
        %vm678 = vmand %vm646, %vm614
        %v679 = vadd.s32 %v365, 16
        %v680 = vadd.s32 %v372, 16
        %v681 = vadd.s32 %v379, 16
        %v682 = vadd.s32 %v386, 16
        %v683 = vadd.s32 %v393, 16
        %v684 = vadd.s32 %v400, 16
        %v685 = vadd.s32 %v407, 16
        %v686 = vadd.s32 %v414, 16
        %v687 = vadd.s32 %v421, 16
        %v688 = vadd.s32 %v428, 16
        %v689 = vadd.s32 %v435, 16
        %v690 = vadd.s32 %v442, 16
        %v691 = vadd.s32 %v449, 16
        %v692 = vadd.s32 %v456, 16
        %v693 = vadd.s32 %v463, 16
        %v694 = vadd.s32 %v470, 16
        %v695 = vadd.s32 %v477, 16
        %v696 = vadd.s32 %v484, 16
        %v697 = vadd.s32 %v491, 16
        %v698 = vadd.s32 %v498, 16
        %v699 = vadd.s32 %v505, 16
        %v700 = vadd.s32 %v512, 16
        %v701 = vadd.s32 %v519, 16
        %v702 = vadd.s32 %v526, 16
        %v703 = vadd.s32 %v533, 16
        %v704 = vadd.s32 %v540, 16
        %v705 = vadd.s32 %v547, 16
        %v706 = vadd.s32 %v554, 16
        %v707 = vadd.s32 %v561, 16
        %v708 = vadd.s32 %v568, 16
        %v709 = vadd.s32 %v575, 16
        %v710 = vadd.s32 %v582, 16
        %v711 = vsel %vm647, %v679, %v365
        %v712 = vsel %vm648, %v680, %v372
        %v713 = vsel %vm649, %v681, %v379
        %v714 = vsel %vm650, %v682, %v386
        %v715 = vsel %vm651, %v683, %v393
        %v716 = vsel %vm652, %v684, %v400
        %v717 = vsel %vm653, %v685, %v407
        %v718 = vsel %vm654, %v686, %v414
        %v719 = vsel %vm655, %v687, %v421
        %v720 = vsel %vm656, %v688, %v428
        %v721 = vsel %vm657, %v689, %v435
        %v722 = vsel %vm658, %v690, %v442
        %v723 = vsel %vm659, %v691, %v449
        %v724 = vsel %vm660, %v692, %v456
        %v725 = vsel %vm661, %v693, %v463
        %v726 = vsel %vm662, %v694, %v470
        %v727 = vsel %vm663, %v695, %v477
        %v728 = vsel %vm664, %v696, %v484
        %v729 = vsel %vm665, %v697, %v491
        %v730 = vsel %vm666, %v698, %v498
        %v731 = vsel %vm667, %v699, %v505
        %v732 = vsel %vm668, %v700, %v512
        %v733 = vsel %vm669, %v701, %v519
        %v734 = vsel %vm670, %v702, %v526
        %v735 = vsel %vm671, %v703, %v533
        %v736 = vsel %vm672, %v704, %v540
        %v737 = vsel %vm673, %v705, %v547
        %v738 = vsel %vm674, %v706, %v554
        %v739 = vsel %vm675, %v707, %v561
        %v740 = vsel %vm676, %v708, %v568
        %v741 = vsel %vm677, %v709, %v575
        %v742 = vsel %vm678, %v710, %v582
        %vm743 = vcmp.gt.s32.totalorder %v711, 0
        %vm744 = vcmp.gt.s32.totalorder %v712, 0
        %vm745 = vcmp.gt.s32.totalorder %v713, 0
        %vm746 = vcmp.gt.s32.totalorder %v714, 0
        %vm747 = vcmp.gt.s32.totalorder %v715, 0
        %vm748 = vcmp.gt.s32.totalorder %v716, 0
        %vm749 = vcmp.gt.s32.totalorder %v717, 0
        %vm750 = vcmp.gt.s32.totalorder %v718, 0
        %vm751 = vcmp.gt.s32.totalorder %v719, 0
        %vm752 = vcmp.gt.s32.totalorder %v720, 0
        %vm753 = vcmp.gt.s32.totalorder %v721, 0
        %vm754 = vcmp.gt.s32.totalorder %v722, 0
        %vm755 = vcmp.gt.s32.totalorder %v723, 0
        %vm756 = vcmp.gt.s32.totalorder %v724, 0
        %vm757 = vcmp.gt.s32.totalorder %v725, 0
        %vm758 = vcmp.gt.s32.totalorder %v726, 0
        %vm759 = vcmp.gt.s32.totalorder %v727, 0
        %vm760 = vcmp.gt.s32.totalorder %v728, 0
        %vm761 = vcmp.gt.s32.totalorder %v729, 0
        %vm762 = vcmp.gt.s32.totalorder %v730, 0
        %vm763 = vcmp.gt.s32.totalorder %v731, 0
        %vm764 = vcmp.gt.s32.totalorder %v732, 0
        %vm765 = vcmp.gt.s32.totalorder %v733, 0
        %vm766 = vcmp.gt.s32.totalorder %v734, 0
        %vm767 = vcmp.gt.s32.totalorder %v735, 0
        %vm768 = vcmp.gt.s32.totalorder %v736, 0
        %vm769 = vcmp.gt.s32.totalorder %v737, 0
        %vm770 = vcmp.gt.s32.totalorder %v738, 0
        %vm771 = vcmp.gt.s32.totalorder %v739, 0
        %vm772 = vcmp.gt.s32.totalorder %v740, 0
        %vm773 = vcmp.gt.s32.totalorder %v741, 0
        %vm774 = vcmp.gt.s32.totalorder %v742, 0
        %vm775 = vcmp.lt.s32.totalorder %v711, 15
        %vm776 = vcmp.lt.s32.totalorder %v712, 15
        %vm777 = vcmp.lt.s32.totalorder %v713, 15
        %vm778 = vcmp.lt.s32.totalorder %v714, 15
        %vm779 = vcmp.lt.s32.totalorder %v715, 15
        %vm780 = vcmp.lt.s32.totalorder %v716, 15
        %vm781 = vcmp.lt.s32.totalorder %v717, 15
        %vm782 = vcmp.lt.s32.totalorder %v718, 15
        %vm783 = vcmp.lt.s32.totalorder %v719, 15
        %vm784 = vcmp.lt.s32.totalorder %v720, 15
        %vm785 = vcmp.lt.s32.totalorder %v721, 15
        %vm786 = vcmp.lt.s32.totalorder %v722, 15
        %vm787 = vcmp.lt.s32.totalorder %v723, 15
        %vm788 = vcmp.lt.s32.totalorder %v724, 15
        %vm789 = vcmp.lt.s32.totalorder %v725, 15
        %vm790 = vcmp.lt.s32.totalorder %v726, 15
        %vm791 = vcmp.lt.s32.totalorder %v727, 15
        %vm792 = vcmp.lt.s32.totalorder %v728, 15
        %vm793 = vcmp.lt.s32.totalorder %v729, 15
        %vm794 = vcmp.lt.s32.totalorder %v730, 15
        %vm795 = vcmp.lt.s32.totalorder %v731, 15
        %vm796 = vcmp.lt.s32.totalorder %v732, 15
        %vm797 = vcmp.lt.s32.totalorder %v733, 15
        %vm798 = vcmp.lt.s32.totalorder %v734, 15
        %vm799 = vcmp.lt.s32.totalorder %v735, 15
        %vm800 = vcmp.lt.s32.totalorder %v736, 15
        %vm801 = vcmp.lt.s32.totalorder %v737, 15
        %vm802 = vcmp.lt.s32.totalorder %v738, 15
        %vm803 = vcmp.lt.s32.totalorder %v739, 15
        %vm804 = vcmp.lt.s32.totalorder %v740, 15
        %vm805 = vcmp.lt.s32.totalorder %v741, 15
        %vm806 = vcmp.lt.s32.totalorder %v742, 15
        %v807 = vld [vmem:[%s275] sm:$0xff]
        %v808 = vld [vmem:[%s275 + $0x8] sm:$0xff]
        %v809 = vld [vmem:[%s275 + $0x10] sm:$0xff]
        %v810 = vld [vmem:[%s275 + $0x18] sm:$0xff]
        %v811 = vld [vmem:[%s275 + $0x20] sm:$0xff]
        %v812 = vld [vmem:[%s275 + $0x28] sm:$0xff]
        %v813 = vld [vmem:[%s275 + $0x30] sm:$0xff]
        %v814 = vld [vmem:[%s275 + $0x38] sm:$0xff]
        %v815 = vld [vmem:[%s275 + $0x40] sm:$0xff]
        %v816 = vld [vmem:[%s275 + $0x48] sm:$0xff]
        %v817 = vld [vmem:[%s275 + $0x50] sm:$0xff]
        %v818 = vld [vmem:[%s275 + $0x58] sm:$0xff]
        %v819 = vld [vmem:[%s275 + $0x60] sm:$0xff]
        %v820 = vld [vmem:[%s275 + $0x68] sm:$0xff]
        %v821 = vld [vmem:[%s275 + $0x70] sm:$0xff]
        %v822 = vld [vmem:[%s275 + $0x78] sm:$0xff]
        %v823 = vld [vmem:[%s275 + $0x80] sm:$0xff]
        %v824 = vld [vmem:[%s275 + $0x88] sm:$0xff]
        %v825 = vld [vmem:[%s275 + $0x90] sm:$0xff]
        %v826 = vld [vmem:[%s275 + $0x98] sm:$0xff]
        %v827 = vld [vmem:[%s275 + $0xa0] sm:$0xff]
        %v828 = vld [vmem:[%s275 + $0xa8] sm:$0xff]
        %v829 = vld [vmem:[%s275 + $0xb0] sm:$0xff]
        %v830 = vld [vmem:[%s275 + $0xb8] sm:$0xff]
        %v831 = vld [vmem:[%s275 + $0xc0] sm:$0xff]
        %v832 = vld [vmem:[%s275 + $0xc8] sm:$0xff]
        %v833 = vld [vmem:[%s275 + $0xd0] sm:$0xff]
        %v834 = vld [vmem:[%s275 + $0xd8] sm:$0xff]
        %v835 = vld [vmem:[%s275 + $0xe0] sm:$0xff]
        %v836 = vld [vmem:[%s275 + $0xe8] sm:$0xff]
        %v837 = vld [vmem:[%s275 + $0xf0] sm:$0xff]
        %v838 = vld [vmem:[%s275 + $0xf8] sm:$0xff]
        %v839 = vld [vmem:[#allocation7] sm:$0x1]
        %v841 = vperm.slane %v839, 0
        %v843 = vmul.f32 %v807, %v841
        %v844 = vmul.f32 %v808, %v841
        %v845 = vmul.f32 %v809, %v841
        %v846 = vmul.f32 %v810, %v841
        %v847 = vmul.f32 %v811, %v841
        %v848 = vmul.f32 %v812, %v841
        %v849 = vmul.f32 %v813, %v841
        %v850 = vmul.f32 %v814, %v841
        %v851 = vmul.f32 %v815, %v841
        %v852 = vmul.f32 %v816, %v841
        %v853 = vmul.f32 %v817, %v841
        %v854 = vmul.f32 %v818, %v841
        %v855 = vmul.f32 %v819, %v841
        %v856 = vmul.f32 %v820, %v841
        %v857 = vmul.f32 %v821, %v841
        %v858 = vmul.f32 %v822, %v841
        %v859 = vmul.f32 %v823, %v841
        %v860 = vmul.f32 %v824, %v841
        %v861 = vmul.f32 %v825, %v841
        %v862 = vmul.f32 %v826, %v841
        %v863 = vmul.f32 %v827, %v841
        %v864 = vmul.f32 %v828, %v841
        %v865 = vmul.f32 %v829, %v841
        %v866 = vmul.f32 %v830, %v841
        %v867 = vmul.f32 %v831, %v841
        %v868 = vmul.f32 %v832, %v841
        %v869 = vmul.f32 %v833, %v841
        %v870 = vmul.f32 %v834, %v841
        %v871 = vmul.f32 %v835, %v841
        %v872 = vmul.f32 %v836, %v841
        %v873 = vmul.f32 %v837, %v841
        %v874 = vmul.f32 %v838, %v841
        %v875 = vld [vmem:[%s2] sm:$0x1]
        %v877 = vperm.slane %v875, 0
        %v879 = vadd.f32 %v843, %v877
        %v880 = vadd.f32 %v844, %v877
        %v881 = vadd.f32 %v845, %v877
        %v882 = vadd.f32 %v846, %v877
        %v883 = vadd.f32 %v847, %v877
        %v884 = vadd.f32 %v848, %v877
        %v885 = vadd.f32 %v849, %v877
        %v886 = vadd.f32 %v850, %v877
        %v887 = vadd.f32 %v851, %v877
        %v888 = vadd.f32 %v852, %v877
        %v889 = vadd.f32 %v853, %v877
        %v890 = vadd.f32 %v854, %v877
        %v891 = vadd.f32 %v855, %v877
        %v892 = vadd.f32 %v856, %v877
        %v893 = vadd.f32 %v857, %v877
        %v894 = vadd.f32 %v858, %v877
        %v895 = vadd.f32 %v859, %v877
        %v896 = vadd.f32 %v860, %v877
        %v897 = vadd.f32 %v861, %v877
        %v898 = vadd.f32 %v862, %v877
        %v899 = vadd.f32 %v863, %v877
        %v900 = vadd.f32 %v864, %v877
        %v901 = vadd.f32 %v865, %v877
        %v902 = vadd.f32 %v866, %v877
        %v903 = vadd.f32 %v867, %v877
        %v904 = vadd.f32 %v868, %v877
        %v905 = vadd.f32 %v869, %v877
        %v906 = vadd.f32 %v870, %v877
        %v907 = vadd.f32 %v871, %v877
        %v908 = vadd.f32 %v872, %v877
        %v909 = vadd.f32 %v873, %v877
        %v910 = vadd.f32 %v874, %v877
        %v911 = vmax.f32 %v879, 0.0
        %v912 = vmax.f32 %v880, 0.0
        %v913 = vmax.f32 %v881, 0.0
        %v914 = vmax.f32 %v882, 0.0
        %v915 = vmax.f32 %v883, 0.0
        %v916 = vmax.f32 %v884, 0.0
        %v917 = vmax.f32 %v885, 0.0
        %v918 = vmax.f32 %v886, 0.0
        %v919 = vmax.f32 %v887, 0.0
        %v920 = vmax.f32 %v888, 0.0
        %v921 = vmax.f32 %v889, 0.0
        %v922 = vmax.f32 %v890, 0.0
        %v923 = vmax.f32 %v891, 0.0
        %v924 = vmax.f32 %v892, 0.0
        %v925 = vmax.f32 %v893, 0.0
        %v926 = vmax.f32 %v894, 0.0
        %v927 = vmax.f32 %v895, 0.0
        %v928 = vmax.f32 %v896, 0.0
        %v929 = vmax.f32 %v897, 0.0
        %v930 = vmax.f32 %v898, 0.0
        %v931 = vmax.f32 %v899, 0.0
        %v932 = vmax.f32 %v900, 0.0
        %v933 = vmax.f32 %v901, 0.0
        %v934 = vmax.f32 %v902, 0.0
        %v935 = vmax.f32 %v903, 0.0
        %v936 = vmax.f32 %v904, 0.0
        %v937 = vmax.f32 %v905, 0.0
        %v938 = vmax.f32 %v906, 0.0
        %v939 = vmax.f32 %v907, 0.0
        %v940 = vmax.f32 %v908, 0.0
        %v941 = vmax.f32 %v909, 0.0
        %v942 = vmax.f32 %v910, 0.0
        %943 = vst [vmem:[#allocation2 + $0x18] sm:$0xff] %v911
        %944 = vst [vmem:[#allocation2 + $0x20] sm:$0xff] %v912
        %945 = vst [vmem:[#allocation2 + $0x28] sm:$0xff] %v913
        %946 = vst [vmem:[#allocation2 + $0x30] sm:$0xff] %v914
        %947 = vst [vmem:[#allocation2 + $0x38] sm:$0xff] %v915
        %948 = vst [vmem:[#allocation2 + $0x40] sm:$0xff] %v916
        %949 = vst [vmem:[#allocation2 + $0x48] sm:$0xff] %v917
        %950 = vst [vmem:[#allocation2 + $0x50] sm:$0xff] %v918
        %951 = vst [vmem:[#allocation2 + $0x58] sm:$0xff] %v919
        %952 = vst [vmem:[#allocation2 + $0x60] sm:$0xff] %v920
        %953 = vst [vmem:[#allocation2 + $0x68] sm:$0xff] %v921
        %954 = vst [vmem:[#allocation2 + $0x70] sm:$0xff] %v922
        %955 = vst [vmem:[#allocation2 + $0x78] sm:$0xff] %v923
        %956 = vst [vmem:[#allocation2 + $0x80] sm:$0xff] %v924
        %957 = vst [vmem:[#allocation2 + $0x88] sm:$0xff] %v925
        %958 = vst [vmem:[#allocation2 + $0x90] sm:$0xff] %v926
        %959 = vst [vmem:[#allocation2 + $0x98] sm:$0xff] %v927
        %960 = vst [vmem:[#allocation2 + $0xa0] sm:$0xff] %v928
        %961 = vst [vmem:[#allocation2 + $0xa8] sm:$0xff] %v929
        %962 = vst [vmem:[#allocation2 + $0xb0] sm:$0xff] %v930
        %963 = vst [vmem:[#allocation2 + $0xb8] sm:$0xff] %v931
        %964 = vst [vmem:[#allocation2 + $0xc0] sm:$0xff] %v932
        %965 = vst [vmem:[#allocation2 + $0xc8] sm:$0xff] %v933
        %966 = vst [vmem:[#allocation2 + $0xd0] sm:$0xff] %v934
        %967 = vst [vmem:[#allocation2 + $0xd8] sm:$0xff] %v935
        %968 = vst [vmem:[#allocation2 + $0xe0] sm:$0xff] %v936
        %969 = vst [vmem:[#allocation2 + $0xe8] sm:$0xff] %v937
        %970 = vst [vmem:[#allocation2 + $0xf0] sm:$0xff] %v938
        %971 = vst [vmem:[#allocation2 + $0xf8] sm:$0xff] %v939
        %972 = vst [vmem:[#allocation2 + $0x100] sm:$0xff] %v940
        %973 = vst [vmem:[#allocation2 + $0x108] sm:$0xff] %v941
        %974 = vst [vmem:[#allocation2 + $0x110] sm:$0xff] %v942
        %v975 = vld [vmem:[#allocation2 + $0x7] sm:$0xff]
        %v976 = vld [vmem:[#allocation2 + $0xf] sm:$0xff]
        %v977 = vld [vmem:[#allocation2 + $0x17] sm:$0xff]
        %v978 = vld [vmem:[#allocation2 + $0x1f] sm:$0xff]
        %v979 = vld [vmem:[#allocation2 + $0x27] sm:$0xff]
        %v980 = vld [vmem:[#allocation2 + $0x2f] sm:$0xff]
        %v981 = vld [vmem:[#allocation2 + $0x37] sm:$0xff]
        %v982 = vld [vmem:[#allocation2 + $0x3f] sm:$0xff]
        %v983 = vld [vmem:[#allocation2 + $0x47] sm:$0xff]
        %v984 = vld [vmem:[#allocation2 + $0x4f] sm:$0xff]
        %v985 = vld [vmem:[#allocation2 + $0x57] sm:$0xff]
        %v986 = vld [vmem:[#allocation2 + $0x5f] sm:$0xff]
        %v987 = vld [vmem:[#allocation2 + $0x67] sm:$0xff]
        %v988 = vld [vmem:[#allocation2 + $0x6f] sm:$0xff]
        %v989 = vld [vmem:[#allocation2 + $0x77] sm:$0xff]
        %v990 = vld [vmem:[#allocation2 + $0x7f] sm:$0xff]
        %v991 = vld [vmem:[#allocation2 + $0x87] sm:$0xff]
        %v992 = vld [vmem:[#allocation2 + $0x8f] sm:$0xff]
        %v993 = vld [vmem:[#allocation2 + $0x97] sm:$0xff]
        %v994 = vld [vmem:[#allocation2 + $0x9f] sm:$0xff]
        %v995 = vld [vmem:[#allocation2 + $0xa7] sm:$0xff]
        %v996 = vld [vmem:[#allocation2 + $0xaf] sm:$0xff]
        %v997 = vld [vmem:[#allocation2 + $0xb7] sm:$0xff]
        %v998 = vld [vmem:[#allocation2 + $0xbf] sm:$0xff]
        %v999 = vld [vmem:[#allocation2 + $0xc7] sm:$0xff]
        %v1000 = vld [vmem:[#allocation2 + $0xcf] sm:$0xff]
        %v1001 = vld [vmem:[#allocation2 + $0xd7] sm:$0xff]
        %v1002 = vld [vmem:[#allocation2 + $0xdf] sm:$0xff]
        %v1003 = vld [vmem:[#allocation2 + $0xe7] sm:$0xff]
        %v1004 = vld [vmem:[#allocation2 + $0xef] sm:$0xff]
        %v1005 = vld [vmem:[#allocation2 + $0xf7] sm:$0xff]
        %v1006 = vld [vmem:[#allocation2 + $0xff] sm:$0xff]
        %v1007 = vsel %vm743, %v975, 0.0
        %v1008 = vsel %vm744, %v976, 0.0
        %v1009 = vsel %vm745, %v977, 0.0
        %v1010 = vsel %vm746, %v978, 0.0
        %v1011 = vsel %vm747, %v979, 0.0
        %v1012 = vsel %vm748, %v980, 0.0
        %v1013 = vsel %vm749, %v981, 0.0
        %v1014 = vsel %vm750, %v982, 0.0
        %v1015 = vsel %vm751, %v983, 0.0
        %v1016 = vsel %vm752, %v984, 0.0
        %v1017 = vsel %vm753, %v985, 0.0
        %v1018 = vsel %vm754, %v986, 0.0
        %v1019 = vsel %vm755, %v987, 0.0
        %v1020 = vsel %vm756, %v988, 0.0
        %v1021 = vsel %vm757, %v989, 0.0
        %v1022 = vsel %vm758, %v990, 0.0
        %v1023 = vsel %vm759, %v991, 0.0
        %v1024 = vsel %vm760, %v992, 0.0
        %v1025 = vsel %vm761, %v993, 0.0
        %v1026 = vsel %vm762, %v994, 0.0
        %v1027 = vsel %vm763, %v995, 0.0
        %v1028 = vsel %vm764, %v996, 0.0
        %v1029 = vsel %vm765, %v997, 0.0
        %v1030 = vsel %vm766, %v998, 0.0
        %v1031 = vsel %vm767, %v999, 0.0
        %v1032 = vsel %vm768, %v1000, 0.0
        %v1033 = vsel %vm769, %v1001, 0.0
        %v1034 = vsel %vm770, %v1002, 0.0
        %v1035 = vsel %vm771, %v1003, 0.0
        %v1036 = vsel %vm772, %v1004, 0.0
        %v1037 = vsel %vm773, %v1005, 0.0
        %v1038 = vsel %vm774, %v1006, 0.0
        %v1039 = vpack.c.bf16 %v1007, %v1007
        %v1040 = vpack.c.bf16 %v1008, %v1008
        %v1041 = vpack.c.bf16 %v1009, %v1009
        %v1042 = vpack.c.bf16 %v1010, %v1010
        %v1043 = vpack.c.bf16 %v1011, %v1011
        %v1044 = vpack.c.bf16 %v1012, %v1012
        %v1045 = vpack.c.bf16 %v1013, %v1013
        %v1046 = vpack.c.bf16 %v1014, %v1014
        %v1047 = vpack.c.bf16 %v1015, %v1015
        %v1048 = vpack.c.bf16 %v1016, %v1016
        %v1049 = vpack.c.bf16 %v1017, %v1017
        %v1050 = vpack.c.bf16 %v1018, %v1018
        %v1051 = vpack.c.bf16 %v1019, %v1019
        %v1052 = vpack.c.bf16 %v1020, %v1020
        %v1053 = vpack.c.bf16 %v1021, %v1021
        %v1054 = vpack.c.bf16 %v1022, %v1022
        %v1055 = vpack.c.bf16 %v1023, %v1023
        %v1056 = vpack.c.bf16 %v1024, %v1024
        %v1057 = vpack.c.bf16 %v1025, %v1025
        %v1058 = vpack.c.bf16 %v1026, %v1026
        %v1059 = vpack.c.bf16 %v1027, %v1027
        %v1060 = vpack.c.bf16 %v1028, %v1028
        %v1061 = vpack.c.bf16 %v1029, %v1029
        %v1062 = vpack.c.bf16 %v1030, %v1030
        %v1063 = vpack.c.bf16 %v1031, %v1031
        %v1064 = vpack.c.bf16 %v1032, %v1032
        %v1065 = vpack.c.bf16 %v1033, %v1033
        %v1066 = vpack.c.bf16 %v1034, %v1034
        %v1067 = vpack.c.bf16 %v1035, %v1035
        %v1068 = vpack.c.bf16 %v1036, %v1036
        %v1069 = vpack.c.bf16 %v1037, %v1037
        %v1070 = vpack.c.bf16 %v1038, %v1038
        %1071 = vst [vmem:[#allocation3] sm:$0xf] %v1039
        %1072 = vst [vmem:[#allocation3 + $0x24] sm:$0xf] %v1040
        %1073 = vst [vmem:[#allocation3 + $0x48] sm:$0xf] %v1041
        %1074 = vst [vmem:[#allocation3 + $0x6c] sm:$0xf] %v1042
        %1075 = vst [vmem:[#allocation3 + $0x90] sm:$0xf] %v1043
        %1076 = vst [vmem:[#allocation3 + $0xb4] sm:$0xf] %v1044
        %1077 = vst [vmem:[#allocation3 + $0xd8] sm:$0xf] %v1045
        %1078 = vst [vmem:[#allocation3 + $0xfc] sm:$0xf] %v1046
        %1079 = vst [vmem:[#allocation3 + $0x120] sm:$0xf] %v1047
        %1080 = vst [vmem:[#allocation3 + $0x144] sm:$0xf] %v1048
        %1081 = vst [vmem:[#allocation3 + $0x168] sm:$0xf] %v1049
        %1082 = vst [vmem:[#allocation3 + $0x18c] sm:$0xf] %v1050
        %1083 = vst [vmem:[#allocation3 + $0x1b0] sm:$0xf] %v1051
        %1084 = vst [vmem:[#allocation3 + $0x1d4] sm:$0xf] %v1052
        %1085 = vst [vmem:[#allocation3 + $0x1f8] sm:$0xf] %v1053
        %1086 = vst [vmem:[#allocation3 + $0x21c] sm:$0xf] %v1054
        %1087 = vst [vmem:[#allocation3 + $0x240] sm:$0xf] %v1055
        %1088 = vst [vmem:[#allocation3 + $0x264] sm:$0xf] %v1056
        %1089 = vst [vmem:[#allocation3 + $0x288] sm:$0xf] %v1057
        %1090 = vst [vmem:[#allocation3 + $0x2ac] sm:$0xf] %v1058
        %1091 = vst [vmem:[#allocation3 + $0x2d0] sm:$0xf] %v1059
        %1092 = vst [vmem:[#allocation3 + $0x2f4] sm:$0xf] %v1060
        %1093 = vst [vmem:[#allocation3 + $0x318] sm:$0xf] %v1061
        %1094 = vst [vmem:[#allocation3 + $0x33c] sm:$0xf] %v1062
        %1095 = vst [vmem:[#allocation3 + $0x360] sm:$0xf] %v1063
        %1096 = vst [vmem:[#allocation3 + $0x384] sm:$0xf] %v1064
        %1097 = vst [vmem:[#allocation3 + $0x3a8] sm:$0xf] %v1065
        %1098 = vst [vmem:[#allocation3 + $0x3cc] sm:$0xf] %v1066
        %1099 = vst [vmem:[#allocation3 + $0x3f0] sm:$0xf] %v1067
        %1100 = vst [vmem:[#allocation3 + $0x414] sm:$0xf] %v1068
        %1101 = vst [vmem:[#allocation3 + $0x438] sm:$0xf] %v1069
        %1102 = vst [vmem:[#allocation3 + $0x45c] sm:$0xf] %v1070
        %v1103 = vld [vmem:[#allocation2 + $0x8] sm:$0xff]
        %v1104 = vld [vmem:[#allocation2 + $0x10] sm:$0xff]
        %v1105 = vld [vmem:[#allocation2 + $0x18] sm:$0xff]
        %v1106 = vld [vmem:[#allocation2 + $0x20] sm:$0xff]
        %v1107 = vld [vmem:[#allocation2 + $0x28] sm:$0xff]
        %v1108 = vld [vmem:[#allocation2 + $0x30] sm:$0xff]
        %v1109 = vld [vmem:[#allocation2 + $0x38] sm:$0xff]
        %v1110 = vld [vmem:[#allocation2 + $0x40] sm:$0xff]
        %v1111 = vld [vmem:[#allocation2 + $0x48] sm:$0xff]
        %v1112 = vld [vmem:[#allocation2 + $0x50] sm:$0xff]
        %v1113 = vld [vmem:[#allocation2 + $0x58] sm:$0xff]
        %v1114 = vld [vmem:[#allocation2 + $0x60] sm:$0xff]
        %v1115 = vld [vmem:[#allocation2 + $0x68] sm:$0xff]
        %v1116 = vld [vmem:[#allocation2 + $0x70] sm:$0xff]
        %v1117 = vld [vmem:[#allocation2 + $0x78] sm:$0xff]
        %v1118 = vld [vmem:[#allocation2 + $0x80] sm:$0xff]
        %v1119 = vld [vmem:[#allocation2 + $0x88] sm:$0xff]
        %v1120 = vld [vmem:[#allocation2 + $0x90] sm:$0xff]
        %v1121 = vld [vmem:[#allocation2 + $0x98] sm:$0xff]
        %v1122 = vld [vmem:[#allocation2 + $0xa0] sm:$0xff]
        %v1123 = vld [vmem:[#allocation2 + $0xa8] sm:$0xff]
        %v1124 = vld [vmem:[#allocation2 + $0xb0] sm:$0xff]
        %v1125 = vld [vmem:[#allocation2 + $0xb8] sm:$0xff]
        %v1126 = vld [vmem:[#allocation2 + $0xc0] sm:$0xff]
        %v1127 = vld [vmem:[#allocation2 + $0xc8] sm:$0xff]
        %v1128 = vld [vmem:[#allocation2 + $0xd0] sm:$0xff]
        %v1129 = vld [vmem:[#allocation2 + $0xd8] sm:$0xff]
        %v1130 = vld [vmem:[#allocation2 + $0xe0] sm:$0xff]
        %v1131 = vld [vmem:[#allocation2 + $0xe8] sm:$0xff]
        %v1132 = vld [vmem:[#allocation2 + $0xf0] sm:$0xff]
        %v1133 = vld [vmem:[#allocation2 + $0xf8] sm:$0xff]
        %v1134 = vld [vmem:[#allocation2 + $0x100] sm:$0xff]
        %v1135 = vpack.c.bf16 %v1103, %v1103
        %v1136 = vpack.c.bf16 %v1104, %v1104
        %v1137 = vpack.c.bf16 %v1105, %v1105
        %v1138 = vpack.c.bf16 %v1106, %v1106
        %v1139 = vpack.c.bf16 %v1107, %v1107
        %v1140 = vpack.c.bf16 %v1108, %v1108
        %v1141 = vpack.c.bf16 %v1109, %v1109
        %v1142 = vpack.c.bf16 %v1110, %v1110
        %v1143 = vpack.c.bf16 %v1111, %v1111
        %v1144 = vpack.c.bf16 %v1112, %v1112
        %v1145 = vpack.c.bf16 %v1113, %v1113
        %v1146 = vpack.c.bf16 %v1114, %v1114
        %v1147 = vpack.c.bf16 %v1115, %v1115
        %v1148 = vpack.c.bf16 %v1116, %v1116
        %v1149 = vpack.c.bf16 %v1117, %v1117
        %v1150 = vpack.c.bf16 %v1118, %v1118
        %v1151 = vpack.c.bf16 %v1119, %v1119
        %v1152 = vpack.c.bf16 %v1120, %v1120
        %v1153 = vpack.c.bf16 %v1121, %v1121
        %v1154 = vpack.c.bf16 %v1122, %v1122
        %v1155 = vpack.c.bf16 %v1123, %v1123
        %v1156 = vpack.c.bf16 %v1124, %v1124
        %v1157 = vpack.c.bf16 %v1125, %v1125
        %v1158 = vpack.c.bf16 %v1126, %v1126
        %v1159 = vpack.c.bf16 %v1127, %v1127
        %v1160 = vpack.c.bf16 %v1128, %v1128
        %v1161 = vpack.c.bf16 %v1129, %v1129
        %v1162 = vpack.c.bf16 %v1130, %v1130
        %v1163 = vpack.c.bf16 %v1131, %v1131
        %v1164 = vpack.c.bf16 %v1132, %v1132
        %v1165 = vpack.c.bf16 %v1133, %v1133
        %v1166 = vpack.c.bf16 %v1134, %v1134
        %1167 = vst [vmem:[#allocation3 + $0x4] sm:$0xf] %v1135
        %1168 = vst [vmem:[#allocation3 + $0x28] sm:$0xf] %v1136
        %1169 = vst [vmem:[#allocation3 + $0x4c] sm:$0xf] %v1137
        %1170 = vst [vmem:[#allocation3 + $0x70] sm:$0xf] %v1138
        %1171 = vst [vmem:[#allocation3 + $0x94] sm:$0xf] %v1139
        %1172 = vst [vmem:[#allocation3 + $0xb8] sm:$0xf] %v1140
        %1173 = vst [vmem:[#allocation3 + $0xdc] sm:$0xf] %v1141
        %1174 = vst [vmem:[#allocation3 + $0x100] sm:$0xf] %v1142
        %1175 = vst [vmem:[#allocation3 + $0x124] sm:$0xf] %v1143
        %1176 = vst [vmem:[#allocation3 + $0x148] sm:$0xf] %v1144
        %1177 = vst [vmem:[#allocation3 + $0x16c] sm:$0xf] %v1145
        %1178 = vst [vmem:[#allocation3 + $0x190] sm:$0xf] %v1146
        %1179 = vst [vmem:[#allocation3 + $0x1b4] sm:$0xf] %v1147
        %1180 = vst [vmem:[#allocation3 + $0x1d8] sm:$0xf] %v1148
        %1181 = vst [vmem:[#allocation3 + $0x1fc] sm:$0xf] %v1149
        %1182 = vst [vmem:[#allocation3 + $0x220] sm:$0xf] %v1150
        %1183 = vst [vmem:[#allocation3 + $0x244] sm:$0xf] %v1151
        %1184 = vst [vmem:[#allocation3 + $0x268] sm:$0xf] %v1152
        %1185 = vst [vmem:[#allocation3 + $0x28c] sm:$0xf] %v1153
        %1186 = vst [vmem:[#allocation3 + $0x2b0] sm:$0xf] %v1154
        %1187 = vst [vmem:[#allocation3 + $0x2d4] sm:$0xf] %v1155
        %1188 = vst [vmem:[#allocation3 + $0x2f8] sm:$0xf] %v1156
        %1189 = vst [vmem:[#allocation3 + $0x31c] sm:$0xf] %v1157
        %1190 = vst [vmem:[#allocation3 + $0x340] sm:$0xf] %v1158
        %1191 = vst [vmem:[#allocation3 + $0x364] sm:$0xf] %v1159
        %1192 = vst [vmem:[#allocation3 + $0x388] sm:$0xf] %v1160
        %1193 = vst [vmem:[#allocation3 + $0x3ac] sm:$0xf] %v1161
        %1194 = vst [vmem:[#allocation3 + $0x3d0] sm:$0xf] %v1162
        %1195 = vst [vmem:[#allocation3 + $0x3f4] sm:$0xf] %v1163
        %1196 = vst [vmem:[#allocation3 + $0x418] sm:$0xf] %v1164
        %1197 = vst [vmem:[#allocation3 + $0x43c] sm:$0xf] %v1165
        %1198 = vst [vmem:[#allocation3 + $0x460] sm:$0xf] %v1166
        %v1199 = vld [vmem:[#allocation2 + $0x9] sm:$0xff]
        %v1200 = vld [vmem:[#allocation2 + $0x11] sm:$0xff]
        %v1201 = vld [vmem:[#allocation2 + $0x19] sm:$0xff]
        %v1202 = vld [vmem:[#allocation2 + $0x21] sm:$0xff]
        %v1203 = vld [vmem:[#allocation2 + $0x29] sm:$0xff]
        %v1204 = vld [vmem:[#allocation2 + $0x31] sm:$0xff]
        %v1205 = vld [vmem:[#allocation2 + $0x39] sm:$0xff]
        %v1206 = vld [vmem:[#allocation2 + $0x41] sm:$0xff]
        %v1207 = vld [vmem:[#allocation2 + $0x49] sm:$0xff]
        %v1208 = vld [vmem:[#allocation2 + $0x51] sm:$0xff]
        %v1209 = vld [vmem:[#allocation2 + $0x59] sm:$0xff]
        %v1210 = vld [vmem:[#allocation2 + $0x61] sm:$0xff]
        %v1211 = vld [vmem:[#allocation2 + $0x69] sm:$0xff]
        %v1212 = vld [vmem:[#allocation2 + $0x71] sm:$0xff]
        %v1213 = vld [vmem:[#allocation2 + $0x79] sm:$0xff]
        %v1214 = vld [vmem:[#allocation2 + $0x81] sm:$0xff]
        %v1215 = vld [vmem:[#allocation2 + $0x89] sm:$0xff]
        %v1216 = vld [vmem:[#allocation2 + $0x91] sm:$0xff]
        %v1217 = vld [vmem:[#allocation2 + $0x99] sm:$0xff]
        %v1218 = vld [vmem:[#allocation2 + $0xa1] sm:$0xff]
        %v1219 = vld [vmem:[#allocation2 + $0xa9] sm:$0xff]
        %v1220 = vld [vmem:[#allocation2 + $0xb1] sm:$0xff]
        %v1221 = vld [vmem:[#allocation2 + $0xb9] sm:$0xff]
        %v1222 = vld [vmem:[#allocation2 + $0xc1] sm:$0xff]
        %v1223 = vld [vmem:[#allocation2 + $0xc9] sm:$0xff]
        %v1224 = vld [vmem:[#allocation2 + $0xd1] sm:$0xff]
        %v1225 = vld [vmem:[#allocation2 + $0xd9] sm:$0xff]
        %v1226 = vld [vmem:[#allocation2 + $0xe1] sm:$0xff]
        %v1227 = vld [vmem:[#allocation2 + $0xe9] sm:$0xff]
        %v1228 = vld [vmem:[#allocation2 + $0xf1] sm:$0xff]
        %v1229 = vld [vmem:[#allocation2 + $0xf9] sm:$0xff]
        %v1230 = vld [vmem:[#allocation2 + $0x101] sm:$0xff]
        %v1231 = vsel %vm775, %v1199, 0.0
        %v1232 = vsel %vm776, %v1200, 0.0
        %v1233 = vsel %vm777, %v1201, 0.0
        %v1234 = vsel %vm778, %v1202, 0.0
        %v1235 = vsel %vm779, %v1203, 0.0
        %v1236 = vsel %vm780, %v1204, 0.0
        %v1237 = vsel %vm781, %v1205, 0.0
        %v1238 = vsel %vm782, %v1206, 0.0
        %v1239 = vsel %vm783, %v1207, 0.0
        %v1240 = vsel %vm784, %v1208, 0.0
        %v1241 = vsel %vm785, %v1209, 0.0
        %v1242 = vsel %vm786, %v1210, 0.0
        %v1243 = vsel %vm787, %v1211, 0.0
        %v1244 = vsel %vm788, %v1212, 0.0
        %v1245 = vsel %vm789, %v1213, 0.0
        %v1246 = vsel %vm790, %v1214, 0.0
        %v1247 = vsel %vm791, %v1215, 0.0
        %v1248 = vsel %vm792, %v1216, 0.0
        %v1249 = vsel %vm793, %v1217, 0.0
        %v1250 = vsel %vm794, %v1218, 0.0
        %v1251 = vsel %vm795, %v1219, 0.0
        %v1252 = vsel %vm796, %v1220, 0.0
        %v1253 = vsel %vm797, %v1221, 0.0
        %v1254 = vsel %vm798, %v1222, 0.0
        %v1255 = vsel %vm799, %v1223, 0.0
        %v1256 = vsel %vm800, %v1224, 0.0
        %v1257 = vsel %vm801, %v1225, 0.0
        %v1258 = vsel %vm802, %v1226, 0.0
        %v1259 = vsel %vm803, %v1227, 0.0
        %v1260 = vsel %vm804, %v1228, 0.0
        %v1261 = vsel %vm805, %v1229, 0.0
        %v1262 = vsel %vm806, %v1230, 0.0
        %v1263 = vpack.c.bf16 %v1231, %v1231
        %v1264 = vpack.c.bf16 %v1232, %v1232
        %v1265 = vpack.c.bf16 %v1233, %v1233
        %v1266 = vpack.c.bf16 %v1234, %v1234
        %v1267 = vpack.c.bf16 %v1235, %v1235
        %v1268 = vpack.c.bf16 %v1236, %v1236
        %v1269 = vpack.c.bf16 %v1237, %v1237
        %v1270 = vpack.c.bf16 %v1238, %v1238
        %v1271 = vpack.c.bf16 %v1239, %v1239
        %v1272 = vpack.c.bf16 %v1240, %v1240
        %v1273 = vpack.c.bf16 %v1241, %v1241
        %v1274 = vpack.c.bf16 %v1242, %v1242
        %v1275 = vpack.c.bf16 %v1243, %v1243
        %v1276 = vpack.c.bf16 %v1244, %v1244
        %v1277 = vpack.c.bf16 %v1245, %v1245
        %v1278 = vpack.c.bf16 %v1246, %v1246
        %v1279 = vpack.c.bf16 %v1247, %v1247
        %v1280 = vpack.c.bf16 %v1248, %v1248
        %v1281 = vpack.c.bf16 %v1249, %v1249
        %v1282 = vpack.c.bf16 %v1250, %v1250
        %v1283 = vpack.c.bf16 %v1251, %v1251
        %v1284 = vpack.c.bf16 %v1252, %v1252
        %v1285 = vpack.c.bf16 %v1253, %v1253
        %v1286 = vpack.c.bf16 %v1254, %v1254
        %v1287 = vpack.c.bf16 %v1255, %v1255
        %v1288 = vpack.c.bf16 %v1256, %v1256
        %v1289 = vpack.c.bf16 %v1257, %v1257
        %v1290 = vpack.c.bf16 %v1258, %v1258
        %v1291 = vpack.c.bf16 %v1259, %v1259
        %v1292 = vpack.c.bf16 %v1260, %v1260
        %v1293 = vpack.c.bf16 %v1261, %v1261
        %v1294 = vpack.c.bf16 %v1262, %v1262
        %1295 = vst [vmem:[#allocation3 + $0x8] sm:$0xf] %v1263
        %1296 = vst [vmem:[#allocation3 + $0x2c] sm:$0xf] %v1264
        %1297 = vst [vmem:[#allocation3 + $0x50] sm:$0xf] %v1265
        %1298 = vst [vmem:[#allocation3 + $0x74] sm:$0xf] %v1266
        %1299 = vst [vmem:[#allocation3 + $0x98] sm:$0xf] %v1267
        %1300 = vst [vmem:[#allocation3 + $0xbc] sm:$0xf] %v1268
        %1301 = vst [vmem:[#allocation3 + $0xe0] sm:$0xf] %v1269
        %1302 = vst [vmem:[#allocation3 + $0x104] sm:$0xf] %v1270
        %1303 = vst [vmem:[#allocation3 + $0x128] sm:$0xf] %v1271
        %1304 = vst [vmem:[#allocation3 + $0x14c] sm:$0xf] %v1272
        %1305 = vst [vmem:[#allocation3 + $0x170] sm:$0xf] %v1273
        %1306 = vst [vmem:[#allocation3 + $0x194] sm:$0xf] %v1274
        %1307 = vst [vmem:[#allocation3 + $0x1b8] sm:$0xf] %v1275
        %1308 = vst [vmem:[#allocation3 + $0x1dc] sm:$0xf] %v1276
        %1309 = vst [vmem:[#allocation3 + $0x200] sm:$0xf] %v1277
        %1310 = vst [vmem:[#allocation3 + $0x224] sm:$0xf] %v1278
        %1311 = vst [vmem:[#allocation3 + $0x248] sm:$0xf] %v1279
        %1312 = vst [vmem:[#allocation3 + $0x26c] sm:$0xf] %v1280
        %1313 = vst [vmem:[#allocation3 + $0x290] sm:$0xf] %v1281
        %1314 = vst [vmem:[#allocation3 + $0x2b4] sm:$0xf] %v1282
        %1315 = vst [vmem:[#allocation3 + $0x2d8] sm:$0xf] %v1283
        %1316 = vst [vmem:[#allocation3 + $0x2fc] sm:$0xf] %v1284
        %1317 = vst [vmem:[#allocation3 + $0x320] sm:$0xf] %v1285
        %1318 = vst [vmem:[#allocation3 + $0x344] sm:$0xf] %v1286
        %1319 = vst [vmem:[#allocation3 + $0x368] sm:$0xf] %v1287
        %1320 = vst [vmem:[#allocation3 + $0x38c] sm:$0xf] %v1288
        %1321 = vst [vmem:[#allocation3 + $0x3b0] sm:$0xf] %v1289
        %1322 = vst [vmem:[#allocation3 + $0x3d4] sm:$0xf] %v1290
        %1323 = vst [vmem:[#allocation3 + $0x3f8] sm:$0xf] %v1291
        %1324 = vst [vmem:[#allocation3 + $0x41c] sm:$0xf] %v1292
        %1325 = vst [vmem:[#allocation3 + $0x440] sm:$0xf] %v1293
        %1326 = vst [vmem:[#allocation3 + $0x464] sm:$0xf] %v1294
        %v1327 = vld [vmem:[#allocation2 + $0x17] sm:$0xff]
        %v1328 = vld [vmem:[#allocation2 + $0x1f] sm:$0xff]
        %v1329 = vld [vmem:[#allocation2 + $0x27] sm:$0xff]
        %v1330 = vld [vmem:[#allocation2 + $0x2f] sm:$0xff]
        %v1331 = vld [vmem:[#allocation2 + $0x37] sm:$0xff]
        %v1332 = vld [vmem:[#allocation2 + $0x3f] sm:$0xff]
        %v1333 = vld [vmem:[#allocation2 + $0x47] sm:$0xff]
        %v1334 = vld [vmem:[#allocation2 + $0x4f] sm:$0xff]
        %v1335 = vld [vmem:[#allocation2 + $0x57] sm:$0xff]
        %v1336 = vld [vmem:[#allocation2 + $0x5f] sm:$0xff]
        %v1337 = vld [vmem:[#allocation2 + $0x67] sm:$0xff]
        %v1338 = vld [vmem:[#allocation2 + $0x6f] sm:$0xff]
        %v1339 = vld [vmem:[#allocation2 + $0x77] sm:$0xff]
        %v1340 = vld [vmem:[#allocation2 + $0x7f] sm:$0xff]
        %v1341 = vld [vmem:[#allocation2 + $0x87] sm:$0xff]
        %v1342 = vld [vmem:[#allocation2 + $0x8f] sm:$0xff]
        %v1343 = vld [vmem:[#allocation2 + $0x97] sm:$0xff]
        %v1344 = vld [vmem:[#allocation2 + $0x9f] sm:$0xff]
        %v1345 = vld [vmem:[#allocation2 + $0xa7] sm:$0xff]
        %v1346 = vld [vmem:[#allocation2 + $0xaf] sm:$0xff]
        %v1347 = vld [vmem:[#allocation2 + $0xb7] sm:$0xff]
        %v1348 = vld [vmem:[#allocation2 + $0xbf] sm:$0xff]
        %v1349 = vld [vmem:[#allocation2 + $0xc7] sm:$0xff]
        %v1350 = vld [vmem:[#allocation2 + $0xcf] sm:$0xff]
        %v1351 = vld [vmem:[#allocation2 + $0xd7] sm:$0xff]
        %v1352 = vld [vmem:[#allocation2 + $0xdf] sm:$0xff]
        %v1353 = vld [vmem:[#allocation2 + $0xe7] sm:$0xff]
        %v1354 = vld [vmem:[#allocation2 + $0xef] sm:$0xff]
        %v1355 = vld [vmem:[#allocation2 + $0xf7] sm:$0xff]
        %v1356 = vld [vmem:[#allocation2 + $0xff] sm:$0xff]
        %v1357 = vld [vmem:[#allocation2 + $0x107] sm:$0xff]
        %v1358 = vld [vmem:[#allocation2 + $0x10f] sm:$0xff]
        %v1359 = vsel %vm743, %v1327, 0.0
        %v1360 = vsel %vm744, %v1328, 0.0
        %v1361 = vsel %vm745, %v1329, 0.0
        %v1362 = vsel %vm746, %v1330, 0.0
        %v1363 = vsel %vm747, %v1331, 0.0
        %v1364 = vsel %vm748, %v1332, 0.0
        %v1365 = vsel %vm749, %v1333, 0.0
        %v1366 = vsel %vm750, %v1334, 0.0
        %v1367 = vsel %vm751, %v1335, 0.0
        %v1368 = vsel %vm752, %v1336, 0.0
        %v1369 = vsel %vm753, %v1337, 0.0
        %v1370 = vsel %vm754, %v1338, 0.0
        %v1371 = vsel %vm755, %v1339, 0.0
        %v1372 = vsel %vm756, %v1340, 0.0
        %v1373 = vsel %vm757, %v1341, 0.0
        %v1374 = vsel %vm758, %v1342, 0.0
        %v1375 = vsel %vm759, %v1343, 0.0
        %v1376 = vsel %vm760, %v1344, 0.0
        %v1377 = vsel %vm761, %v1345, 0.0
        %v1378 = vsel %vm762, %v1346, 0.0
        %v1379 = vsel %vm763, %v1347, 0.0
        %v1380 = vsel %vm764, %v1348, 0.0
        %v1381 = vsel %vm765, %v1349, 0.0
        %v1382 = vsel %vm766, %v1350, 0.0
        %v1383 = vsel %vm767, %v1351, 0.0
        %v1384 = vsel %vm768, %v1352, 0.0
        %v1385 = vsel %vm769, %v1353, 0.0
        %v1386 = vsel %vm770, %v1354, 0.0
        %v1387 = vsel %vm771, %v1355, 0.0
        %v1388 = vsel %vm772, %v1356, 0.0
        %v1389 = vsel %vm773, %v1357, 0.0
        %v1390 = vsel %vm774, %v1358, 0.0
        %v1391 = vpack.c.bf16 %v1359, %v1359
        %v1392 = vpack.c.bf16 %v1360, %v1360
        %v1393 = vpack.c.bf16 %v1361, %v1361
        %v1394 = vpack.c.bf16 %v1362, %v1362
        %v1395 = vpack.c.bf16 %v1363, %v1363
        %v1396 = vpack.c.bf16 %v1364, %v1364
        %v1397 = vpack.c.bf16 %v1365, %v1365
        %v1398 = vpack.c.bf16 %v1366, %v1366
        %v1399 = vpack.c.bf16 %v1367, %v1367
        %v1400 = vpack.c.bf16 %v1368, %v1368
        %v1401 = vpack.c.bf16 %v1369, %v1369
        %v1402 = vpack.c.bf16 %v1370, %v1370
        %v1403 = vpack.c.bf16 %v1371, %v1371
        %v1404 = vpack.c.bf16 %v1372, %v1372
        %v1405 = vpack.c.bf16 %v1373, %v1373
        %v1406 = vpack.c.bf16 %v1374, %v1374
        %v1407 = vpack.c.bf16 %v1375, %v1375
        %v1408 = vpack.c.bf16 %v1376, %v1376
        %v1409 = vpack.c.bf16 %v1377, %v1377
        %v1410 = vpack.c.bf16 %v1378, %v1378
        %v1411 = vpack.c.bf16 %v1379, %v1379
        %v1412 = vpack.c.bf16 %v1380, %v1380
        %v1413 = vpack.c.bf16 %v1381, %v1381
        %v1414 = vpack.c.bf16 %v1382, %v1382
        %v1415 = vpack.c.bf16 %v1383, %v1383
        %v1416 = vpack.c.bf16 %v1384, %v1384
        %v1417 = vpack.c.bf16 %v1385, %v1385
        %v1418 = vpack.c.bf16 %v1386, %v1386
        %v1419 = vpack.c.bf16 %v1387, %v1387
        %v1420 = vpack.c.bf16 %v1388, %v1388
        %v1421 = vpack.c.bf16 %v1389, %v1389
        %v1422 = vpack.c.bf16 %v1390, %v1390
        %1423 = vst [vmem:[#allocation3 + $0xc] sm:$0xf] %v1391
        %1424 = vst [vmem:[#allocation3 + $0x30] sm:$0xf] %v1392
        %1425 = vst [vmem:[#allocation3 + $0x54] sm:$0xf] %v1393
        %1426 = vst [vmem:[#allocation3 + $0x78] sm:$0xf] %v1394
        %1427 = vst [vmem:[#allocation3 + $0x9c] sm:$0xf] %v1395
        %1428 = vst [vmem:[#allocation3 + $0xc0] sm:$0xf] %v1396
        %1429 = vst [vmem:[#allocation3 + $0xe4] sm:$0xf] %v1397
        %1430 = vst [vmem:[#allocation3 + $0x108] sm:$0xf] %v1398
        %1431 = vst [vmem:[#allocation3 + $0x12c] sm:$0xf] %v1399
        %1432 = vst [vmem:[#allocation3 + $0x150] sm:$0xf] %v1400
        %1433 = vst [vmem:[#allocation3 + $0x174] sm:$0xf] %v1401
        %1434 = vst [vmem:[#allocation3 + $0x198] sm:$0xf] %v1402
        %1435 = vst [vmem:[#allocation3 + $0x1bc] sm:$0xf] %v1403
        %1436 = vst [vmem:[#allocation3 + $0x1e0] sm:$0xf] %v1404
        %1437 = vst [vmem:[#allocation3 + $0x204] sm:$0xf] %v1405
        %1438 = vst [vmem:[#allocation3 + $0x228] sm:$0xf] %v1406
        %1439 = vst [vmem:[#allocation3 + $0x24c] sm:$0xf] %v1407
        %1440 = vst [vmem:[#allocation3 + $0x270] sm:$0xf] %v1408
        %1441 = vst [vmem:[#allocation3 + $0x294] sm:$0xf] %v1409
        %1442 = vst [vmem:[#allocation3 + $0x2b8] sm:$0xf] %v1410
        %1443 = vst [vmem:[#allocation3 + $0x2dc] sm:$0xf] %v1411
        %1444 = vst [vmem:[#allocation3 + $0x300] sm:$0xf] %v1412
        %1445 = vst [vmem:[#allocation3 + $0x324] sm:$0xf] %v1413
        %1446 = vst [vmem:[#allocation3 + $0x348] sm:$0xf] %v1414
        %1447 = vst [vmem:[#allocation3 + $0x36c] sm:$0xf] %v1415
        %1448 = vst [vmem:[#allocation3 + $0x390] sm:$0xf] %v1416
        %1449 = vst [vmem:[#allocation3 + $0x3b4] sm:$0xf] %v1417
        %1450 = vst [vmem:[#allocation3 + $0x3d8] sm:$0xf] %v1418
        %1451 = vst [vmem:[#allocation3 + $0x3fc] sm:$0xf] %v1419
        %1452 = vst [vmem:[#allocation3 + $0x420] sm:$0xf] %v1420
        %1453 = vst [vmem:[#allocation3 + $0x444] sm:$0xf] %v1421
        %1454 = vst [vmem:[#allocation3 + $0x468] sm:$0xf] %v1422
        %v1455 = vld [vmem:[#allocation2 + $0x18] sm:$0xff]
        %v1456 = vld [vmem:[#allocation2 + $0x20] sm:$0xff]
        %v1457 = vld [vmem:[#allocation2 + $0x28] sm:$0xff]
        %v1458 = vld [vmem:[#allocation2 + $0x30] sm:$0xff]
        %v1459 = vld [vmem:[#allocation2 + $0x38] sm:$0xff]
        %v1460 = vld [vmem:[#allocation2 + $0x40] sm:$0xff]
        %v1461 = vld [vmem:[#allocation2 + $0x48] sm:$0xff]
        %v1462 = vld [vmem:[#allocation2 + $0x50] sm:$0xff]
        %v1463 = vld [vmem:[#allocation2 + $0x58] sm:$0xff]
        %v1464 = vld [vmem:[#allocation2 + $0x60] sm:$0xff]
        %v1465 = vld [vmem:[#allocation2 + $0x68] sm:$0xff]
        %v1466 = vld [vmem:[#allocation2 + $0x70] sm:$0xff]
        %v1467 = vld [vmem:[#allocation2 + $0x78] sm:$0xff]
        %v1468 = vld [vmem:[#allocation2 + $0x80] sm:$0xff]
        %v1469 = vld [vmem:[#allocation2 + $0x88] sm:$0xff]
        %v1470 = vld [vmem:[#allocation2 + $0x90] sm:$0xff]
        %v1471 = vld [vmem:[#allocation2 + $0x98] sm:$0xff]
        %v1472 = vld [vmem:[#allocation2 + $0xa0] sm:$0xff]
        %v1473 = vld [vmem:[#allocation2 + $0xa8] sm:$0xff]
        %v1474 = vld [vmem:[#allocation2 + $0xb0] sm:$0xff]
        %v1475 = vld [vmem:[#allocation2 + $0xb8] sm:$0xff]
        %v1476 = vld [vmem:[#allocation2 + $0xc0] sm:$0xff]
        %v1477 = vld [vmem:[#allocation2 + $0xc8] sm:$0xff]
        %v1478 = vld [vmem:[#allocation2 + $0xd0] sm:$0xff]
        %v1479 = vld [vmem:[#allocation2 + $0xd8] sm:$0xff]
        %v1480 = vld [vmem:[#allocation2 + $0xe0] sm:$0xff]
        %v1481 = vld [vmem:[#allocation2 + $0xe8] sm:$0xff]
        %v1482 = vld [vmem:[#allocation2 + $0xf0] sm:$0xff]
        %v1483 = vld [vmem:[#allocation2 + $0xf8] sm:$0xff]
        %v1484 = vld [vmem:[#allocation2 + $0x100] sm:$0xff]
        %v1485 = vld [vmem:[#allocation2 + $0x108] sm:$0xff]
        %v1486 = vld [vmem:[#allocation2 + $0x110] sm:$0xff]
        %v1487 = vpack.c.bf16 %v1455, %v1455
        %v1488 = vpack.c.bf16 %v1456, %v1456
        %v1489 = vpack.c.bf16 %v1457, %v1457
        %v1490 = vpack.c.bf16 %v1458, %v1458
        %v1491 = vpack.c.bf16 %v1459, %v1459
        %v1492 = vpack.c.bf16 %v1460, %v1460
        %v1493 = vpack.c.bf16 %v1461, %v1461
        %v1494 = vpack.c.bf16 %v1462, %v1462
        %v1495 = vpack.c.bf16 %v1463, %v1463
        %v1496 = vpack.c.bf16 %v1464, %v1464
        %v1497 = vpack.c.bf16 %v1465, %v1465
        %v1498 = vpack.c.bf16 %v1466, %v1466
        %v1499 = vpack.c.bf16 %v1467, %v1467
        %v1500 = vpack.c.bf16 %v1468, %v1468
        %v1501 = vpack.c.bf16 %v1469, %v1469
        %v1502 = vpack.c.bf16 %v1470, %v1470
        %v1503 = vpack.c.bf16 %v1471, %v1471
        %v1504 = vpack.c.bf16 %v1472, %v1472
        %v1505 = vpack.c.bf16 %v1473, %v1473
        %v1506 = vpack.c.bf16 %v1474, %v1474
        %v1507 = vpack.c.bf16 %v1475, %v1475
        %v1508 = vpack.c.bf16 %v1476, %v1476
        %v1509 = vpack.c.bf16 %v1477, %v1477
        %v1510 = vpack.c.bf16 %v1478, %v1478
        %v1511 = vpack.c.bf16 %v1479, %v1479
        %v1512 = vpack.c.bf16 %v1480, %v1480
        %v1513 = vpack.c.bf16 %v1481, %v1481
        %v1514 = vpack.c.bf16 %v1482, %v1482
        %v1515 = vpack.c.bf16 %v1483, %v1483
        %v1516 = vpack.c.bf16 %v1484, %v1484
        %v1517 = vpack.c.bf16 %v1485, %v1485
        %v1518 = vpack.c.bf16 %v1486, %v1486
        %1519 = vst [vmem:[#allocation3 + $0x10] sm:$0xf] %v1487
        %1520 = vst [vmem:[#allocation3 + $0x34] sm:$0xf] %v1488
        %1521 = vst [vmem:[#allocation3 + $0x58] sm:$0xf] %v1489
        %1522 = vst [vmem:[#allocation3 + $0x7c] sm:$0xf] %v1490
        %1523 = vst [vmem:[#allocation3 + $0xa0] sm:$0xf] %v1491
        %1524 = vst [vmem:[#allocation3 + $0xc4] sm:$0xf] %v1492
        %1525 = vst [vmem:[#allocation3 + $0xe8] sm:$0xf] %v1493
        %1526 = vst [vmem:[#allocation3 + $0x10c] sm:$0xf] %v1494
        %1527 = vst [vmem:[#allocation3 + $0x130] sm:$0xf] %v1495
        %1528 = vst [vmem:[#allocation3 + $0x154] sm:$0xf] %v1496
        %1529 = vst [vmem:[#allocation3 + $0x178] sm:$0xf] %v1497
        %1530 = vst [vmem:[#allocation3 + $0x19c] sm:$0xf] %v1498
        %1531 = vst [vmem:[#allocation3 + $0x1c0] sm:$0xf] %v1499
        %1532 = vst [vmem:[#allocation3 + $0x1e4] sm:$0xf] %v1500
        %1533 = vst [vmem:[#allocation3 + $0x208] sm:$0xf] %v1501
        %1534 = vst [vmem:[#allocation3 + $0x22c] sm:$0xf] %v1502
        %1535 = vst [vmem:[#allocation3 + $0x250] sm:$0xf] %v1503
        %1536 = vst [vmem:[#allocation3 + $0x274] sm:$0xf] %v1504
        %1537 = vst [vmem:[#allocation3 + $0x298] sm:$0xf] %v1505
        %1538 = vst [vmem:[#allocation3 + $0x2bc] sm:$0xf] %v1506
        %1539 = vst [vmem:[#allocation3 + $0x2e0] sm:$0xf] %v1507
        %1540 = vst [vmem:[#allocation3 + $0x304] sm:$0xf] %v1508
        %1541 = vst [vmem:[#allocation3 + $0x328] sm:$0xf] %v1509
        %1542 = vst [vmem:[#allocation3 + $0x34c] sm:$0xf] %v1510
        %1543 = vst [vmem:[#allocation3 + $0x370] sm:$0xf] %v1511
        %1544 = vst [vmem:[#allocation3 + $0x394] sm:$0xf] %v1512
        %1545 = vst [vmem:[#allocation3 + $0x3b8] sm:$0xf] %v1513
        %1546 = vst [vmem:[#allocation3 + $0x3dc] sm:$0xf] %v1514
        %1547 = vst [vmem:[#allocation3 + $0x400] sm:$0xf] %v1515
        %1548 = vst [vmem:[#allocation3 + $0x424] sm:$0xf] %v1516
        %1549 = vst [vmem:[#allocation3 + $0x448] sm:$0xf] %v1517
        %1550 = vst [vmem:[#allocation3 + $0x46c] sm:$0xf] %v1518
        %v1551 = vld [vmem:[#allocation2 + $0x19] sm:$0xff]
        %v1552 = vld [vmem:[#allocation2 + $0x21] sm:$0xff]
        %v1553 = vld [vmem:[#allocation2 + $0x29] sm:$0xff]
        %v1554 = vld [vmem:[#allocation2 + $0x31] sm:$0xff]
        %v1555 = vld [vmem:[#allocation2 + $0x39] sm:$0xff]
        %v1556 = vld [vmem:[#allocation2 + $0x41] sm:$0xff]
        %v1557 = vld [vmem:[#allocation2 + $0x49] sm:$0xff]
        %v1558 = vld [vmem:[#allocation2 + $0x51] sm:$0xff]
        %v1559 = vld [vmem:[#allocation2 + $0x59] sm:$0xff]
        %v1560 = vld [vmem:[#allocation2 + $0x61] sm:$0xff]
        %v1561 = vld [vmem:[#allocation2 + $0x69] sm:$0xff]
        %v1562 = vld [vmem:[#allocation2 + $0x71] sm:$0xff]
        %v1563 = vld [vmem:[#allocation2 + $0x79] sm:$0xff]
        %v1564 = vld [vmem:[#allocation2 + $0x81] sm:$0xff]
        %v1565 = vld [vmem:[#allocation2 + $0x89] sm:$0xff]
        %v1566 = vld [vmem:[#allocation2 + $0x91] sm:$0xff]
        %v1567 = vld [vmem:[#allocation2 + $0x99] sm:$0xff]
        %v1568 = vld [vmem:[#allocation2 + $0xa1] sm:$0xff]
        %v1569 = vld [vmem:[#allocation2 + $0xa9] sm:$0xff]
        %v1570 = vld [vmem:[#allocation2 + $0xb1] sm:$0xff]
        %v1571 = vld [vmem:[#allocation2 + $0xb9] sm:$0xff]
        %v1572 = vld [vmem:[#allocation2 + $0xc1] sm:$0xff]
        %v1573 = vld [vmem:[#allocation2 + $0xc9] sm:$0xff]
        %v1574 = vld [vmem:[#allocation2 + $0xd1] sm:$0xff]
        %v1575 = vld [vmem:[#allocation2 + $0xd9] sm:$0xff]
        %v1576 = vld [vmem:[#allocation2 + $0xe1] sm:$0xff]
        %v1577 = vld [vmem:[#allocation2 + $0xe9] sm:$0xff]
        %v1578 = vld [vmem:[#allocation2 + $0xf1] sm:$0xff]
        %v1579 = vld [vmem:[#allocation2 + $0xf9] sm:$0xff]
        %v1580 = vld [vmem:[#allocation2 + $0x101] sm:$0xff]
        %v1581 = vld [vmem:[#allocation2 + $0x109] sm:$0xff]
        %v1582 = vld [vmem:[#allocation2 + $0x111] sm:$0xff]
        %v1583 = vsel %vm775, %v1551, 0.0
        %v1584 = vsel %vm776, %v1552, 0.0
        %v1585 = vsel %vm777, %v1553, 0.0
        %v1586 = vsel %vm778, %v1554, 0.0
        %v1587 = vsel %vm779, %v1555, 0.0
        %v1588 = vsel %vm780, %v1556, 0.0
        %v1589 = vsel %vm781, %v1557, 0.0
        %v1590 = vsel %vm782, %v1558, 0.0
        %v1591 = vsel %vm783, %v1559, 0.0
        %v1592 = vsel %vm784, %v1560, 0.0
        %v1593 = vsel %vm785, %v1561, 0.0
        %v1594 = vsel %vm786, %v1562, 0.0
        %v1595 = vsel %vm787, %v1563, 0.0
        %v1596 = vsel %vm788, %v1564, 0.0
        %v1597 = vsel %vm789, %v1565, 0.0
        %v1598 = vsel %vm790, %v1566, 0.0
        %v1599 = vsel %vm791, %v1567, 0.0
        %v1600 = vsel %vm792, %v1568, 0.0
        %v1601 = vsel %vm793, %v1569, 0.0
        %v1602 = vsel %vm794, %v1570, 0.0
        %v1603 = vsel %vm795, %v1571, 0.0
        %v1604 = vsel %vm796, %v1572, 0.0
        %v1605 = vsel %vm797, %v1573, 0.0
        %v1606 = vsel %vm798, %v1574, 0.0
        %v1607 = vsel %vm799, %v1575, 0.0
        %v1608 = vsel %vm800, %v1576, 0.0
        %v1609 = vsel %vm801, %v1577, 0.0
        %v1610 = vsel %vm802, %v1578, 0.0
        %v1611 = vsel %vm803, %v1579, 0.0
        %v1612 = vsel %vm804, %v1580, 0.0
        %v1613 = vsel %vm805, %v1581, 0.0
        %v1614 = vsel %vm806, %v1582, 0.0
        %v1615 = vpack.c.bf16 %v1583, %v1583
        %v1616 = vpack.c.bf16 %v1584, %v1584
        %v1617 = vpack.c.bf16 %v1585, %v1585
        %v1618 = vpack.c.bf16 %v1586, %v1586
        %v1619 = vpack.c.bf16 %v1587, %v1587
        %v1620 = vpack.c.bf16 %v1588, %v1588
        %v1621 = vpack.c.bf16 %v1589, %v1589
        %v1622 = vpack.c.bf16 %v1590, %v1590
        %v1623 = vpack.c.bf16 %v1591, %v1591
        %v1624 = vpack.c.bf16 %v1592, %v1592
        %v1625 = vpack.c.bf16 %v1593, %v1593
        %v1626 = vpack.c.bf16 %v1594, %v1594
        %v1627 = vpack.c.bf16 %v1595, %v1595
        %v1628 = vpack.c.bf16 %v1596, %v1596
        %v1629 = vpack.c.bf16 %v1597, %v1597
        %v1630 = vpack.c.bf16 %v1598, %v1598
        %v1631 = vpack.c.bf16 %v1599, %v1599
        %v1632 = vpack.c.bf16 %v1600, %v1600
        %v1633 = vpack.c.bf16 %v1601, %v1601
        %v1634 = vpack.c.bf16 %v1602, %v1602
        %v1635 = vpack.c.bf16 %v1603, %v1603
        %v1636 = vpack.c.bf16 %v1604, %v1604
        %v1637 = vpack.c.bf16 %v1605, %v1605
        %v1638 = vpack.c.bf16 %v1606, %v1606
        %v1639 = vpack.c.bf16 %v1607, %v1607
        %v1640 = vpack.c.bf16 %v1608, %v1608
        %v1641 = vpack.c.bf16 %v1609, %v1609
        %v1642 = vpack.c.bf16 %v1610, %v1610
        %v1643 = vpack.c.bf16 %v1611, %v1611
        %v1644 = vpack.c.bf16 %v1612, %v1612
        %v1645 = vpack.c.bf16 %v1613, %v1613
        %v1646 = vpack.c.bf16 %v1614, %v1614
        %1647 = vst [vmem:[#allocation3 + $0x14] sm:$0xf] %v1615
        %1648 = vst [vmem:[#allocation3 + $0x38] sm:$0xf] %v1616
        %1649 = vst [vmem:[#allocation3 + $0x5c] sm:$0xf] %v1617
        %1650 = vst [vmem:[#allocation3 + $0x80] sm:$0xf] %v1618
        %1651 = vst [vmem:[#allocation3 + $0xa4] sm:$0xf] %v1619
        %1652 = vst [vmem:[#allocation3 + $0xc8] sm:$0xf] %v1620
        %1653 = vst [vmem:[#allocation3 + $0xec] sm:$0xf] %v1621
        %1654 = vst [vmem:[#allocation3 + $0x110] sm:$0xf] %v1622
        %1655 = vst [vmem:[#allocation3 + $0x134] sm:$0xf] %v1623
        %1656 = vst [vmem:[#allocation3 + $0x158] sm:$0xf] %v1624
        %1657 = vst [vmem:[#allocation3 + $0x17c] sm:$0xf] %v1625
        %1658 = vst [vmem:[#allocation3 + $0x1a0] sm:$0xf] %v1626
        %1659 = vst [vmem:[#allocation3 + $0x1c4] sm:$0xf] %v1627
        %1660 = vst [vmem:[#allocation3 + $0x1e8] sm:$0xf] %v1628
        %1661 = vst [vmem:[#allocation3 + $0x20c] sm:$0xf] %v1629
        %1662 = vst [vmem:[#allocation3 + $0x230] sm:$0xf] %v1630
        %1663 = vst [vmem:[#allocation3 + $0x254] sm:$0xf] %v1631
        %1664 = vst [vmem:[#allocation3 + $0x278] sm:$0xf] %v1632
        %1665 = vst [vmem:[#allocation3 + $0x29c] sm:$0xf] %v1633
        %1666 = vst [vmem:[#allocation3 + $0x2c0] sm:$0xf] %v1634
        %1667 = vst [vmem:[#allocation3 + $0x2e4] sm:$0xf] %v1635
        %1668 = vst [vmem:[#allocation3 + $0x308] sm:$0xf] %v1636
        %1669 = vst [vmem:[#allocation3 + $0x32c] sm:$0xf] %v1637
        %1670 = vst [vmem:[#allocation3 + $0x350] sm:$0xf] %v1638
        %1671 = vst [vmem:[#allocation3 + $0x374] sm:$0xf] %v1639
        %1672 = vst [vmem:[#allocation3 + $0x398] sm:$0xf] %v1640
        %1673 = vst [vmem:[#allocation3 + $0x3bc] sm:$0xf] %v1641
        %1674 = vst [vmem:[#allocation3 + $0x3e0] sm:$0xf] %v1642
        %1675 = vst [vmem:[#allocation3 + $0x404] sm:$0xf] %v1643
        %1676 = vst [vmem:[#allocation3 + $0x428] sm:$0xf] %v1644
        %1677 = vst [vmem:[#allocation3 + $0x44c] sm:$0xf] %v1645
        %1678 = vst [vmem:[#allocation3 + $0x470] sm:$0xf] %v1646
        %v1679 = vld [vmem:[#allocation2 + $0x27] sm:$0xff]
        %v1680 = vld [vmem:[#allocation2 + $0x2f] sm:$0xff]
        %v1681 = vld [vmem:[#allocation2 + $0x37] sm:$0xff]
        %v1682 = vld [vmem:[#allocation2 + $0x3f] sm:$0xff]
        %v1683 = vld [vmem:[#allocation2 + $0x47] sm:$0xff]
        %v1684 = vld [vmem:[#allocation2 + $0x4f] sm:$0xff]
        %v1685 = vld [vmem:[#allocation2 + $0x57] sm:$0xff]
        %v1686 = vld [vmem:[#allocation2 + $0x5f] sm:$0xff]
        %v1687 = vld [vmem:[#allocation2 + $0x67] sm:$0xff]
        %v1688 = vld [vmem:[#allocation2 + $0x6f] sm:$0xff]
        %v1689 = vld [vmem:[#allocation2 + $0x77] sm:$0xff]
        %v1690 = vld [vmem:[#allocation2 + $0x7f] sm:$0xff]
        %v1691 = vld [vmem:[#allocation2 + $0x87] sm:$0xff]
        %v1692 = vld [vmem:[#allocation2 + $0x8f] sm:$0xff]
        %v1693 = vld [vmem:[#allocation2 + $0x97] sm:$0xff]
        %v1694 = vld [vmem:[#allocation2 + $0x9f] sm:$0xff]
        %v1695 = vld [vmem:[#allocation2 + $0xa7] sm:$0xff]
        %v1696 = vld [vmem:[#allocation2 + $0xaf] sm:$0xff]
        %v1697 = vld [vmem:[#allocation2 + $0xb7] sm:$0xff]
        %v1698 = vld [vmem:[#allocation2 + $0xbf] sm:$0xff]
        %v1699 = vld [vmem:[#allocation2 + $0xc7] sm:$0xff]
        %v1700 = vld [vmem:[#allocation2 + $0xcf] sm:$0xff]
        %v1701 = vld [vmem:[#allocation2 + $0xd7] sm:$0xff]
        %v1702 = vld [vmem:[#allocation2 + $0xdf] sm:$0xff]
        %v1703 = vld [vmem:[#allocation2 + $0xe7] sm:$0xff]
        %v1704 = vld [vmem:[#allocation2 + $0xef] sm:$0xff]
        %v1705 = vld [vmem:[#allocation2 + $0xf7] sm:$0xff]
        %v1706 = vld [vmem:[#allocation2 + $0xff] sm:$0xff]
        %v1707 = vld [vmem:[#allocation2 + $0x107] sm:$0xff]
        %v1708 = vld [vmem:[#allocation2 + $0x10f] sm:$0xff]
        %v1709 = vld [vmem:[#allocation2 + $0x117] sm:$0xff]
        %v1710 = vld [vmem:[#allocation2 + $0x11f] sm:$0xff]
        %v1711 = vsel %vm743, %v1679, 0.0
        %v1712 = vsel %vm744, %v1680, 0.0
        %v1713 = vsel %vm745, %v1681, 0.0
        %v1714 = vsel %vm746, %v1682, 0.0
        %v1715 = vsel %vm747, %v1683, 0.0
        %v1716 = vsel %vm748, %v1684, 0.0
        %v1717 = vsel %vm749, %v1685, 0.0
        %v1718 = vsel %vm750, %v1686, 0.0
        %v1719 = vsel %vm751, %v1687, 0.0
        %v1720 = vsel %vm752, %v1688, 0.0
        %v1721 = vsel %vm753, %v1689, 0.0
        %v1722 = vsel %vm754, %v1690, 0.0
        %v1723 = vsel %vm755, %v1691, 0.0
        %v1724 = vsel %vm756, %v1692, 0.0
        %v1725 = vsel %vm757, %v1693, 0.0
        %v1726 = vsel %vm758, %v1694, 0.0
        %v1727 = vsel %vm759, %v1695, 0.0
        %v1728 = vsel %vm760, %v1696, 0.0
        %v1729 = vsel %vm761, %v1697, 0.0
        %v1730 = vsel %vm762, %v1698, 0.0
        %v1731 = vsel %vm763, %v1699, 0.0
        %v1732 = vsel %vm764, %v1700, 0.0
        %v1733 = vsel %vm765, %v1701, 0.0
        %v1734 = vsel %vm766, %v1702, 0.0
        %v1735 = vsel %vm767, %v1703, 0.0
        %v1736 = vsel %vm768, %v1704, 0.0
        %v1737 = vsel %vm769, %v1705, 0.0
        %v1738 = vsel %vm770, %v1706, 0.0
        %v1739 = vsel %vm771, %v1707, 0.0
        %v1740 = vsel %vm772, %v1708, 0.0
        %v1741 = vsel %vm773, %v1709, 0.0
        %v1742 = vsel %vm774, %v1710, 0.0
        %v1743 = vpack.c.bf16 %v1711, %v1711
        %v1744 = vpack.c.bf16 %v1712, %v1712
        %v1745 = vpack.c.bf16 %v1713, %v1713
        %v1746 = vpack.c.bf16 %v1714, %v1714
        %v1747 = vpack.c.bf16 %v1715, %v1715
        %v1748 = vpack.c.bf16 %v1716, %v1716
        %v1749 = vpack.c.bf16 %v1717, %v1717
        %v1750 = vpack.c.bf16 %v1718, %v1718
        %v1751 = vpack.c.bf16 %v1719, %v1719
        %v1752 = vpack.c.bf16 %v1720, %v1720
        %v1753 = vpack.c.bf16 %v1721, %v1721
        %v1754 = vpack.c.bf16 %v1722, %v1722
        %v1755 = vpack.c.bf16 %v1723, %v1723
        %v1756 = vpack.c.bf16 %v1724, %v1724
        %v1757 = vpack.c.bf16 %v1725, %v1725
        %v1758 = vpack.c.bf16 %v1726, %v1726
        %v1759 = vpack.c.bf16 %v1727, %v1727
        %v1760 = vpack.c.bf16 %v1728, %v1728
        %v1761 = vpack.c.bf16 %v1729, %v1729
        %v1762 = vpack.c.bf16 %v1730, %v1730
        %v1763 = vpack.c.bf16 %v1731, %v1731
        %v1764 = vpack.c.bf16 %v1732, %v1732
        %v1765 = vpack.c.bf16 %v1733, %v1733
        %v1766 = vpack.c.bf16 %v1734, %v1734
        %v1767 = vpack.c.bf16 %v1735, %v1735
        %v1768 = vpack.c.bf16 %v1736, %v1736
        %v1769 = vpack.c.bf16 %v1737, %v1737
        %v1770 = vpack.c.bf16 %v1738, %v1738
        %v1771 = vpack.c.bf16 %v1739, %v1739
        %v1772 = vpack.c.bf16 %v1740, %v1740
        %v1773 = vpack.c.bf16 %v1741, %v1741
        %v1774 = vpack.c.bf16 %v1742, %v1742
        %1775 = vst [vmem:[#allocation3 + $0x18] sm:$0xf] %v1743
        %1776 = vst [vmem:[#allocation3 + $0x3c] sm:$0xf] %v1744
        %1777 = vst [vmem:[#allocation3 + $0x60] sm:$0xf] %v1745
        %1778 = vst [vmem:[#allocation3 + $0x84] sm:$0xf] %v1746
        %1779 = vst [vmem:[#allocation3 + $0xa8] sm:$0xf] %v1747
        %1780 = vst [vmem:[#allocation3 + $0xcc] sm:$0xf] %v1748
        %1781 = vst [vmem:[#allocation3 + $0xf0] sm:$0xf] %v1749
        %1782 = vst [vmem:[#allocation3 + $0x114] sm:$0xf] %v1750
        %1783 = vst [vmem:[#allocation3 + $0x138] sm:$0xf] %v1751
        %1784 = vst [vmem:[#allocation3 + $0x15c] sm:$0xf] %v1752
        %1785 = vst [vmem:[#allocation3 + $0x180] sm:$0xf] %v1753
        %1786 = vst [vmem:[#allocation3 + $0x1a4] sm:$0xf] %v1754
        %1787 = vst [vmem:[#allocation3 + $0x1c8] sm:$0xf] %v1755
        %1788 = vst [vmem:[#allocation3 + $0x1ec] sm:$0xf] %v1756
        %1789 = vst [vmem:[#allocation3 + $0x210] sm:$0xf] %v1757
        %1790 = vst [vmem:[#allocation3 + $0x234] sm:$0xf] %v1758
        %1791 = vst [vmem:[#allocation3 + $0x258] sm:$0xf] %v1759
        %1792 = vst [vmem:[#allocation3 + $0x27c] sm:$0xf] %v1760
        %1793 = vst [vmem:[#allocation3 + $0x2a0] sm:$0xf] %v1761
        %1794 = vst [vmem:[#allocation3 + $0x2c4] sm:$0xf] %v1762
        %1795 = vst [vmem:[#allocation3 + $0x2e8] sm:$0xf] %v1763
        %1796 = vst [vmem:[#allocation3 + $0x30c] sm:$0xf] %v1764
        %1797 = vst [vmem:[#allocation3 + $0x330] sm:$0xf] %v1765
        %1798 = vst [vmem:[#allocation3 + $0x354] sm:$0xf] %v1766
        %1799 = vst [vmem:[#allocation3 + $0x378] sm:$0xf] %v1767
        %1800 = vst [vmem:[#allocation3 + $0x39c] sm:$0xf] %v1768
        %1801 = vst [vmem:[#allocation3 + $0x3c0] sm:$0xf] %v1769
        %1802 = vst [vmem:[#allocation3 + $0x3e4] sm:$0xf] %v1770
        %1803 = vst [vmem:[#allocation3 + $0x408] sm:$0xf] %v1771
        %1804 = vst [vmem:[#allocation3 + $0x42c] sm:$0xf] %v1772
        %1805 = vst [vmem:[#allocation3 + $0x450] sm:$0xf] %v1773
        %1806 = vst [vmem:[#allocation3 + $0x474] sm:$0xf] %v1774
        %v1807 = vld [vmem:[#allocation2 + $0x28] sm:$0xff]
        %v1808 = vld [vmem:[#allocation2 + $0x30] sm:$0xff]
        %v1809 = vld [vmem:[#allocation2 + $0x38] sm:$0xff]
        %v1810 = vld [vmem:[#allocation2 + $0x40] sm:$0xff]
        %v1811 = vld [vmem:[#allocation2 + $0x48] sm:$0xff]
        %v1812 = vld [vmem:[#allocation2 + $0x50] sm:$0xff]
        %v1813 = vld [vmem:[#allocation2 + $0x58] sm:$0xff]
        %v1814 = vld [vmem:[#allocation2 + $0x60] sm:$0xff]
        %v1815 = vld [vmem:[#allocation2 + $0x68] sm:$0xff]
        %v1816 = vld [vmem:[#allocation2 + $0x70] sm:$0xff]
        %v1817 = vld [vmem:[#allocation2 + $0x78] sm:$0xff]
        %v1818 = vld [vmem:[#allocation2 + $0x80] sm:$0xff]
        %v1819 = vld [vmem:[#allocation2 + $0x88] sm:$0xff]
        %v1820 = vld [vmem:[#allocation2 + $0x90] sm:$0xff]
        %v1821 = vld [vmem:[#allocation2 + $0x98] sm:$0xff]
        %v1822 = vld [vmem:[#allocation2 + $0xa0] sm:$0xff]
        %v1823 = vld [vmem:[#allocation2 + $0xa8] sm:$0xff]
        %v1824 = vld [vmem:[#allocation2 + $0xb0] sm:$0xff]
        %v1825 = vld [vmem:[#allocation2 + $0xb8] sm:$0xff]
        %v1826 = vld [vmem:[#allocation2 + $0xc0] sm:$0xff]
        %v1827 = vld [vmem:[#allocation2 + $0xc8] sm:$0xff]
        %v1828 = vld [vmem:[#allocation2 + $0xd0] sm:$0xff]
        %v1829 = vld [vmem:[#allocation2 + $0xd8] sm:$0xff]
        %v1830 = vld [vmem:[#allocation2 + $0xe0] sm:$0xff]
        %v1831 = vld [vmem:[#allocation2 + $0xe8] sm:$0xff]
        %v1832 = vld [vmem:[#allocation2 + $0xf0] sm:$0xff]
        %v1833 = vld [vmem:[#allocation2 + $0xf8] sm:$0xff]
        %v1834 = vld [vmem:[#allocation2 + $0x100] sm:$0xff]
        %v1835 = vld [vmem:[#allocation2 + $0x108] sm:$0xff]
        %v1836 = vld [vmem:[#allocation2 + $0x110] sm:$0xff]
        %v1837 = vld [vmem:[#allocation2 + $0x118] sm:$0xff]
        %v1838 = vld [vmem:[#allocation2 + $0x120] sm:$0xff]
        %v1839 = vpack.c.bf16 %v1807, %v1807
        %v1840 = vpack.c.bf16 %v1808, %v1808
        %v1841 = vpack.c.bf16 %v1809, %v1809
        %v1842 = vpack.c.bf16 %v1810, %v1810
        %v1843 = vpack.c.bf16 %v1811, %v1811
        %v1844 = vpack.c.bf16 %v1812, %v1812
        %v1845 = vpack.c.bf16 %v1813, %v1813
        %v1846 = vpack.c.bf16 %v1814, %v1814
        %v1847 = vpack.c.bf16 %v1815, %v1815
        %v1848 = vpack.c.bf16 %v1816, %v1816
        %v1849 = vpack.c.bf16 %v1817, %v1817
        %v1850 = vpack.c.bf16 %v1818, %v1818
        %v1851 = vpack.c.bf16 %v1819, %v1819
        %v1852 = vpack.c.bf16 %v1820, %v1820
        %v1853 = vpack.c.bf16 %v1821, %v1821
        %v1854 = vpack.c.bf16 %v1822, %v1822
        %v1855 = vpack.c.bf16 %v1823, %v1823
        %v1856 = vpack.c.bf16 %v1824, %v1824
        %v1857 = vpack.c.bf16 %v1825, %v1825
        %v1858 = vpack.c.bf16 %v1826, %v1826
        %v1859 = vpack.c.bf16 %v1827, %v1827
        %v1860 = vpack.c.bf16 %v1828, %v1828
        %v1861 = vpack.c.bf16 %v1829, %v1829
        %v1862 = vpack.c.bf16 %v1830, %v1830
        %v1863 = vpack.c.bf16 %v1831, %v1831
        %v1864 = vpack.c.bf16 %v1832, %v1832
        %v1865 = vpack.c.bf16 %v1833, %v1833
        %v1866 = vpack.c.bf16 %v1834, %v1834
        %v1867 = vpack.c.bf16 %v1835, %v1835
        %v1868 = vpack.c.bf16 %v1836, %v1836
        %v1869 = vpack.c.bf16 %v1837, %v1837
        %v1870 = vpack.c.bf16 %v1838, %v1838
        %1871 = vst [vmem:[#allocation3 + $0x1c] sm:$0xf] %v1839
        %1872 = vst [vmem:[#allocation3 + $0x40] sm:$0xf] %v1840
        %1873 = vst [vmem:[#allocation3 + $0x64] sm:$0xf] %v1841
        %1874 = vst [vmem:[#allocation3 + $0x88] sm:$0xf] %v1842
        %1875 = vst [vmem:[#allocation3 + $0xac] sm:$0xf] %v1843
        %1876 = vst [vmem:[#allocation3 + $0xd0] sm:$0xf] %v1844
        %1877 = vst [vmem:[#allocation3 + $0xf4] sm:$0xf] %v1845
        %1878 = vst [vmem:[#allocation3 + $0x118] sm:$0xf] %v1846
        %1879 = vst [vmem:[#allocation3 + $0x13c] sm:$0xf] %v1847
        %1880 = vst [vmem:[#allocation3 + $0x160] sm:$0xf] %v1848
        %1881 = vst [vmem:[#allocation3 + $0x184] sm:$0xf] %v1849
        %1882 = vst [vmem:[#allocation3 + $0x1a8] sm:$0xf] %v1850
        %1883 = vst [vmem:[#allocation3 + $0x1cc] sm:$0xf] %v1851
        %1884 = vst [vmem:[#allocation3 + $0x1f0] sm:$0xf] %v1852
        %1885 = vst [vmem:[#allocation3 + $0x214] sm:$0xf] %v1853
        %1886 = vst [vmem:[#allocation3 + $0x238] sm:$0xf] %v1854
        %1887 = vst [vmem:[#allocation3 + $0x25c] sm:$0xf] %v1855
        %1888 = vst [vmem:[#allocation3 + $0x280] sm:$0xf] %v1856
        %1889 = vst [vmem:[#allocation3 + $0x2a4] sm:$0xf] %v1857
        %1890 = vst [vmem:[#allocation3 + $0x2c8] sm:$0xf] %v1858
        %1891 = vst [vmem:[#allocation3 + $0x2ec] sm:$0xf] %v1859
        %1892 = vst [vmem:[#allocation3 + $0x310] sm:$0xf] %v1860
        %1893 = vst [vmem:[#allocation3 + $0x334] sm:$0xf] %v1861
        %1894 = vst [vmem:[#allocation3 + $0x358] sm:$0xf] %v1862
        %1895 = vst [vmem:[#allocation3 + $0x37c] sm:$0xf] %v1863
        %1896 = vst [vmem:[#allocation3 + $0x3a0] sm:$0xf] %v1864
        %1897 = vst [vmem:[#allocation3 + $0x3c4] sm:$0xf] %v1865
        %1898 = vst [vmem:[#allocation3 + $0x3e8] sm:$0xf] %v1866
        %1899 = vst [vmem:[#allocation3 + $0x40c] sm:$0xf] %v1867
        %1900 = vst [vmem:[#allocation3 + $0x430] sm:$0xf] %v1868
        %1901 = vst [vmem:[#allocation3 + $0x454] sm:$0xf] %v1869
        %1902 = vst [vmem:[#allocation3 + $0x478] sm:$0xf] %v1870
        %v1903 = vld [vmem:[#allocation2 + $0x29] sm:$0xff]
        %v1904 = vld [vmem:[#allocation2 + $0x31] sm:$0xff]
        %v1905 = vld [vmem:[#allocation2 + $0x39] sm:$0xff]
        %v1906 = vld [vmem:[#allocation2 + $0x41] sm:$0xff]
        %v1907 = vld [vmem:[#allocation2 + $0x49] sm:$0xff]
        %v1908 = vld [vmem:[#allocation2 + $0x51] sm:$0xff]
        %v1909 = vld [vmem:[#allocation2 + $0x59] sm:$0xff]
        %v1910 = vld [vmem:[#allocation2 + $0x61] sm:$0xff]
        %v1911 = vld [vmem:[#allocation2 + $0x69] sm:$0xff]
        %v1912 = vld [vmem:[#allocation2 + $0x71] sm:$0xff]
        %v1913 = vld [vmem:[#allocation2 + $0x79] sm:$0xff]
        %v1914 = vld [vmem:[#allocation2 + $0x81] sm:$0xff]
        %v1915 = vld [vmem:[#allocation2 + $0x89] sm:$0xff]
        %v1916 = vld [vmem:[#allocation2 + $0x91] sm:$0xff]
        %v1917 = vld [vmem:[#allocation2 + $0x99] sm:$0xff]
        %v1918 = vld [vmem:[#allocation2 + $0xa1] sm:$0xff]
        %v1919 = vld [vmem:[#allocation2 + $0xa9] sm:$0xff]
        %v1920 = vld [vmem:[#allocation2 + $0xb1] sm:$0xff]
        %v1921 = vld [vmem:[#allocation2 + $0xb9] sm:$0xff]
        %v1922 = vld [vmem:[#allocation2 + $0xc1] sm:$0xff]
        %v1923 = vld [vmem:[#allocation2 + $0xc9] sm:$0xff]
        %v1924 = vld [vmem:[#allocation2 + $0xd1] sm:$0xff]
        %v1925 = vld [vmem:[#allocation2 + $0xd9] sm:$0xff]
        %v1926 = vld [vmem:[#allocation2 + $0xe1] sm:$0xff]
        %v1927 = vld [vmem:[#allocation2 + $0xe9] sm:$0xff]
        %v1928 = vld [vmem:[#allocation2 + $0xf1] sm:$0xff]
        %v1929 = vld [vmem:[#allocation2 + $0xf9] sm:$0xff]
        %v1930 = vld [vmem:[#allocation2 + $0x101] sm:$0xff]
        %v1931 = vld [vmem:[#allocation2 + $0x109] sm:$0xff]
        %v1932 = vld [vmem:[#allocation2 + $0x111] sm:$0xff]
        %v1933 = vld [vmem:[#allocation2 + $0x119] sm:$0xff]
        %v1934 = vld [vmem:[#allocation2 + $0x121] sm:$0xff]
        %v1935 = vsel %vm775, %v1903, 0.0
        %v1936 = vsel %vm776, %v1904, 0.0
        %v1937 = vsel %vm777, %v1905, 0.0
        %v1938 = vsel %vm778, %v1906, 0.0
        %v1939 = vsel %vm779, %v1907, 0.0
        %v1940 = vsel %vm780, %v1908, 0.0
        %v1941 = vsel %vm781, %v1909, 0.0
        %v1942 = vsel %vm782, %v1910, 0.0
        %v1943 = vsel %vm783, %v1911, 0.0
        %v1944 = vsel %vm784, %v1912, 0.0
        %v1945 = vsel %vm785, %v1913, 0.0
        %v1946 = vsel %vm786, %v1914, 0.0
        %v1947 = vsel %vm787, %v1915, 0.0
        %v1948 = vsel %vm788, %v1916, 0.0
        %v1949 = vsel %vm789, %v1917, 0.0
        %v1950 = vsel %vm790, %v1918, 0.0
        %v1951 = vsel %vm791, %v1919, 0.0
        %v1952 = vsel %vm792, %v1920, 0.0
        %v1953 = vsel %vm793, %v1921, 0.0
        %v1954 = vsel %vm794, %v1922, 0.0
        %v1955 = vsel %vm795, %v1923, 0.0
        %v1956 = vsel %vm796, %v1924, 0.0
        %v1957 = vsel %vm797, %v1925, 0.0
        %v1958 = vsel %vm798, %v1926, 0.0
        %v1959 = vsel %vm799, %v1927, 0.0
        %v1960 = vsel %vm800, %v1928, 0.0
        %v1961 = vsel %vm801, %v1929, 0.0
        %v1962 = vsel %vm802, %v1930, 0.0
        %v1963 = vsel %vm803, %v1931, 0.0
        %v1964 = vsel %vm804, %v1932, 0.0
        %v1965 = vsel %vm805, %v1933, 0.0
        %v1966 = vsel %vm806, %v1934, 0.0
        %v1967 = vpack.c.bf16 %v1935, %v1935
        %v1968 = vpack.c.bf16 %v1936, %v1936
        %v1969 = vpack.c.bf16 %v1937, %v1937
        %v1970 = vpack.c.bf16 %v1938, %v1938
        %v1971 = vpack.c.bf16 %v1939, %v1939
        %v1972 = vpack.c.bf16 %v1940, %v1940
        %v1973 = vpack.c.bf16 %v1941, %v1941
        %v1974 = vpack.c.bf16 %v1942, %v1942
        %v1975 = vpack.c.bf16 %v1943, %v1943
        %v1976 = vpack.c.bf16 %v1944, %v1944
        %v1977 = vpack.c.bf16 %v1945, %v1945
        %v1978 = vpack.c.bf16 %v1946, %v1946
        %v1979 = vpack.c.bf16 %v1947, %v1947
        %v1980 = vpack.c.bf16 %v1948, %v1948
        %v1981 = vpack.c.bf16 %v1949, %v1949
        %v1982 = vpack.c.bf16 %v1950, %v1950
        %v1983 = vpack.c.bf16 %v1951, %v1951
        %v1984 = vpack.c.bf16 %v1952, %v1952
        %v1985 = vpack.c.bf16 %v1953, %v1953
        %v1986 = vpack.c.bf16 %v1954, %v1954
        %v1987 = vpack.c.bf16 %v1955, %v1955
        %v1988 = vpack.c.bf16 %v1956, %v1956
        %v1989 = vpack.c.bf16 %v1957, %v1957
        %v1990 = vpack.c.bf16 %v1958, %v1958
        %v1991 = vpack.c.bf16 %v1959, %v1959
        %v1992 = vpack.c.bf16 %v1960, %v1960
        %v1993 = vpack.c.bf16 %v1961, %v1961
        %v1994 = vpack.c.bf16 %v1962, %v1962
        %v1995 = vpack.c.bf16 %v1963, %v1963
        %v1996 = vpack.c.bf16 %v1964, %v1964
        %v1997 = vpack.c.bf16 %v1965, %v1965
        %v1998 = vpack.c.bf16 %v1966, %v1966
        %1999 = vst [vmem:[#allocation3 + $0x20] sm:$0xf] %v1967
        %2000 = vst [vmem:[#allocation3 + $0x44] sm:$0xf] %v1968
        %2001 = vst [vmem:[#allocation3 + $0x68] sm:$0xf] %v1969
        %2002 = vst [vmem:[#allocation3 + $0x8c] sm:$0xf] %v1970
        %2003 = vst [vmem:[#allocation3 + $0xb0] sm:$0xf] %v1971
        %2004 = vst [vmem:[#allocation3 + $0xd4] sm:$0xf] %v1972
        %2005 = vst [vmem:[#allocation3 + $0xf8] sm:$0xf] %v1973
        %2006 = vst [vmem:[#allocation3 + $0x11c] sm:$0xf] %v1974
        %2007 = vst [vmem:[#allocation3 + $0x140] sm:$0xf] %v1975
        %2008 = vst [vmem:[#allocation3 + $0x164] sm:$0xf] %v1976
        %2009 = vst [vmem:[#allocation3 + $0x188] sm:$0xf] %v1977
        %2010 = vst [vmem:[#allocation3 + $0x1ac] sm:$0xf] %v1978
        %2011 = vst [vmem:[#allocation3 + $0x1d0] sm:$0xf] %v1979
        %2012 = vst [vmem:[#allocation3 + $0x1f4] sm:$0xf] %v1980
        %2013 = vst [vmem:[#allocation3 + $0x218] sm:$0xf] %v1981
        %2014 = vst [vmem:[#allocation3 + $0x23c] sm:$0xf] %v1982
        %2015 = vst [vmem:[#allocation3 + $0x260] sm:$0xf] %v1983
        %2016 = vst [vmem:[#allocation3 + $0x284] sm:$0xf] %v1984
        %2017 = vst [vmem:[#allocation3 + $0x2a8] sm:$0xf] %v1985
        %2018 = vst [vmem:[#allocation3 + $0x2cc] sm:$0xf] %v1986
        %2019 = vst [vmem:[#allocation3 + $0x2f0] sm:$0xf] %v1987
        %2020 = vst [vmem:[#allocation3 + $0x314] sm:$0xf] %v1988
        %2021 = vst [vmem:[#allocation3 + $0x338] sm:$0xf] %v1989
        %2022 = vst [vmem:[#allocation3 + $0x35c] sm:$0xf] %v1990
        %2023 = vst [vmem:[#allocation3 + $0x380] sm:$0xf] %v1991
        %2024 = vst [vmem:[#allocation3 + $0x3a4] sm:$0xf] %v1992
        %2025 = vst [vmem:[#allocation3 + $0x3c8] sm:$0xf] %v1993
        %2026 = vst [vmem:[#allocation3 + $0x3ec] sm:$0xf] %v1994
        %2027 = vst [vmem:[#allocation3 + $0x410] sm:$0xf] %v1995
        %2028 = vst [vmem:[#allocation3 + $0x434] sm:$0xf] %v1996
        %2029 = vst [vmem:[#allocation3 + $0x458] sm:$0xf] %v1997
        %2030 = vst [vmem:[#allocation3 + $0x47c] sm:$0xf] %v1998
        %v2031 = vld [vmem:[#allocation3] sm:$0xff]
        %v2032 = vld [vmem:[#allocation3 + $0x8] sm:$0xff]
        %v2033 = vld [vmem:[#allocation3 + $0x10] sm:$0xff]
        %v2034 = vld [vmem:[#allocation3 + $0x18] sm:$0xff]
        %v2035 = vld [vmem:[#allocation3 + $0x20] sm:$0xf]
        %v2036 = vld [vmem:[#allocation3 + $0x24] sm:$0xff]
        %v2037 = vld [vmem:[#allocation3 + $0x2c] sm:$0xff]
        %v2038 = vld [vmem:[#allocation3 + $0x34] sm:$0xff]
        %v2039 = vld [vmem:[#allocation3 + $0x3c] sm:$0xff]
        %v2040 = vld [vmem:[#allocation3 + $0x44] sm:$0xf]
        %v2041 = vld [vmem:[#allocation3 + $0x48] sm:$0xff]
        %v2042 = vld [vmem:[#allocation3 + $0x50] sm:$0xff]
        %v2043 = vld [vmem:[#allocation3 + $0x58] sm:$0xff]
        %v2044 = vld [vmem:[#allocation3 + $0x60] sm:$0xff]
        %v2045 = vld [vmem:[#allocation3 + $0x68] sm:$0xf]
        %v2046 = vld [vmem:[#allocation3 + $0x6c] sm:$0xff]
        %v2047 = vld [vmem:[#allocation3 + $0x74] sm:$0xff]
        %v2048 = vld [vmem:[#allocation3 + $0x7c] sm:$0xff]
        %v2049 = vld [vmem:[#allocation3 + $0x84] sm:$0xff]
        %v2050 = vld [vmem:[#allocation3 + $0x8c] sm:$0xf]
        %v2051 = vld [vmem:[#allocation3 + $0x90] sm:$0xff]
        %v2052 = vld [vmem:[#allocation3 + $0x98] sm:$0xff]
        %v2053 = vld [vmem:[#allocation3 + $0xa0] sm:$0xff]
        %v2054 = vld [vmem:[#allocation3 + $0xa8] sm:$0xff]
        %v2055 = vld [vmem:[#allocation3 + $0xb0] sm:$0xf]
        %v2056 = vld [vmem:[#allocation3 + $0xb4] sm:$0xff]
        %v2057 = vld [vmem:[#allocation3 + $0xbc] sm:$0xff]
        %v2058 = vld [vmem:[#allocation3 + $0xc4] sm:$0xff]
        %v2059 = vld [vmem:[#allocation3 + $0xcc] sm:$0xff]
        %v2060 = vld [vmem:[#allocation3 + $0xd4] sm:$0xf]
        %v2061 = vld [vmem:[#allocation3 + $0xd8] sm:$0xff]
        %v2062 = vld [vmem:[#allocation3 + $0xe0] sm:$0xff]
        %v2063 = vld [vmem:[#allocation3 + $0xe8] sm:$0xff]
        %v2064 = vld [vmem:[#allocation3 + $0xf0] sm:$0xff]
        %v2065 = vld [vmem:[#allocation3 + $0xf8] sm:$0xf]
        %v2066 = vld [vmem:[#allocation3 + $0xfc] sm:$0xff]
        %v2067 = vld [vmem:[#allocation3 + $0x104] sm:$0xff]
        %v2068 = vld [vmem:[#allocation3 + $0x10c] sm:$0xff]
        %v2069 = vld [vmem:[#allocation3 + $0x114] sm:$0xff]
        %v2070 = vld [vmem:[#allocation3 + $0x11c] sm:$0xf]
        %v2071 = vld [vmem:[#allocation3 + $0x120] sm:$0xff]
        %v2072 = vld [vmem:[#allocation3 + $0x128] sm:$0xff]
        %v2073 = vld [vmem:[#allocation3 + $0x130] sm:$0xff]
        %v2074 = vld [vmem:[#allocation3 + $0x138] sm:$0xff]
        %v2075 = vld [vmem:[#allocation3 + $0x140] sm:$0xf]
        %v2076 = vld [vmem:[#allocation3 + $0x144] sm:$0xff]
        %v2077 = vld [vmem:[#allocation3 + $0x14c] sm:$0xff]
        %v2078 = vld [vmem:[#allocation3 + $0x154] sm:$0xff]
        %v2079 = vld [vmem:[#allocation3 + $0x15c] sm:$0xff]
        %v2080 = vld [vmem:[#allocation3 + $0x164] sm:$0xf]
        %v2081 = vld [vmem:[#allocation3 + $0x168] sm:$0xff]
        %v2082 = vld [vmem:[#allocation3 + $0x170] sm:$0xff]
        %v2083 = vld [vmem:[#allocation3 + $0x178] sm:$0xff]
        %v2084 = vld [vmem:[#allocation3 + $0x180] sm:$0xff]
        %v2085 = vld [vmem:[#allocation3 + $0x188] sm:$0xf]
        %v2086 = vld [vmem:[#allocation3 + $0x18c] sm:$0xff]
        %v2087 = vld [vmem:[#allocation3 + $0x194] sm:$0xff]
        %v2088 = vld [vmem:[#allocation3 + $0x19c] sm:$0xff]
        %v2089 = vld [vmem:[#allocation3 + $0x1a4] sm:$0xff]
        %v2090 = vld [vmem:[#allocation3 + $0x1ac] sm:$0xf]
        %v2091 = vld [vmem:[#allocation3 + $0x1b0] sm:$0xff]
        %v2092 = vld [vmem:[#allocation3 + $0x1b8] sm:$0xff]
        %v2093 = vld [vmem:[#allocation3 + $0x1c0] sm:$0xff]
        %v2094 = vld [vmem:[#allocation3 + $0x1c8] sm:$0xff]
        %v2095 = vld [vmem:[#allocation3 + $0x1d0] sm:$0xf]
        %v2096 = vld [vmem:[#allocation3 + $0x1d4] sm:$0xff]
        %v2097 = vld [vmem:[#allocation3 + $0x1dc] sm:$0xff]
        %v2098 = vld [vmem:[#allocation3 + $0x1e4] sm:$0xff]
        %v2099 = vld [vmem:[#allocation3 + $0x1ec] sm:$0xff]
        %v2100 = vld [vmem:[#allocation3 + $0x1f4] sm:$0xf]
        %v2101 = vld [vmem:[#allocation3 + $0x1f8] sm:$0xff]
        %v2102 = vld [vmem:[#allocation3 + $0x200] sm:$0xff]
        %v2103 = vld [vmem:[#allocation3 + $0x208] sm:$0xff]
        %v2104 = vld [vmem:[#allocation3 + $0x210] sm:$0xff]
        %v2105 = vld [vmem:[#allocation3 + $0x218] sm:$0xf]
        %v2106 = vld [vmem:[#allocation3 + $0x21c] sm:$0xff]
        %v2107 = vld [vmem:[#allocation3 + $0x224] sm:$0xff]
        %v2108 = vld [vmem:[#allocation3 + $0x22c] sm:$0xff]
        %v2109 = vld [vmem:[#allocation3 + $0x234] sm:$0xff]
        %v2110 = vld [vmem:[#allocation3 + $0x23c] sm:$0xf]
        %v2111 = vld [vmem:[#allocation3 + $0x240] sm:$0xff]
        %v2112 = vld [vmem:[#allocation3 + $0x248] sm:$0xff]
        %v2113 = vld [vmem:[#allocation3 + $0x250] sm:$0xff]
        %v2114 = vld [vmem:[#allocation3 + $0x258] sm:$0xff]
        %v2115 = vld [vmem:[#allocation3 + $0x260] sm:$0xf]
        %v2116 = vld [vmem:[#allocation3 + $0x264] sm:$0xff]
        %v2117 = vld [vmem:[#allocation3 + $0x26c] sm:$0xff]
        %v2118 = vld [vmem:[#allocation3 + $0x274] sm:$0xff]
        %v2119 = vld [vmem:[#allocation3 + $0x27c] sm:$0xff]
        %v2120 = vld [vmem:[#allocation3 + $0x284] sm:$0xf]
        %v2121 = vld [vmem:[#allocation3 + $0x288] sm:$0xff]
        %v2122 = vld [vmem:[#allocation3 + $0x290] sm:$0xff]
        %v2123 = vld [vmem:[#allocation3 + $0x298] sm:$0xff]
        %v2124 = vld [vmem:[#allocation3 + $0x2a0] sm:$0xff]
        %v2125 = vld [vmem:[#allocation3 + $0x2a8] sm:$0xf]
        %v2126 = vld [vmem:[#allocation3 + $0x2ac] sm:$0xff]
        %v2127 = vld [vmem:[#allocation3 + $0x2b4] sm:$0xff]
        %v2128 = vld [vmem:[#allocation3 + $0x2bc] sm:$0xff]
        %v2129 = vld [vmem:[#allocation3 + $0x2c4] sm:$0xff]
        %v2130 = vld [vmem:[#allocation3 + $0x2cc] sm:$0xf]
        %v2131 = vld [vmem:[#allocation3 + $0x2d0] sm:$0xff]
        %v2132 = vld [vmem:[#allocation3 + $0x2d8] sm:$0xff]
        %v2133 = vld [vmem:[#allocation3 + $0x2e0] sm:$0xff]
        %v2134 = vld [vmem:[#allocation3 + $0x2e8] sm:$0xff]
        %v2135 = vld [vmem:[#allocation3 + $0x2f0] sm:$0xf]
        %v2136 = vld [vmem:[#allocation3 + $0x2f4] sm:$0xff]
        %v2137 = vld [vmem:[#allocation3 + $0x2fc] sm:$0xff]
        %v2138 = vld [vmem:[#allocation3 + $0x304] sm:$0xff]
        %v2139 = vld [vmem:[#allocation3 + $0x30c] sm:$0xff]
        %v2140 = vld [vmem:[#allocation3 + $0x314] sm:$0xf]
        %v2141 = vld [vmem:[#allocation3 + $0x318] sm:$0xff]
        %v2142 = vld [vmem:[#allocation3 + $0x320] sm:$0xff]
        %v2143 = vld [vmem:[#allocation3 + $0x328] sm:$0xff]
        %v2144 = vld [vmem:[#allocation3 + $0x330] sm:$0xff]
        %v2145 = vld [vmem:[#allocation3 + $0x338] sm:$0xf]
        %v2146 = vld [vmem:[#allocation3 + $0x33c] sm:$0xff]
        %v2147 = vld [vmem:[#allocation3 + $0x344] sm:$0xff]
        %v2148 = vld [vmem:[#allocation3 + $0x34c] sm:$0xff]
        %v2149 = vld [vmem:[#allocation3 + $0x354] sm:$0xff]
        %v2150 = vld [vmem:[#allocation3 + $0x35c] sm:$0xf]
        %v2151 = vld [vmem:[#allocation3 + $0x360] sm:$0xff]
        %v2152 = vld [vmem:[#allocation3 + $0x368] sm:$0xff]
        %v2153 = vld [vmem:[#allocation3 + $0x370] sm:$0xff]
        %v2154 = vld [vmem:[#allocation3 + $0x378] sm:$0xff]
        %v2155 = vld [vmem:[#allocation3 + $0x380] sm:$0xf]
        %v2156 = vld [vmem:[#allocation3 + $0x384] sm:$0xff]
        %v2157 = vld [vmem:[#allocation3 + $0x38c] sm:$0xff]
        %v2158 = vld [vmem:[#allocation3 + $0x394] sm:$0xff]
        %v2159 = vld [vmem:[#allocation3 + $0x39c] sm:$0xff]
        %v2160 = vld [vmem:[#allocation3 + $0x3a4] sm:$0xf]
        %v2161 = vld [vmem:[#allocation3 + $0x3a8] sm:$0xff]
        %v2162 = vld [vmem:[#allocation3 + $0x3b0] sm:$0xff]
        %v2163 = vld [vmem:[#allocation3 + $0x3b8] sm:$0xff]
        %v2164 = vld [vmem:[#allocation3 + $0x3c0] sm:$0xff]
        %v2165 = vld [vmem:[#allocation3 + $0x3c8] sm:$0xf]
        %v2166 = vld [vmem:[#allocation3 + $0x3cc] sm:$0xff]
        %v2167 = vld [vmem:[#allocation3 + $0x3d4] sm:$0xff]
        %v2168 = vld [vmem:[#allocation3 + $0x3dc] sm:$0xff]
        %v2169 = vld [vmem:[#allocation3 + $0x3e4] sm:$0xff]
        %v2170 = vld [vmem:[#allocation3 + $0x3ec] sm:$0xf]
        %v2171 = vld [vmem:[#allocation3 + $0x3f0] sm:$0xff]
        %v2172 = vld [vmem:[#allocation3 + $0x3f8] sm:$0xff]
        %v2173 = vld [vmem:[#allocation3 + $0x400] sm:$0xff]
        %v2174 = vld [vmem:[#allocation3 + $0x408] sm:$0xff]
        %v2175 = vld [vmem:[#allocation3 + $0x410] sm:$0xf]
        %v2176 = vld [vmem:[#allocation3 + $0x414] sm:$0xff]
        %v2177 = vld [vmem:[#allocation3 + $0x41c] sm:$0xff]
        %v2178 = vld [vmem:[#allocation3 + $0x424] sm:$0xff]
        %v2179 = vld [vmem:[#allocation3 + $0x42c] sm:$0xff]
        %v2180 = vld [vmem:[#allocation3 + $0x434] sm:$0xf]
        %v2181 = vld [vmem:[#allocation3 + $0x438] sm:$0xff]
        %v2182 = vld [vmem:[#allocation3 + $0x440] sm:$0xff]
        %v2183 = vld [vmem:[#allocation3 + $0x448] sm:$0xff]
        %v2184 = vld [vmem:[#allocation3 + $0x450] sm:$0xff]
        %v2185 = vld [vmem:[#allocation3 + $0x458] sm:$0xf]
        %v2186 = vld [vmem:[#allocation3 + $0x45c] sm:$0xff]
        %v2187 = vld [vmem:[#allocation3 + $0x464] sm:$0xff]
        %v2188 = vld [vmem:[#allocation3 + $0x46c] sm:$0xff]
        %v2189 = vld [vmem:[#allocation3 + $0x474] sm:$0xff]
        %v2190 = vld [vmem:[#allocation3 + $0x47c] sm:$0xf]
        %v2191 = vld [vmem:[#allocation9] sm:$0xf]
        %v2192 = vld [vmem:[#allocation9 + $0x4] sm:$0xf]
        %v2193 = vld [vmem:[#allocation9 + $0x8] sm:$0xf]
        %v2194 = vld [vmem:[#allocation9 + $0xc] sm:$0xf]
        %v2195 = vld [vmem:[#allocation9 + $0x10] sm:$0xf]
        %v2196 = vld [vmem:[#allocation9 + $0x14] sm:$0xf]
        %v2197 = vld [vmem:[#allocation9 + $0x18] sm:$0xf]
        %v2198 = vld [vmem:[#allocation9 + $0x1c] sm:$0xf]
        %v2199 = vld [vmem:[#allocation9 + $0x20] sm:$0xf]
        %v2200 = vld [vmem:[#allocation9 + $0x24] sm:$0xf]
        %v2201 = vld [vmem:[#allocation9 + $0x28] sm:$0xf]
        %v2202 = vld [vmem:[#allocation9 + $0x2c] sm:$0xf]
        %v2203 = vld [vmem:[#allocation9 + $0x30] sm:$0xf]
        %v2204 = vld [vmem:[#allocation9 + $0x34] sm:$0xf]
        %v2205 = vld [vmem:[#allocation9 + $0x38] sm:$0xf]
        %v2206 = vld [vmem:[#allocation9 + $0x3c] sm:$0xf]
        %v2207 = vld [vmem:[#allocation9 + $0x40] sm:$0xf]
        %v2208 = vld [vmem:[#allocation9 + $0x44] sm:$0xf]
        %v2209 = vld [vmem:[#allocation9 + $0x48] sm:$0xf]
        %v2210 = vld [vmem:[#allocation9 + $0x4c] sm:$0xf]
        %v2211 = vld [vmem:[#allocation9 + $0x50] sm:$0xf]
        %v2212 = vld [vmem:[#allocation9 + $0x54] sm:$0xf]
        %v2213 = vld [vmem:[#allocation9 + $0x58] sm:$0xf]
        %v2214 = vld [vmem:[#allocation9 + $0x5c] sm:$0xf]
        %v2215 = vld [vmem:[#allocation9 + $0x60] sm:$0xf]
        %v2216 = vld [vmem:[#allocation9 + $0x64] sm:$0xf]
        %v2217 = vld [vmem:[#allocation9 + $0x68] sm:$0xf]
        %v2218 = vld [vmem:[#allocation9 + $0x6c] sm:$0xf]
        %v2219 = vld [vmem:[#allocation9 + $0x70] sm:$0xf]
        %v2220 = vld [vmem:[#allocation9 + $0x74] sm:$0xf]
        %v2221 = vld [vmem:[#allocation9 + $0x78] sm:$0xf]
        %v2222 = vld [vmem:[#allocation9 + $0x7c] sm:$0xf]
        %v2223 = vld [vmem:[#allocation9 + $0x80] sm:$0xf]
        %v2224 = vld [vmem:[#allocation9 + $0x84] sm:$0xf]
        %v2225 = vld [vmem:[#allocation9 + $0x88] sm:$0xf]
        %v2226 = vld [vmem:[#allocation9 + $0x8c] sm:$0xf]
        %v2227 = vld [vmem:[#allocation9 + $0x90] sm:$0xf]
        %v2228 = vld [vmem:[#allocation9 + $0x94] sm:$0xf]
        %v2229 = vld [vmem:[#allocation9 + $0x98] sm:$0xf]
        %v2230 = vld [vmem:[#allocation9 + $0x9c] sm:$0xf]
        %v2231 = vld [vmem:[#allocation9 + $0xa0] sm:$0xf]
        %v2232 = vld [vmem:[#allocation9 + $0xa4] sm:$0xf]
        %v2233 = vld [vmem:[#allocation9 + $0xa8] sm:$0xf]
        %v2234 = vld [vmem:[#allocation9 + $0xac] sm:$0xf]
        %v2235 = vld [vmem:[#allocation9 + $0xb0] sm:$0xf]
        %v2236 = vld [vmem:[#allocation9 + $0xb4] sm:$0xf]
        %v2237 = vld [vmem:[#allocation9 + $0xb8] sm:$0xf]
        %v2238 = vld [vmem:[#allocation9 + $0xbc] sm:$0xf]
        %v2239 = vld [vmem:[#allocation9 + $0xc0] sm:$0xf]
        %v2240 = vld [vmem:[#allocation9 + $0xc4] sm:$0xf]
        %v2241 = vld [vmem:[#allocation9 + $0xc8] sm:$0xf]
        %v2242 = vld [vmem:[#allocation9 + $0xcc] sm:$0xf]
        %v2243 = vld [vmem:[#allocation9 + $0xd0] sm:$0xf]
        %v2244 = vld [vmem:[#allocation9 + $0xd4] sm:$0xf]
        %v2245 = vld [vmem:[#allocation9 + $0xd8] sm:$0xf]
        %v2246 = vld [vmem:[#allocation9 + $0xdc] sm:$0xf]
        %v2247 = vld [vmem:[#allocation9 + $0xe0] sm:$0xf]
        %v2248 = vld [vmem:[#allocation9 + $0xe4] sm:$0xf]
        %v2249 = vld [vmem:[#allocation9 + $0xe8] sm:$0xf]
        %v2250 = vld [vmem:[#allocation9 + $0xec] sm:$0xf]
        %v2251 = vld [vmem:[#allocation9 + $0xf0] sm:$0xf]
        %v2252 = vld [vmem:[#allocation9 + $0xf4] sm:$0xf]
        %v2253 = vld [vmem:[#allocation9 + $0xf8] sm:$0xf]
        %v2254 = vld [vmem:[#allocation9 + $0xfc] sm:$0xf]
        %v2255 = vld [vmem:[#allocation9 + $0x100] sm:$0xf]
        %v2256 = vld [vmem:[#allocation9 + $0x104] sm:$0xf]
        %v2257 = vld [vmem:[#allocation9 + $0x108] sm:$0xf]
        %v2258 = vld [vmem:[#allocation9 + $0x10c] sm:$0xf]
        %v2259 = vld [vmem:[#allocation9 + $0x110] sm:$0xf]
        %v2260 = vld [vmem:[#allocation9 + $0x114] sm:$0xf]
        %v2261 = vld [vmem:[#allocation9 + $0x118] sm:$0xf]
        %v2262 = vld [vmem:[#allocation9 + $0x11c] sm:$0xf]
        %v2263 = vld [vmem:[#allocation9 + $0x120] sm:$0xf]
        %v2264 = vld [vmem:[#allocation9 + $0x124] sm:$0xf]
        %v2265 = vld [vmem:[#allocation9 + $0x128] sm:$0xf]
        %v2266 = vld [vmem:[#allocation9 + $0x12c] sm:$0xf]
        %v2267 = vld [vmem:[#allocation9 + $0x130] sm:$0xf]
        %v2268 = vld [vmem:[#allocation9 + $0x134] sm:$0xf]
        %v2269 = vld [vmem:[#allocation9 + $0x138] sm:$0xf]
        %v2270 = vld [vmem:[#allocation9 + $0x13c] sm:$0xf]
        %v2271 = vld [vmem:[#allocation9 + $0x140] sm:$0xf]
        %v2272 = vld [vmem:[#allocation9 + $0x144] sm:$0xf]
        %v2273 = vld [vmem:[#allocation9 + $0x148] sm:$0xf]
        %v2274 = vld [vmem:[#allocation9 + $0x14c] sm:$0xf]
        %v2275 = vld [vmem:[#allocation9 + $0x150] sm:$0xf]
        %v2276 = vld [vmem:[#allocation9 + $0x154] sm:$0xf]
        %v2277 = vld [vmem:[#allocation9 + $0x158] sm:$0xf]
        %v2278 = vld [vmem:[#allocation9 + $0x15c] sm:$0xf]
        %v2279 = vld [vmem:[#allocation9 + $0x160] sm:$0xf]
        %v2280 = vld [vmem:[#allocation9 + $0x164] sm:$0xf]
        %v2281 = vld [vmem:[#allocation9 + $0x168] sm:$0xf]
        %v2282 = vld [vmem:[#allocation9 + $0x16c] sm:$0xf]
        %v2283 = vld [vmem:[#allocation9 + $0x170] sm:$0xf]
        %v2284 = vld [vmem:[#allocation9 + $0x174] sm:$0xf]
        %v2285 = vld [vmem:[#allocation9 + $0x178] sm:$0xf]
        %v2286 = vld [vmem:[#allocation9 + $0x17c] sm:$0xf]
        %v2287 = vld [vmem:[#allocation9 + $0x180] sm:$0xf]
        %v2288 = vld [vmem:[#allocation9 + $0x184] sm:$0xf]
        %v2289 = vld [vmem:[#allocation9 + $0x188] sm:$0xf]
        %v2290 = vld [vmem:[#allocation9 + $0x18c] sm:$0xf]
        %v2291 = vld [vmem:[#allocation9 + $0x190] sm:$0xf]
        %v2292 = vld [vmem:[#allocation9 + $0x194] sm:$0xf]
        %v2293 = vld [vmem:[#allocation9 + $0x198] sm:$0xf]
        %v2294 = vld [vmem:[#allocation9 + $0x19c] sm:$0xf]
        %v2295 = vld [vmem:[#allocation9 + $0x1a0] sm:$0xf]
        %v2296 = vld [vmem:[#allocation9 + $0x1a4] sm:$0xf]
        %v2297 = vld [vmem:[#allocation9 + $0x1a8] sm:$0xf]
        %v2298 = vld [vmem:[#allocation9 + $0x1ac] sm:$0xf]
        %v2299 = vld [vmem:[#allocation9 + $0x1b0] sm:$0xf]
        %v2300 = vld [vmem:[#allocation9 + $0x1b4] sm:$0xf]
        %v2301 = vld [vmem:[#allocation9 + $0x1b8] sm:$0xf]
        %v2302 = vld [vmem:[#allocation9 + $0x1bc] sm:$0xf]
        %v2303 = vld [vmem:[#allocation9 + $0x1c0] sm:$0xf]
        %v2304 = vld [vmem:[#allocation9 + $0x1c4] sm:$0xf]
        %v2305 = vld [vmem:[#allocation9 + $0x1c8] sm:$0xf]
        %v2306 = vld [vmem:[#allocation9 + $0x1cc] sm:$0xf]
        %v2307 = vld [vmem:[#allocation9 + $0x1d0] sm:$0xf]
        %v2308 = vld [vmem:[#allocation9 + $0x1d4] sm:$0xf]
        %v2309 = vld [vmem:[#allocation9 + $0x1d8] sm:$0xf]
        %v2310 = vld [vmem:[#allocation9 + $0x1dc] sm:$0xf]
        %v2311 = vld [vmem:[#allocation9 + $0x1e0] sm:$0xf]
        %v2312 = vld [vmem:[#allocation9 + $0x1e4] sm:$0xf]
        %v2313 = vld [vmem:[#allocation9 + $0x1e8] sm:$0xf]
        %v2314 = vld [vmem:[#allocation9 + $0x1ec] sm:$0xf]
        %v2315 = vld [vmem:[#allocation9 + $0x1f0] sm:$0xf]
        %v2316 = vld [vmem:[#allocation9 + $0x1f4] sm:$0xf]
        %v2317 = vld [vmem:[#allocation9 + $0x1f8] sm:$0xf]
        %v2318 = vld [vmem:[#allocation9 + $0x1fc] sm:$0xf]
        %v2319 = vld [vmem:[#allocation9 + $0x200] sm:$0xf]
        %v2320 = vld [vmem:[#allocation9 + $0x204] sm:$0xf]
        %v2321 = vld [vmem:[#allocation9 + $0x208] sm:$0xf]
        %v2322 = vld [vmem:[#allocation9 + $0x20c] sm:$0xf]
        %v2323 = vld [vmem:[#allocation9 + $0x210] sm:$0xf]
        %v2324 = vld [vmem:[#allocation9 + $0x214] sm:$0xf]
        %v2325 = vld [vmem:[#allocation9 + $0x218] sm:$0xf]
        %v2326 = vld [vmem:[#allocation9 + $0x21c] sm:$0xf]
        %v2327 = vld [vmem:[#allocation9 + $0x220] sm:$0xf]
        %v2328 = vld [vmem:[#allocation9 + $0x224] sm:$0xf]
        %v2329 = vld [vmem:[#allocation9 + $0x228] sm:$0xf]
        %v2330 = vld [vmem:[#allocation9 + $0x22c] sm:$0xf]
        %v2331 = vld [vmem:[#allocation9 + $0x230] sm:$0xf]
        %v2332 = vld [vmem:[#allocation9 + $0x234] sm:$0xf]
        %v2333 = vld [vmem:[#allocation9 + $0x238] sm:$0xf]
        %v2334 = vld [vmem:[#allocation9 + $0x23c] sm:$0xf]
        %v2335 = vld [vmem:[%s4] sm:$0x1]
        %v2337 = vperm.slane %v2335, 0
        %v2499 = vunpack.c.l.b16 %v2031
        %v2500 = vunpack.c.h.b16 %v2031
        %v2501 = vunpack.c.l.b16 %v2032
        %v2502 = vunpack.c.h.b16 %v2032
        %v2503 = vunpack.c.l.b16 %v2033
        %v2504 = vunpack.c.h.b16 %v2033
        %v2505 = vunpack.c.l.b16 %v2034
        %v2506 = vunpack.c.h.b16 %v2034
        %v2507 = vunpack.c.l.b16 %v2035
        %v2508 = vunpack.c.l.b16 %v2036
        %v2509 = vunpack.c.h.b16 %v2036
        %v2510 = vunpack.c.l.b16 %v2037
        %v2511 = vunpack.c.h.b16 %v2037
        %v2512 = vunpack.c.l.b16 %v2038
        %v2513 = vunpack.c.h.b16 %v2038
        %v2514 = vunpack.c.l.b16 %v2039
        %v2515 = vunpack.c.h.b16 %v2039
        %v2516 = vunpack.c.l.b16 %v2040
        %v2517 = vunpack.c.l.b16 %v2041
        %v2518 = vunpack.c.h.b16 %v2041
        %v2519 = vunpack.c.l.b16 %v2042
        %v2520 = vunpack.c.h.b16 %v2042
        %v2521 = vunpack.c.l.b16 %v2043
        %v2522 = vunpack.c.h.b16 %v2043
        %v2523 = vunpack.c.l.b16 %v2044
        %v2524 = vunpack.c.h.b16 %v2044
        %v2525 = vunpack.c.l.b16 %v2045
        %v2526 = vunpack.c.l.b16 %v2046
        %v2527 = vunpack.c.h.b16 %v2046
        %v2528 = vunpack.c.l.b16 %v2047
        %v2529 = vunpack.c.h.b16 %v2047
        %v2530 = vunpack.c.l.b16 %v2048
        %v2531 = vunpack.c.h.b16 %v2048
        %v2532 = vunpack.c.l.b16 %v2049
        %v2533 = vunpack.c.h.b16 %v2049
        %v2534 = vunpack.c.l.b16 %v2050
        %v2535 = vunpack.c.l.b16 %v2051
        %v2536 = vunpack.c.h.b16 %v2051
        %v2537 = vunpack.c.l.b16 %v2052
        %v2538 = vunpack.c.h.b16 %v2052
        %v2539 = vunpack.c.l.b16 %v2053
        %v2540 = vunpack.c.h.b16 %v2053
        %v2541 = vunpack.c.l.b16 %v2054
        %v2542 = vunpack.c.h.b16 %v2054
        %v2543 = vunpack.c.l.b16 %v2055
        %v2544 = vunpack.c.l.b16 %v2056
        %v2545 = vunpack.c.h.b16 %v2056
        %v2546 = vunpack.c.l.b16 %v2057
        %v2547 = vunpack.c.h.b16 %v2057
        %v2548 = vunpack.c.l.b16 %v2058
        %v2549 = vunpack.c.h.b16 %v2058
        %v2550 = vunpack.c.l.b16 %v2059
        %v2551 = vunpack.c.h.b16 %v2059
        %v2552 = vunpack.c.l.b16 %v2060
        %v2553 = vunpack.c.l.b16 %v2061
        %v2554 = vunpack.c.h.b16 %v2061
        %v2555 = vunpack.c.l.b16 %v2062
        %v2556 = vunpack.c.h.b16 %v2062
        %v2557 = vunpack.c.l.b16 %v2063
        %v2558 = vunpack.c.h.b16 %v2063
        %v2559 = vunpack.c.l.b16 %v2064
        %v2560 = vunpack.c.h.b16 %v2064
        %v2561 = vunpack.c.l.b16 %v2065
        %v2562 = vunpack.c.l.b16 %v2066
        %v2563 = vunpack.c.h.b16 %v2066
        %v2564 = vunpack.c.l.b16 %v2067
        %v2565 = vunpack.c.h.b16 %v2067
        %v2566 = vunpack.c.l.b16 %v2068
        %v2567 = vunpack.c.h.b16 %v2068
        %v2568 = vunpack.c.l.b16 %v2069
        %v2569 = vunpack.c.h.b16 %v2069
        %v2570 = vunpack.c.l.b16 %v2070
        %v2571 = vunpack.c.l.b16 %v2071
        %v2572 = vunpack.c.h.b16 %v2071
        %v2573 = vunpack.c.l.b16 %v2072
        %v2574 = vunpack.c.h.b16 %v2072
        %v2575 = vunpack.c.l.b16 %v2073
        %v2576 = vunpack.c.h.b16 %v2073
        %v2577 = vunpack.c.l.b16 %v2074
        %v2578 = vunpack.c.h.b16 %v2074
        %v2579 = vunpack.c.l.b16 %v2075
        %v2580 = vunpack.c.l.b16 %v2076
        %v2581 = vunpack.c.h.b16 %v2076
        %v2582 = vunpack.c.l.b16 %v2077
        %v2583 = vunpack.c.h.b16 %v2077
        %v2584 = vunpack.c.l.b16 %v2078
        %v2585 = vunpack.c.h.b16 %v2078
        %v2586 = vunpack.c.l.b16 %v2079
        %v2587 = vunpack.c.h.b16 %v2079
        %v2588 = vunpack.c.l.b16 %v2080
        %v2589 = vunpack.c.l.b16 %v2081
        %v2590 = vunpack.c.h.b16 %v2081
        %v2591 = vunpack.c.l.b16 %v2082
        %v2592 = vunpack.c.h.b16 %v2082
        %v2593 = vunpack.c.l.b16 %v2083
        %v2594 = vunpack.c.h.b16 %v2083
        %v2595 = vunpack.c.l.b16 %v2084
        %v2596 = vunpack.c.h.b16 %v2084
        %v2597 = vunpack.c.l.b16 %v2085
        %v2598 = vunpack.c.l.b16 %v2086
        %v2599 = vunpack.c.h.b16 %v2086
        %v2600 = vunpack.c.l.b16 %v2087
        %v2601 = vunpack.c.h.b16 %v2087
        %v2602 = vunpack.c.l.b16 %v2088
        %v2603 = vunpack.c.h.b16 %v2088
        %v2604 = vunpack.c.l.b16 %v2089
        %v2605 = vunpack.c.h.b16 %v2089
        %v2606 = vunpack.c.l.b16 %v2090
        %v2607 = vunpack.c.l.b16 %v2091
        %v2608 = vunpack.c.h.b16 %v2091
        %v2609 = vunpack.c.l.b16 %v2092
        %v2610 = vunpack.c.h.b16 %v2092
        %v2611 = vunpack.c.l.b16 %v2093
        %v2612 = vunpack.c.h.b16 %v2093
        %v2613 = vunpack.c.l.b16 %v2094
        %v2614 = vunpack.c.h.b16 %v2094
        %v2615 = vunpack.c.l.b16 %v2095
        %v2616 = vunpack.c.l.b16 %v2096
        %v2617 = vunpack.c.h.b16 %v2096
        %v2618 = vunpack.c.l.b16 %v2097
        %v2619 = vunpack.c.h.b16 %v2097
        %v2620 = vunpack.c.l.b16 %v2098
        %v2621 = vunpack.c.h.b16 %v2098
        %v2622 = vunpack.c.l.b16 %v2099
        %v2623 = vunpack.c.h.b16 %v2099
        %v2624 = vunpack.c.l.b16 %v2100
        %v2625 = vunpack.c.l.b16 %v2101
        %v2626 = vunpack.c.h.b16 %v2101
        %v2627 = vunpack.c.l.b16 %v2102
        %v2628 = vunpack.c.h.b16 %v2102
        %v2629 = vunpack.c.l.b16 %v2103
        %v2630 = vunpack.c.h.b16 %v2103
        %v2631 = vunpack.c.l.b16 %v2104
        %v2632 = vunpack.c.h.b16 %v2104
        %v2633 = vunpack.c.l.b16 %v2105
        %v2634 = vunpack.c.l.b16 %v2106
        %v2635 = vunpack.c.h.b16 %v2106
        %v2636 = vunpack.c.l.b16 %v2107
        %v2637 = vunpack.c.h.b16 %v2107
        %v2638 = vunpack.c.l.b16 %v2108
        %v2639 = vunpack.c.h.b16 %v2108
        %v2640 = vunpack.c.l.b16 %v2109
        %v2641 = vunpack.c.h.b16 %v2109
        %v2642 = vunpack.c.l.b16 %v2110
        %v2643 = vunpack.c.l.b16 %v2111
        %v2644 = vunpack.c.h.b16 %v2111
        %v2645 = vunpack.c.l.b16 %v2112
        %v2646 = vunpack.c.h.b16 %v2112
        %v2647 = vunpack.c.l.b16 %v2113
        %v2648 = vunpack.c.h.b16 %v2113
        %v2649 = vunpack.c.l.b16 %v2114
        %v2650 = vunpack.c.h.b16 %v2114
        %v2651 = vunpack.c.l.b16 %v2115
        %v2652 = vunpack.c.l.b16 %v2116
        %v2653 = vunpack.c.h.b16 %v2116
        %v2654 = vunpack.c.l.b16 %v2117
        %v2655 = vunpack.c.h.b16 %v2117
        %v2656 = vunpack.c.l.b16 %v2118
        %v2657 = vunpack.c.h.b16 %v2118
        %v2658 = vunpack.c.l.b16 %v2119
        %v2659 = vunpack.c.h.b16 %v2119
        %v2660 = vunpack.c.l.b16 %v2120
        %v2661 = vunpack.c.l.b16 %v2121
        %v2662 = vunpack.c.h.b16 %v2121
        %v2663 = vunpack.c.l.b16 %v2122
        %v2664 = vunpack.c.h.b16 %v2122
        %v2665 = vunpack.c.l.b16 %v2123
        %v2666 = vunpack.c.h.b16 %v2123
        %v2667 = vunpack.c.l.b16 %v2124
        %v2668 = vunpack.c.h.b16 %v2124
        %v2669 = vunpack.c.l.b16 %v2125
        %v2670 = vunpack.c.l.b16 %v2126
        %v2671 = vunpack.c.h.b16 %v2126
        %v2672 = vunpack.c.l.b16 %v2127
        %v2673 = vunpack.c.h.b16 %v2127
        %v2674 = vunpack.c.l.b16 %v2128
        %v2675 = vunpack.c.h.b16 %v2128
        %v2676 = vunpack.c.l.b16 %v2129
        %v2677 = vunpack.c.h.b16 %v2129
        %v2678 = vunpack.c.l.b16 %v2130
        %v2679 = vunpack.c.l.b16 %v2131
        %v2680 = vunpack.c.h.b16 %v2131
        %v2681 = vunpack.c.l.b16 %v2132
        %v2682 = vunpack.c.h.b16 %v2132
        %v2683 = vunpack.c.l.b16 %v2133
        %v2684 = vunpack.c.h.b16 %v2133
        %v2685 = vunpack.c.l.b16 %v2134
        %v2686 = vunpack.c.h.b16 %v2134
        %v2687 = vunpack.c.l.b16 %v2135
        %v2688 = vunpack.c.l.b16 %v2136
        %v2689 = vunpack.c.h.b16 %v2136
        %v2690 = vunpack.c.l.b16 %v2137
        %v2691 = vunpack.c.h.b16 %v2137
        %v2692 = vunpack.c.l.b16 %v2138
        %v2693 = vunpack.c.h.b16 %v2138
        %v2694 = vunpack.c.l.b16 %v2139
        %v2695 = vunpack.c.h.b16 %v2139
        %v2696 = vunpack.c.l.b16 %v2140
        %v2697 = vunpack.c.l.b16 %v2141
        %v2698 = vunpack.c.h.b16 %v2141
        %v2699 = vunpack.c.l.b16 %v2142
        %v2700 = vunpack.c.h.b16 %v2142
        %v2701 = vunpack.c.l.b16 %v2143
        %v2702 = vunpack.c.h.b16 %v2143
        %v2703 = vunpack.c.l.b16 %v2144
        %v2704 = vunpack.c.h.b16 %v2144
        %v2705 = vunpack.c.l.b16 %v2145
        %v2706 = vunpack.c.l.b16 %v2146
        %v2707 = vunpack.c.h.b16 %v2146
        %v2708 = vunpack.c.l.b16 %v2147
        %v2709 = vunpack.c.h.b16 %v2147
        %v2710 = vunpack.c.l.b16 %v2148
        %v2711 = vunpack.c.h.b16 %v2148
        %v2712 = vunpack.c.l.b16 %v2149
        %v2713 = vunpack.c.h.b16 %v2149
        %v2714 = vunpack.c.l.b16 %v2150
        %v2715 = vunpack.c.l.b16 %v2151
        %v2716 = vunpack.c.h.b16 %v2151
        %v2717 = vunpack.c.l.b16 %v2152
        %v2718 = vunpack.c.h.b16 %v2152
        %v2719 = vunpack.c.l.b16 %v2153
        %v2720 = vunpack.c.h.b16 %v2153
        %v2721 = vunpack.c.l.b16 %v2154
        %v2722 = vunpack.c.h.b16 %v2154
        %v2723 = vunpack.c.l.b16 %v2155
        %v2724 = vunpack.c.l.b16 %v2156
        %v2725 = vunpack.c.h.b16 %v2156
        %v2726 = vunpack.c.l.b16 %v2157
        %v2727 = vunpack.c.h.b16 %v2157
        %v2728 = vunpack.c.l.b16 %v2158
        %v2729 = vunpack.c.h.b16 %v2158
        %v2730 = vunpack.c.l.b16 %v2159
        %v2731 = vunpack.c.h.b16 %v2159
        %v2732 = vunpack.c.l.b16 %v2160
        %v2733 = vunpack.c.l.b16 %v2161
        %v2734 = vunpack.c.h.b16 %v2161
        %v2735 = vunpack.c.l.b16 %v2162
        %v2736 = vunpack.c.h.b16 %v2162
        %v2737 = vunpack.c.l.b16 %v2163
        %v2738 = vunpack.c.h.b16 %v2163
        %v2739 = vunpack.c.l.b16 %v2164
        %v2740 = vunpack.c.h.b16 %v2164
        %v2741 = vunpack.c.l.b16 %v2165
        %v2742 = vunpack.c.l.b16 %v2166
        %v2743 = vunpack.c.h.b16 %v2166
        %v2744 = vunpack.c.l.b16 %v2167
        %v2745 = vunpack.c.h.b16 %v2167
        %v2746 = vunpack.c.l.b16 %v2168
        %v2747 = vunpack.c.h.b16 %v2168
        %v2748 = vunpack.c.l.b16 %v2169
        %v2749 = vunpack.c.h.b16 %v2169
        %v2750 = vunpack.c.l.b16 %v2170
        %v2751 = vunpack.c.l.b16 %v2171
        %v2752 = vunpack.c.h.b16 %v2171
        %v2753 = vunpack.c.l.b16 %v2172
        %v2754 = vunpack.c.h.b16 %v2172
        %v2755 = vunpack.c.l.b16 %v2173
        %v2756 = vunpack.c.h.b16 %v2173
        %v2757 = vunpack.c.l.b16 %v2174
        %v2758 = vunpack.c.h.b16 %v2174
        %v2759 = vunpack.c.l.b16 %v2175
        %v2760 = vunpack.c.l.b16 %v2176
        %v2761 = vunpack.c.h.b16 %v2176
        %v2762 = vunpack.c.l.b16 %v2177
        %v2763 = vunpack.c.h.b16 %v2177
        %v2764 = vunpack.c.l.b16 %v2178
        %v2765 = vunpack.c.h.b16 %v2178
        %v2766 = vunpack.c.l.b16 %v2179
        %v2767 = vunpack.c.h.b16 %v2179
        %v2768 = vunpack.c.l.b16 %v2180
        %v2769 = vunpack.c.l.b16 %v2181
        %v2770 = vunpack.c.h.b16 %v2181
        %v2771 = vunpack.c.l.b16 %v2182
        %v2772 = vunpack.c.h.b16 %v2182
        %v2773 = vunpack.c.l.b16 %v2183
        %v2774 = vunpack.c.h.b16 %v2183
        %v2775 = vunpack.c.l.b16 %v2184
        %v2776 = vunpack.c.h.b16 %v2184
        %v2777 = vunpack.c.l.b16 %v2185
        %v2778 = vunpack.c.l.b16 %v2186
        %v2779 = vunpack.c.h.b16 %v2186
        %v2780 = vunpack.c.l.b16 %v2187
        %v2781 = vunpack.c.h.b16 %v2187
        %v2782 = vunpack.c.l.b16 %v2188
        %v2783 = vunpack.c.h.b16 %v2188
        %v2784 = vunpack.c.l.b16 %v2189
        %v2785 = vunpack.c.h.b16 %v2189
        %v2786 = vunpack.c.l.b16 %v2190
        %v2787 = vpack.c.b16 %v2508, %v2499
        %v2788 = vpack.c.b16 %v2509, %v2500
        %v2789 = vpack.c.b16 %v2510, %v2501
        %v2790 = vpack.c.b16 %v2511, %v2502
        %v2791 = vpack.c.b16 %v2512, %v2503
        %v2792 = vpack.c.b16 %v2513, %v2504
        %v2793 = vpack.c.b16 %v2514, %v2505
        %v2794 = vpack.c.b16 %v2515, %v2506
        %v2795 = vpack.c.b16 %v2516, %v2507
        %v2796 = vpack.c.b16 %v2526, %v2517
        %v2797 = vpack.c.b16 %v2527, %v2518
        %v2798 = vpack.c.b16 %v2528, %v2519
        %v2799 = vpack.c.b16 %v2529, %v2520
        %v2800 = vpack.c.b16 %v2530, %v2521
        %v2801 = vpack.c.b16 %v2531, %v2522
        %v2802 = vpack.c.b16 %v2532, %v2523
        %v2803 = vpack.c.b16 %v2533, %v2524
        %v2804 = vpack.c.b16 %v2534, %v2525
        %v2805 = vpack.c.b16 %v2544, %v2535
        %v2806 = vpack.c.b16 %v2545, %v2536
        %v2807 = vpack.c.b16 %v2546, %v2537
        %v2808 = vpack.c.b16 %v2547, %v2538
        %v2809 = vpack.c.b16 %v2548, %v2539
        %v2810 = vpack.c.b16 %v2549, %v2540
        %v2811 = vpack.c.b16 %v2550, %v2541
        %v2812 = vpack.c.b16 %v2551, %v2542
        %v2813 = vpack.c.b16 %v2552, %v2543
        %v2814 = vpack.c.b16 %v2562, %v2553
        %v2815 = vpack.c.b16 %v2563, %v2554
        %v2816 = vpack.c.b16 %v2564, %v2555
        %v2817 = vpack.c.b16 %v2565, %v2556
        %v2818 = vpack.c.b16 %v2566, %v2557
        %v2819 = vpack.c.b16 %v2567, %v2558
        %v2820 = vpack.c.b16 %v2568, %v2559
        %v2821 = vpack.c.b16 %v2569, %v2560
        %v2822 = vpack.c.b16 %v2570, %v2561
        %v2823 = vpack.c.b16 %v2580, %v2571
        %v2824 = vpack.c.b16 %v2581, %v2572
        %v2825 = vpack.c.b16 %v2582, %v2573
        %v2826 = vpack.c.b16 %v2583, %v2574
        %v2827 = vpack.c.b16 %v2584, %v2575
        %v2828 = vpack.c.b16 %v2585, %v2576
        %v2829 = vpack.c.b16 %v2586, %v2577
        %v2830 = vpack.c.b16 %v2587, %v2578
        %v2831 = vpack.c.b16 %v2588, %v2579
        %v2832 = vpack.c.b16 %v2598, %v2589
        %v2833 = vpack.c.b16 %v2599, %v2590
        %v2834 = vpack.c.b16 %v2600, %v2591
        %v2835 = vpack.c.b16 %v2601, %v2592
        %v2836 = vpack.c.b16 %v2602, %v2593
        %v2837 = vpack.c.b16 %v2603, %v2594
        %v2838 = vpack.c.b16 %v2604, %v2595
        %v2839 = vpack.c.b16 %v2605, %v2596
        %v2840 = vpack.c.b16 %v2606, %v2597
        %v2841 = vpack.c.b16 %v2616, %v2607
        %v2842 = vpack.c.b16 %v2617, %v2608
        %v2843 = vpack.c.b16 %v2618, %v2609
        %v2844 = vpack.c.b16 %v2619, %v2610
        %v2845 = vpack.c.b16 %v2620, %v2611
        %v2846 = vpack.c.b16 %v2621, %v2612
        %v2847 = vpack.c.b16 %v2622, %v2613
        %v2848 = vpack.c.b16 %v2623, %v2614
        %v2849 = vpack.c.b16 %v2624, %v2615
        %v2850 = vpack.c.b16 %v2634, %v2625
        %v2851 = vpack.c.b16 %v2635, %v2626
        %v2852 = vpack.c.b16 %v2636, %v2627
        %v2853 = vpack.c.b16 %v2637, %v2628
        %v2854 = vpack.c.b16 %v2638, %v2629
        %v2855 = vpack.c.b16 %v2639, %v2630
        %v2856 = vpack.c.b16 %v2640, %v2631
        %v2857 = vpack.c.b16 %v2641, %v2632
        %v2858 = vpack.c.b16 %v2642, %v2633
        %v2859 = vpack.c.b16 %v2652, %v2643
        %v2860 = vpack.c.b16 %v2653, %v2644
        %v2861 = vpack.c.b16 %v2654, %v2645
        %v2862 = vpack.c.b16 %v2655, %v2646
        %v2863 = vpack.c.b16 %v2656, %v2647
        %v2864 = vpack.c.b16 %v2657, %v2648
        %v2865 = vpack.c.b16 %v2658, %v2649
        %v2866 = vpack.c.b16 %v2659, %v2650
        %v2867 = vpack.c.b16 %v2660, %v2651
        %v2868 = vpack.c.b16 %v2670, %v2661
        %v2869 = vpack.c.b16 %v2671, %v2662
        %v2870 = vpack.c.b16 %v2672, %v2663
        %v2871 = vpack.c.b16 %v2673, %v2664
        %v2872 = vpack.c.b16 %v2674, %v2665
        %v2873 = vpack.c.b16 %v2675, %v2666
        %v2874 = vpack.c.b16 %v2676, %v2667
        %v2875 = vpack.c.b16 %v2677, %v2668
        %v2876 = vpack.c.b16 %v2678, %v2669
        %v2877 = vpack.c.b16 %v2688, %v2679
        %v2878 = vpack.c.b16 %v2689, %v2680
        %v2879 = vpack.c.b16 %v2690, %v2681
        %v2880 = vpack.c.b16 %v2691, %v2682
        %v2881 = vpack.c.b16 %v2692, %v2683
        %v2882 = vpack.c.b16 %v2693, %v2684
        %v2883 = vpack.c.b16 %v2694, %v2685
        %v2884 = vpack.c.b16 %v2695, %v2686
        %v2885 = vpack.c.b16 %v2696, %v2687
        %v2886 = vpack.c.b16 %v2706, %v2697
        %v2887 = vpack.c.b16 %v2707, %v2698
        %v2888 = vpack.c.b16 %v2708, %v2699
        %v2889 = vpack.c.b16 %v2709, %v2700
        %v2890 = vpack.c.b16 %v2710, %v2701
        %v2891 = vpack.c.b16 %v2711, %v2702
        %v2892 = vpack.c.b16 %v2712, %v2703
        %v2893 = vpack.c.b16 %v2713, %v2704
        %v2894 = vpack.c.b16 %v2714, %v2705
        %v2895 = vpack.c.b16 %v2724, %v2715
        %v2896 = vpack.c.b16 %v2725, %v2716
        %v2897 = vpack.c.b16 %v2726, %v2717
        %v2898 = vpack.c.b16 %v2727, %v2718
        %v2899 = vpack.c.b16 %v2728, %v2719
        %v2900 = vpack.c.b16 %v2729, %v2720
        %v2901 = vpack.c.b16 %v2730, %v2721
        %v2902 = vpack.c.b16 %v2731, %v2722
        %v2903 = vpack.c.b16 %v2732, %v2723
        %v2904 = vpack.c.b16 %v2742, %v2733
        %v2905 = vpack.c.b16 %v2743, %v2734
        %v2906 = vpack.c.b16 %v2744, %v2735
        %v2907 = vpack.c.b16 %v2745, %v2736
        %v2908 = vpack.c.b16 %v2746, %v2737
        %v2909 = vpack.c.b16 %v2747, %v2738
        %v2910 = vpack.c.b16 %v2748, %v2739
        %v2911 = vpack.c.b16 %v2749, %v2740
        %v2912 = vpack.c.b16 %v2750, %v2741
        %v2913 = vpack.c.b16 %v2760, %v2751
        %v2914 = vpack.c.b16 %v2761, %v2752
        %v2915 = vpack.c.b16 %v2762, %v2753
        %v2916 = vpack.c.b16 %v2763, %v2754
        %v2917 = vpack.c.b16 %v2764, %v2755
        %v2918 = vpack.c.b16 %v2765, %v2756
        %v2919 = vpack.c.b16 %v2766, %v2757
        %v2920 = vpack.c.b16 %v2767, %v2758
        %v2921 = vpack.c.b16 %v2768, %v2759
        %v2922 = vpack.c.b16 %v2778, %v2769
        %v2923 = vpack.c.b16 %v2779, %v2770
        %v2924 = vpack.c.b16 %v2780, %v2771
        %v2925 = vpack.c.b16 %v2781, %v2772
        %v2926 = vpack.c.b16 %v2782, %v2773
        %v2927 = vpack.c.b16 %v2783, %v2774
        %v2928 = vpack.c.b16 %v2784, %v2775
        %v2929 = vpack.c.b16 %v2785, %v2776
        %v2930 = vpack.c.b16 %v2786, %v2777
        %v3219 = vunpack.c.l.b16 %v2191
        %v3220 = vunpack.c.l.b16 %v2192
        %v3221 = vunpack.c.l.b16 %v2193
        %v3222 = vunpack.c.l.b16 %v2194
        %v3223 = vunpack.c.l.b16 %v2195
        %v3224 = vunpack.c.l.b16 %v2196
        %v3225 = vunpack.c.l.b16 %v2197
        %v3226 = vunpack.c.l.b16 %v2198
        %v3227 = vunpack.c.l.b16 %v2199
        %v3228 = vunpack.c.l.b16 %v2200
        %v3229 = vunpack.c.l.b16 %v2201
        %v3230 = vunpack.c.l.b16 %v2202
        %v3231 = vunpack.c.l.b16 %v2203
        %v3232 = vunpack.c.l.b16 %v2204
        %v3233 = vunpack.c.l.b16 %v2205
        %v3234 = vunpack.c.l.b16 %v2206
        %v3235 = vunpack.c.l.b16 %v2207
        %v3236 = vunpack.c.l.b16 %v2208
        %v3237 = vunpack.c.l.b16 %v2209
        %v3238 = vunpack.c.l.b16 %v2210
        %v3239 = vunpack.c.l.b16 %v2211
        %v3240 = vunpack.c.l.b16 %v2212
        %v3241 = vunpack.c.l.b16 %v2213
        %v3242 = vunpack.c.l.b16 %v2214
        %v3243 = vunpack.c.l.b16 %v2215
        %v3244 = vunpack.c.l.b16 %v2216
        %v3245 = vunpack.c.l.b16 %v2217
        %v3246 = vunpack.c.l.b16 %v2218
        %v3247 = vunpack.c.l.b16 %v2219
        %v3248 = vunpack.c.l.b16 %v2220
        %v3249 = vunpack.c.l.b16 %v2221
        %v3250 = vunpack.c.l.b16 %v2222
        %v3251 = vunpack.c.l.b16 %v2223
        %v3252 = vunpack.c.l.b16 %v2224
        %v3253 = vunpack.c.l.b16 %v2225
        %v3254 = vunpack.c.l.b16 %v2226
        %v3255 = vunpack.c.l.b16 %v2227
        %v3256 = vunpack.c.l.b16 %v2228
        %v3257 = vunpack.c.l.b16 %v2229
        %v3258 = vunpack.c.l.b16 %v2230
        %v3259 = vunpack.c.l.b16 %v2231
        %v3260 = vunpack.c.l.b16 %v2232
        %v3261 = vunpack.c.l.b16 %v2233
        %v3262 = vunpack.c.l.b16 %v2234
        %v3263 = vunpack.c.l.b16 %v2235
        %v3264 = vunpack.c.l.b16 %v2236
        %v3265 = vunpack.c.l.b16 %v2237
        %v3266 = vunpack.c.l.b16 %v2238
        %v3267 = vunpack.c.l.b16 %v2239
        %v3268 = vunpack.c.l.b16 %v2240
        %v3269 = vunpack.c.l.b16 %v2241
        %v3270 = vunpack.c.l.b16 %v2242
        %v3271 = vunpack.c.l.b16 %v2243
        %v3272 = vunpack.c.l.b16 %v2244
        %v3273 = vunpack.c.l.b16 %v2245
        %v3274 = vunpack.c.l.b16 %v2246
        %v3275 = vunpack.c.l.b16 %v2247
        %v3276 = vunpack.c.l.b16 %v2248
        %v3277 = vunpack.c.l.b16 %v2249
        %v3278 = vunpack.c.l.b16 %v2250
        %v3279 = vunpack.c.l.b16 %v2251
        %v3280 = vunpack.c.l.b16 %v2252
        %v3281 = vunpack.c.l.b16 %v2253
        %v3282 = vunpack.c.l.b16 %v2254
        %v3283 = vunpack.c.l.b16 %v2255
        %v3284 = vunpack.c.l.b16 %v2256
        %v3285 = vunpack.c.l.b16 %v2257
        %v3286 = vunpack.c.l.b16 %v2258
        %v3287 = vunpack.c.l.b16 %v2259
        %v3288 = vunpack.c.l.b16 %v2260
        %v3289 = vunpack.c.l.b16 %v2261
        %v3290 = vunpack.c.l.b16 %v2262
        %v3291 = vunpack.c.l.b16 %v2263
        %v3292 = vunpack.c.l.b16 %v2264
        %v3293 = vunpack.c.l.b16 %v2265
        %v3294 = vunpack.c.l.b16 %v2266
        %v3295 = vunpack.c.l.b16 %v2267
        %v3296 = vunpack.c.l.b16 %v2268
        %v3297 = vunpack.c.l.b16 %v2269
        %v3298 = vunpack.c.l.b16 %v2270
        %v3299 = vunpack.c.l.b16 %v2271
        %v3300 = vunpack.c.l.b16 %v2272
        %v3301 = vunpack.c.l.b16 %v2273
        %v3302 = vunpack.c.l.b16 %v2274
        %v3303 = vunpack.c.l.b16 %v2275
        %v3304 = vunpack.c.l.b16 %v2276
        %v3305 = vunpack.c.l.b16 %v2277
        %v3306 = vunpack.c.l.b16 %v2278
        %v3307 = vunpack.c.l.b16 %v2279
        %v3308 = vunpack.c.l.b16 %v2280
        %v3309 = vunpack.c.l.b16 %v2281
        %v3310 = vunpack.c.l.b16 %v2282
        %v3311 = vunpack.c.l.b16 %v2283
        %v3312 = vunpack.c.l.b16 %v2284
        %v3313 = vunpack.c.l.b16 %v2285
        %v3314 = vunpack.c.l.b16 %v2286
        %v3315 = vunpack.c.l.b16 %v2287
        %v3316 = vunpack.c.l.b16 %v2288
        %v3317 = vunpack.c.l.b16 %v2289
        %v3318 = vunpack.c.l.b16 %v2290
        %v3319 = vunpack.c.l.b16 %v2291
        %v3320 = vunpack.c.l.b16 %v2292
        %v3321 = vunpack.c.l.b16 %v2293
        %v3322 = vunpack.c.l.b16 %v2294
        %v3323 = vunpack.c.l.b16 %v2295
        %v3324 = vunpack.c.l.b16 %v2296
        %v3325 = vunpack.c.l.b16 %v2297
        %v3326 = vunpack.c.l.b16 %v2298
        %v3327 = vunpack.c.l.b16 %v2299
        %v3328 = vunpack.c.l.b16 %v2300
        %v3329 = vunpack.c.l.b16 %v2301
        %v3330 = vunpack.c.l.b16 %v2302
        %v3331 = vunpack.c.l.b16 %v2303
        %v3332 = vunpack.c.l.b16 %v2304
        %v3333 = vunpack.c.l.b16 %v2305
        %v3334 = vunpack.c.l.b16 %v2306
        %v3335 = vunpack.c.l.b16 %v2307
        %v3336 = vunpack.c.l.b16 %v2308
        %v3337 = vunpack.c.l.b16 %v2309
        %v3338 = vunpack.c.l.b16 %v2310
        %v3339 = vunpack.c.l.b16 %v2311
        %v3340 = vunpack.c.l.b16 %v2312
        %v3341 = vunpack.c.l.b16 %v2313
        %v3342 = vunpack.c.l.b16 %v2314
        %v3343 = vunpack.c.l.b16 %v2315
        %v3344 = vunpack.c.l.b16 %v2316
        %v3345 = vunpack.c.l.b16 %v2317
        %v3346 = vunpack.c.l.b16 %v2318
        %v3347 = vunpack.c.l.b16 %v2319
        %v3348 = vunpack.c.l.b16 %v2320
        %v3349 = vunpack.c.l.b16 %v2321
        %v3350 = vunpack.c.l.b16 %v2322
        %v3351 = vunpack.c.l.b16 %v2323
        %v3352 = vunpack.c.l.b16 %v2324
        %v3353 = vunpack.c.l.b16 %v2325
        %v3354 = vunpack.c.l.b16 %v2326
        %v3355 = vunpack.c.l.b16 %v2327
        %v3356 = vunpack.c.l.b16 %v2328
        %v3357 = vunpack.c.l.b16 %v2329
        %v3358 = vunpack.c.l.b16 %v2330
        %v3359 = vunpack.c.l.b16 %v2331
        %v3360 = vunpack.c.l.b16 %v2332
        %v3361 = vunpack.c.l.b16 %v2333
        %v3362 = vunpack.c.l.b16 %v2334
        %v3363 = vpack.c.b16 %v3220, %v3219
        %v3364 = vpack.c.b16 %v3222, %v3221
        %v3365 = vpack.c.b16 %v3224, %v3223
        %v3366 = vpack.c.b16 %v3226, %v3225
        %v3367 = vpack.c.b16 %v3228, %v3227
        %v3368 = vpack.c.b16 %v3230, %v3229
        %v3369 = vpack.c.b16 %v3232, %v3231
        %v3370 = vpack.c.b16 %v3234, %v3233
        %v3371 = vpack.c.b16 %v3236, %v3235
        %v3372 = vpack.c.b16 %v3238, %v3237
        %v3373 = vpack.c.b16 %v3240, %v3239
        %v3374 = vpack.c.b16 %v3242, %v3241
        %v3375 = vpack.c.b16 %v3244, %v3243
        %v3376 = vpack.c.b16 %v3246, %v3245
        %v3377 = vpack.c.b16 %v3248, %v3247
        %v3378 = vpack.c.b16 %v3250, %v3249
        %v3379 = vpack.c.b16 %v3252, %v3251
        %v3380 = vpack.c.b16 %v3254, %v3253
        %v3381 = vpack.c.b16 %v3256, %v3255
        %v3382 = vpack.c.b16 %v3258, %v3257
        %v3383 = vpack.c.b16 %v3260, %v3259
        %v3384 = vpack.c.b16 %v3262, %v3261
        %v3385 = vpack.c.b16 %v3264, %v3263
        %v3386 = vpack.c.b16 %v3266, %v3265
        %v3387 = vpack.c.b16 %v3268, %v3267
        %v3388 = vpack.c.b16 %v3270, %v3269
        %v3389 = vpack.c.b16 %v3272, %v3271
        %v3390 = vpack.c.b16 %v3274, %v3273
        %v3391 = vpack.c.b16 %v3276, %v3275
        %v3392 = vpack.c.b16 %v3278, %v3277
        %v3393 = vpack.c.b16 %v3280, %v3279
        %v3394 = vpack.c.b16 %v3282, %v3281
        %v3395 = vpack.c.b16 %v3284, %v3283
        %v3396 = vpack.c.b16 %v3286, %v3285
        %v3397 = vpack.c.b16 %v3288, %v3287
        %v3398 = vpack.c.b16 %v3290, %v3289
        %v3399 = vpack.c.b16 %v3292, %v3291
        %v3400 = vpack.c.b16 %v3294, %v3293
        %v3401 = vpack.c.b16 %v3296, %v3295
        %v3402 = vpack.c.b16 %v3298, %v3297
        %v3403 = vpack.c.b16 %v3300, %v3299
        %v3404 = vpack.c.b16 %v3302, %v3301
        %v3405 = vpack.c.b16 %v3304, %v3303
        %v3406 = vpack.c.b16 %v3306, %v3305
        %v3407 = vpack.c.b16 %v3308, %v3307
        %v3408 = vpack.c.b16 %v3310, %v3309
        %v3409 = vpack.c.b16 %v3312, %v3311
        %v3410 = vpack.c.b16 %v3314, %v3313
        %v3411 = vpack.c.b16 %v3316, %v3315
        %v3412 = vpack.c.b16 %v3318, %v3317
        %v3413 = vpack.c.b16 %v3320, %v3319
        %v3414 = vpack.c.b16 %v3322, %v3321
        %v3415 = vpack.c.b16 %v3324, %v3323
        %v3416 = vpack.c.b16 %v3326, %v3325
        %v3417 = vpack.c.b16 %v3328, %v3327
        %v3418 = vpack.c.b16 %v3330, %v3329
        %v3419 = vpack.c.b16 %v3332, %v3331
        %v3420 = vpack.c.b16 %v3334, %v3333
        %v3421 = vpack.c.b16 %v3336, %v3335
        %v3422 = vpack.c.b16 %v3338, %v3337
        %v3423 = vpack.c.b16 %v3340, %v3339
        %v3424 = vpack.c.b16 %v3342, %v3341
        %v3425 = vpack.c.b16 %v3344, %v3343
        %v3426 = vpack.c.b16 %v3346, %v3345
        %v3427 = vpack.c.b16 %v3348, %v3347
        %v3428 = vpack.c.b16 %v3350, %v3349
        %v3429 = vpack.c.b16 %v3352, %v3351
        %v3430 = vpack.c.b16 %v3354, %v3353
        %v3431 = vpack.c.b16 %v3356, %v3355
        %v3432 = vpack.c.b16 %v3358, %v3357
        %v3433 = vpack.c.b16 %v3360, %v3359
        %v3434 = vpack.c.b16 %v3362, %v3361
        %3507 = vmatpush.bf16.msra.mxu0 %v3370
        %3508 = vmatpush.bf16.msra.mxu0 %v3369
        %3509 = vmatpush.bf16.msra.mxu0 %v3368
        %3510 = vmatpush.bf16.msra.mxu0 %v3367
        %3511 = vmatpush.bf16.msra.mxu0 %v3366
        %3512 = vmatpush.bf16.msra.mxu0 %v3365
        %3513 = vmatpush.bf16.msra.mxu0 %v3364
        %3514 = vmatpush.bf16.msra.mxu0 %v3363
        %3515 = vmatmul.bf16.gmra.mxu0 %v2787
        %v3516 = vpop.f32.mrf.mxu0
        %v3517 = vadd.f32 %v2337, %v3516
        %v3518 = vpop.f32.mrf.mxu0
        %v3519 = vadd.f32 %v2337, %v3518
        %3520 = vmatmul.bf16.gmra.mxu0 %v2796
        %v3521 = vpop.f32.mrf.mxu0
        %v3522 = vadd.f32 %v2337, %v3521
        %v3523 = vpop.f32.mrf.mxu0
        %v3524 = vadd.f32 %v2337, %v3523
        %3525 = vmatmul.bf16.gmra.mxu0 %v2805
        %v3526 = vpop.f32.mrf.mxu0
        %v3527 = vadd.f32 %v2337, %v3526
        %v3528 = vpop.f32.mrf.mxu0
        %v3529 = vadd.f32 %v2337, %v3528
        %3530 = vmatmul.bf16.gmra.mxu0 %v2814
        %v3531 = vpop.f32.mrf.mxu0
        %v3532 = vadd.f32 %v2337, %v3531
        %v3533 = vpop.f32.mrf.mxu0
        %v3534 = vadd.f32 %v2337, %v3533
        %3535 = vmatmul.bf16.gmra.mxu0 %v2823
        %v3536 = vpop.f32.mrf.mxu0
        %v3537 = vadd.f32 %v2337, %v3536
        %v3538 = vpop.f32.mrf.mxu0
        %v3539 = vadd.f32 %v2337, %v3538
        %3540 = vmatmul.bf16.gmra.mxu0 %v2832
        %v3541 = vpop.f32.mrf.mxu0
        %v3542 = vadd.f32 %v2337, %v3541
        %v3543 = vpop.f32.mrf.mxu0
        %v3544 = vadd.f32 %v2337, %v3543
        %3545 = vmatmul.bf16.gmra.mxu0 %v2841
        %v3546 = vpop.f32.mrf.mxu0
        %v3547 = vadd.f32 %v2337, %v3546
        %v3548 = vpop.f32.mrf.mxu0
        %v3549 = vadd.f32 %v2337, %v3548
        %3550 = vmatmul.bf16.gmra.mxu0 %v2850
        %v3551 = vpop.f32.mrf.mxu0
        %v3552 = vadd.f32 %v2337, %v3551
        %v3553 = vpop.f32.mrf.mxu0
        %v3554 = vadd.f32 %v2337, %v3553
        %3555 = vmatmul.bf16.gmra.mxu0 %v2859
        %v3556 = vpop.f32.mrf.mxu0
        %v3557 = vadd.f32 %v2337, %v3556
        %v3558 = vpop.f32.mrf.mxu0
        %v3559 = vadd.f32 %v2337, %v3558
        %3560 = vmatmul.bf16.gmra.mxu0 %v2868
        %v3561 = vpop.f32.mrf.mxu0
        %v3562 = vadd.f32 %v2337, %v3561
        %v3563 = vpop.f32.mrf.mxu0
        %v3564 = vadd.f32 %v2337, %v3563
        %3565 = vmatmul.bf16.gmra.mxu0 %v2877
        %v3566 = vpop.f32.mrf.mxu0
        %v3567 = vadd.f32 %v2337, %v3566
        %v3568 = vpop.f32.mrf.mxu0
        %v3569 = vadd.f32 %v2337, %v3568
        %3570 = vmatmul.bf16.gmra.mxu0 %v2886
        %v3571 = vpop.f32.mrf.mxu0
        %v3572 = vadd.f32 %v2337, %v3571
        %v3573 = vpop.f32.mrf.mxu0
        %v3574 = vadd.f32 %v2337, %v3573
        %3575 = vmatmul.bf16.gmra.mxu0 %v2895
        %v3576 = vpop.f32.mrf.mxu0
        %v3577 = vadd.f32 %v2337, %v3576
        %v3578 = vpop.f32.mrf.mxu0
        %v3579 = vadd.f32 %v2337, %v3578
        %3580 = vmatmul.bf16.gmra.mxu0 %v2904
        %v3581 = vpop.f32.mrf.mxu0
        %v3582 = vadd.f32 %v2337, %v3581
        %v3583 = vpop.f32.mrf.mxu0
        %v3584 = vadd.f32 %v2337, %v3583
        %3585 = vmatmul.bf16.gmra.mxu0 %v2913
        %v3586 = vpop.f32.mrf.mxu0
        %v3587 = vadd.f32 %v2337, %v3586
        %v3588 = vpop.f32.mrf.mxu0
        %v3589 = vadd.f32 %v2337, %v3588
        %3590 = vmatmul.bf16.gmra.mxu0 %v2922
        %v3591 = vpop.f32.mrf.mxu0
        %v3592 = vadd.f32 %v2337, %v3591
        %v3593 = vpop.f32.mrf.mxu0
        %v3594 = vadd.f32 %v2337, %v3593
        %3595 = vdwg.mxu0
        %3596 = vmatpush.bf16.msra.mxu0 %v3378
        %3597 = vmatpush.bf16.msra.mxu0 %v3377
        %3598 = vmatpush.bf16.msra.mxu0 %v3376
        %3599 = vmatpush.bf16.msra.mxu0 %v3375
        %3600 = vmatpush.bf16.msra.mxu0 %v3374
        %3601 = vmatpush.bf16.msra.mxu0 %v3373
        %3602 = vmatpush.bf16.msra.mxu0 %v3372
        %3603 = vmatpush.bf16.msra.mxu0 %v3371
        %3604 = vmatmul.bf16.gmra.mxu0 %v2788
        %v3605 = vpop.f32.mrf.mxu0
        %v3606 = vadd.f32 %v3517, %v3605
        %v3607 = vpop.f32.mrf.mxu0
        %v3608 = vadd.f32 %v3519, %v3607
        %3609 = vmatmul.bf16.gmra.mxu0 %v2797
        %v3610 = vpop.f32.mrf.mxu0
        %v3611 = vadd.f32 %v3522, %v3610
        %v3612 = vpop.f32.mrf.mxu0
        %v3613 = vadd.f32 %v3524, %v3612
        %3614 = vmatmul.bf16.gmra.mxu0 %v2806
        %v3615 = vpop.f32.mrf.mxu0
        %v3616 = vadd.f32 %v3527, %v3615
        %v3617 = vpop.f32.mrf.mxu0
        %v3618 = vadd.f32 %v3529, %v3617
        %3619 = vmatmul.bf16.gmra.mxu0 %v2815
        %v3620 = vpop.f32.mrf.mxu0
        %v3621 = vadd.f32 %v3532, %v3620
        %v3622 = vpop.f32.mrf.mxu0
        %v3623 = vadd.f32 %v3534, %v3622
        %3624 = vmatmul.bf16.gmra.mxu0 %v2824
        %v3625 = vpop.f32.mrf.mxu0
        %v3626 = vadd.f32 %v3537, %v3625
        %v3627 = vpop.f32.mrf.mxu0
        %v3628 = vadd.f32 %v3539, %v3627
        %3629 = vmatmul.bf16.gmra.mxu0 %v2833
        %v3630 = vpop.f32.mrf.mxu0
        %v3631 = vadd.f32 %v3542, %v3630
        %v3632 = vpop.f32.mrf.mxu0
        %v3633 = vadd.f32 %v3544, %v3632
        %3634 = vmatmul.bf16.gmra.mxu0 %v2842
        %v3635 = vpop.f32.mrf.mxu0
        %v3636 = vadd.f32 %v3547, %v3635
        %v3637 = vpop.f32.mrf.mxu0
        %v3638 = vadd.f32 %v3549, %v3637
        %3639 = vmatmul.bf16.gmra.mxu0 %v2851
        %v3640 = vpop.f32.mrf.mxu0
        %v3641 = vadd.f32 %v3552, %v3640
        %v3642 = vpop.f32.mrf.mxu0
        %v3643 = vadd.f32 %v3554, %v3642
        %3644 = vmatmul.bf16.gmra.mxu0 %v2860
        %v3645 = vpop.f32.mrf.mxu0
        %v3646 = vadd.f32 %v3557, %v3645
        %v3647 = vpop.f32.mrf.mxu0
        %v3648 = vadd.f32 %v3559, %v3647
        %3649 = vmatmul.bf16.gmra.mxu0 %v2869
        %v3650 = vpop.f32.mrf.mxu0
        %v3651 = vadd.f32 %v3562, %v3650
        %v3652 = vpop.f32.mrf.mxu0
        %v3653 = vadd.f32 %v3564, %v3652
        %3654 = vmatmul.bf16.gmra.mxu0 %v2878
        %v3655 = vpop.f32.mrf.mxu0
        %v3656 = vadd.f32 %v3567, %v3655
        %v3657 = vpop.f32.mrf.mxu0
        %v3658 = vadd.f32 %v3569, %v3657
        %3659 = vmatmul.bf16.gmra.mxu0 %v2887
        %v3660 = vpop.f32.mrf.mxu0
        %v3661 = vadd.f32 %v3572, %v3660
        %v3662 = vpop.f32.mrf.mxu0
        %v3663 = vadd.f32 %v3574, %v3662
        %3664 = vmatmul.bf16.gmra.mxu0 %v2896
        %v3665 = vpop.f32.mrf.mxu0
        %v3666 = vadd.f32 %v3577, %v3665
        %v3667 = vpop.f32.mrf.mxu0
        %v3668 = vadd.f32 %v3579, %v3667
        %3669 = vmatmul.bf16.gmra.mxu0 %v2905
        %v3670 = vpop.f32.mrf.mxu0
        %v3671 = vadd.f32 %v3582, %v3670
        %v3672 = vpop.f32.mrf.mxu0
        %v3673 = vadd.f32 %v3584, %v3672
        %3674 = vmatmul.bf16.gmra.mxu0 %v2914
        %v3675 = vpop.f32.mrf.mxu0
        %v3676 = vadd.f32 %v3587, %v3675
        %v3677 = vpop.f32.mrf.mxu0
        %v3678 = vadd.f32 %v3589, %v3677
        %3679 = vmatmul.bf16.gmra.mxu0 %v2923
        %v3680 = vpop.f32.mrf.mxu0
        %v3681 = vadd.f32 %v3592, %v3680
        %v3682 = vpop.f32.mrf.mxu0
        %v3683 = vadd.f32 %v3594, %v3682
        %3684 = vdwg.mxu0
        %3685 = vmatpush.bf16.msra.mxu0 %v3386
        %3686 = vmatpush.bf16.msra.mxu0 %v3385
        %3687 = vmatpush.bf16.msra.mxu0 %v3384
        %3688 = vmatpush.bf16.msra.mxu0 %v3383
        %3689 = vmatpush.bf16.msra.mxu0 %v3382
        %3690 = vmatpush.bf16.msra.mxu0 %v3381
        %3691 = vmatpush.bf16.msra.mxu0 %v3380
        %3692 = vmatpush.bf16.msra.mxu0 %v3379
        %3693 = vmatmul.bf16.gmra.mxu0 %v2789
        %v3694 = vpop.f32.mrf.mxu0
        %v3695 = vadd.f32 %v3606, %v3694
        %v3696 = vpop.f32.mrf.mxu0
        %v3697 = vadd.f32 %v3608, %v3696
        %3698 = vmatmul.bf16.gmra.mxu0 %v2798
        %v3699 = vpop.f32.mrf.mxu0
        %v3700 = vadd.f32 %v3611, %v3699
        %v3701 = vpop.f32.mrf.mxu0
        %v3702 = vadd.f32 %v3613, %v3701
        %3703 = vmatmul.bf16.gmra.mxu0 %v2807
        %v3704 = vpop.f32.mrf.mxu0
        %v3705 = vadd.f32 %v3616, %v3704
        %v3706 = vpop.f32.mrf.mxu0
        %v3707 = vadd.f32 %v3618, %v3706
        %3708 = vmatmul.bf16.gmra.mxu0 %v2816
        %v3709 = vpop.f32.mrf.mxu0
        %v3710 = vadd.f32 %v3621, %v3709
        %v3711 = vpop.f32.mrf.mxu0
        %v3712 = vadd.f32 %v3623, %v3711
        %3713 = vmatmul.bf16.gmra.mxu0 %v2825
        %v3714 = vpop.f32.mrf.mxu0
        %v3715 = vadd.f32 %v3626, %v3714
        %v3716 = vpop.f32.mrf.mxu0
        %v3717 = vadd.f32 %v3628, %v3716
        %3718 = vmatmul.bf16.gmra.mxu0 %v2834
        %v3719 = vpop.f32.mrf.mxu0
        %v3720 = vadd.f32 %v3631, %v3719
        %v3721 = vpop.f32.mrf.mxu0
        %v3722 = vadd.f32 %v3633, %v3721
        %3723 = vmatmul.bf16.gmra.mxu0 %v2843
        %v3724 = vpop.f32.mrf.mxu0
        %v3725 = vadd.f32 %v3636, %v3724
        %v3726 = vpop.f32.mrf.mxu0
        %v3727 = vadd.f32 %v3638, %v3726
        %3728 = vmatmul.bf16.gmra.mxu0 %v2852
        %v3729 = vpop.f32.mrf.mxu0
        %v3730 = vadd.f32 %v3641, %v3729
        %v3731 = vpop.f32.mrf.mxu0
        %v3732 = vadd.f32 %v3643, %v3731
        %3733 = vmatmul.bf16.gmra.mxu0 %v2861
        %v3734 = vpop.f32.mrf.mxu0
        %v3735 = vadd.f32 %v3646, %v3734
        %v3736 = vpop.f32.mrf.mxu0
        %v3737 = vadd.f32 %v3648, %v3736
        %3738 = vmatmul.bf16.gmra.mxu0 %v2870
        %v3739 = vpop.f32.mrf.mxu0
        %v3740 = vadd.f32 %v3651, %v3739
        %v3741 = vpop.f32.mrf.mxu0
        %v3742 = vadd.f32 %v3653, %v3741
        %3743 = vmatmul.bf16.gmra.mxu0 %v2879
        %v3744 = vpop.f32.mrf.mxu0
        %v3745 = vadd.f32 %v3656, %v3744
        %v3746 = vpop.f32.mrf.mxu0
        %v3747 = vadd.f32 %v3658, %v3746
        %3748 = vmatmul.bf16.gmra.mxu0 %v2888
        %v3749 = vpop.f32.mrf.mxu0
        %v3750 = vadd.f32 %v3661, %v3749
        %v3751 = vpop.f32.mrf.mxu0
        %v3752 = vadd.f32 %v3663, %v3751
        %3753 = vmatmul.bf16.gmra.mxu0 %v2897
        %v3754 = vpop.f32.mrf.mxu0
        %v3755 = vadd.f32 %v3666, %v3754
        %v3756 = vpop.f32.mrf.mxu0
        %v3757 = vadd.f32 %v3668, %v3756
        %3758 = vmatmul.bf16.gmra.mxu0 %v2906
        %v3759 = vpop.f32.mrf.mxu0
        %v3760 = vadd.f32 %v3671, %v3759
        %v3761 = vpop.f32.mrf.mxu0
        %v3762 = vadd.f32 %v3673, %v3761
        %3763 = vmatmul.bf16.gmra.mxu0 %v2915
        %v3764 = vpop.f32.mrf.mxu0
        %v3765 = vadd.f32 %v3676, %v3764
        %v3766 = vpop.f32.mrf.mxu0
        %v3767 = vadd.f32 %v3678, %v3766
        %3768 = vmatmul.bf16.gmra.mxu0 %v2924
        %v3769 = vpop.f32.mrf.mxu0
        %v3770 = vadd.f32 %v3681, %v3769
        %v3771 = vpop.f32.mrf.mxu0
        %v3772 = vadd.f32 %v3683, %v3771
        %3773 = vdwg.mxu0
        %3774 = vmatpush.bf16.msra.mxu0 %v3394
        %3775 = vmatpush.bf16.msra.mxu0 %v3393
        %3776 = vmatpush.bf16.msra.mxu0 %v3392
        %3777 = vmatpush.bf16.msra.mxu0 %v3391
        %3778 = vmatpush.bf16.msra.mxu0 %v3390
        %3779 = vmatpush.bf16.msra.mxu0 %v3389
        %3780 = vmatpush.bf16.msra.mxu0 %v3388
        %3781 = vmatpush.bf16.msra.mxu0 %v3387
        %3782 = vmatmul.bf16.gmra.mxu0 %v2790
        %v3783 = vpop.f32.mrf.mxu0
        %v3784 = vadd.f32 %v3695, %v3783
        %v3785 = vpop.f32.mrf.mxu0
        %v3786 = vadd.f32 %v3697, %v3785
        %3787 = vmatmul.bf16.gmra.mxu0 %v2799
        %v3788 = vpop.f32.mrf.mxu0
        %v3789 = vadd.f32 %v3700, %v3788
        %v3790 = vpop.f32.mrf.mxu0
        %v3791 = vadd.f32 %v3702, %v3790
        %3792 = vmatmul.bf16.gmra.mxu0 %v2808
        %v3793 = vpop.f32.mrf.mxu0
        %v3794 = vadd.f32 %v3705, %v3793
        %v3795 = vpop.f32.mrf.mxu0
        %v3796 = vadd.f32 %v3707, %v3795
        %3797 = vmatmul.bf16.gmra.mxu0 %v2817
        %v3798 = vpop.f32.mrf.mxu0
        %v3799 = vadd.f32 %v3710, %v3798
        %v3800 = vpop.f32.mrf.mxu0
        %v3801 = vadd.f32 %v3712, %v3800
        %3802 = vmatmul.bf16.gmra.mxu0 %v2826
        %v3803 = vpop.f32.mrf.mxu0
        %v3804 = vadd.f32 %v3715, %v3803
        %v3805 = vpop.f32.mrf.mxu0
        %v3806 = vadd.f32 %v3717, %v3805
        %3807 = vmatmul.bf16.gmra.mxu0 %v2835
        %v3808 = vpop.f32.mrf.mxu0
        %v3809 = vadd.f32 %v3720, %v3808
        %v3810 = vpop.f32.mrf.mxu0
        %v3811 = vadd.f32 %v3722, %v3810
        %3812 = vmatmul.bf16.gmra.mxu0 %v2844
        %v3813 = vpop.f32.mrf.mxu0
        %v3814 = vadd.f32 %v3725, %v3813
        %v3815 = vpop.f32.mrf.mxu0
        %v3816 = vadd.f32 %v3727, %v3815
        %3817 = vmatmul.bf16.gmra.mxu0 %v2853
        %v3818 = vpop.f32.mrf.mxu0
        %v3819 = vadd.f32 %v3730, %v3818
        %v3820 = vpop.f32.mrf.mxu0
        %v3821 = vadd.f32 %v3732, %v3820
        %3822 = vmatmul.bf16.gmra.mxu0 %v2862
        %v3823 = vpop.f32.mrf.mxu0
        %v3824 = vadd.f32 %v3735, %v3823
        %v3825 = vpop.f32.mrf.mxu0
        %v3826 = vadd.f32 %v3737, %v3825
        %3827 = vmatmul.bf16.gmra.mxu0 %v2871
        %v3828 = vpop.f32.mrf.mxu0
        %v3829 = vadd.f32 %v3740, %v3828
        %v3830 = vpop.f32.mrf.mxu0
        %v3831 = vadd.f32 %v3742, %v3830
        %3832 = vmatmul.bf16.gmra.mxu0 %v2880
        %v3833 = vpop.f32.mrf.mxu0
        %v3834 = vadd.f32 %v3745, %v3833
        %v3835 = vpop.f32.mrf.mxu0
        %v3836 = vadd.f32 %v3747, %v3835
        %3837 = vmatmul.bf16.gmra.mxu0 %v2889
        %v3838 = vpop.f32.mrf.mxu0
        %v3839 = vadd.f32 %v3750, %v3838
        %v3840 = vpop.f32.mrf.mxu0
        %v3841 = vadd.f32 %v3752, %v3840
        %3842 = vmatmul.bf16.gmra.mxu0 %v2898
        %v3843 = vpop.f32.mrf.mxu0
        %v3844 = vadd.f32 %v3755, %v3843
        %v3845 = vpop.f32.mrf.mxu0
        %v3846 = vadd.f32 %v3757, %v3845
        %3847 = vmatmul.bf16.gmra.mxu0 %v2907
        %v3848 = vpop.f32.mrf.mxu0
        %v3849 = vadd.f32 %v3760, %v3848
        %v3850 = vpop.f32.mrf.mxu0
        %v3851 = vadd.f32 %v3762, %v3850
        %3852 = vmatmul.bf16.gmra.mxu0 %v2916
        %v3853 = vpop.f32.mrf.mxu0
        %v3854 = vadd.f32 %v3765, %v3853
        %v3855 = vpop.f32.mrf.mxu0
        %v3856 = vadd.f32 %v3767, %v3855
        %3857 = vmatmul.bf16.gmra.mxu0 %v2925
        %v3858 = vpop.f32.mrf.mxu0
        %v3859 = vadd.f32 %v3770, %v3858
        %v3860 = vpop.f32.mrf.mxu0
        %v3861 = vadd.f32 %v3772, %v3860
        %3862 = vdwg.mxu0
        %3863 = vmatpush.bf16.msra.mxu0 %v3402
        %3864 = vmatpush.bf16.msra.mxu0 %v3401
        %3865 = vmatpush.bf16.msra.mxu0 %v3400
        %3866 = vmatpush.bf16.msra.mxu0 %v3399
        %3867 = vmatpush.bf16.msra.mxu0 %v3398
        %3868 = vmatpush.bf16.msra.mxu0 %v3397
        %3869 = vmatpush.bf16.msra.mxu0 %v3396
        %3870 = vmatpush.bf16.msra.mxu0 %v3395
        %3871 = vmatmul.bf16.gmra.mxu0 %v2791
        %v3872 = vpop.f32.mrf.mxu0
        %v3873 = vadd.f32 %v3784, %v3872
        %v3874 = vpop.f32.mrf.mxu0
        %v3875 = vadd.f32 %v3786, %v3874
        %3876 = vmatmul.bf16.gmra.mxu0 %v2800
        %v3877 = vpop.f32.mrf.mxu0
        %v3878 = vadd.f32 %v3789, %v3877
        %v3879 = vpop.f32.mrf.mxu0
        %v3880 = vadd.f32 %v3791, %v3879
        %3881 = vmatmul.bf16.gmra.mxu0 %v2809
        %v3882 = vpop.f32.mrf.mxu0
        %v3883 = vadd.f32 %v3794, %v3882
        %v3884 = vpop.f32.mrf.mxu0
        %v3885 = vadd.f32 %v3796, %v3884
        %3886 = vmatmul.bf16.gmra.mxu0 %v2818
        %v3887 = vpop.f32.mrf.mxu0
        %v3888 = vadd.f32 %v3799, %v3887
        %v3889 = vpop.f32.mrf.mxu0
        %v3890 = vadd.f32 %v3801, %v3889
        %3891 = vmatmul.bf16.gmra.mxu0 %v2827
        %v3892 = vpop.f32.mrf.mxu0
        %v3893 = vadd.f32 %v3804, %v3892
        %v3894 = vpop.f32.mrf.mxu0
        %v3895 = vadd.f32 %v3806, %v3894
        %3896 = vmatmul.bf16.gmra.mxu0 %v2836
        %v3897 = vpop.f32.mrf.mxu0
        %v3898 = vadd.f32 %v3809, %v3897
        %v3899 = vpop.f32.mrf.mxu0
        %v3900 = vadd.f32 %v3811, %v3899
        %3901 = vmatmul.bf16.gmra.mxu0 %v2845
        %v3902 = vpop.f32.mrf.mxu0
        %v3903 = vadd.f32 %v3814, %v3902
        %v3904 = vpop.f32.mrf.mxu0
        %v3905 = vadd.f32 %v3816, %v3904
        %3906 = vmatmul.bf16.gmra.mxu0 %v2854
        %v3907 = vpop.f32.mrf.mxu0
        %v3908 = vadd.f32 %v3819, %v3907
        %v3909 = vpop.f32.mrf.mxu0
        %v3910 = vadd.f32 %v3821, %v3909
        %3911 = vmatmul.bf16.gmra.mxu0 %v2863
        %v3912 = vpop.f32.mrf.mxu0
        %v3913 = vadd.f32 %v3824, %v3912
        %v3914 = vpop.f32.mrf.mxu0
        %v3915 = vadd.f32 %v3826, %v3914
        %3916 = vmatmul.bf16.gmra.mxu0 %v2872
        %v3917 = vpop.f32.mrf.mxu0
        %v3918 = vadd.f32 %v3829, %v3917
        %v3919 = vpop.f32.mrf.mxu0
        %v3920 = vadd.f32 %v3831, %v3919
        %3921 = vmatmul.bf16.gmra.mxu0 %v2881
        %v3922 = vpop.f32.mrf.mxu0
        %v3923 = vadd.f32 %v3834, %v3922
        %v3924 = vpop.f32.mrf.mxu0
        %v3925 = vadd.f32 %v3836, %v3924
        %3926 = vmatmul.bf16.gmra.mxu0 %v2890
        %v3927 = vpop.f32.mrf.mxu0
        %v3928 = vadd.f32 %v3839, %v3927
        %v3929 = vpop.f32.mrf.mxu0
        %v3930 = vadd.f32 %v3841, %v3929
        %3931 = vmatmul.bf16.gmra.mxu0 %v2899
        %v3932 = vpop.f32.mrf.mxu0
        %v3933 = vadd.f32 %v3844, %v3932
        %v3934 = vpop.f32.mrf.mxu0
        %v3935 = vadd.f32 %v3846, %v3934
        %3936 = vmatmul.bf16.gmra.mxu0 %v2908
        %v3937 = vpop.f32.mrf.mxu0
        %v3938 = vadd.f32 %v3849, %v3937
        %v3939 = vpop.f32.mrf.mxu0
        %v3940 = vadd.f32 %v3851, %v3939
        %3941 = vmatmul.bf16.gmra.mxu0 %v2917
        %v3942 = vpop.f32.mrf.mxu0
        %v3943 = vadd.f32 %v3854, %v3942
        %v3944 = vpop.f32.mrf.mxu0
        %v3945 = vadd.f32 %v3856, %v3944
        %3946 = vmatmul.bf16.gmra.mxu0 %v2926
        %v3947 = vpop.f32.mrf.mxu0
        %v3948 = vadd.f32 %v3859, %v3947
        %v3949 = vpop.f32.mrf.mxu0
        %v3950 = vadd.f32 %v3861, %v3949
        %3951 = vdwg.mxu0
        %3952 = vmatpush.bf16.msra.mxu0 %v3410
        %3953 = vmatpush.bf16.msra.mxu0 %v3409
        %3954 = vmatpush.bf16.msra.mxu0 %v3408
        %3955 = vmatpush.bf16.msra.mxu0 %v3407
        %3956 = vmatpush.bf16.msra.mxu0 %v3406
        %3957 = vmatpush.bf16.msra.mxu0 %v3405
        %3958 = vmatpush.bf16.msra.mxu0 %v3404
        %3959 = vmatpush.bf16.msra.mxu0 %v3403
        %3960 = vmatmul.bf16.gmra.mxu0 %v2792
        %v3961 = vpop.f32.mrf.mxu0
        %v3962 = vadd.f32 %v3873, %v3961
        %v3963 = vpop.f32.mrf.mxu0
        %v3964 = vadd.f32 %v3875, %v3963
        %3965 = vmatmul.bf16.gmra.mxu0 %v2801
        %v3966 = vpop.f32.mrf.mxu0
        %v3967 = vadd.f32 %v3878, %v3966
        %v3968 = vpop.f32.mrf.mxu0
        %v3969 = vadd.f32 %v3880, %v3968
        %3970 = vmatmul.bf16.gmra.mxu0 %v2810
        %v3971 = vpop.f32.mrf.mxu0
        %v3972 = vadd.f32 %v3883, %v3971
        %v3973 = vpop.f32.mrf.mxu0
        %v3974 = vadd.f32 %v3885, %v3973
        %3975 = vmatmul.bf16.gmra.mxu0 %v2819
        %v3976 = vpop.f32.mrf.mxu0
        %v3977 = vadd.f32 %v3888, %v3976
        %v3978 = vpop.f32.mrf.mxu0
        %v3979 = vadd.f32 %v3890, %v3978
        %3980 = vmatmul.bf16.gmra.mxu0 %v2828
        %v3981 = vpop.f32.mrf.mxu0
        %v3982 = vadd.f32 %v3893, %v3981
        %v3983 = vpop.f32.mrf.mxu0
        %v3984 = vadd.f32 %v3895, %v3983
        %3985 = vmatmul.bf16.gmra.mxu0 %v2837
        %v3986 = vpop.f32.mrf.mxu0
        %v3987 = vadd.f32 %v3898, %v3986
        %v3988 = vpop.f32.mrf.mxu0
        %v3989 = vadd.f32 %v3900, %v3988
        %3990 = vmatmul.bf16.gmra.mxu0 %v2846
        %v3991 = vpop.f32.mrf.mxu0
        %v3992 = vadd.f32 %v3903, %v3991
        %v3993 = vpop.f32.mrf.mxu0
        %v3994 = vadd.f32 %v3905, %v3993
        %3995 = vmatmul.bf16.gmra.mxu0 %v2855
        %v3996 = vpop.f32.mrf.mxu0
        %v3997 = vadd.f32 %v3908, %v3996
        %v3998 = vpop.f32.mrf.mxu0
        %v3999 = vadd.f32 %v3910, %v3998
        %4000 = vmatmul.bf16.gmra.mxu0 %v2864
        %v4001 = vpop.f32.mrf.mxu0
        %v4002 = vadd.f32 %v3913, %v4001
        %v4003 = vpop.f32.mrf.mxu0
        %v4004 = vadd.f32 %v3915, %v4003
        %4005 = vmatmul.bf16.gmra.mxu0 %v2873
        %v4006 = vpop.f32.mrf.mxu0
        %v4007 = vadd.f32 %v3918, %v4006
        %v4008 = vpop.f32.mrf.mxu0
        %v4009 = vadd.f32 %v3920, %v4008
        %4010 = vmatmul.bf16.gmra.mxu0 %v2882
        %v4011 = vpop.f32.mrf.mxu0
        %v4012 = vadd.f32 %v3923, %v4011
        %v4013 = vpop.f32.mrf.mxu0
        %v4014 = vadd.f32 %v3925, %v4013
        %4015 = vmatmul.bf16.gmra.mxu0 %v2891
        %v4016 = vpop.f32.mrf.mxu0
        %v4017 = vadd.f32 %v3928, %v4016
        %v4018 = vpop.f32.mrf.mxu0
        %v4019 = vadd.f32 %v3930, %v4018
        %4020 = vmatmul.bf16.gmra.mxu0 %v2900
        %v4021 = vpop.f32.mrf.mxu0
        %v4022 = vadd.f32 %v3933, %v4021
        %v4023 = vpop.f32.mrf.mxu0
        %v4024 = vadd.f32 %v3935, %v4023
        %4025 = vmatmul.bf16.gmra.mxu0 %v2909
        %v4026 = vpop.f32.mrf.mxu0
        %v4027 = vadd.f32 %v3938, %v4026
        %v4028 = vpop.f32.mrf.mxu0
        %v4029 = vadd.f32 %v3940, %v4028
        %4030 = vmatmul.bf16.gmra.mxu0 %v2918
        %v4031 = vpop.f32.mrf.mxu0
        %v4032 = vadd.f32 %v3943, %v4031
        %v4033 = vpop.f32.mrf.mxu0
        %v4034 = vadd.f32 %v3945, %v4033
        %4035 = vmatmul.bf16.gmra.mxu0 %v2927
        %v4036 = vpop.f32.mrf.mxu0
        %v4037 = vadd.f32 %v3948, %v4036
        %v4038 = vpop.f32.mrf.mxu0
        %v4039 = vadd.f32 %v3950, %v4038
        %4040 = vdwg.mxu0
        %4041 = vmatpush.bf16.msra.mxu0 %v3418
        %4042 = vmatpush.bf16.msra.mxu0 %v3417
        %4043 = vmatpush.bf16.msra.mxu0 %v3416
        %4044 = vmatpush.bf16.msra.mxu0 %v3415
        %4045 = vmatpush.bf16.msra.mxu0 %v3414
        %4046 = vmatpush.bf16.msra.mxu0 %v3413
        %4047 = vmatpush.bf16.msra.mxu0 %v3412
        %4048 = vmatpush.bf16.msra.mxu0 %v3411
        %4049 = vmatmul.bf16.gmra.mxu0 %v2793
        %v4050 = vpop.f32.mrf.mxu0
        %v4051 = vadd.f32 %v3962, %v4050
        %v4052 = vpop.f32.mrf.mxu0
        %v4053 = vadd.f32 %v3964, %v4052
        %4054 = vmatmul.bf16.gmra.mxu0 %v2802
        %v4055 = vpop.f32.mrf.mxu0
        %v4056 = vadd.f32 %v3967, %v4055
        %v4057 = vpop.f32.mrf.mxu0
        %v4058 = vadd.f32 %v3969, %v4057
        %4059 = vmatmul.bf16.gmra.mxu0 %v2811
        %v4060 = vpop.f32.mrf.mxu0
        %v4061 = vadd.f32 %v3972, %v4060
        %v4062 = vpop.f32.mrf.mxu0
        %v4063 = vadd.f32 %v3974, %v4062
        %4064 = vmatmul.bf16.gmra.mxu0 %v2820
        %v4065 = vpop.f32.mrf.mxu0
        %v4066 = vadd.f32 %v3977, %v4065
        %v4067 = vpop.f32.mrf.mxu0
        %v4068 = vadd.f32 %v3979, %v4067
        %4069 = vmatmul.bf16.gmra.mxu0 %v2829
        %v4070 = vpop.f32.mrf.mxu0
        %v4071 = vadd.f32 %v3982, %v4070
        %v4072 = vpop.f32.mrf.mxu0
        %v4073 = vadd.f32 %v3984, %v4072
        %4074 = vmatmul.bf16.gmra.mxu0 %v2838
        %v4075 = vpop.f32.mrf.mxu0
        %v4076 = vadd.f32 %v3987, %v4075
        %v4077 = vpop.f32.mrf.mxu0
        %v4078 = vadd.f32 %v3989, %v4077
        %4079 = vmatmul.bf16.gmra.mxu0 %v2847
        %v4080 = vpop.f32.mrf.mxu0
        %v4081 = vadd.f32 %v3992, %v4080
        %v4082 = vpop.f32.mrf.mxu0
        %v4083 = vadd.f32 %v3994, %v4082
        %4084 = vmatmul.bf16.gmra.mxu0 %v2856
        %v4085 = vpop.f32.mrf.mxu0
        %v4086 = vadd.f32 %v3997, %v4085
        %v4087 = vpop.f32.mrf.mxu0
        %v4088 = vadd.f32 %v3999, %v4087
        %4089 = vmatmul.bf16.gmra.mxu0 %v2865
        %v4090 = vpop.f32.mrf.mxu0
        %v4091 = vadd.f32 %v4002, %v4090
        %v4092 = vpop.f32.mrf.mxu0
        %v4093 = vadd.f32 %v4004, %v4092
        %4094 = vmatmul.bf16.gmra.mxu0 %v2874
        %v4095 = vpop.f32.mrf.mxu0
        %v4096 = vadd.f32 %v4007, %v4095
        %v4097 = vpop.f32.mrf.mxu0
        %v4098 = vadd.f32 %v4009, %v4097
        %4099 = vmatmul.bf16.gmra.mxu0 %v2883
        %v4100 = vpop.f32.mrf.mxu0
        %v4101 = vadd.f32 %v4012, %v4100
        %v4102 = vpop.f32.mrf.mxu0
        %v4103 = vadd.f32 %v4014, %v4102
        %4104 = vmatmul.bf16.gmra.mxu0 %v2892
        %v4105 = vpop.f32.mrf.mxu0
        %v4106 = vadd.f32 %v4017, %v4105
        %v4107 = vpop.f32.mrf.mxu0
        %v4108 = vadd.f32 %v4019, %v4107
        %4109 = vmatmul.bf16.gmra.mxu0 %v2901
        %v4110 = vpop.f32.mrf.mxu0
        %v4111 = vadd.f32 %v4022, %v4110
        %v4112 = vpop.f32.mrf.mxu0
        %v4113 = vadd.f32 %v4024, %v4112
        %4114 = vmatmul.bf16.gmra.mxu0 %v2910
        %v4115 = vpop.f32.mrf.mxu0
        %v4116 = vadd.f32 %v4027, %v4115
        %v4117 = vpop.f32.mrf.mxu0
        %v4118 = vadd.f32 %v4029, %v4117
        %4119 = vmatmul.bf16.gmra.mxu0 %v2919
        %v4120 = vpop.f32.mrf.mxu0
        %v4121 = vadd.f32 %v4032, %v4120
        %v4122 = vpop.f32.mrf.mxu0
        %v4123 = vadd.f32 %v4034, %v4122
        %4124 = vmatmul.bf16.gmra.mxu0 %v2928
        %v4125 = vpop.f32.mrf.mxu0
        %v4126 = vadd.f32 %v4037, %v4125
        %v4127 = vpop.f32.mrf.mxu0
        %v4128 = vadd.f32 %v4039, %v4127
        %4129 = vdwg.mxu0
        %4130 = vmatpush.bf16.msra.mxu0 %v3426
        %4131 = vmatpush.bf16.msra.mxu0 %v3425
        %4132 = vmatpush.bf16.msra.mxu0 %v3424
        %4133 = vmatpush.bf16.msra.mxu0 %v3423
        %4134 = vmatpush.bf16.msra.mxu0 %v3422
        %4135 = vmatpush.bf16.msra.mxu0 %v3421
        %4136 = vmatpush.bf16.msra.mxu0 %v3420
        %4137 = vmatpush.bf16.msra.mxu0 %v3419
        %4138 = vmatmul.bf16.gmra.mxu0 %v2794
        %v4139 = vpop.f32.mrf.mxu0
        %v4140 = vadd.f32 %v4051, %v4139
        %v4141 = vpop.f32.mrf.mxu0
        %v4142 = vadd.f32 %v4053, %v4141
        %4143 = vmatmul.bf16.gmra.mxu0 %v2803
        %v4144 = vpop.f32.mrf.mxu0
        %v4145 = vadd.f32 %v4056, %v4144
        %v4146 = vpop.f32.mrf.mxu0
        %v4147 = vadd.f32 %v4058, %v4146
        %4148 = vmatmul.bf16.gmra.mxu0 %v2812
        %v4149 = vpop.f32.mrf.mxu0
        %v4150 = vadd.f32 %v4061, %v4149
        %v4151 = vpop.f32.mrf.mxu0
        %v4152 = vadd.f32 %v4063, %v4151
        %4153 = vmatmul.bf16.gmra.mxu0 %v2821
        %v4154 = vpop.f32.mrf.mxu0
        %v4155 = vadd.f32 %v4066, %v4154
        %v4156 = vpop.f32.mrf.mxu0
        %v4157 = vadd.f32 %v4068, %v4156
        %4158 = vmatmul.bf16.gmra.mxu0 %v2830
        %v4159 = vpop.f32.mrf.mxu0
        %v4160 = vadd.f32 %v4071, %v4159
        %v4161 = vpop.f32.mrf.mxu0
        %v4162 = vadd.f32 %v4073, %v4161
        %4163 = vmatmul.bf16.gmra.mxu0 %v2839
        %v4164 = vpop.f32.mrf.mxu0
        %v4165 = vadd.f32 %v4076, %v4164
        %v4166 = vpop.f32.mrf.mxu0
        %v4167 = vadd.f32 %v4078, %v4166
        %4168 = vmatmul.bf16.gmra.mxu0 %v2848
        %v4169 = vpop.f32.mrf.mxu0
        %v4170 = vadd.f32 %v4081, %v4169
        %v4171 = vpop.f32.mrf.mxu0
        %v4172 = vadd.f32 %v4083, %v4171
        %4173 = vmatmul.bf16.gmra.mxu0 %v2857
        %v4174 = vpop.f32.mrf.mxu0
        %v4175 = vadd.f32 %v4086, %v4174
        %v4176 = vpop.f32.mrf.mxu0
        %v4177 = vadd.f32 %v4088, %v4176
        %4178 = vmatmul.bf16.gmra.mxu0 %v2866
        %v4179 = vpop.f32.mrf.mxu0
        %v4180 = vadd.f32 %v4091, %v4179
        %v4181 = vpop.f32.mrf.mxu0
        %v4182 = vadd.f32 %v4093, %v4181
        %4183 = vmatmul.bf16.gmra.mxu0 %v2875
        %v4184 = vpop.f32.mrf.mxu0
        %v4185 = vadd.f32 %v4096, %v4184
        %v4186 = vpop.f32.mrf.mxu0
        %v4187 = vadd.f32 %v4098, %v4186
        %4188 = vmatmul.bf16.gmra.mxu0 %v2884
        %v4189 = vpop.f32.mrf.mxu0
        %v4190 = vadd.f32 %v4101, %v4189
        %v4191 = vpop.f32.mrf.mxu0
        %v4192 = vadd.f32 %v4103, %v4191
        %4193 = vmatmul.bf16.gmra.mxu0 %v2893
        %v4194 = vpop.f32.mrf.mxu0
        %v4195 = vadd.f32 %v4106, %v4194
        %v4196 = vpop.f32.mrf.mxu0
        %v4197 = vadd.f32 %v4108, %v4196
        %4198 = vmatmul.bf16.gmra.mxu0 %v2902
        %v4199 = vpop.f32.mrf.mxu0
        %v4200 = vadd.f32 %v4111, %v4199
        %v4201 = vpop.f32.mrf.mxu0
        %v4202 = vadd.f32 %v4113, %v4201
        %4203 = vmatmul.bf16.gmra.mxu0 %v2911
        %v4204 = vpop.f32.mrf.mxu0
        %v4205 = vadd.f32 %v4116, %v4204
        %v4206 = vpop.f32.mrf.mxu0
        %v4207 = vadd.f32 %v4118, %v4206
        %4208 = vmatmul.bf16.gmra.mxu0 %v2920
        %v4209 = vpop.f32.mrf.mxu0
        %v4210 = vadd.f32 %v4121, %v4209
        %v4211 = vpop.f32.mrf.mxu0
        %v4212 = vadd.f32 %v4123, %v4211
        %4213 = vmatmul.bf16.gmra.mxu0 %v2929
        %v4214 = vpop.f32.mrf.mxu0
        %v4215 = vadd.f32 %v4126, %v4214
        %v4216 = vpop.f32.mrf.mxu0
        %v4217 = vadd.f32 %v4128, %v4216
        %4218 = vdwg.mxu0
        %4219 = vmatpush.bf16.msra.mxu0 %v3434
        %4220 = vmatpush.bf16.msra.mxu0 %v3433
        %4221 = vmatpush.bf16.msra.mxu0 %v3432
        %4222 = vmatpush.bf16.msra.mxu0 %v3431
        %4223 = vmatpush.bf16.msra.mxu0 %v3430
        %4224 = vmatpush.bf16.msra.mxu0 %v3429
        %4225 = vmatpush.bf16.msra.mxu0 %v3428
        %4226 = vmatpush.bf16.msra.mxu0 %v3427
        %4227 = vmatmul.bf16.gmra.mxu0 %v2795
        %v4228 = vpop.f32.mrf.mxu0
        %v4229 = vadd.f32 %v4140, %v4228
        %v4230 = vpop.f32.mrf.mxu0
        %v4231 = vadd.f32 %v4142, %v4230
        %4232 = vmatmul.bf16.gmra.mxu0 %v2804
        %v4233 = vpop.f32.mrf.mxu0
        %v4234 = vadd.f32 %v4145, %v4233
        %v4235 = vpop.f32.mrf.mxu0
        %v4236 = vadd.f32 %v4147, %v4235
        %4237 = vmatmul.bf16.gmra.mxu0 %v2813
        %v4238 = vpop.f32.mrf.mxu0
        %v4239 = vadd.f32 %v4150, %v4238
        %v4240 = vpop.f32.mrf.mxu0
        %v4241 = vadd.f32 %v4152, %v4240
        %4242 = vmatmul.bf16.gmra.mxu0 %v2822
        %v4243 = vpop.f32.mrf.mxu0
        %v4244 = vadd.f32 %v4155, %v4243
        %v4245 = vpop.f32.mrf.mxu0
        %v4246 = vadd.f32 %v4157, %v4245
        %4247 = vmatmul.bf16.gmra.mxu0 %v2831
        %v4248 = vpop.f32.mrf.mxu0
        %v4249 = vadd.f32 %v4160, %v4248
        %v4250 = vpop.f32.mrf.mxu0
        %v4251 = vadd.f32 %v4162, %v4250
        %4252 = vmatmul.bf16.gmra.mxu0 %v2840
        %v4253 = vpop.f32.mrf.mxu0
        %v4254 = vadd.f32 %v4165, %v4253
        %v4255 = vpop.f32.mrf.mxu0
        %v4256 = vadd.f32 %v4167, %v4255
        %4257 = vmatmul.bf16.gmra.mxu0 %v2849
        %v4258 = vpop.f32.mrf.mxu0
        %v4259 = vadd.f32 %v4170, %v4258
        %v4260 = vpop.f32.mrf.mxu0
        %v4261 = vadd.f32 %v4172, %v4260
        %4262 = vmatmul.bf16.gmra.mxu0 %v2858
        %v4263 = vpop.f32.mrf.mxu0
        %v4264 = vadd.f32 %v4175, %v4263
        %v4265 = vpop.f32.mrf.mxu0
        %v4266 = vadd.f32 %v4177, %v4265
        %4267 = vmatmul.bf16.gmra.mxu0 %v2867
        %v4268 = vpop.f32.mrf.mxu0
        %v4269 = vadd.f32 %v4180, %v4268
        %v4270 = vpop.f32.mrf.mxu0
        %v4271 = vadd.f32 %v4182, %v4270
        %4272 = vmatmul.bf16.gmra.mxu0 %v2876
        %v4273 = vpop.f32.mrf.mxu0
        %v4274 = vadd.f32 %v4185, %v4273
        %v4275 = vpop.f32.mrf.mxu0
        %v4276 = vadd.f32 %v4187, %v4275
        %4277 = vmatmul.bf16.gmra.mxu0 %v2885
        %v4278 = vpop.f32.mrf.mxu0
        %v4279 = vadd.f32 %v4190, %v4278
        %v4280 = vpop.f32.mrf.mxu0
        %v4281 = vadd.f32 %v4192, %v4280
        %4282 = vmatmul.bf16.gmra.mxu0 %v2894
        %v4283 = vpop.f32.mrf.mxu0
        %v4284 = vadd.f32 %v4195, %v4283
        %v4285 = vpop.f32.mrf.mxu0
        %v4286 = vadd.f32 %v4197, %v4285
        %4287 = vmatmul.bf16.gmra.mxu0 %v2903
        %v4288 = vpop.f32.mrf.mxu0
        %v4289 = vadd.f32 %v4200, %v4288
        %v4290 = vpop.f32.mrf.mxu0
        %v4291 = vadd.f32 %v4202, %v4290
        %4292 = vmatmul.bf16.gmra.mxu0 %v2912
        %v4293 = vpop.f32.mrf.mxu0
        %v4294 = vadd.f32 %v4205, %v4293
        %v4295 = vpop.f32.mrf.mxu0
        %v4296 = vadd.f32 %v4207, %v4295
        %4297 = vmatmul.bf16.gmra.mxu0 %v2921
        %v4298 = vpop.f32.mrf.mxu0
        %v4299 = vadd.f32 %v4210, %v4298
        %v4300 = vpop.f32.mrf.mxu0
        %v4301 = vadd.f32 %v4212, %v4300
        %4302 = vmatmul.bf16.gmra.mxu0 %v2930
        %v4303 = vpop.f32.mrf.mxu0
        %v4304 = vadd.f32 %v4215, %v4303
        %v4305 = vpop.f32.mrf.mxu0
        %v4306 = vadd.f32 %v4217, %v4305
        %4307 = vdwg.mxu0
        %v4308 = vmax.f32 %v4229, 0.0
        %v4309 = vmax.f32 %v4231, 0.0
        %v4310 = vmax.f32 %v4234, 0.0
        %v4311 = vmax.f32 %v4236, 0.0
        %v4312 = vmax.f32 %v4239, 0.0
        %v4313 = vmax.f32 %v4241, 0.0
        %v4314 = vmax.f32 %v4244, 0.0
        %v4315 = vmax.f32 %v4246, 0.0
        %v4316 = vmax.f32 %v4249, 0.0
        %v4317 = vmax.f32 %v4251, 0.0
        %v4318 = vmax.f32 %v4254, 0.0
        %v4319 = vmax.f32 %v4256, 0.0
        %v4320 = vmax.f32 %v4259, 0.0
        %v4321 = vmax.f32 %v4261, 0.0
        %v4322 = vmax.f32 %v4264, 0.0
        %v4323 = vmax.f32 %v4266, 0.0
        %v4324 = vmax.f32 %v4269, 0.0
        %v4325 = vmax.f32 %v4271, 0.0
        %v4326 = vmax.f32 %v4274, 0.0
        %v4327 = vmax.f32 %v4276, 0.0
        %v4328 = vmax.f32 %v4279, 0.0
        %v4329 = vmax.f32 %v4281, 0.0
        %v4330 = vmax.f32 %v4284, 0.0
        %v4331 = vmax.f32 %v4286, 0.0
        %v4332 = vmax.f32 %v4289, 0.0
        %v4333 = vmax.f32 %v4291, 0.0
        %v4334 = vmax.f32 %v4294, 0.0
        %v4335 = vmax.f32 %v4296, 0.0
        %v4336 = vmax.f32 %v4299, 0.0
        %v4337 = vmax.f32 %v4301, 0.0
        %v4338 = vmax.f32 %v4304, 0.0
        %v4339 = vmax.f32 %v4306, 0.0
        %4340 = vst [vmem:[#allocation2 + $0x18] sm:$0xff] %v4308
        %4341 = vst [vmem:[#allocation2 + $0x20] sm:$0xff] %v4309
        %4342 = vst [vmem:[#allocation2 + $0x28] sm:$0xff] %v4310
        %4343 = vst [vmem:[#allocation2 + $0x30] sm:$0xff] %v4311
        %4344 = vst [vmem:[#allocation2 + $0x38] sm:$0xff] %v4312
        %4345 = vst [vmem:[#allocation2 + $0x40] sm:$0xff] %v4313
        %4346 = vst [vmem:[#allocation2 + $0x48] sm:$0xff] %v4314
        %4347 = vst [vmem:[#allocation2 + $0x50] sm:$0xff] %v4315
        %4348 = vst [vmem:[#allocation2 + $0x58] sm:$0xff] %v4316
        %4349 = vst [vmem:[#allocation2 + $0x60] sm:$0xff] %v4317
        %4350 = vst [vmem:[#allocation2 + $0x68] sm:$0xff] %v4318
        %4351 = vst [vmem:[#allocation2 + $0x70] sm:$0xff] %v4319
        %4352 = vst [vmem:[#allocation2 + $0x78] sm:$0xff] %v4320
        %4353 = vst [vmem:[#allocation2 + $0x80] sm:$0xff] %v4321
        %4354 = vst [vmem:[#allocation2 + $0x88] sm:$0xff] %v4322
        %4355 = vst [vmem:[#allocation2 + $0x90] sm:$0xff] %v4323
        %4356 = vst [vmem:[#allocation2 + $0x98] sm:$0xff] %v4324
        %4357 = vst [vmem:[#allocation2 + $0xa0] sm:$0xff] %v4325
        %4358 = vst [vmem:[#allocation2 + $0xa8] sm:$0xff] %v4326
        %4359 = vst [vmem:[#allocation2 + $0xb0] sm:$0xff] %v4327
        %4360 = vst [vmem:[#allocation2 + $0xb8] sm:$0xff] %v4328
        %4361 = vst [vmem:[#allocation2 + $0xc0] sm:$0xff] %v4329
        %4362 = vst [vmem:[#allocation2 + $0xc8] sm:$0xff] %v4330
        %4363 = vst [vmem:[#allocation2 + $0xd0] sm:$0xff] %v4331
        %4364 = vst [vmem:[#allocation2 + $0xd8] sm:$0xff] %v4332
        %4365 = vst [vmem:[#allocation2 + $0xe0] sm:$0xff] %v4333
        %4366 = vst [vmem:[#allocation2 + $0xe8] sm:$0xff] %v4334
        %4367 = vst [vmem:[#allocation2 + $0xf0] sm:$0xff] %v4335
        %4368 = vst [vmem:[#allocation2 + $0xf8] sm:$0xff] %v4336
        %4369 = vst [vmem:[#allocation2 + $0x100] sm:$0xff] %v4337
        %4370 = vst [vmem:[#allocation2 + $0x108] sm:$0xff] %v4338
        %4371 = vst [vmem:[#allocation2 + $0x110] sm:$0xff] %v4339
        %v4372 = vld [vmem:[#allocation2 + $0x7] sm:$0xff]
        %v4373 = vld [vmem:[#allocation2 + $0xf] sm:$0xff]
        %v4374 = vld [vmem:[#allocation2 + $0x17] sm:$0xff]
        %v4375 = vld [vmem:[#allocation2 + $0x1f] sm:$0xff]
        %v4376 = vld [vmem:[#allocation2 + $0x27] sm:$0xff]
        %v4377 = vld [vmem:[#allocation2 + $0x2f] sm:$0xff]
        %v4378 = vld [vmem:[#allocation2 + $0x37] sm:$0xff]
        %v4379 = vld [vmem:[#allocation2 + $0x3f] sm:$0xff]
        %v4380 = vld [vmem:[#allocation2 + $0x47] sm:$0xff]
        %v4381 = vld [vmem:[#allocation2 + $0x4f] sm:$0xff]
        %v4382 = vld [vmem:[#allocation2 + $0x57] sm:$0xff]
        %v4383 = vld [vmem:[#allocation2 + $0x5f] sm:$0xff]
        %v4384 = vld [vmem:[#allocation2 + $0x67] sm:$0xff]
        %v4385 = vld [vmem:[#allocation2 + $0x6f] sm:$0xff]
        %v4386 = vld [vmem:[#allocation2 + $0x77] sm:$0xff]
        %v4387 = vld [vmem:[#allocation2 + $0x7f] sm:$0xff]
        %v4388 = vld [vmem:[#allocation2 + $0x87] sm:$0xff]
        %v4389 = vld [vmem:[#allocation2 + $0x8f] sm:$0xff]
        %v4390 = vld [vmem:[#allocation2 + $0x97] sm:$0xff]
        %v4391 = vld [vmem:[#allocation2 + $0x9f] sm:$0xff]
        %v4392 = vld [vmem:[#allocation2 + $0xa7] sm:$0xff]
        %v4393 = vld [vmem:[#allocation2 + $0xaf] sm:$0xff]
        %v4394 = vld [vmem:[#allocation2 + $0xb7] sm:$0xff]
        %v4395 = vld [vmem:[#allocation2 + $0xbf] sm:$0xff]
        %v4396 = vld [vmem:[#allocation2 + $0xc7] sm:$0xff]
        %v4397 = vld [vmem:[#allocation2 + $0xcf] sm:$0xff]
        %v4398 = vld [vmem:[#allocation2 + $0xd7] sm:$0xff]
        %v4399 = vld [vmem:[#allocation2 + $0xdf] sm:$0xff]
        %v4400 = vld [vmem:[#allocation2 + $0xe7] sm:$0xff]
        %v4401 = vld [vmem:[#allocation2 + $0xef] sm:$0xff]
        %v4402 = vld [vmem:[#allocation2 + $0xf7] sm:$0xff]
        %v4403 = vld [vmem:[#allocation2 + $0xff] sm:$0xff]
        %v4404 = vsel %vm743, %v4372, 0.0
        %v4405 = vsel %vm744, %v4373, 0.0
        %v4406 = vsel %vm745, %v4374, 0.0
        %v4407 = vsel %vm746, %v4375, 0.0
        %v4408 = vsel %vm747, %v4376, 0.0
        %v4409 = vsel %vm748, %v4377, 0.0
        %v4410 = vsel %vm749, %v4378, 0.0
        %v4411 = vsel %vm750, %v4379, 0.0
        %v4412 = vsel %vm751, %v4380, 0.0
        %v4413 = vsel %vm752, %v4381, 0.0
        %v4414 = vsel %vm753, %v4382, 0.0
        %v4415 = vsel %vm754, %v4383, 0.0
        %v4416 = vsel %vm755, %v4384, 0.0
        %v4417 = vsel %vm756, %v4385, 0.0
        %v4418 = vsel %vm757, %v4386, 0.0
        %v4419 = vsel %vm758, %v4387, 0.0
        %v4420 = vsel %vm759, %v4388, 0.0
        %v4421 = vsel %vm760, %v4389, 0.0
        %v4422 = vsel %vm761, %v4390, 0.0
        %v4423 = vsel %vm762, %v4391, 0.0
        %v4424 = vsel %vm763, %v4392, 0.0
        %v4425 = vsel %vm764, %v4393, 0.0
        %v4426 = vsel %vm765, %v4394, 0.0
        %v4427 = vsel %vm766, %v4395, 0.0
        %v4428 = vsel %vm767, %v4396, 0.0
        %v4429 = vsel %vm768, %v4397, 0.0
        %v4430 = vsel %vm769, %v4398, 0.0
        %v4431 = vsel %vm770, %v4399, 0.0
        %v4432 = vsel %vm771, %v4400, 0.0
        %v4433 = vsel %vm772, %v4401, 0.0
        %v4434 = vsel %vm773, %v4402, 0.0
        %v4435 = vsel %vm774, %v4403, 0.0
        %v4436 = vpack.c.bf16 %v4404, %v4404
        %v4437 = vpack.c.bf16 %v4405, %v4405
        %v4438 = vpack.c.bf16 %v4406, %v4406
        %v4439 = vpack.c.bf16 %v4407, %v4407
        %v4440 = vpack.c.bf16 %v4408, %v4408
        %v4441 = vpack.c.bf16 %v4409, %v4409
        %v4442 = vpack.c.bf16 %v4410, %v4410
        %v4443 = vpack.c.bf16 %v4411, %v4411
        %v4444 = vpack.c.bf16 %v4412, %v4412
        %v4445 = vpack.c.bf16 %v4413, %v4413
        %v4446 = vpack.c.bf16 %v4414, %v4414
        %v4447 = vpack.c.bf16 %v4415, %v4415
        %v4448 = vpack.c.bf16 %v4416, %v4416
        %v4449 = vpack.c.bf16 %v4417, %v4417
        %v4450 = vpack.c.bf16 %v4418, %v4418
        %v4451 = vpack.c.bf16 %v4419, %v4419
        %v4452 = vpack.c.bf16 %v4420, %v4420
        %v4453 = vpack.c.bf16 %v4421, %v4421
        %v4454 = vpack.c.bf16 %v4422, %v4422
        %v4455 = vpack.c.bf16 %v4423, %v4423
        %v4456 = vpack.c.bf16 %v4424, %v4424
        %v4457 = vpack.c.bf16 %v4425, %v4425
        %v4458 = vpack.c.bf16 %v4426, %v4426
        %v4459 = vpack.c.bf16 %v4427, %v4427
        %v4460 = vpack.c.bf16 %v4428, %v4428
        %v4461 = vpack.c.bf16 %v4429, %v4429
        %v4462 = vpack.c.bf16 %v4430, %v4430
        %v4463 = vpack.c.bf16 %v4431, %v4431
        %v4464 = vpack.c.bf16 %v4432, %v4432
        %v4465 = vpack.c.bf16 %v4433, %v4433
        %v4466 = vpack.c.bf16 %v4434, %v4434
        %v4467 = vpack.c.bf16 %v4435, %v4435
        %4468 = vst [vmem:[#allocation3] sm:$0xf] %v4436
        %4469 = vst [vmem:[#allocation3 + $0x24] sm:$0xf] %v4437
        %4470 = vst [vmem:[#allocation3 + $0x48] sm:$0xf] %v4438
        %4471 = vst [vmem:[#allocation3 + $0x6c] sm:$0xf] %v4439
        %4472 = vst [vmem:[#allocation3 + $0x90] sm:$0xf] %v4440
        %4473 = vst [vmem:[#allocation3 + $0xb4] sm:$0xf] %v4441
        %4474 = vst [vmem:[#allocation3 + $0xd8] sm:$0xf] %v4442
        %4475 = vst [vmem:[#allocation3 + $0xfc] sm:$0xf] %v4443
        %4476 = vst [vmem:[#allocation3 + $0x120] sm:$0xf] %v4444
        %4477 = vst [vmem:[#allocation3 + $0x144] sm:$0xf] %v4445
        %4478 = vst [vmem:[#allocation3 + $0x168] sm:$0xf] %v4446
        %4479 = vst [vmem:[#allocation3 + $0x18c] sm:$0xf] %v4447
        %4480 = vst [vmem:[#allocation3 + $0x1b0] sm:$0xf] %v4448
        %4481 = vst [vmem:[#allocation3 + $0x1d4] sm:$0xf] %v4449
        %4482 = vst [vmem:[#allocation3 + $0x1f8] sm:$0xf] %v4450
        %4483 = vst [vmem:[#allocation3 + $0x21c] sm:$0xf] %v4451
        %4484 = vst [vmem:[#allocation3 + $0x240] sm:$0xf] %v4452
        %4485 = vst [vmem:[#allocation3 + $0x264] sm:$0xf] %v4453
        %4486 = vst [vmem:[#allocation3 + $0x288] sm:$0xf] %v4454
        %4487 = vst [vmem:[#allocation3 + $0x2ac] sm:$0xf] %v4455
        %4488 = vst [vmem:[#allocation3 + $0x2d0] sm:$0xf] %v4456
        %4489 = vst [vmem:[#allocation3 + $0x2f4] sm:$0xf] %v4457
        %4490 = vst [vmem:[#allocation3 + $0x318] sm:$0xf] %v4458
        %4491 = vst [vmem:[#allocation3 + $0x33c] sm:$0xf] %v4459
        %4492 = vst [vmem:[#allocation3 + $0x360] sm:$0xf] %v4460
        %4493 = vst [vmem:[#allocation3 + $0x384] sm:$0xf] %v4461
        %4494 = vst [vmem:[#allocation3 + $0x3a8] sm:$0xf] %v4462
        %4495 = vst [vmem:[#allocation3 + $0x3cc] sm:$0xf] %v4463
        %4496 = vst [vmem:[#allocation3 + $0x3f0] sm:$0xf] %v4464
        %4497 = vst [vmem:[#allocation3 + $0x414] sm:$0xf] %v4465
        %4498 = vst [vmem:[#allocation3 + $0x438] sm:$0xf] %v4466
        %4499 = vst [vmem:[#allocation3 + $0x45c] sm:$0xf] %v4467
        %v4500 = vld [vmem:[#allocation2 + $0x8] sm:$0xff]
        %v4501 = vld [vmem:[#allocation2 + $0x10] sm:$0xff]
        %v4502 = vld [vmem:[#allocation2 + $0x18] sm:$0xff]
        %v4503 = vld [vmem:[#allocation2 + $0x20] sm:$0xff]
        %v4504 = vld [vmem:[#allocation2 + $0x28] sm:$0xff]
        %v4505 = vld [vmem:[#allocation2 + $0x30] sm:$0xff]
        %v4506 = vld [vmem:[#allocation2 + $0x38] sm:$0xff]
        %v4507 = vld [vmem:[#allocation2 + $0x40] sm:$0xff]
        %v4508 = vld [vmem:[#allocation2 + $0x48] sm:$0xff]
        %v4509 = vld [vmem:[#allocation2 + $0x50] sm:$0xff]
        %v4510 = vld [vmem:[#allocation2 + $0x58] sm:$0xff]
        %v4511 = vld [vmem:[#allocation2 + $0x60] sm:$0xff]
        %v4512 = vld [vmem:[#allocation2 + $0x68] sm:$0xff]
        %v4513 = vld [vmem:[#allocation2 + $0x70] sm:$0xff]
        %v4514 = vld [vmem:[#allocation2 + $0x78] sm:$0xff]
        %v4515 = vld [vmem:[#allocation2 + $0x80] sm:$0xff]
        %v4516 = vld [vmem:[#allocation2 + $0x88] sm:$0xff]
        %v4517 = vld [vmem:[#allocation2 + $0x90] sm:$0xff]
        %v4518 = vld [vmem:[#allocation2 + $0x98] sm:$0xff]
        %v4519 = vld [vmem:[#allocation2 + $0xa0] sm:$0xff]
        %v4520 = vld [vmem:[#allocation2 + $0xa8] sm:$0xff]
        %v4521 = vld [vmem:[#allocation2 + $0xb0] sm:$0xff]
        %v4522 = vld [vmem:[#allocation2 + $0xb8] sm:$0xff]
        %v4523 = vld [vmem:[#allocation2 + $0xc0] sm:$0xff]
        %v4524 = vld [vmem:[#allocation2 + $0xc8] sm:$0xff]
        %v4525 = vld [vmem:[#allocation2 + $0xd0] sm:$0xff]
        %v4526 = vld [vmem:[#allocation2 + $0xd8] sm:$0xff]
        %v4527 = vld [vmem:[#allocation2 + $0xe0] sm:$0xff]
        %v4528 = vld [vmem:[#allocation2 + $0xe8] sm:$0xff]
        %v4529 = vld [vmem:[#allocation2 + $0xf0] sm:$0xff]
        %v4530 = vld [vmem:[#allocation2 + $0xf8] sm:$0xff]
        %v4531 = vld [vmem:[#allocation2 + $0x100] sm:$0xff]
        %v4532 = vpack.c.bf16 %v4500, %v4500
        %v4533 = vpack.c.bf16 %v4501, %v4501
        %v4534 = vpack.c.bf16 %v4502, %v4502
        %v4535 = vpack.c.bf16 %v4503, %v4503
        %v4536 = vpack.c.bf16 %v4504, %v4504
        %v4537 = vpack.c.bf16 %v4505, %v4505
        %v4538 = vpack.c.bf16 %v4506, %v4506
        %v4539 = vpack.c.bf16 %v4507, %v4507
        %v4540 = vpack.c.bf16 %v4508, %v4508
        %v4541 = vpack.c.bf16 %v4509, %v4509
        %v4542 = vpack.c.bf16 %v4510, %v4510
        %v4543 = vpack.c.bf16 %v4511, %v4511
        %v4544 = vpack.c.bf16 %v4512, %v4512
        %v4545 = vpack.c.bf16 %v4513, %v4513
        %v4546 = vpack.c.bf16 %v4514, %v4514
        %v4547 = vpack.c.bf16 %v4515, %v4515
        %v4548 = vpack.c.bf16 %v4516, %v4516
        %v4549 = vpack.c.bf16 %v4517, %v4517
        %v4550 = vpack.c.bf16 %v4518, %v4518
        %v4551 = vpack.c.bf16 %v4519, %v4519
        %v4552 = vpack.c.bf16 %v4520, %v4520
        %v4553 = vpack.c.bf16 %v4521, %v4521
        %v4554 = vpack.c.bf16 %v4522, %v4522
        %v4555 = vpack.c.bf16 %v4523, %v4523
        %v4556 = vpack.c.bf16 %v4524, %v4524
        %v4557 = vpack.c.bf16 %v4525, %v4525
        %v4558 = vpack.c.bf16 %v4526, %v4526
        %v4559 = vpack.c.bf16 %v4527, %v4527
        %v4560 = vpack.c.bf16 %v4528, %v4528
        %v4561 = vpack.c.bf16 %v4529, %v4529
        %v4562 = vpack.c.bf16 %v4530, %v4530
        %v4563 = vpack.c.bf16 %v4531, %v4531
        %4564 = vst [vmem:[#allocation3 + $0x4] sm:$0xf] %v4532
        %4565 = vst [vmem:[#allocation3 + $0x28] sm:$0xf] %v4533
        %4566 = vst [vmem:[#allocation3 + $0x4c] sm:$0xf] %v4534
        %4567 = vst [vmem:[#allocation3 + $0x70] sm:$0xf] %v4535
        %4568 = vst [vmem:[#allocation3 + $0x94] sm:$0xf] %v4536
        %4569 = vst [vmem:[#allocation3 + $0xb8] sm:$0xf] %v4537
        %4570 = vst [vmem:[#allocation3 + $0xdc] sm:$0xf] %v4538
        %4571 = vst [vmem:[#allocation3 + $0x100] sm:$0xf] %v4539
        %4572 = vst [vmem:[#allocation3 + $0x124] sm:$0xf] %v4540
        %4573 = vst [vmem:[#allocation3 + $0x148] sm:$0xf] %v4541
        %4574 = vst [vmem:[#allocation3 + $0x16c] sm:$0xf] %v4542
        %4575 = vst [vmem:[#allocation3 + $0x190] sm:$0xf] %v4543
        %4576 = vst [vmem:[#allocation3 + $0x1b4] sm:$0xf] %v4544
        %4577 = vst [vmem:[#allocation3 + $0x1d8] sm:$0xf] %v4545
        %4578 = vst [vmem:[#allocation3 + $0x1fc] sm:$0xf] %v4546
        %4579 = vst [vmem:[#allocation3 + $0x220] sm:$0xf] %v4547
        %4580 = vst [vmem:[#allocation3 + $0x244] sm:$0xf] %v4548
        %4581 = vst [vmem:[#allocation3 + $0x268] sm:$0xf] %v4549
        %4582 = vst [vmem:[#allocation3 + $0x28c] sm:$0xf] %v4550
        %4583 = vst [vmem:[#allocation3 + $0x2b0] sm:$0xf] %v4551
        %4584 = vst [vmem:[#allocation3 + $0x2d4] sm:$0xf] %v4552
        %4585 = vst [vmem:[#allocation3 + $0x2f8] sm:$0xf] %v4553
        %4586 = vst [vmem:[#allocation3 + $0x31c] sm:$0xf] %v4554
        %4587 = vst [vmem:[#allocation3 + $0x340] sm:$0xf] %v4555
        %4588 = vst [vmem:[#allocation3 + $0x364] sm:$0xf] %v4556
        %4589 = vst [vmem:[#allocation3 + $0x388] sm:$0xf] %v4557
        %4590 = vst [vmem:[#allocation3 + $0x3ac] sm:$0xf] %v4558
        %4591 = vst [vmem:[#allocation3 + $0x3d0] sm:$0xf] %v4559
        %4592 = vst [vmem:[#allocation3 + $0x3f4] sm:$0xf] %v4560
        %4593 = vst [vmem:[#allocation3 + $0x418] sm:$0xf] %v4561
        %4594 = vst [vmem:[#allocation3 + $0x43c] sm:$0xf] %v4562
        %4595 = vst [vmem:[#allocation3 + $0x460] sm:$0xf] %v4563
        %v4596 = vld [vmem:[#allocation2 + $0x9] sm:$0xff]
        %v4597 = vld [vmem:[#allocation2 + $0x11] sm:$0xff]
        %v4598 = vld [vmem:[#allocation2 + $0x19] sm:$0xff]
        %v4599 = vld [vmem:[#allocation2 + $0x21] sm:$0xff]
        %v4600 = vld [vmem:[#allocation2 + $0x29] sm:$0xff]
        %v4601 = vld [vmem:[#allocation2 + $0x31] sm:$0xff]
        %v4602 = vld [vmem:[#allocation2 + $0x39] sm:$0xff]
        %v4603 = vld [vmem:[#allocation2 + $0x41] sm:$0xff]
        %v4604 = vld [vmem:[#allocation2 + $0x49] sm:$0xff]
        %v4605 = vld [vmem:[#allocation2 + $0x51] sm:$0xff]
        %v4606 = vld [vmem:[#allocation2 + $0x59] sm:$0xff]
        %v4607 = vld [vmem:[#allocation2 + $0x61] sm:$0xff]
        %v4608 = vld [vmem:[#allocation2 + $0x69] sm:$0xff]
        %v4609 = vld [vmem:[#allocation2 + $0x71] sm:$0xff]
        %v4610 = vld [vmem:[#allocation2 + $0x79] sm:$0xff]
        %v4611 = vld [vmem:[#allocation2 + $0x81] sm:$0xff]
        %v4612 = vld [vmem:[#allocation2 + $0x89] sm:$0xff]
        %v4613 = vld [vmem:[#allocation2 + $0x91] sm:$0xff]
        %v4614 = vld [vmem:[#allocation2 + $0x99] sm:$0xff]
        %v4615 = vld [vmem:[#allocation2 + $0xa1] sm:$0xff]
        %v4616 = vld [vmem:[#allocation2 + $0xa9] sm:$0xff]
        %v4617 = vld [vmem:[#allocation2 + $0xb1] sm:$0xff]
        %v4618 = vld [vmem:[#allocation2 + $0xb9] sm:$0xff]
        %v4619 = vld [vmem:[#allocation2 + $0xc1] sm:$0xff]
        %v4620 = vld [vmem:[#allocation2 + $0xc9] sm:$0xff]
        %v4621 = vld [vmem:[#allocation2 + $0xd1] sm:$0xff]
        %v4622 = vld [vmem:[#allocation2 + $0xd9] sm:$0xff]
        %v4623 = vld [vmem:[#allocation2 + $0xe1] sm:$0xff]
        %v4624 = vld [vmem:[#allocation2 + $0xe9] sm:$0xff]
        %v4625 = vld [vmem:[#allocation2 + $0xf1] sm:$0xff]
        %v4626 = vld [vmem:[#allocation2 + $0xf9] sm:$0xff]
        %v4627 = vld [vmem:[#allocation2 + $0x101] sm:$0xff]
        %v4628 = vsel %vm775, %v4596, 0.0
        %v4629 = vsel %vm776, %v4597, 0.0
        %v4630 = vsel %vm777, %v4598, 0.0
        %v4631 = vsel %vm778, %v4599, 0.0
        %v4632 = vsel %vm779, %v4600, 0.0
        %v4633 = vsel %vm780, %v4601, 0.0
        %v4634 = vsel %vm781, %v4602, 0.0
        %v4635 = vsel %vm782, %v4603, 0.0
        %v4636 = vsel %vm783, %v4604, 0.0
        %v4637 = vsel %vm784, %v4605, 0.0
        %v4638 = vsel %vm785, %v4606, 0.0
        %v4639 = vsel %vm786, %v4607, 0.0
        %v4640 = vsel %vm787, %v4608, 0.0
        %v4641 = vsel %vm788, %v4609, 0.0
        %v4642 = vsel %vm789, %v4610, 0.0
        %v4643 = vsel %vm790, %v4611, 0.0
        %v4644 = vsel %vm791, %v4612, 0.0
        %v4645 = vsel %vm792, %v4613, 0.0
        %v4646 = vsel %vm793, %v4614, 0.0
        %v4647 = vsel %vm794, %v4615, 0.0
        %v4648 = vsel %vm795, %v4616, 0.0
        %v4649 = vsel %vm796, %v4617, 0.0
        %v4650 = vsel %vm797, %v4618, 0.0
        %v4651 = vsel %vm798, %v4619, 0.0
        %v4652 = vsel %vm799, %v4620, 0.0
        %v4653 = vsel %vm800, %v4621, 0.0
        %v4654 = vsel %vm801, %v4622, 0.0
        %v4655 = vsel %vm802, %v4623, 0.0
        %v4656 = vsel %vm803, %v4624, 0.0
        %v4657 = vsel %vm804, %v4625, 0.0
        %v4658 = vsel %vm805, %v4626, 0.0
        %v4659 = vsel %vm806, %v4627, 0.0
        %v4660 = vpack.c.bf16 %v4628, %v4628
        %v4661 = vpack.c.bf16 %v4629, %v4629
        %v4662 = vpack.c.bf16 %v4630, %v4630
        %v4663 = vpack.c.bf16 %v4631, %v4631
        %v4664 = vpack.c.bf16 %v4632, %v4632
        %v4665 = vpack.c.bf16 %v4633, %v4633
        %v4666 = vpack.c.bf16 %v4634, %v4634
        %v4667 = vpack.c.bf16 %v4635, %v4635
        %v4668 = vpack.c.bf16 %v4636, %v4636
        %v4669 = vpack.c.bf16 %v4637, %v4637
        %v4670 = vpack.c.bf16 %v4638, %v4638
        %v4671 = vpack.c.bf16 %v4639, %v4639
        %v4672 = vpack.c.bf16 %v4640, %v4640
        %v4673 = vpack.c.bf16 %v4641, %v4641
        %v4674 = vpack.c.bf16 %v4642, %v4642
        %v4675 = vpack.c.bf16 %v4643, %v4643
        %v4676 = vpack.c.bf16 %v4644, %v4644
        %v4677 = vpack.c.bf16 %v4645, %v4645
        %v4678 = vpack.c.bf16 %v4646, %v4646
        %v4679 = vpack.c.bf16 %v4647, %v4647
        %v4680 = vpack.c.bf16 %v4648, %v4648
        %v4681 = vpack.c.bf16 %v4649, %v4649
        %v4682 = vpack.c.bf16 %v4650, %v4650
        %v4683 = vpack.c.bf16 %v4651, %v4651
        %v4684 = vpack.c.bf16 %v4652, %v4652
        %v4685 = vpack.c.bf16 %v4653, %v4653
        %v4686 = vpack.c.bf16 %v4654, %v4654
        %v4687 = vpack.c.bf16 %v4655, %v4655
        %v4688 = vpack.c.bf16 %v4656, %v4656
        %v4689 = vpack.c.bf16 %v4657, %v4657
        %v4690 = vpack.c.bf16 %v4658, %v4658
        %v4691 = vpack.c.bf16 %v4659, %v4659
        %4692 = vst [vmem:[#allocation3 + $0x8] sm:$0xf] %v4660
        %4693 = vst [vmem:[#allocation3 + $0x2c] sm:$0xf] %v4661
        %4694 = vst [vmem:[#allocation3 + $0x50] sm:$0xf] %v4662
        %4695 = vst [vmem:[#allocation3 + $0x74] sm:$0xf] %v4663
        %4696 = vst [vmem:[#allocation3 + $0x98] sm:$0xf] %v4664
        %4697 = vst [vmem:[#allocation3 + $0xbc] sm:$0xf] %v4665
        %4698 = vst [vmem:[#allocation3 + $0xe0] sm:$0xf] %v4666
        %4699 = vst [vmem:[#allocation3 + $0x104] sm:$0xf] %v4667
        %4700 = vst [vmem:[#allocation3 + $0x128] sm:$0xf] %v4668
        %4701 = vst [vmem:[#allocation3 + $0x14c] sm:$0xf] %v4669
        %4702 = vst [vmem:[#allocation3 + $0x170] sm:$0xf] %v4670
        %4703 = vst [vmem:[#allocation3 + $0x194] sm:$0xf] %v4671
        %4704 = vst [vmem:[#allocation3 + $0x1b8] sm:$0xf] %v4672
        %4705 = vst [vmem:[#allocation3 + $0x1dc] sm:$0xf] %v4673
        %4706 = vst [vmem:[#allocation3 + $0x200] sm:$0xf] %v4674
        %4707 = vst [vmem:[#allocation3 + $0x224] sm:$0xf] %v4675
        %4708 = vst [vmem:[#allocation3 + $0x248] sm:$0xf] %v4676
        %4709 = vst [vmem:[#allocation3 + $0x26c] sm:$0xf] %v4677
        %4710 = vst [vmem:[#allocation3 + $0x290] sm:$0xf] %v4678
        %4711 = vst [vmem:[#allocation3 + $0x2b4] sm:$0xf] %v4679
        %4712 = vst [vmem:[#allocation3 + $0x2d8] sm:$0xf] %v4680
        %4713 = vst [vmem:[#allocation3 + $0x2fc] sm:$0xf] %v4681
        %4714 = vst [vmem:[#allocation3 + $0x320] sm:$0xf] %v4682
        %4715 = vst [vmem:[#allocation3 + $0x344] sm:$0xf] %v4683
        %4716 = vst [vmem:[#allocation3 + $0x368] sm:$0xf] %v4684
        %4717 = vst [vmem:[#allocation3 + $0x38c] sm:$0xf] %v4685
        %4718 = vst [vmem:[#allocation3 + $0x3b0] sm:$0xf] %v4686
        %4719 = vst [vmem:[#allocation3 + $0x3d4] sm:$0xf] %v4687
        %4720 = vst [vmem:[#allocation3 + $0x3f8] sm:$0xf] %v4688
        %4721 = vst [vmem:[#allocation3 + $0x41c] sm:$0xf] %v4689
        %4722 = vst [vmem:[#allocation3 + $0x440] sm:$0xf] %v4690
        %4723 = vst [vmem:[#allocation3 + $0x464] sm:$0xf] %v4691
        %v4724 = vld [vmem:[#allocation2 + $0x17] sm:$0xff]
        %v4725 = vld [vmem:[#allocation2 + $0x1f] sm:$0xff]
        %v4726 = vld [vmem:[#allocation2 + $0x27] sm:$0xff]
        %v4727 = vld [vmem:[#allocation2 + $0x2f] sm:$0xff]
        %v4728 = vld [vmem:[#allocation2 + $0x37] sm:$0xff]
        %v4729 = vld [vmem:[#allocation2 + $0x3f] sm:$0xff]
        %v4730 = vld [vmem:[#allocation2 + $0x47] sm:$0xff]
        %v4731 = vld [vmem:[#allocation2 + $0x4f] sm:$0xff]
        %v4732 = vld [vmem:[#allocation2 + $0x57] sm:$0xff]
        %v4733 = vld [vmem:[#allocation2 + $0x5f] sm:$0xff]
        %v4734 = vld [vmem:[#allocation2 + $0x67] sm:$0xff]
        %v4735 = vld [vmem:[#allocation2 + $0x6f] sm:$0xff]
        %v4736 = vld [vmem:[#allocation2 + $0x77] sm:$0xff]
        %v4737 = vld [vmem:[#allocation2 + $0x7f] sm:$0xff]
        %v4738 = vld [vmem:[#allocation2 + $0x87] sm:$0xff]
        %v4739 = vld [vmem:[#allocation2 + $0x8f] sm:$0xff]
        %v4740 = vld [vmem:[#allocation2 + $0x97] sm:$0xff]
        %v4741 = vld [vmem:[#allocation2 + $0x9f] sm:$0xff]
        %v4742 = vld [vmem:[#allocation2 + $0xa7] sm:$0xff]
        %v4743 = vld [vmem:[#allocation2 + $0xaf] sm:$0xff]
        %v4744 = vld [vmem:[#allocation2 + $0xb7] sm:$0xff]
        %v4745 = vld [vmem:[#allocation2 + $0xbf] sm:$0xff]
        %v4746 = vld [vmem:[#allocation2 + $0xc7] sm:$0xff]
        %v4747 = vld [vmem:[#allocation2 + $0xcf] sm:$0xff]
        %v4748 = vld [vmem:[#allocation2 + $0xd7] sm:$0xff]
        %v4749 = vld [vmem:[#allocation2 + $0xdf] sm:$0xff]
        %v4750 = vld [vmem:[#allocation2 + $0xe7] sm:$0xff]
        %v4751 = vld [vmem:[#allocation2 + $0xef] sm:$0xff]
        %v4752 = vld [vmem:[#allocation2 + $0xf7] sm:$0xff]
        %v4753 = vld [vmem:[#allocation2 + $0xff] sm:$0xff]
        %v4754 = vld [vmem:[#allocation2 + $0x107] sm:$0xff]
        %v4755 = vld [vmem:[#allocation2 + $0x10f] sm:$0xff]
        %v4756 = vsel %vm743, %v4724, 0.0
        %v4757 = vsel %vm744, %v4725, 0.0
        %v4758 = vsel %vm745, %v4726, 0.0
        %v4759 = vsel %vm746, %v4727, 0.0
        %v4760 = vsel %vm747, %v4728, 0.0
        %v4761 = vsel %vm748, %v4729, 0.0
        %v4762 = vsel %vm749, %v4730, 0.0
        %v4763 = vsel %vm750, %v4731, 0.0
        %v4764 = vsel %vm751, %v4732, 0.0
        %v4765 = vsel %vm752, %v4733, 0.0
        %v4766 = vsel %vm753, %v4734, 0.0
        %v4767 = vsel %vm754, %v4735, 0.0
        %v4768 = vsel %vm755, %v4736, 0.0
        %v4769 = vsel %vm756, %v4737, 0.0
        %v4770 = vsel %vm757, %v4738, 0.0
        %v4771 = vsel %vm758, %v4739, 0.0
        %v4772 = vsel %vm759, %v4740, 0.0
        %v4773 = vsel %vm760, %v4741, 0.0
        %v4774 = vsel %vm761, %v4742, 0.0
        %v4775 = vsel %vm762, %v4743, 0.0
        %v4776 = vsel %vm763, %v4744, 0.0
        %v4777 = vsel %vm764, %v4745, 0.0
        %v4778 = vsel %vm765, %v4746, 0.0
        %v4779 = vsel %vm766, %v4747, 0.0
        %v4780 = vsel %vm767, %v4748, 0.0
        %v4781 = vsel %vm768, %v4749, 0.0
        %v4782 = vsel %vm769, %v4750, 0.0
        %v4783 = vsel %vm770, %v4751, 0.0
        %v4784 = vsel %vm771, %v4752, 0.0
        %v4785 = vsel %vm772, %v4753, 0.0
        %v4786 = vsel %vm773, %v4754, 0.0
        %v4787 = vsel %vm774, %v4755, 0.0
        %v4788 = vpack.c.bf16 %v4756, %v4756
        %v4789 = vpack.c.bf16 %v4757, %v4757
        %v4790 = vpack.c.bf16 %v4758, %v4758
        %v4791 = vpack.c.bf16 %v4759, %v4759
        %v4792 = vpack.c.bf16 %v4760, %v4760
        %v4793 = vpack.c.bf16 %v4761, %v4761
        %v4794 = vpack.c.bf16 %v4762, %v4762
        %v4795 = vpack.c.bf16 %v4763, %v4763
        %v4796 = vpack.c.bf16 %v4764, %v4764
        %v4797 = vpack.c.bf16 %v4765, %v4765
        %v4798 = vpack.c.bf16 %v4766, %v4766
        %v4799 = vpack.c.bf16 %v4767, %v4767
        %v4800 = vpack.c.bf16 %v4768, %v4768
        %v4801 = vpack.c.bf16 %v4769, %v4769
        %v4802 = vpack.c.bf16 %v4770, %v4770
        %v4803 = vpack.c.bf16 %v4771, %v4771
        %v4804 = vpack.c.bf16 %v4772, %v4772
        %v4805 = vpack.c.bf16 %v4773, %v4773
        %v4806 = vpack.c.bf16 %v4774, %v4774
        %v4807 = vpack.c.bf16 %v4775, %v4775
        %v4808 = vpack.c.bf16 %v4776, %v4776
        %v4809 = vpack.c.bf16 %v4777, %v4777
        %v4810 = vpack.c.bf16 %v4778, %v4778
        %v4811 = vpack.c.bf16 %v4779, %v4779
        %v4812 = vpack.c.bf16 %v4780, %v4780
        %v4813 = vpack.c.bf16 %v4781, %v4781
        %v4814 = vpack.c.bf16 %v4782, %v4782
        %v4815 = vpack.c.bf16 %v4783, %v4783
        %v4816 = vpack.c.bf16 %v4784, %v4784
        %v4817 = vpack.c.bf16 %v4785, %v4785
        %v4818 = vpack.c.bf16 %v4786, %v4786
        %v4819 = vpack.c.bf16 %v4787, %v4787
        %4820 = vst [vmem:[#allocation3 + $0xc] sm:$0xf] %v4788
        %4821 = vst [vmem:[#allocation3 + $0x30] sm:$0xf] %v4789
        %4822 = vst [vmem:[#allocation3 + $0x54] sm:$0xf] %v4790
        %4823 = vst [vmem:[#allocation3 + $0x78] sm:$0xf] %v4791
        %4824 = vst [vmem:[#allocation3 + $0x9c] sm:$0xf] %v4792
        %4825 = vst [vmem:[#allocation3 + $0xc0] sm:$0xf] %v4793
        %4826 = vst [vmem:[#allocation3 + $0xe4] sm:$0xf] %v4794
        %4827 = vst [vmem:[#allocation3 + $0x108] sm:$0xf] %v4795
        %4828 = vst [vmem:[#allocation3 + $0x12c] sm:$0xf] %v4796
        %4829 = vst [vmem:[#allocation3 + $0x150] sm:$0xf] %v4797
        %4830 = vst [vmem:[#allocation3 + $0x174] sm:$0xf] %v4798
        %4831 = vst [vmem:[#allocation3 + $0x198] sm:$0xf] %v4799
        %4832 = vst [vmem:[#allocation3 + $0x1bc] sm:$0xf] %v4800
        %4833 = vst [vmem:[#allocation3 + $0x1e0] sm:$0xf] %v4801
        %4834 = vst [vmem:[#allocation3 + $0x204] sm:$0xf] %v4802
        %4835 = vst [vmem:[#allocation3 + $0x228] sm:$0xf] %v4803
        %4836 = vst [vmem:[#allocation3 + $0x24c] sm:$0xf] %v4804
        %4837 = vst [vmem:[#allocation3 + $0x270] sm:$0xf] %v4805
        %4838 = vst [vmem:[#allocation3 + $0x294] sm:$0xf] %v4806
        %4839 = vst [vmem:[#allocation3 + $0x2b8] sm:$0xf] %v4807
        %4840 = vst [vmem:[#allocation3 + $0x2dc] sm:$0xf] %v4808
        %4841 = vst [vmem:[#allocation3 + $0x300] sm:$0xf] %v4809
        %4842 = vst [vmem:[#allocation3 + $0x324] sm:$0xf] %v4810
        %4843 = vst [vmem:[#allocation3 + $0x348] sm:$0xf] %v4811
        %4844 = vst [vmem:[#allocation3 + $0x36c] sm:$0xf] %v4812
        %4845 = vst [vmem:[#allocation3 + $0x390] sm:$0xf] %v4813
        %4846 = vst [vmem:[#allocation3 + $0x3b4] sm:$0xf] %v4814
        %4847 = vst [vmem:[#allocation3 + $0x3d8] sm:$0xf] %v4815
        %4848 = vst [vmem:[#allocation3 + $0x3fc] sm:$0xf] %v4816
        %4849 = vst [vmem:[#allocation3 + $0x420] sm:$0xf] %v4817
        %4850 = vst [vmem:[#allocation3 + $0x444] sm:$0xf] %v4818
        %4851 = vst [vmem:[#allocation3 + $0x468] sm:$0xf] %v4819
        %v4852 = vld [vmem:[#allocation2 + $0x18] sm:$0xff]
        %v4853 = vld [vmem:[#allocation2 + $0x20] sm:$0xff]
        %v4854 = vld [vmem:[#allocation2 + $0x28] sm:$0xff]
        %v4855 = vld [vmem:[#allocation2 + $0x30] sm:$0xff]
        %v4856 = vld [vmem:[#allocation2 + $0x38] sm:$0xff]
        %v4857 = vld [vmem:[#allocation2 + $0x40] sm:$0xff]
        %v4858 = vld [vmem:[#allocation2 + $0x48] sm:$0xff]
        %v4859 = vld [vmem:[#allocation2 + $0x50] sm:$0xff]
        %v4860 = vld [vmem:[#allocation2 + $0x58] sm:$0xff]
        %v4861 = vld [vmem:[#allocation2 + $0x60] sm:$0xff]
        %v4862 = vld [vmem:[#allocation2 + $0x68] sm:$0xff]
        %v4863 = vld [vmem:[#allocation2 + $0x70] sm:$0xff]
        %v4864 = vld [vmem:[#allocation2 + $0x78] sm:$0xff]
        %v4865 = vld [vmem:[#allocation2 + $0x80] sm:$0xff]
        %v4866 = vld [vmem:[#allocation2 + $0x88] sm:$0xff]
        %v4867 = vld [vmem:[#allocation2 + $0x90] sm:$0xff]
        %v4868 = vld [vmem:[#allocation2 + $0x98] sm:$0xff]
        %v4869 = vld [vmem:[#allocation2 + $0xa0] sm:$0xff]
        %v4870 = vld [vmem:[#allocation2 + $0xa8] sm:$0xff]
        %v4871 = vld [vmem:[#allocation2 + $0xb0] sm:$0xff]
        %v4872 = vld [vmem:[#allocation2 + $0xb8] sm:$0xff]
        %v4873 = vld [vmem:[#allocation2 + $0xc0] sm:$0xff]
        %v4874 = vld [vmem:[#allocation2 + $0xc8] sm:$0xff]
        %v4875 = vld [vmem:[#allocation2 + $0xd0] sm:$0xff]
        %v4876 = vld [vmem:[#allocation2 + $0xd8] sm:$0xff]
        %v4877 = vld [vmem:[#allocation2 + $0xe0] sm:$0xff]
        %v4878 = vld [vmem:[#allocation2 + $0xe8] sm:$0xff]
        %v4879 = vld [vmem:[#allocation2 + $0xf0] sm:$0xff]
        %v4880 = vld [vmem:[#allocation2 + $0xf8] sm:$0xff]
        %v4881 = vld [vmem:[#allocation2 + $0x100] sm:$0xff]
        %v4882 = vld [vmem:[#allocation2 + $0x108] sm:$0xff]
        %v4883 = vld [vmem:[#allocation2 + $0x110] sm:$0xff]
        %v4884 = vpack.c.bf16 %v4852, %v4852
        %v4885 = vpack.c.bf16 %v4853, %v4853
        %v4886 = vpack.c.bf16 %v4854, %v4854
        %v4887 = vpack.c.bf16 %v4855, %v4855
        %v4888 = vpack.c.bf16 %v4856, %v4856
        %v4889 = vpack.c.bf16 %v4857, %v4857
        %v4890 = vpack.c.bf16 %v4858, %v4858
        %v4891 = vpack.c.bf16 %v4859, %v4859
        %v4892 = vpack.c.bf16 %v4860, %v4860
        %v4893 = vpack.c.bf16 %v4861, %v4861
        %v4894 = vpack.c.bf16 %v4862, %v4862
        %v4895 = vpack.c.bf16 %v4863, %v4863
        %v4896 = vpack.c.bf16 %v4864, %v4864
        %v4897 = vpack.c.bf16 %v4865, %v4865
        %v4898 = vpack.c.bf16 %v4866, %v4866
        %v4899 = vpack.c.bf16 %v4867, %v4867
        %v4900 = vpack.c.bf16 %v4868, %v4868
        %v4901 = vpack.c.bf16 %v4869, %v4869
        %v4902 = vpack.c.bf16 %v4870, %v4870
        %v4903 = vpack.c.bf16 %v4871, %v4871
        %v4904 = vpack.c.bf16 %v4872, %v4872
        %v4905 = vpack.c.bf16 %v4873, %v4873
        %v4906 = vpack.c.bf16 %v4874, %v4874
        %v4907 = vpack.c.bf16 %v4875, %v4875
        %v4908 = vpack.c.bf16 %v4876, %v4876
        %v4909 = vpack.c.bf16 %v4877, %v4877
        %v4910 = vpack.c.bf16 %v4878, %v4878
        %v4911 = vpack.c.bf16 %v4879, %v4879
        %v4912 = vpack.c.bf16 %v4880, %v4880
        %v4913 = vpack.c.bf16 %v4881, %v4881
        %v4914 = vpack.c.bf16 %v4882, %v4882
        %v4915 = vpack.c.bf16 %v4883, %v4883
        %4916 = vst [vmem:[#allocation3 + $0x10] sm:$0xf] %v4884
        %4917 = vst [vmem:[#allocation3 + $0x34] sm:$0xf] %v4885
        %4918 = vst [vmem:[#allocation3 + $0x58] sm:$0xf] %v4886
        %4919 = vst [vmem:[#allocation3 + $0x7c] sm:$0xf] %v4887
        %4920 = vst [vmem:[#allocation3 + $0xa0] sm:$0xf] %v4888
        %4921 = vst [vmem:[#allocation3 + $0xc4] sm:$0xf] %v4889
        %4922 = vst [vmem:[#allocation3 + $0xe8] sm:$0xf] %v4890
        %4923 = vst [vmem:[#allocation3 + $0x10c] sm:$0xf] %v4891
        %4924 = vst [vmem:[#allocation3 + $0x130] sm:$0xf] %v4892
        %4925 = vst [vmem:[#allocation3 + $0x154] sm:$0xf] %v4893
        %4926 = vst [vmem:[#allocation3 + $0x178] sm:$0xf] %v4894
        %4927 = vst [vmem:[#allocation3 + $0x19c] sm:$0xf] %v4895
        %4928 = vst [vmem:[#allocation3 + $0x1c0] sm:$0xf] %v4896
        %4929 = vst [vmem:[#allocation3 + $0x1e4] sm:$0xf] %v4897
        %4930 = vst [vmem:[#allocation3 + $0x208] sm:$0xf] %v4898
        %4931 = vst [vmem:[#allocation3 + $0x22c] sm:$0xf] %v4899
        %4932 = vst [vmem:[#allocation3 + $0x250] sm:$0xf] %v4900
        %4933 = vst [vmem:[#allocation3 + $0x274] sm:$0xf] %v4901
        %4934 = vst [vmem:[#allocation3 + $0x298] sm:$0xf] %v4902
        %4935 = vst [vmem:[#allocation3 + $0x2bc] sm:$0xf] %v4903
        %4936 = vst [vmem:[#allocation3 + $0x2e0] sm:$0xf] %v4904
        %4937 = vst [vmem:[#allocation3 + $0x304] sm:$0xf] %v4905
        %4938 = vst [vmem:[#allocation3 + $0x328] sm:$0xf] %v4906
        %4939 = vst [vmem:[#allocation3 + $0x34c] sm:$0xf] %v4907
        %4940 = vst [vmem:[#allocation3 + $0x370] sm:$0xf] %v4908
        %4941 = vst [vmem:[#allocation3 + $0x394] sm:$0xf] %v4909
        %4942 = vst [vmem:[#allocation3 + $0x3b8] sm:$0xf] %v4910
        %4943 = vst [vmem:[#allocation3 + $0x3dc] sm:$0xf] %v4911
        %4944 = vst [vmem:[#allocation3 + $0x400] sm:$0xf] %v4912
        %4945 = vst [vmem:[#allocation3 + $0x424] sm:$0xf] %v4913
        %4946 = vst [vmem:[#allocation3 + $0x448] sm:$0xf] %v4914
        %4947 = vst [vmem:[#allocation3 + $0x46c] sm:$0xf] %v4915
        %v4948 = vld [vmem:[#allocation2 + $0x19] sm:$0xff]
        %v4949 = vld [vmem:[#allocation2 + $0x21] sm:$0xff]
        %v4950 = vld [vmem:[#allocation2 + $0x29] sm:$0xff]
        %v4951 = vld [vmem:[#allocation2 + $0x31] sm:$0xff]
        %v4952 = vld [vmem:[#allocation2 + $0x39] sm:$0xff]
        %v4953 = vld [vmem:[#allocation2 + $0x41] sm:$0xff]
        %v4954 = vld [vmem:[#allocation2 + $0x49] sm:$0xff]
        %v4955 = vld [vmem:[#allocation2 + $0x51] sm:$0xff]
        %v4956 = vld [vmem:[#allocation2 + $0x59] sm:$0xff]
        %v4957 = vld [vmem:[#allocation2 + $0x61] sm:$0xff]
        %v4958 = vld [vmem:[#allocation2 + $0x69] sm:$0xff]
        %v4959 = vld [vmem:[#allocation2 + $0x71] sm:$0xff]
        %v4960 = vld [vmem:[#allocation2 + $0x79] sm:$0xff]
        %v4961 = vld [vmem:[#allocation2 + $0x81] sm:$0xff]
        %v4962 = vld [vmem:[#allocation2 + $0x89] sm:$0xff]
        %v4963 = vld [vmem:[#allocation2 + $0x91] sm:$0xff]
        %v4964 = vld [vmem:[#allocation2 + $0x99] sm:$0xff]
        %v4965 = vld [vmem:[#allocation2 + $0xa1] sm:$0xff]
        %v4966 = vld [vmem:[#allocation2 + $0xa9] sm:$0xff]
        %v4967 = vld [vmem:[#allocation2 + $0xb1] sm:$0xff]
        %v4968 = vld [vmem:[#allocation2 + $0xb9] sm:$0xff]
        %v4969 = vld [vmem:[#allocation2 + $0xc1] sm:$0xff]
        %v4970 = vld [vmem:[#allocation2 + $0xc9] sm:$0xff]
        %v4971 = vld [vmem:[#allocation2 + $0xd1] sm:$0xff]
        %v4972 = vld [vmem:[#allocation2 + $0xd9] sm:$0xff]
        %v4973 = vld [vmem:[#allocation2 + $0xe1] sm:$0xff]
        %v4974 = vld [vmem:[#allocation2 + $0xe9] sm:$0xff]
        %v4975 = vld [vmem:[#allocation2 + $0xf1] sm:$0xff]
        %v4976 = vld [vmem:[#allocation2 + $0xf9] sm:$0xff]
        %v4977 = vld [vmem:[#allocation2 + $0x101] sm:$0xff]
        %v4978 = vld [vmem:[#allocation2 + $0x109] sm:$0xff]
        %v4979 = vld [vmem:[#allocation2 + $0x111] sm:$0xff]
        %v4980 = vsel %vm775, %v4948, 0.0
        %v4981 = vsel %vm776, %v4949, 0.0
        %v4982 = vsel %vm777, %v4950, 0.0
        %v4983 = vsel %vm778, %v4951, 0.0
        %v4984 = vsel %vm779, %v4952, 0.0
        %v4985 = vsel %vm780, %v4953, 0.0
        %v4986 = vsel %vm781, %v4954, 0.0
        %v4987 = vsel %vm782, %v4955, 0.0
        %v4988 = vsel %vm783, %v4956, 0.0
        %v4989 = vsel %vm784, %v4957, 0.0
        %v4990 = vsel %vm785, %v4958, 0.0
        %v4991 = vsel %vm786, %v4959, 0.0
        %v4992 = vsel %vm787, %v4960, 0.0
        %v4993 = vsel %vm788, %v4961, 0.0
        %v4994 = vsel %vm789, %v4962, 0.0
        %v4995 = vsel %vm790, %v4963, 0.0
        %v4996 = vsel %vm791, %v4964, 0.0
        %v4997 = vsel %vm792, %v4965, 0.0
        %v4998 = vsel %vm793, %v4966, 0.0
        %v4999 = vsel %vm794, %v4967, 0.0
        %v5000 = vsel %vm795, %v4968, 0.0
        %v5001 = vsel %vm796, %v4969, 0.0
        %v5002 = vsel %vm797, %v4970, 0.0
        %v5003 = vsel %vm798, %v4971, 0.0
        %v5004 = vsel %vm799, %v4972, 0.0
        %v5005 = vsel %vm800, %v4973, 0.0
        %v5006 = vsel %vm801, %v4974, 0.0
        %v5007 = vsel %vm802, %v4975, 0.0
        %v5008 = vsel %vm803, %v4976, 0.0
        %v5009 = vsel %vm804, %v4977, 0.0
        %v5010 = vsel %vm805, %v4978, 0.0
        %v5011 = vsel %vm806, %v4979, 0.0
        %v5012 = vpack.c.bf16 %v4980, %v4980
        %v5013 = vpack.c.bf16 %v4981, %v4981
        %v5014 = vpack.c.bf16 %v4982, %v4982
        %v5015 = vpack.c.bf16 %v4983, %v4983
        %v5016 = vpack.c.bf16 %v4984, %v4984
        %v5017 = vpack.c.bf16 %v4985, %v4985
        %v5018 = vpack.c.bf16 %v4986, %v4986
        %v5019 = vpack.c.bf16 %v4987, %v4987
        %v5020 = vpack.c.bf16 %v4988, %v4988
        %v5021 = vpack.c.bf16 %v4989, %v4989
        %v5022 = vpack.c.bf16 %v4990, %v4990
        %v5023 = vpack.c.bf16 %v4991, %v4991
        %v5024 = vpack.c.bf16 %v4992, %v4992
        %v5025 = vpack.c.bf16 %v4993, %v4993
        %v5026 = vpack.c.bf16 %v4994, %v4994
        %v5027 = vpack.c.bf16 %v4995, %v4995
        %v5028 = vpack.c.bf16 %v4996, %v4996
        %v5029 = vpack.c.bf16 %v4997, %v4997
        %v5030 = vpack.c.bf16 %v4998, %v4998
        %v5031 = vpack.c.bf16 %v4999, %v4999
        %v5032 = vpack.c.bf16 %v5000, %v5000
        %v5033 = vpack.c.bf16 %v5001, %v5001
        %v5034 = vpack.c.bf16 %v5002, %v5002
        %v5035 = vpack.c.bf16 %v5003, %v5003
        %v5036 = vpack.c.bf16 %v5004, %v5004
        %v5037 = vpack.c.bf16 %v5005, %v5005
        %v5038 = vpack.c.bf16 %v5006, %v5006
        %v5039 = vpack.c.bf16 %v5007, %v5007
        %v5040 = vpack.c.bf16 %v5008, %v5008
        %v5041 = vpack.c.bf16 %v5009, %v5009
        %v5042 = vpack.c.bf16 %v5010, %v5010
        %v5043 = vpack.c.bf16 %v5011, %v5011
        %5044 = vst [vmem:[#allocation3 + $0x14] sm:$0xf] %v5012
        %5045 = vst [vmem:[#allocation3 + $0x38] sm:$0xf] %v5013
        %5046 = vst [vmem:[#allocation3 + $0x5c] sm:$0xf] %v5014
        %5047 = vst [vmem:[#allocation3 + $0x80] sm:$0xf] %v5015
        %5048 = vst [vmem:[#allocation3 + $0xa4] sm:$0xf] %v5016
        %5049 = vst [vmem:[#allocation3 + $0xc8] sm:$0xf] %v5017
        %5050 = vst [vmem:[#allocation3 + $0xec] sm:$0xf] %v5018
        %5051 = vst [vmem:[#allocation3 + $0x110] sm:$0xf] %v5019
        %5052 = vst [vmem:[#allocation3 + $0x134] sm:$0xf] %v5020
        %5053 = vst [vmem:[#allocation3 + $0x158] sm:$0xf] %v5021
        %5054 = vst [vmem:[#allocation3 + $0x17c] sm:$0xf] %v5022
        %5055 = vst [vmem:[#allocation3 + $0x1a0] sm:$0xf] %v5023
        %5056 = vst [vmem:[#allocation3 + $0x1c4] sm:$0xf] %v5024
        %5057 = vst [vmem:[#allocation3 + $0x1e8] sm:$0xf] %v5025
        %5058 = vst [vmem:[#allocation3 + $0x20c] sm:$0xf] %v5026
        %5059 = vst [vmem:[#allocation3 + $0x230] sm:$0xf] %v5027
        %5060 = vst [vmem:[#allocation3 + $0x254] sm:$0xf] %v5028
        %5061 = vst [vmem:[#allocation3 + $0x278] sm:$0xf] %v5029
        %5062 = vst [vmem:[#allocation3 + $0x29c] sm:$0xf] %v5030
        %5063 = vst [vmem:[#allocation3 + $0x2c0] sm:$0xf] %v5031
        %5064 = vst [vmem:[#allocation3 + $0x2e4] sm:$0xf] %v5032
        %5065 = vst [vmem:[#allocation3 + $0x308] sm:$0xf] %v5033
        %5066 = vst [vmem:[#allocation3 + $0x32c] sm:$0xf] %v5034
        %5067 = vst [vmem:[#allocation3 + $0x350] sm:$0xf] %v5035
        %5068 = vst [vmem:[#allocation3 + $0x374] sm:$0xf] %v5036
        %5069 = vst [vmem:[#allocation3 + $0x398] sm:$0xf] %v5037
        %5070 = vst [vmem:[#allocation3 + $0x3bc] sm:$0xf] %v5038
        %5071 = vst [vmem:[#allocation3 + $0x3e0] sm:$0xf] %v5039
        %5072 = vst [vmem:[#allocation3 + $0x404] sm:$0xf] %v5040
        %5073 = vst [vmem:[#allocation3 + $0x428] sm:$0xf] %v5041
        %5074 = vst [vmem:[#allocation3 + $0x44c] sm:$0xf] %v5042
        %5075 = vst [vmem:[#allocation3 + $0x470] sm:$0xf] %v5043
        %v5076 = vld [vmem:[#allocation2 + $0x27] sm:$0xff]
        %v5077 = vld [vmem:[#allocation2 + $0x2f] sm:$0xff]
        %v5078 = vld [vmem:[#allocation2 + $0x37] sm:$0xff]
        %v5079 = vld [vmem:[#allocation2 + $0x3f] sm:$0xff]
        %v5080 = vld [vmem:[#allocation2 + $0x47] sm:$0xff]
        %v5081 = vld [vmem:[#allocation2 + $0x4f] sm:$0xff]
        %v5082 = vld [vmem:[#allocation2 + $0x57] sm:$0xff]
        %v5083 = vld [vmem:[#allocation2 + $0x5f] sm:$0xff]
        %v5084 = vld [vmem:[#allocation2 + $0x67] sm:$0xff]
        %v5085 = vld [vmem:[#allocation2 + $0x6f] sm:$0xff]
        %v5086 = vld [vmem:[#allocation2 + $0x77] sm:$0xff]
        %v5087 = vld [vmem:[#allocation2 + $0x7f] sm:$0xff]
        %v5088 = vld [vmem:[#allocation2 + $0x87] sm:$0xff]
        %v5089 = vld [vmem:[#allocation2 + $0x8f] sm:$0xff]
        %v5090 = vld [vmem:[#allocation2 + $0x97] sm:$0xff]
        %v5091 = vld [vmem:[#allocation2 + $0x9f] sm:$0xff]
        %v5092 = vld [vmem:[#allocation2 + $0xa7] sm:$0xff]
        %v5093 = vld [vmem:[#allocation2 + $0xaf] sm:$0xff]
        %v5094 = vld [vmem:[#allocation2 + $0xb7] sm:$0xff]
        %v5095 = vld [vmem:[#allocation2 + $0xbf] sm:$0xff]
        %v5096 = vld [vmem:[#allocation2 + $0xc7] sm:$0xff]
        %v5097 = vld [vmem:[#allocation2 + $0xcf] sm:$0xff]
        %v5098 = vld [vmem:[#allocation2 + $0xd7] sm:$0xff]
        %v5099 = vld [vmem:[#allocation2 + $0xdf] sm:$0xff]
        %v5100 = vld [vmem:[#allocation2 + $0xe7] sm:$0xff]
        %v5101 = vld [vmem:[#allocation2 + $0xef] sm:$0xff]
        %v5102 = vld [vmem:[#allocation2 + $0xf7] sm:$0xff]
        %v5103 = vld [vmem:[#allocation2 + $0xff] sm:$0xff]
        %v5104 = vld [vmem:[#allocation2 + $0x107] sm:$0xff]
        %v5105 = vld [vmem:[#allocation2 + $0x10f] sm:$0xff]
        %v5106 = vld [vmem:[#allocation2 + $0x117] sm:$0xff]
        %v5107 = vld [vmem:[#allocation2 + $0x11f] sm:$0xff]
        %v5108 = vsel %vm743, %v5076, 0.0
        %v5109 = vsel %vm744, %v5077, 0.0
        %v5110 = vsel %vm745, %v5078, 0.0
        %v5111 = vsel %vm746, %v5079, 0.0
        %v5112 = vsel %vm747, %v5080, 0.0
        %v5113 = vsel %vm748, %v5081, 0.0
        %v5114 = vsel %vm749, %v5082, 0.0
        %v5115 = vsel %vm750, %v5083, 0.0
        %v5116 = vsel %vm751, %v5084, 0.0
        %v5117 = vsel %vm752, %v5085, 0.0
        %v5118 = vsel %vm753, %v5086, 0.0
        %v5119 = vsel %vm754, %v5087, 0.0
        %v5120 = vsel %vm755, %v5088, 0.0
        %v5121 = vsel %vm756, %v5089, 0.0
        %v5122 = vsel %vm757, %v5090, 0.0
        %v5123 = vsel %vm758, %v5091, 0.0
        %v5124 = vsel %vm759, %v5092, 0.0
        %v5125 = vsel %vm760, %v5093, 0.0
        %v5126 = vsel %vm761, %v5094, 0.0
        %v5127 = vsel %vm762, %v5095, 0.0
        %v5128 = vsel %vm763, %v5096, 0.0
        %v5129 = vsel %vm764, %v5097, 0.0
        %v5130 = vsel %vm765, %v5098, 0.0
        %v5131 = vsel %vm766, %v5099, 0.0
        %v5132 = vsel %vm767, %v5100, 0.0
        %v5133 = vsel %vm768, %v5101, 0.0
        %v5134 = vsel %vm769, %v5102, 0.0
        %v5135 = vsel %vm770, %v5103, 0.0
        %v5136 = vsel %vm771, %v5104, 0.0
        %v5137 = vsel %vm772, %v5105, 0.0
        %v5138 = vsel %vm773, %v5106, 0.0
        %v5139 = vsel %vm774, %v5107, 0.0
        %v5140 = vpack.c.bf16 %v5108, %v5108
        %v5141 = vpack.c.bf16 %v5109, %v5109
        %v5142 = vpack.c.bf16 %v5110, %v5110
        %v5143 = vpack.c.bf16 %v5111, %v5111
        %v5144 = vpack.c.bf16 %v5112, %v5112
        %v5145 = vpack.c.bf16 %v5113, %v5113
        %v5146 = vpack.c.bf16 %v5114, %v5114
        %v5147 = vpack.c.bf16 %v5115, %v5115
        %v5148 = vpack.c.bf16 %v5116, %v5116
        %v5149 = vpack.c.bf16 %v5117, %v5117
        %v5150 = vpack.c.bf16 %v5118, %v5118
        %v5151 = vpack.c.bf16 %v5119, %v5119
        %v5152 = vpack.c.bf16 %v5120, %v5120
        %v5153 = vpack.c.bf16 %v5121, %v5121
        %v5154 = vpack.c.bf16 %v5122, %v5122
        %v5155 = vpack.c.bf16 %v5123, %v5123
        %v5156 = vpack.c.bf16 %v5124, %v5124
        %v5157 = vpack.c.bf16 %v5125, %v5125
        %v5158 = vpack.c.bf16 %v5126, %v5126
        %v5159 = vpack.c.bf16 %v5127, %v5127
        %v5160 = vpack.c.bf16 %v5128, %v5128
        %v5161 = vpack.c.bf16 %v5129, %v5129
        %v5162 = vpack.c.bf16 %v5130, %v5130
        %v5163 = vpack.c.bf16 %v5131, %v5131
        %v5164 = vpack.c.bf16 %v5132, %v5132
        %v5165 = vpack.c.bf16 %v5133, %v5133
        %v5166 = vpack.c.bf16 %v5134, %v5134
        %v5167 = vpack.c.bf16 %v5135, %v5135
        %v5168 = vpack.c.bf16 %v5136, %v5136
        %v5169 = vpack.c.bf16 %v5137, %v5137
        %v5170 = vpack.c.bf16 %v5138, %v5138
        %v5171 = vpack.c.bf16 %v5139, %v5139
        %5172 = vst [vmem:[#allocation3 + $0x18] sm:$0xf] %v5140
        %5173 = vst [vmem:[#allocation3 + $0x3c] sm:$0xf] %v5141
        %5174 = vst [vmem:[#allocation3 + $0x60] sm:$0xf] %v5142
        %5175 = vst [vmem:[#allocation3 + $0x84] sm:$0xf] %v5143
        %5176 = vst [vmem:[#allocation3 + $0xa8] sm:$0xf] %v5144
        %5177 = vst [vmem:[#allocation3 + $0xcc] sm:$0xf] %v5145
        %5178 = vst [vmem:[#allocation3 + $0xf0] sm:$0xf] %v5146
        %5179 = vst [vmem:[#allocation3 + $0x114] sm:$0xf] %v5147
        %5180 = vst [vmem:[#allocation3 + $0x138] sm:$0xf] %v5148
        %5181 = vst [vmem:[#allocation3 + $0x15c] sm:$0xf] %v5149
        %5182 = vst [vmem:[#allocation3 + $0x180] sm:$0xf] %v5150
        %5183 = vst [vmem:[#allocation3 + $0x1a4] sm:$0xf] %v5151
        %5184 = vst [vmem:[#allocation3 + $0x1c8] sm:$0xf] %v5152
        %5185 = vst [vmem:[#allocation3 + $0x1ec] sm:$0xf] %v5153
        %5186 = vst [vmem:[#allocation3 + $0x210] sm:$0xf] %v5154
        %5187 = vst [vmem:[#allocation3 + $0x234] sm:$0xf] %v5155
        %5188 = vst [vmem:[#allocation3 + $0x258] sm:$0xf] %v5156
        %5189 = vst [vmem:[#allocation3 + $0x27c] sm:$0xf] %v5157
        %5190 = vst [vmem:[#allocation3 + $0x2a0] sm:$0xf] %v5158
        %5191 = vst [vmem:[#allocation3 + $0x2c4] sm:$0xf] %v5159
        %5192 = vst [vmem:[#allocation3 + $0x2e8] sm:$0xf] %v5160
        %5193 = vst [vmem:[#allocation3 + $0x30c] sm:$0xf] %v5161
        %5194 = vst [vmem:[#allocation3 + $0x330] sm:$0xf] %v5162
        %5195 = vst [vmem:[#allocation3 + $0x354] sm:$0xf] %v5163
        %5196 = vst [vmem:[#allocation3 + $0x378] sm:$0xf] %v5164
        %5197 = vst [vmem:[#allocation3 + $0x39c] sm:$0xf] %v5165
        %5198 = vst [vmem:[#allocation3 + $0x3c0] sm:$0xf] %v5166
        %5199 = vst [vmem:[#allocation3 + $0x3e4] sm:$0xf] %v5167
        %5200 = vst [vmem:[#allocation3 + $0x408] sm:$0xf] %v5168
        %5201 = vst [vmem:[#allocation3 + $0x42c] sm:$0xf] %v5169
        %5202 = vst [vmem:[#allocation3 + $0x450] sm:$0xf] %v5170
        %5203 = vst [vmem:[#allocation3 + $0x474] sm:$0xf] %v5171
        %v5204 = vld [vmem:[#allocation2 + $0x28] sm:$0xff]
        %v5205 = vld [vmem:[#allocation2 + $0x30] sm:$0xff]
        %v5206 = vld [vmem:[#allocation2 + $0x38] sm:$0xff]
        %v5207 = vld [vmem:[#allocation2 + $0x40] sm:$0xff]
        %v5208 = vld [vmem:[#allocation2 + $0x48] sm:$0xff]
        %v5209 = vld [vmem:[#allocation2 + $0x50] sm:$0xff]
        %v5210 = vld [vmem:[#allocation2 + $0x58] sm:$0xff]
        %v5211 = vld [vmem:[#allocation2 + $0x60] sm:$0xff]
        %v5212 = vld [vmem:[#allocation2 + $0x68] sm:$0xff]
        %v5213 = vld [vmem:[#allocation2 + $0x70] sm:$0xff]
        %v5214 = vld [vmem:[#allocation2 + $0x78] sm:$0xff]
        %v5215 = vld [vmem:[#allocation2 + $0x80] sm:$0xff]
        %v5216 = vld [vmem:[#allocation2 + $0x88] sm:$0xff]
        %v5217 = vld [vmem:[#allocation2 + $0x90] sm:$0xff]
        %v5218 = vld [vmem:[#allocation2 + $0x98] sm:$0xff]
        %v5219 = vld [vmem:[#allocation2 + $0xa0] sm:$0xff]
        %v5220 = vld [vmem:[#allocation2 + $0xa8] sm:$0xff]
        %v5221 = vld [vmem:[#allocation2 + $0xb0] sm:$0xff]
        %v5222 = vld [vmem:[#allocation2 + $0xb8] sm:$0xff]
        %v5223 = vld [vmem:[#allocation2 + $0xc0] sm:$0xff]
        %v5224 = vld [vmem:[#allocation2 + $0xc8] sm:$0xff]
        %v5225 = vld [vmem:[#allocation2 + $0xd0] sm:$0xff]
        %v5226 = vld [vmem:[#allocation2 + $0xd8] sm:$0xff]
        %v5227 = vld [vmem:[#allocation2 + $0xe0] sm:$0xff]
        %v5228 = vld [vmem:[#allocation2 + $0xe8] sm:$0xff]
        %v5229 = vld [vmem:[#allocation2 + $0xf0] sm:$0xff]
        %v5230 = vld [vmem:[#allocation2 + $0xf8] sm:$0xff]
        %v5231 = vld [vmem:[#allocation2 + $0x100] sm:$0xff]
        %v5232 = vld [vmem:[#allocation2 + $0x108] sm:$0xff]
        %v5233 = vld [vmem:[#allocation2 + $0x110] sm:$0xff]
        %v5234 = vld [vmem:[#allocation2 + $0x118] sm:$0xff]
        %v5235 = vld [vmem:[#allocation2 + $0x120] sm:$0xff]
        %v5236 = vpack.c.bf16 %v5204, %v5204
        %v5237 = vpack.c.bf16 %v5205, %v5205
        %v5238 = vpack.c.bf16 %v5206, %v5206
        %v5239 = vpack.c.bf16 %v5207, %v5207
        %v5240 = vpack.c.bf16 %v5208, %v5208
        %v5241 = vpack.c.bf16 %v5209, %v5209
        %v5242 = vpack.c.bf16 %v5210, %v5210
        %v5243 = vpack.c.bf16 %v5211, %v5211
        %v5244 = vpack.c.bf16 %v5212, %v5212
        %v5245 = vpack.c.bf16 %v5213, %v5213
        %v5246 = vpack.c.bf16 %v5214, %v5214
        %v5247 = vpack.c.bf16 %v5215, %v5215
        %v5248 = vpack.c.bf16 %v5216, %v5216
        %v5249 = vpack.c.bf16 %v5217, %v5217
        %v5250 = vpack.c.bf16 %v5218, %v5218
        %v5251 = vpack.c.bf16 %v5219, %v5219
        %v5252 = vpack.c.bf16 %v5220, %v5220
        %v5253 = vpack.c.bf16 %v5221, %v5221
        %v5254 = vpack.c.bf16 %v5222, %v5222
        %v5255 = vpack.c.bf16 %v5223, %v5223
        %v5256 = vpack.c.bf16 %v5224, %v5224
        %v5257 = vpack.c.bf16 %v5225, %v5225
        %v5258 = vpack.c.bf16 %v5226, %v5226
        %v5259 = vpack.c.bf16 %v5227, %v5227
        %v5260 = vpack.c.bf16 %v5228, %v5228
        %v5261 = vpack.c.bf16 %v5229, %v5229
        %v5262 = vpack.c.bf16 %v5230, %v5230
        %v5263 = vpack.c.bf16 %v5231, %v5231
        %v5264 = vpack.c.bf16 %v5232, %v5232
        %v5265 = vpack.c.bf16 %v5233, %v5233
        %v5266 = vpack.c.bf16 %v5234, %v5234
        %v5267 = vpack.c.bf16 %v5235, %v5235
        %5268 = vst [vmem:[#allocation3 + $0x1c] sm:$0xf] %v5236
        %5269 = vst [vmem:[#allocation3 + $0x40] sm:$0xf] %v5237
        %5270 = vst [vmem:[#allocation3 + $0x64] sm:$0xf] %v5238
        %5271 = vst [vmem:[#allocation3 + $0x88] sm:$0xf] %v5239
        %5272 = vst [vmem:[#allocation3 + $0xac] sm:$0xf] %v5240
        %5273 = vst [vmem:[#allocation3 + $0xd0] sm:$0xf] %v5241
        %5274 = vst [vmem:[#allocation3 + $0xf4] sm:$0xf] %v5242
        %5275 = vst [vmem:[#allocation3 + $0x118] sm:$0xf] %v5243
        %5276 = vst [vmem:[#allocation3 + $0x13c] sm:$0xf] %v5244
        %5277 = vst [vmem:[#allocation3 + $0x160] sm:$0xf] %v5245
        %5278 = vst [vmem:[#allocation3 + $0x184] sm:$0xf] %v5246
        %5279 = vst [vmem:[#allocation3 + $0x1a8] sm:$0xf] %v5247
        %5280 = vst [vmem:[#allocation3 + $0x1cc] sm:$0xf] %v5248
        %5281 = vst [vmem:[#allocation3 + $0x1f0] sm:$0xf] %v5249
        %5282 = vst [vmem:[#allocation3 + $0x214] sm:$0xf] %v5250
        %5283 = vst [vmem:[#allocation3 + $0x238] sm:$0xf] %v5251
        %5284 = vst [vmem:[#allocation3 + $0x25c] sm:$0xf] %v5252
        %5285 = vst [vmem:[#allocation3 + $0x280] sm:$0xf] %v5253
        %5286 = vst [vmem:[#allocation3 + $0x2a4] sm:$0xf] %v5254
        %5287 = vst [vmem:[#allocation3 + $0x2c8] sm:$0xf] %v5255
        %5288 = vst [vmem:[#allocation3 + $0x2ec] sm:$0xf] %v5256
        %5289 = vst [vmem:[#allocation3 + $0x310] sm:$0xf] %v5257
        %5290 = vst [vmem:[#allocation3 + $0x334] sm:$0xf] %v5258
        %5291 = vst [vmem:[#allocation3 + $0x358] sm:$0xf] %v5259
        %5292 = vst [vmem:[#allocation3 + $0x37c] sm:$0xf] %v5260
        %5293 = vst [vmem:[#allocation3 + $0x3a0] sm:$0xf] %v5261
        %5294 = vst [vmem:[#allocation3 + $0x3c4] sm:$0xf] %v5262
        %5295 = vst [vmem:[#allocation3 + $0x3e8] sm:$0xf] %v5263
        %5296 = vst [vmem:[#allocation3 + $0x40c] sm:$0xf] %v5264
        %5297 = vst [vmem:[#allocation3 + $0x430] sm:$0xf] %v5265
        %5298 = vst [vmem:[#allocation3 + $0x454] sm:$0xf] %v5266
        %5299 = vst [vmem:[#allocation3 + $0x478] sm:$0xf] %v5267
        %v5300 = vld [vmem:[#allocation2 + $0x29] sm:$0xff]
        %v5301 = vld [vmem:[#allocation2 + $0x31] sm:$0xff]
        %v5302 = vld [vmem:[#allocation2 + $0x39] sm:$0xff]
        %v5303 = vld [vmem:[#allocation2 + $0x41] sm:$0xff]
        %v5304 = vld [vmem:[#allocation2 + $0x49] sm:$0xff]
        %v5305 = vld [vmem:[#allocation2 + $0x51] sm:$0xff]
        %v5306 = vld [vmem:[#allocation2 + $0x59] sm:$0xff]
        %v5307 = vld [vmem:[#allocation2 + $0x61] sm:$0xff]
        %v5308 = vld [vmem:[#allocation2 + $0x69] sm:$0xff]
        %v5309 = vld [vmem:[#allocation2 + $0x71] sm:$0xff]
        %v5310 = vld [vmem:[#allocation2 + $0x79] sm:$0xff]
        %v5311 = vld [vmem:[#allocation2 + $0x81] sm:$0xff]
        %v5312 = vld [vmem:[#allocation2 + $0x89] sm:$0xff]
        %v5313 = vld [vmem:[#allocation2 + $0x91] sm:$0xff]
        %v5314 = vld [vmem:[#allocation2 + $0x99] sm:$0xff]
        %v5315 = vld [vmem:[#allocation2 + $0xa1] sm:$0xff]
        %v5316 = vld [vmem:[#allocation2 + $0xa9] sm:$0xff]
        %v5317 = vld [vmem:[#allocation2 + $0xb1] sm:$0xff]
        %v5318 = vld [vmem:[#allocation2 + $0xb9] sm:$0xff]
        %v5319 = vld [vmem:[#allocation2 + $0xc1] sm:$0xff]
        %v5320 = vld [vmem:[#allocation2 + $0xc9] sm:$0xff]
        %v5321 = vld [vmem:[#allocation2 + $0xd1] sm:$0xff]
        %v5322 = vld [vmem:[#allocation2 + $0xd9] sm:$0xff]
        %v5323 = vld [vmem:[#allocation2 + $0xe1] sm:$0xff]
        %v5324 = vld [vmem:[#allocation2 + $0xe9] sm:$0xff]
        %v5325 = vld [vmem:[#allocation2 + $0xf1] sm:$0xff]
        %v5326 = vld [vmem:[#allocation2 + $0xf9] sm:$0xff]
        %v5327 = vld [vmem:[#allocation2 + $0x101] sm:$0xff]
        %v5328 = vld [vmem:[#allocation2 + $0x109] sm:$0xff]
        %v5329 = vld [vmem:[#allocation2 + $0x111] sm:$0xff]
        %v5330 = vld [vmem:[#allocation2 + $0x119] sm:$0xff]
        %v5331 = vld [vmem:[#allocation2 + $0x121] sm:$0xff]
        %v5332 = vsel %vm775, %v5300, 0.0
        %v5333 = vsel %vm776, %v5301, 0.0
        %v5334 = vsel %vm777, %v5302, 0.0
        %v5335 = vsel %vm778, %v5303, 0.0
        %v5336 = vsel %vm779, %v5304, 0.0
        %v5337 = vsel %vm780, %v5305, 0.0
        %v5338 = vsel %vm781, %v5306, 0.0
        %v5339 = vsel %vm782, %v5307, 0.0
        %v5340 = vsel %vm783, %v5308, 0.0
        %v5341 = vsel %vm784, %v5309, 0.0
        %v5342 = vsel %vm785, %v5310, 0.0
        %v5343 = vsel %vm786, %v5311, 0.0
        %v5344 = vsel %vm787, %v5312, 0.0
        %v5345 = vsel %vm788, %v5313, 0.0
        %v5346 = vsel %vm789, %v5314, 0.0
        %v5347 = vsel %vm790, %v5315, 0.0
        %v5348 = vsel %vm791, %v5316, 0.0
        %v5349 = vsel %vm792, %v5317, 0.0
        %v5350 = vsel %vm793, %v5318, 0.0
        %v5351 = vsel %vm794, %v5319, 0.0
        %v5352 = vsel %vm795, %v5320, 0.0
        %v5353 = vsel %vm796, %v5321, 0.0
        %v5354 = vsel %vm797, %v5322, 0.0
        %v5355 = vsel %vm798, %v5323, 0.0
        %v5356 = vsel %vm799, %v5324, 0.0
        %v5357 = vsel %vm800, %v5325, 0.0
        %v5358 = vsel %vm801, %v5326, 0.0
        %v5359 = vsel %vm802, %v5327, 0.0
        %v5360 = vsel %vm803, %v5328, 0.0
        %v5361 = vsel %vm804, %v5329, 0.0
        %v5362 = vsel %vm805, %v5330, 0.0
        %v5363 = vsel %vm806, %v5331, 0.0
        %v5364 = vpack.c.bf16 %v5332, %v5332
        %v5365 = vpack.c.bf16 %v5333, %v5333
        %v5366 = vpack.c.bf16 %v5334, %v5334
        %v5367 = vpack.c.bf16 %v5335, %v5335
        %v5368 = vpack.c.bf16 %v5336, %v5336
        %v5369 = vpack.c.bf16 %v5337, %v5337
        %v5370 = vpack.c.bf16 %v5338, %v5338
        %v5371 = vpack.c.bf16 %v5339, %v5339
        %v5372 = vpack.c.bf16 %v5340, %v5340
        %v5373 = vpack.c.bf16 %v5341, %v5341
        %v5374 = vpack.c.bf16 %v5342, %v5342
        %v5375 = vpack.c.bf16 %v5343, %v5343
        %v5376 = vpack.c.bf16 %v5344, %v5344
        %v5377 = vpack.c.bf16 %v5345, %v5345
        %v5378 = vpack.c.bf16 %v5346, %v5346
        %v5379 = vpack.c.bf16 %v5347, %v5347
        %v5380 = vpack.c.bf16 %v5348, %v5348
        %v5381 = vpack.c.bf16 %v5349, %v5349
        %v5382 = vpack.c.bf16 %v5350, %v5350
        %v5383 = vpack.c.bf16 %v5351, %v5351
        %v5384 = vpack.c.bf16 %v5352, %v5352
        %v5385 = vpack.c.bf16 %v5353, %v5353
        %v5386 = vpack.c.bf16 %v5354, %v5354
        %v5387 = vpack.c.bf16 %v5355, %v5355
        %v5388 = vpack.c.bf16 %v5356, %v5356
        %v5389 = vpack.c.bf16 %v5357, %v5357
        %v5390 = vpack.c.bf16 %v5358, %v5358
        %v5391 = vpack.c.bf16 %v5359, %v5359
        %v5392 = vpack.c.bf16 %v5360, %v5360
        %v5393 = vpack.c.bf16 %v5361, %v5361
        %v5394 = vpack.c.bf16 %v5362, %v5362
        %v5395 = vpack.c.bf16 %v5363, %v5363
        %5396 = vst [vmem:[#allocation3 + $0x20] sm:$0xf] %v5364
        %5397 = vst [vmem:[#allocation3 + $0x44] sm:$0xf] %v5365
        %5398 = vst [vmem:[#allocation3 + $0x68] sm:$0xf] %v5366
        %5399 = vst [vmem:[#allocation3 + $0x8c] sm:$0xf] %v5367
        %5400 = vst [vmem:[#allocation3 + $0xb0] sm:$0xf] %v5368
        %5401 = vst [vmem:[#allocation3 + $0xd4] sm:$0xf] %v5369
        %5402 = vst [vmem:[#allocation3 + $0xf8] sm:$0xf] %v5370
        %5403 = vst [vmem:[#allocation3 + $0x11c] sm:$0xf] %v5371
        %5404 = vst [vmem:[#allocation3 + $0x140] sm:$0xf] %v5372
        %5405 = vst [vmem:[#allocation3 + $0x164] sm:$0xf] %v5373
        %5406 = vst [vmem:[#allocation3 + $0x188] sm:$0xf] %v5374
        %5407 = vst [vmem:[#allocation3 + $0x1ac] sm:$0xf] %v5375
        %5408 = vst [vmem:[#allocation3 + $0x1d0] sm:$0xf] %v5376
        %5409 = vst [vmem:[#allocation3 + $0x1f4] sm:$0xf] %v5377
        %5410 = vst [vmem:[#allocation3 + $0x218] sm:$0xf] %v5378
        %5411 = vst [vmem:[#allocation3 + $0x23c] sm:$0xf] %v5379
        %5412 = vst [vmem:[#allocation3 + $0x260] sm:$0xf] %v5380
        %5413 = vst [vmem:[#allocation3 + $0x284] sm:$0xf] %v5381
        %5414 = vst [vmem:[#allocation3 + $0x2a8] sm:$0xf] %v5382
        %5415 = vst [vmem:[#allocation3 + $0x2cc] sm:$0xf] %v5383
        %5416 = vst [vmem:[#allocation3 + $0x2f0] sm:$0xf] %v5384
        %5417 = vst [vmem:[#allocation3 + $0x314] sm:$0xf] %v5385
        %5418 = vst [vmem:[#allocation3 + $0x338] sm:$0xf] %v5386
        %5419 = vst [vmem:[#allocation3 + $0x35c] sm:$0xf] %v5387
        %5420 = vst [vmem:[#allocation3 + $0x380] sm:$0xf] %v5388
        %5421 = vst [vmem:[#allocation3 + $0x3a4] sm:$0xf] %v5389
        %5422 = vst [vmem:[#allocation3 + $0x3c8] sm:$0xf] %v5390
        %5423 = vst [vmem:[#allocation3 + $0x3ec] sm:$0xf] %v5391
        %5424 = vst [vmem:[#allocation3 + $0x410] sm:$0xf] %v5392
        %5425 = vst [vmem:[#allocation3 + $0x434] sm:$0xf] %v5393
        %5426 = vst [vmem:[#allocation3 + $0x458] sm:$0xf] %v5394
        %5427 = vst [vmem:[#allocation3 + $0x47c] sm:$0xf] %v5395
        %v5428 = vld [vmem:[#allocation3] sm:$0xff]
        %v5429 = vld [vmem:[#allocation3 + $0x8] sm:$0xff]
        %v5430 = vld [vmem:[#allocation3 + $0x10] sm:$0xff]
        %v5431 = vld [vmem:[#allocation3 + $0x18] sm:$0xff]
        %v5432 = vld [vmem:[#allocation3 + $0x20] sm:$0xf]
        %v5433 = vld [vmem:[#allocation3 + $0x24] sm:$0xff]
        %v5434 = vld [vmem:[#allocation3 + $0x2c] sm:$0xff]
        %v5435 = vld [vmem:[#allocation3 + $0x34] sm:$0xff]
        %v5436 = vld [vmem:[#allocation3 + $0x3c] sm:$0xff]
        %v5437 = vld [vmem:[#allocation3 + $0x44] sm:$0xf]
        %v5438 = vld [vmem:[#allocation3 + $0x48] sm:$0xff]
        %v5439 = vld [vmem:[#allocation3 + $0x50] sm:$0xff]
        %v5440 = vld [vmem:[#allocation3 + $0x58] sm:$0xff]
        %v5441 = vld [vmem:[#allocation3 + $0x60] sm:$0xff]
        %v5442 = vld [vmem:[#allocation3 + $0x68] sm:$0xf]
        %v5443 = vld [vmem:[#allocation3 + $0x6c] sm:$0xff]
        %v5444 = vld [vmem:[#allocation3 + $0x74] sm:$0xff]
        %v5445 = vld [vmem:[#allocation3 + $0x7c] sm:$0xff]
        %v5446 = vld [vmem:[#allocation3 + $0x84] sm:$0xff]
        %v5447 = vld [vmem:[#allocation3 + $0x8c] sm:$0xf]
        %v5448 = vld [vmem:[#allocation3 + $0x90] sm:$0xff]
        %v5449 = vld [vmem:[#allocation3 + $0x98] sm:$0xff]
        %v5450 = vld [vmem:[#allocation3 + $0xa0] sm:$0xff]
        %v5451 = vld [vmem:[#allocation3 + $0xa8] sm:$0xff]
        %v5452 = vld [vmem:[#allocation3 + $0xb0] sm:$0xf]
        %v5453 = vld [vmem:[#allocation3 + $0xb4] sm:$0xff]
        %v5454 = vld [vmem:[#allocation3 + $0xbc] sm:$0xff]
        %v5455 = vld [vmem:[#allocation3 + $0xc4] sm:$0xff]
        %v5456 = vld [vmem:[#allocation3 + $0xcc] sm:$0xff]
        %v5457 = vld [vmem:[#allocation3 + $0xd4] sm:$0xf]
        %v5458 = vld [vmem:[#allocation3 + $0xd8] sm:$0xff]
        %v5459 = vld [vmem:[#allocation3 + $0xe0] sm:$0xff]
        %v5460 = vld [vmem:[#allocation3 + $0xe8] sm:$0xff]
        %v5461 = vld [vmem:[#allocation3 + $0xf0] sm:$0xff]
        %v5462 = vld [vmem:[#allocation3 + $0xf8] sm:$0xf]
        %v5463 = vld [vmem:[#allocation3 + $0xfc] sm:$0xff]
        %v5464 = vld [vmem:[#allocation3 + $0x104] sm:$0xff]
        %v5465 = vld [vmem:[#allocation3 + $0x10c] sm:$0xff]
        %v5466 = vld [vmem:[#allocation3 + $0x114] sm:$0xff]
        %v5467 = vld [vmem:[#allocation3 + $0x11c] sm:$0xf]
        %v5468 = vld [vmem:[#allocation3 + $0x120] sm:$0xff]
        %v5469 = vld [vmem:[#allocation3 + $0x128] sm:$0xff]
        %v5470 = vld [vmem:[#allocation3 + $0x130] sm:$0xff]
        %v5471 = vld [vmem:[#allocation3 + $0x138] sm:$0xff]
        %v5472 = vld [vmem:[#allocation3 + $0x140] sm:$0xf]
        %v5473 = vld [vmem:[#allocation3 + $0x144] sm:$0xff]
        %v5474 = vld [vmem:[#allocation3 + $0x14c] sm:$0xff]
        %v5475 = vld [vmem:[#allocation3 + $0x154] sm:$0xff]
        %v5476 = vld [vmem:[#allocation3 + $0x15c] sm:$0xff]
        %v5477 = vld [vmem:[#allocation3 + $0x164] sm:$0xf]
        %v5478 = vld [vmem:[#allocation3 + $0x168] sm:$0xff]
        %v5479 = vld [vmem:[#allocation3 + $0x170] sm:$0xff]
        %v5480 = vld [vmem:[#allocation3 + $0x178] sm:$0xff]
        %v5481 = vld [vmem:[#allocation3 + $0x180] sm:$0xff]
        %v5482 = vld [vmem:[#allocation3 + $0x188] sm:$0xf]
        %v5483 = vld [vmem:[#allocation3 + $0x18c] sm:$0xff]
        %v5484 = vld [vmem:[#allocation3 + $0x194] sm:$0xff]
        %v5485 = vld [vmem:[#allocation3 + $0x19c] sm:$0xff]
        %v5486 = vld [vmem:[#allocation3 + $0x1a4] sm:$0xff]
        %v5487 = vld [vmem:[#allocation3 + $0x1ac] sm:$0xf]
        %v5488 = vld [vmem:[#allocation3 + $0x1b0] sm:$0xff]
        %v5489 = vld [vmem:[#allocation3 + $0x1b8] sm:$0xff]
        %v5490 = vld [vmem:[#allocation3 + $0x1c0] sm:$0xff]
        %v5491 = vld [vmem:[#allocation3 + $0x1c8] sm:$0xff]
        %v5492 = vld [vmem:[#allocation3 + $0x1d0] sm:$0xf]
        %v5493 = vld [vmem:[#allocation3 + $0x1d4] sm:$0xff]
        %v5494 = vld [vmem:[#allocation3 + $0x1dc] sm:$0xff]
        %v5495 = vld [vmem:[#allocation3 + $0x1e4] sm:$0xff]
        %v5496 = vld [vmem:[#allocation3 + $0x1ec] sm:$0xff]
        %v5497 = vld [vmem:[#allocation3 + $0x1f4] sm:$0xf]
        %v5498 = vld [vmem:[#allocation3 + $0x1f8] sm:$0xff]
        %v5499 = vld [vmem:[#allocation3 + $0x200] sm:$0xff]
        %v5500 = vld [vmem:[#allocation3 + $0x208] sm:$0xff]
        %v5501 = vld [vmem:[#allocation3 + $0x210] sm:$0xff]
        %v5502 = vld [vmem:[#allocation3 + $0x218] sm:$0xf]
        %v5503 = vld [vmem:[#allocation3 + $0x21c] sm:$0xff]
        %v5504 = vld [vmem:[#allocation3 + $0x224] sm:$0xff]
        %v5505 = vld [vmem:[#allocation3 + $0x22c] sm:$0xff]
        %v5506 = vld [vmem:[#allocation3 + $0x234] sm:$0xff]
        %v5507 = vld [vmem:[#allocation3 + $0x23c] sm:$0xf]
        %v5508 = vld [vmem:[#allocation3 + $0x240] sm:$0xff]
        %v5509 = vld [vmem:[#allocation3 + $0x248] sm:$0xff]
        %v5510 = vld [vmem:[#allocation3 + $0x250] sm:$0xff]
        %v5511 = vld [vmem:[#allocation3 + $0x258] sm:$0xff]
        %v5512 = vld [vmem:[#allocation3 + $0x260] sm:$0xf]
        %v5513 = vld [vmem:[#allocation3 + $0x264] sm:$0xff]
        %v5514 = vld [vmem:[#allocation3 + $0x26c] sm:$0xff]
        %v5515 = vld [vmem:[#allocation3 + $0x274] sm:$0xff]
        %v5516 = vld [vmem:[#allocation3 + $0x27c] sm:$0xff]
        %v5517 = vld [vmem:[#allocation3 + $0x284] sm:$0xf]
        %v5518 = vld [vmem:[#allocation3 + $0x288] sm:$0xff]
        %v5519 = vld [vmem:[#allocation3 + $0x290] sm:$0xff]
        %v5520 = vld [vmem:[#allocation3 + $0x298] sm:$0xff]
        %v5521 = vld [vmem:[#allocation3 + $0x2a0] sm:$0xff]
        %v5522 = vld [vmem:[#allocation3 + $0x2a8] sm:$0xf]
        %v5523 = vld [vmem:[#allocation3 + $0x2ac] sm:$0xff]
        %v5524 = vld [vmem:[#allocation3 + $0x2b4] sm:$0xff]
        %v5525 = vld [vmem:[#allocation3 + $0x2bc] sm:$0xff]
        %v5526 = vld [vmem:[#allocation3 + $0x2c4] sm:$0xff]
        %v5527 = vld [vmem:[#allocation3 + $0x2cc] sm:$0xf]
        %v5528 = vld [vmem:[#allocation3 + $0x2d0] sm:$0xff]
        %v5529 = vld [vmem:[#allocation3 + $0x2d8] sm:$0xff]
        %v5530 = vld [vmem:[#allocation3 + $0x2e0] sm:$0xff]
        %v5531 = vld [vmem:[#allocation3 + $0x2e8] sm:$0xff]
        %v5532 = vld [vmem:[#allocation3 + $0x2f0] sm:$0xf]
        %v5533 = vld [vmem:[#allocation3 + $0x2f4] sm:$0xff]
        %v5534 = vld [vmem:[#allocation3 + $0x2fc] sm:$0xff]
        %v5535 = vld [vmem:[#allocation3 + $0x304] sm:$0xff]
        %v5536 = vld [vmem:[#allocation3 + $0x30c] sm:$0xff]
        %v5537 = vld [vmem:[#allocation3 + $0x314] sm:$0xf]
        %v5538 = vld [vmem:[#allocation3 + $0x318] sm:$0xff]
        %v5539 = vld [vmem:[#allocation3 + $0x320] sm:$0xff]
        %v5540 = vld [vmem:[#allocation3 + $0x328] sm:$0xff]
        %v5541 = vld [vmem:[#allocation3 + $0x330] sm:$0xff]
        %v5542 = vld [vmem:[#allocation3 + $0x338] sm:$0xf]
        %v5543 = vld [vmem:[#allocation3 + $0x33c] sm:$0xff]
        %v5544 = vld [vmem:[#allocation3 + $0x344] sm:$0xff]
        %v5545 = vld [vmem:[#allocation3 + $0x34c] sm:$0xff]
        %v5546 = vld [vmem:[#allocation3 + $0x354] sm:$0xff]
        %v5547 = vld [vmem:[#allocation3 + $0x35c] sm:$0xf]
        %v5548 = vld [vmem:[#allocation3 + $0x360] sm:$0xff]
        %v5549 = vld [vmem:[#allocation3 + $0x368] sm:$0xff]
        %v5550 = vld [vmem:[#allocation3 + $0x370] sm:$0xff]
        %v5551 = vld [vmem:[#allocation3 + $0x378] sm:$0xff]
        %v5552 = vld [vmem:[#allocation3 + $0x380] sm:$0xf]
        %v5553 = vld [vmem:[#allocation3 + $0x384] sm:$0xff]
        %v5554 = vld [vmem:[#allocation3 + $0x38c] sm:$0xff]
        %v5555 = vld [vmem:[#allocation3 + $0x394] sm:$0xff]
        %v5556 = vld [vmem:[#allocation3 + $0x39c] sm:$0xff]
        %v5557 = vld [vmem:[#allocation3 + $0x3a4] sm:$0xf]
        %v5558 = vld [vmem:[#allocation3 + $0x3a8] sm:$0xff]
        %v5559 = vld [vmem:[#allocation3 + $0x3b0] sm:$0xff]
        %v5560 = vld [vmem:[#allocation3 + $0x3b8] sm:$0xff]
        %v5561 = vld [vmem:[#allocation3 + $0x3c0] sm:$0xff]
        %v5562 = vld [vmem:[#allocation3 + $0x3c8] sm:$0xf]
        %v5563 = vld [vmem:[#allocation3 + $0x3cc] sm:$0xff]
        %v5564 = vld [vmem:[#allocation3 + $0x3d4] sm:$0xff]
        %v5565 = vld [vmem:[#allocation3 + $0x3dc] sm:$0xff]
        %v5566 = vld [vmem:[#allocation3 + $0x3e4] sm:$0xff]
        %v5567 = vld [vmem:[#allocation3 + $0x3ec] sm:$0xf]
        %v5568 = vld [vmem:[#allocation3 + $0x3f0] sm:$0xff]
        %v5569 = vld [vmem:[#allocation3 + $0x3f8] sm:$0xff]
        %v5570 = vld [vmem:[#allocation3 + $0x400] sm:$0xff]
        %v5571 = vld [vmem:[#allocation3 + $0x408] sm:$0xff]
        %v5572 = vld [vmem:[#allocation3 + $0x410] sm:$0xf]
        %v5573 = vld [vmem:[#allocation3 + $0x414] sm:$0xff]
        %v5574 = vld [vmem:[#allocation3 + $0x41c] sm:$0xff]
        %v5575 = vld [vmem:[#allocation3 + $0x424] sm:$0xff]
        %v5576 = vld [vmem:[#allocation3 + $0x42c] sm:$0xff]
        %v5577 = vld [vmem:[#allocation3 + $0x434] sm:$0xf]
        %v5578 = vld [vmem:[#allocation3 + $0x438] sm:$0xff]
        %v5579 = vld [vmem:[#allocation3 + $0x440] sm:$0xff]
        %v5580 = vld [vmem:[#allocation3 + $0x448] sm:$0xff]
        %v5581 = vld [vmem:[#allocation3 + $0x450] sm:$0xff]
        %v5582 = vld [vmem:[#allocation3 + $0x458] sm:$0xf]
        %v5583 = vld [vmem:[#allocation3 + $0x45c] sm:$0xff]
        %v5584 = vld [vmem:[#allocation3 + $0x464] sm:$0xff]
        %v5585 = vld [vmem:[#allocation3 + $0x46c] sm:$0xff]
        %v5586 = vld [vmem:[#allocation3 + $0x474] sm:$0xff]
        %v5587 = vld [vmem:[#allocation3 + $0x47c] sm:$0xf]
        %v5588 = vld [vmem:[#allocation10] sm:$0xf]
        %v5589 = vld [vmem:[#allocation10 + $0x4] sm:$0xf]
        %v5590 = vld [vmem:[#allocation10 + $0x8] sm:$0xf]
        %v5591 = vld [vmem:[#allocation10 + $0xc] sm:$0xf]
        %v5592 = vld [vmem:[#allocation10 + $0x10] sm:$0xf]
        %v5593 = vld [vmem:[#allocation10 + $0x14] sm:$0xf]
        %v5594 = vld [vmem:[#allocation10 + $0x18] sm:$0xf]
        %v5595 = vld [vmem:[#allocation10 + $0x1c] sm:$0xf]
        %v5596 = vld [vmem:[#allocation10 + $0x20] sm:$0xf]
        %v5597 = vld [vmem:[#allocation10 + $0x24] sm:$0xf]
        %v5598 = vld [vmem:[#allocation10 + $0x28] sm:$0xf]
        %v5599 = vld [vmem:[#allocation10 + $0x2c] sm:$0xf]
        %v5600 = vld [vmem:[#allocation10 + $0x30] sm:$0xf]
        %v5601 = vld [vmem:[#allocation10 + $0x34] sm:$0xf]
        %v5602 = vld [vmem:[#allocation10 + $0x38] sm:$0xf]
        %v5603 = vld [vmem:[#allocation10 + $0x3c] sm:$0xf]
        %v5604 = vld [vmem:[#allocation10 + $0x40] sm:$0xf]
        %v5605 = vld [vmem:[#allocation10 + $0x44] sm:$0xf]
        %v5606 = vld [vmem:[#allocation10 + $0x48] sm:$0xf]
        %v5607 = vld [vmem:[#allocation10 + $0x4c] sm:$0xf]
        %v5608 = vld [vmem:[#allocation10 + $0x50] sm:$0xf]
        %v5609 = vld [vmem:[#allocation10 + $0x54] sm:$0xf]
        %v5610 = vld [vmem:[#allocation10 + $0x58] sm:$0xf]
        %v5611 = vld [vmem:[#allocation10 + $0x5c] sm:$0xf]
        %v5612 = vld [vmem:[#allocation10 + $0x60] sm:$0xf]
        %v5613 = vld [vmem:[#allocation10 + $0x64] sm:$0xf]
        %v5614 = vld [vmem:[#allocation10 + $0x68] sm:$0xf]
        %v5615 = vld [vmem:[#allocation10 + $0x6c] sm:$0xf]
        %v5616 = vld [vmem:[#allocation10 + $0x70] sm:$0xf]
        %v5617 = vld [vmem:[#allocation10 + $0x74] sm:$0xf]
        %v5618 = vld [vmem:[#allocation10 + $0x78] sm:$0xf]
        %v5619 = vld [vmem:[#allocation10 + $0x7c] sm:$0xf]
        %v5620 = vld [vmem:[#allocation10 + $0x80] sm:$0xf]
        %v5621 = vld [vmem:[#allocation10 + $0x84] sm:$0xf]
        %v5622 = vld [vmem:[#allocation10 + $0x88] sm:$0xf]
        %v5623 = vld [vmem:[#allocation10 + $0x8c] sm:$0xf]
        %v5624 = vld [vmem:[#allocation10 + $0x90] sm:$0xf]
        %v5625 = vld [vmem:[#allocation10 + $0x94] sm:$0xf]
        %v5626 = vld [vmem:[#allocation10 + $0x98] sm:$0xf]
        %v5627 = vld [vmem:[#allocation10 + $0x9c] sm:$0xf]
        %v5628 = vld [vmem:[#allocation10 + $0xa0] sm:$0xf]
        %v5629 = vld [vmem:[#allocation10 + $0xa4] sm:$0xf]
        %v5630 = vld [vmem:[#allocation10 + $0xa8] sm:$0xf]
        %v5631 = vld [vmem:[#allocation10 + $0xac] sm:$0xf]
        %v5632 = vld [vmem:[#allocation10 + $0xb0] sm:$0xf]
        %v5633 = vld [vmem:[#allocation10 + $0xb4] sm:$0xf]
        %v5634 = vld [vmem:[#allocation10 + $0xb8] sm:$0xf]
        %v5635 = vld [vmem:[#allocation10 + $0xbc] sm:$0xf]
        %v5636 = vld [vmem:[#allocation10 + $0xc0] sm:$0xf]
        %v5637 = vld [vmem:[#allocation10 + $0xc4] sm:$0xf]
        %v5638 = vld [vmem:[#allocation10 + $0xc8] sm:$0xf]
        %v5639 = vld [vmem:[#allocation10 + $0xcc] sm:$0xf]
        %v5640 = vld [vmem:[#allocation10 + $0xd0] sm:$0xf]
        %v5641 = vld [vmem:[#allocation10 + $0xd4] sm:$0xf]
        %v5642 = vld [vmem:[#allocation10 + $0xd8] sm:$0xf]
        %v5643 = vld [vmem:[#allocation10 + $0xdc] sm:$0xf]
        %v5644 = vld [vmem:[#allocation10 + $0xe0] sm:$0xf]
        %v5645 = vld [vmem:[#allocation10 + $0xe4] sm:$0xf]
        %v5646 = vld [vmem:[#allocation10 + $0xe8] sm:$0xf]
        %v5647 = vld [vmem:[#allocation10 + $0xec] sm:$0xf]
        %v5648 = vld [vmem:[#allocation10 + $0xf0] sm:$0xf]
        %v5649 = vld [vmem:[#allocation10 + $0xf4] sm:$0xf]
        %v5650 = vld [vmem:[#allocation10 + $0xf8] sm:$0xf]
        %v5651 = vld [vmem:[#allocation10 + $0xfc] sm:$0xf]
        %v5652 = vld [vmem:[#allocation10 + $0x100] sm:$0xf]
        %v5653 = vld [vmem:[#allocation10 + $0x104] sm:$0xf]
        %v5654 = vld [vmem:[#allocation10 + $0x108] sm:$0xf]
        %v5655 = vld [vmem:[#allocation10 + $0x10c] sm:$0xf]
        %v5656 = vld [vmem:[#allocation10 + $0x110] sm:$0xf]
        %v5657 = vld [vmem:[#allocation10 + $0x114] sm:$0xf]
        %v5658 = vld [vmem:[#allocation10 + $0x118] sm:$0xf]
        %v5659 = vld [vmem:[#allocation10 + $0x11c] sm:$0xf]
        %v5660 = vld [vmem:[#allocation10 + $0x120] sm:$0xf]
        %v5661 = vld [vmem:[#allocation10 + $0x124] sm:$0xf]
        %v5662 = vld [vmem:[#allocation10 + $0x128] sm:$0xf]
        %v5663 = vld [vmem:[#allocation10 + $0x12c] sm:$0xf]
        %v5664 = vld [vmem:[#allocation10 + $0x130] sm:$0xf]
        %v5665 = vld [vmem:[#allocation10 + $0x134] sm:$0xf]
        %v5666 = vld [vmem:[#allocation10 + $0x138] sm:$0xf]
        %v5667 = vld [vmem:[#allocation10 + $0x13c] sm:$0xf]
        %v5668 = vld [vmem:[#allocation10 + $0x140] sm:$0xf]
        %v5669 = vld [vmem:[#allocation10 + $0x144] sm:$0xf]
        %v5670 = vld [vmem:[#allocation10 + $0x148] sm:$0xf]
        %v5671 = vld [vmem:[#allocation10 + $0x14c] sm:$0xf]
        %v5672 = vld [vmem:[#allocation10 + $0x150] sm:$0xf]
        %v5673 = vld [vmem:[#allocation10 + $0x154] sm:$0xf]
        %v5674 = vld [vmem:[#allocation10 + $0x158] sm:$0xf]
        %v5675 = vld [vmem:[#allocation10 + $0x15c] sm:$0xf]
        %v5676 = vld [vmem:[#allocation10 + $0x160] sm:$0xf]
        %v5677 = vld [vmem:[#allocation10 + $0x164] sm:$0xf]
        %v5678 = vld [vmem:[#allocation10 + $0x168] sm:$0xf]
        %v5679 = vld [vmem:[#allocation10 + $0x16c] sm:$0xf]
        %v5680 = vld [vmem:[#allocation10 + $0x170] sm:$0xf]
        %v5681 = vld [vmem:[#allocation10 + $0x174] sm:$0xf]
        %v5682 = vld [vmem:[#allocation10 + $0x178] sm:$0xf]
        %v5683 = vld [vmem:[#allocation10 + $0x17c] sm:$0xf]
        %v5684 = vld [vmem:[#allocation10 + $0x180] sm:$0xf]
        %v5685 = vld [vmem:[#allocation10 + $0x184] sm:$0xf]
        %v5686 = vld [vmem:[#allocation10 + $0x188] sm:$0xf]
        %v5687 = vld [vmem:[#allocation10 + $0x18c] sm:$0xf]
        %v5688 = vld [vmem:[#allocation10 + $0x190] sm:$0xf]
        %v5689 = vld [vmem:[#allocation10 + $0x194] sm:$0xf]
        %v5690 = vld [vmem:[#allocation10 + $0x198] sm:$0xf]
        %v5691 = vld [vmem:[#allocation10 + $0x19c] sm:$0xf]
        %v5692 = vld [vmem:[#allocation10 + $0x1a0] sm:$0xf]
        %v5693 = vld [vmem:[#allocation10 + $0x1a4] sm:$0xf]
        %v5694 = vld [vmem:[#allocation10 + $0x1a8] sm:$0xf]
        %v5695 = vld [vmem:[#allocation10 + $0x1ac] sm:$0xf]
        %v5696 = vld [vmem:[#allocation10 + $0x1b0] sm:$0xf]
        %v5697 = vld [vmem:[#allocation10 + $0x1b4] sm:$0xf]
        %v5698 = vld [vmem:[#allocation10 + $0x1b8] sm:$0xf]
        %v5699 = vld [vmem:[#allocation10 + $0x1bc] sm:$0xf]
        %v5700 = vld [vmem:[#allocation10 + $0x1c0] sm:$0xf]
        %v5701 = vld [vmem:[#allocation10 + $0x1c4] sm:$0xf]
        %v5702 = vld [vmem:[#allocation10 + $0x1c8] sm:$0xf]
        %v5703 = vld [vmem:[#allocation10 + $0x1cc] sm:$0xf]
        %v5704 = vld [vmem:[#allocation10 + $0x1d0] sm:$0xf]
        %v5705 = vld [vmem:[#allocation10 + $0x1d4] sm:$0xf]
        %v5706 = vld [vmem:[#allocation10 + $0x1d8] sm:$0xf]
        %v5707 = vld [vmem:[#allocation10 + $0x1dc] sm:$0xf]
        %v5708 = vld [vmem:[#allocation10 + $0x1e0] sm:$0xf]
        %v5709 = vld [vmem:[#allocation10 + $0x1e4] sm:$0xf]
        %v5710 = vld [vmem:[#allocation10 + $0x1e8] sm:$0xf]
        %v5711 = vld [vmem:[#allocation10 + $0x1ec] sm:$0xf]
        %v5712 = vld [vmem:[#allocation10 + $0x1f0] sm:$0xf]
        %v5713 = vld [vmem:[#allocation10 + $0x1f4] sm:$0xf]
        %v5714 = vld [vmem:[#allocation10 + $0x1f8] sm:$0xf]
        %v5715 = vld [vmem:[#allocation10 + $0x1fc] sm:$0xf]
        %v5716 = vld [vmem:[#allocation10 + $0x200] sm:$0xf]
        %v5717 = vld [vmem:[#allocation10 + $0x204] sm:$0xf]
        %v5718 = vld [vmem:[#allocation10 + $0x208] sm:$0xf]
        %v5719 = vld [vmem:[#allocation10 + $0x20c] sm:$0xf]
        %v5720 = vld [vmem:[#allocation10 + $0x210] sm:$0xf]
        %v5721 = vld [vmem:[#allocation10 + $0x214] sm:$0xf]
        %v5722 = vld [vmem:[#allocation10 + $0x218] sm:$0xf]
        %v5723 = vld [vmem:[#allocation10 + $0x21c] sm:$0xf]
        %v5724 = vld [vmem:[#allocation10 + $0x220] sm:$0xf]
        %v5725 = vld [vmem:[#allocation10 + $0x224] sm:$0xf]
        %v5726 = vld [vmem:[#allocation10 + $0x228] sm:$0xf]
        %v5727 = vld [vmem:[#allocation10 + $0x22c] sm:$0xf]
        %v5728 = vld [vmem:[#allocation10 + $0x230] sm:$0xf]
        %v5729 = vld [vmem:[#allocation10 + $0x234] sm:$0xf]
        %v5730 = vld [vmem:[#allocation10 + $0x238] sm:$0xf]
        %v5731 = vld [vmem:[#allocation10 + $0x23c] sm:$0xf]
        %v5732 = vld [vmem:[%s275] sm:$0xff]
        %v5733 = vld [vmem:[%s275 + $0x8] sm:$0xff]
        %v5734 = vld [vmem:[%s275 + $0x10] sm:$0xff]
        %v5735 = vld [vmem:[%s275 + $0x18] sm:$0xff]
        %v5736 = vld [vmem:[%s275 + $0x20] sm:$0xff]
        %v5737 = vld [vmem:[%s275 + $0x28] sm:$0xff]
        %v5738 = vld [vmem:[%s275 + $0x30] sm:$0xff]
        %v5739 = vld [vmem:[%s275 + $0x38] sm:$0xff]
        %v5740 = vld [vmem:[%s275 + $0x40] sm:$0xff]
        %v5741 = vld [vmem:[%s275 + $0x48] sm:$0xff]
        %v5742 = vld [vmem:[%s275 + $0x50] sm:$0xff]
        %v5743 = vld [vmem:[%s275 + $0x58] sm:$0xff]
        %v5744 = vld [vmem:[%s275 + $0x60] sm:$0xff]
        %v5745 = vld [vmem:[%s275 + $0x68] sm:$0xff]
        %v5746 = vld [vmem:[%s275 + $0x70] sm:$0xff]
        %v5747 = vld [vmem:[%s275 + $0x78] sm:$0xff]
        %v5748 = vld [vmem:[%s275 + $0x80] sm:$0xff]
        %v5749 = vld [vmem:[%s275 + $0x88] sm:$0xff]
        %v5750 = vld [vmem:[%s275 + $0x90] sm:$0xff]
        %v5751 = vld [vmem:[%s275 + $0x98] sm:$0xff]
        %v5752 = vld [vmem:[%s275 + $0xa0] sm:$0xff]
        %v5753 = vld [vmem:[%s275 + $0xa8] sm:$0xff]
        %v5754 = vld [vmem:[%s275 + $0xb0] sm:$0xff]
        %v5755 = vld [vmem:[%s275 + $0xb8] sm:$0xff]
        %v5756 = vld [vmem:[%s275 + $0xc0] sm:$0xff]
        %v5757 = vld [vmem:[%s275 + $0xc8] sm:$0xff]
        %v5758 = vld [vmem:[%s275 + $0xd0] sm:$0xff]
        %v5759 = vld [vmem:[%s275 + $0xd8] sm:$0xff]
        %v5760 = vld [vmem:[%s275 + $0xe0] sm:$0xff]
        %v5761 = vld [vmem:[%s275 + $0xe8] sm:$0xff]
        %v5762 = vld [vmem:[%s275 + $0xf0] sm:$0xff]
        %v5763 = vld [vmem:[%s275 + $0xf8] sm:$0xff]
        %v5924 = vunpack.c.l.b16 %v5428
        %v5925 = vunpack.c.h.b16 %v5428
        %v5926 = vunpack.c.l.b16 %v5429
        %v5927 = vunpack.c.h.b16 %v5429
        %v5928 = vunpack.c.l.b16 %v5430
        %v5929 = vunpack.c.h.b16 %v5430
        %v5930 = vunpack.c.l.b16 %v5431
        %v5931 = vunpack.c.h.b16 %v5431
        %v5932 = vunpack.c.l.b16 %v5432
        %v5933 = vunpack.c.l.b16 %v5433
        %v5934 = vunpack.c.h.b16 %v5433
        %v5935 = vunpack.c.l.b16 %v5434
        %v5936 = vunpack.c.h.b16 %v5434
        %v5937 = vunpack.c.l.b16 %v5435
        %v5938 = vunpack.c.h.b16 %v5435
        %v5939 = vunpack.c.l.b16 %v5436
        %v5940 = vunpack.c.h.b16 %v5436
        %v5941 = vunpack.c.l.b16 %v5437
        %v5942 = vunpack.c.l.b16 %v5438
        %v5943 = vunpack.c.h.b16 %v5438
        %v5944 = vunpack.c.l.b16 %v5439
        %v5945 = vunpack.c.h.b16 %v5439
        %v5946 = vunpack.c.l.b16 %v5440
        %v5947 = vunpack.c.h.b16 %v5440
        %v5948 = vunpack.c.l.b16 %v5441
        %v5949 = vunpack.c.h.b16 %v5441
        %v5950 = vunpack.c.l.b16 %v5442
        %v5951 = vunpack.c.l.b16 %v5443
        %v5952 = vunpack.c.h.b16 %v5443
        %v5953 = vunpack.c.l.b16 %v5444
        %v5954 = vunpack.c.h.b16 %v5444
        %v5955 = vunpack.c.l.b16 %v5445
        %v5956 = vunpack.c.h.b16 %v5445
        %v5957 = vunpack.c.l.b16 %v5446
        %v5958 = vunpack.c.h.b16 %v5446
        %v5959 = vunpack.c.l.b16 %v5447
        %v5960 = vunpack.c.l.b16 %v5448
        %v5961 = vunpack.c.h.b16 %v5448
        %v5962 = vunpack.c.l.b16 %v5449
        %v5963 = vunpack.c.h.b16 %v5449
        %v5964 = vunpack.c.l.b16 %v5450
        %v5965 = vunpack.c.h.b16 %v5450
        %v5966 = vunpack.c.l.b16 %v5451
        %v5967 = vunpack.c.h.b16 %v5451
        %v5968 = vunpack.c.l.b16 %v5452
        %v5969 = vunpack.c.l.b16 %v5453
        %v5970 = vunpack.c.h.b16 %v5453
        %v5971 = vunpack.c.l.b16 %v5454
        %v5972 = vunpack.c.h.b16 %v5454
        %v5973 = vunpack.c.l.b16 %v5455
        %v5974 = vunpack.c.h.b16 %v5455
        %v5975 = vunpack.c.l.b16 %v5456
        %v5976 = vunpack.c.h.b16 %v5456
        %v5977 = vunpack.c.l.b16 %v5457
        %v5978 = vunpack.c.l.b16 %v5458
        %v5979 = vunpack.c.h.b16 %v5458
        %v5980 = vunpack.c.l.b16 %v5459
        %v5981 = vunpack.c.h.b16 %v5459
        %v5982 = vunpack.c.l.b16 %v5460
        %v5983 = vunpack.c.h.b16 %v5460
        %v5984 = vunpack.c.l.b16 %v5461
        %v5985 = vunpack.c.h.b16 %v5461
        %v5986 = vunpack.c.l.b16 %v5462
        %v5987 = vunpack.c.l.b16 %v5463
        %v5988 = vunpack.c.h.b16 %v5463
        %v5989 = vunpack.c.l.b16 %v5464
        %v5990 = vunpack.c.h.b16 %v5464
        %v5991 = vunpack.c.l.b16 %v5465
        %v5992 = vunpack.c.h.b16 %v5465
        %v5993 = vunpack.c.l.b16 %v5466
        %v5994 = vunpack.c.h.b16 %v5466
        %v5995 = vunpack.c.l.b16 %v5467
        %v5996 = vunpack.c.l.b16 %v5468
        %v5997 = vunpack.c.h.b16 %v5468
        %v5998 = vunpack.c.l.b16 %v5469
        %v5999 = vunpack.c.h.b16 %v5469
        %v6000 = vunpack.c.l.b16 %v5470
        %v6001 = vunpack.c.h.b16 %v5470
        %v6002 = vunpack.c.l.b16 %v5471
        %v6003 = vunpack.c.h.b16 %v5471
        %v6004 = vunpack.c.l.b16 %v5472
        %v6005 = vunpack.c.l.b16 %v5473
        %v6006 = vunpack.c.h.b16 %v5473
        %v6007 = vunpack.c.l.b16 %v5474
        %v6008 = vunpack.c.h.b16 %v5474
        %v6009 = vunpack.c.l.b16 %v5475
        %v6010 = vunpack.c.h.b16 %v5475
        %v6011 = vunpack.c.l.b16 %v5476
        %v6012 = vunpack.c.h.b16 %v5476
        %v6013 = vunpack.c.l.b16 %v5477
        %v6014 = vunpack.c.l.b16 %v5478
        %v6015 = vunpack.c.h.b16 %v5478
        %v6016 = vunpack.c.l.b16 %v5479
        %v6017 = vunpack.c.h.b16 %v5479
        %v6018 = vunpack.c.l.b16 %v5480
        %v6019 = vunpack.c.h.b16 %v5480
        %v6020 = vunpack.c.l.b16 %v5481
        %v6021 = vunpack.c.h.b16 %v5481
        %v6022 = vunpack.c.l.b16 %v5482
        %v6023 = vunpack.c.l.b16 %v5483
        %v6024 = vunpack.c.h.b16 %v5483
        %v6025 = vunpack.c.l.b16 %v5484
        %v6026 = vunpack.c.h.b16 %v5484
        %v6027 = vunpack.c.l.b16 %v5485
        %v6028 = vunpack.c.h.b16 %v5485
        %v6029 = vunpack.c.l.b16 %v5486
        %v6030 = vunpack.c.h.b16 %v5486
        %v6031 = vunpack.c.l.b16 %v5487
        %v6032 = vunpack.c.l.b16 %v5488
        %v6033 = vunpack.c.h.b16 %v5488
        %v6034 = vunpack.c.l.b16 %v5489
        %v6035 = vunpack.c.h.b16 %v5489
        %v6036 = vunpack.c.l.b16 %v5490
        %v6037 = vunpack.c.h.b16 %v5490
        %v6038 = vunpack.c.l.b16 %v5491
        %v6039 = vunpack.c.h.b16 %v5491
        %v6040 = vunpack.c.l.b16 %v5492
        %v6041 = vunpack.c.l.b16 %v5493
        %v6042 = vunpack.c.h.b16 %v5493
        %v6043 = vunpack.c.l.b16 %v5494
        %v6044 = vunpack.c.h.b16 %v5494
        %v6045 = vunpack.c.l.b16 %v5495
        %v6046 = vunpack.c.h.b16 %v5495
        %v6047 = vunpack.c.l.b16 %v5496
        %v6048 = vunpack.c.h.b16 %v5496
        %v6049 = vunpack.c.l.b16 %v5497
        %v6050 = vunpack.c.l.b16 %v5498
        %v6051 = vunpack.c.h.b16 %v5498
        %v6052 = vunpack.c.l.b16 %v5499
        %v6053 = vunpack.c.h.b16 %v5499
        %v6054 = vunpack.c.l.b16 %v5500
        %v6055 = vunpack.c.h.b16 %v5500
        %v6056 = vunpack.c.l.b16 %v5501
        %v6057 = vunpack.c.h.b16 %v5501
        %v6058 = vunpack.c.l.b16 %v5502
        %v6059 = vunpack.c.l.b16 %v5503
        %v6060 = vunpack.c.h.b16 %v5503
        %v6061 = vunpack.c.l.b16 %v5504
        %v6062 = vunpack.c.h.b16 %v5504
        %v6063 = vunpack.c.l.b16 %v5505
        %v6064 = vunpack.c.h.b16 %v5505
        %v6065 = vunpack.c.l.b16 %v5506
        %v6066 = vunpack.c.h.b16 %v5506
        %v6067 = vunpack.c.l.b16 %v5507
        %v6068 = vunpack.c.l.b16 %v5508
        %v6069 = vunpack.c.h.b16 %v5508
        %v6070 = vunpack.c.l.b16 %v5509
        %v6071 = vunpack.c.h.b16 %v5509
        %v6072 = vunpack.c.l.b16 %v5510
        %v6073 = vunpack.c.h.b16 %v5510
        %v6074 = vunpack.c.l.b16 %v5511
        %v6075 = vunpack.c.h.b16 %v5511
        %v6076 = vunpack.c.l.b16 %v5512
        %v6077 = vunpack.c.l.b16 %v5513
        %v6078 = vunpack.c.h.b16 %v5513
        %v6079 = vunpack.c.l.b16 %v5514
        %v6080 = vunpack.c.h.b16 %v5514
        %v6081 = vunpack.c.l.b16 %v5515
        %v6082 = vunpack.c.h.b16 %v5515
        %v6083 = vunpack.c.l.b16 %v5516
        %v6084 = vunpack.c.h.b16 %v5516
        %v6085 = vunpack.c.l.b16 %v5517
        %v6086 = vunpack.c.l.b16 %v5518
        %v6087 = vunpack.c.h.b16 %v5518
        %v6088 = vunpack.c.l.b16 %v5519
        %v6089 = vunpack.c.h.b16 %v5519
        %v6090 = vunpack.c.l.b16 %v5520
        %v6091 = vunpack.c.h.b16 %v5520
        %v6092 = vunpack.c.l.b16 %v5521
        %v6093 = vunpack.c.h.b16 %v5521
        %v6094 = vunpack.c.l.b16 %v5522
        %v6095 = vunpack.c.l.b16 %v5523
        %v6096 = vunpack.c.h.b16 %v5523
        %v6097 = vunpack.c.l.b16 %v5524
        %v6098 = vunpack.c.h.b16 %v5524
        %v6099 = vunpack.c.l.b16 %v5525
        %v6100 = vunpack.c.h.b16 %v5525
        %v6101 = vunpack.c.l.b16 %v5526
        %v6102 = vunpack.c.h.b16 %v5526
        %v6103 = vunpack.c.l.b16 %v5527
        %v6104 = vunpack.c.l.b16 %v5528
        %v6105 = vunpack.c.h.b16 %v5528
        %v6106 = vunpack.c.l.b16 %v5529
        %v6107 = vunpack.c.h.b16 %v5529
        %v6108 = vunpack.c.l.b16 %v5530
        %v6109 = vunpack.c.h.b16 %v5530
        %v6110 = vunpack.c.l.b16 %v5531
        %v6111 = vunpack.c.h.b16 %v5531
        %v6112 = vunpack.c.l.b16 %v5532
        %v6113 = vunpack.c.l.b16 %v5533
        %v6114 = vunpack.c.h.b16 %v5533
        %v6115 = vunpack.c.l.b16 %v5534
        %v6116 = vunpack.c.h.b16 %v5534
        %v6117 = vunpack.c.l.b16 %v5535
        %v6118 = vunpack.c.h.b16 %v5535
        %v6119 = vunpack.c.l.b16 %v5536
        %v6120 = vunpack.c.h.b16 %v5536
        %v6121 = vunpack.c.l.b16 %v5537
        %v6122 = vunpack.c.l.b16 %v5538
        %v6123 = vunpack.c.h.b16 %v5538
        %v6124 = vunpack.c.l.b16 %v5539
        %v6125 = vunpack.c.h.b16 %v5539
        %v6126 = vunpack.c.l.b16 %v5540
        %v6127 = vunpack.c.h.b16 %v5540
        %v6128 = vunpack.c.l.b16 %v5541
        %v6129 = vunpack.c.h.b16 %v5541
        %v6130 = vunpack.c.l.b16 %v5542
        %v6131 = vunpack.c.l.b16 %v5543
        %v6132 = vunpack.c.h.b16 %v5543
        %v6133 = vunpack.c.l.b16 %v5544
        %v6134 = vunpack.c.h.b16 %v5544
        %v6135 = vunpack.c.l.b16 %v5545
        %v6136 = vunpack.c.h.b16 %v5545
        %v6137 = vunpack.c.l.b16 %v5546
        %v6138 = vunpack.c.h.b16 %v5546
        %v6139 = vunpack.c.l.b16 %v5547
        %v6140 = vunpack.c.l.b16 %v5548
        %v6141 = vunpack.c.h.b16 %v5548
        %v6142 = vunpack.c.l.b16 %v5549
        %v6143 = vunpack.c.h.b16 %v5549
        %v6144 = vunpack.c.l.b16 %v5550
        %v6145 = vunpack.c.h.b16 %v5550
        %v6146 = vunpack.c.l.b16 %v5551
        %v6147 = vunpack.c.h.b16 %v5551
        %v6148 = vunpack.c.l.b16 %v5552
        %v6149 = vunpack.c.l.b16 %v5553
        %v6150 = vunpack.c.h.b16 %v5553
        %v6151 = vunpack.c.l.b16 %v5554
        %v6152 = vunpack.c.h.b16 %v5554
        %v6153 = vunpack.c.l.b16 %v5555
        %v6154 = vunpack.c.h.b16 %v5555
        %v6155 = vunpack.c.l.b16 %v5556
        %v6156 = vunpack.c.h.b16 %v5556
        %v6157 = vunpack.c.l.b16 %v5557
        %v6158 = vunpack.c.l.b16 %v5558
        %v6159 = vunpack.c.h.b16 %v5558
        %v6160 = vunpack.c.l.b16 %v5559
        %v6161 = vunpack.c.h.b16 %v5559
        %v6162 = vunpack.c.l.b16 %v5560
        %v6163 = vunpack.c.h.b16 %v5560
        %v6164 = vunpack.c.l.b16 %v5561
        %v6165 = vunpack.c.h.b16 %v5561
        %v6166 = vunpack.c.l.b16 %v5562
        %v6167 = vunpack.c.l.b16 %v5563
        %v6168 = vunpack.c.h.b16 %v5563
        %v6169 = vunpack.c.l.b16 %v5564
        %v6170 = vunpack.c.h.b16 %v5564
        %v6171 = vunpack.c.l.b16 %v5565
        %v6172 = vunpack.c.h.b16 %v5565
        %v6173 = vunpack.c.l.b16 %v5566
        %v6174 = vunpack.c.h.b16 %v5566
        %v6175 = vunpack.c.l.b16 %v5567
        %v6176 = vunpack.c.l.b16 %v5568
        %v6177 = vunpack.c.h.b16 %v5568
        %v6178 = vunpack.c.l.b16 %v5569
        %v6179 = vunpack.c.h.b16 %v5569
        %v6180 = vunpack.c.l.b16 %v5570
        %v6181 = vunpack.c.h.b16 %v5570
        %v6182 = vunpack.c.l.b16 %v5571
        %v6183 = vunpack.c.h.b16 %v5571
        %v6184 = vunpack.c.l.b16 %v5572
        %v6185 = vunpack.c.l.b16 %v5573
        %v6186 = vunpack.c.h.b16 %v5573
        %v6187 = vunpack.c.l.b16 %v5574
        %v6188 = vunpack.c.h.b16 %v5574
        %v6189 = vunpack.c.l.b16 %v5575
        %v6190 = vunpack.c.h.b16 %v5575
        %v6191 = vunpack.c.l.b16 %v5576
        %v6192 = vunpack.c.h.b16 %v5576
        %v6193 = vunpack.c.l.b16 %v5577
        %v6194 = vunpack.c.l.b16 %v5578
        %v6195 = vunpack.c.h.b16 %v5578
        %v6196 = vunpack.c.l.b16 %v5579
        %v6197 = vunpack.c.h.b16 %v5579
        %v6198 = vunpack.c.l.b16 %v5580
        %v6199 = vunpack.c.h.b16 %v5580
        %v6200 = vunpack.c.l.b16 %v5581
        %v6201 = vunpack.c.h.b16 %v5581
        %v6202 = vunpack.c.l.b16 %v5582
        %v6203 = vunpack.c.l.b16 %v5583
        %v6204 = vunpack.c.h.b16 %v5583
        %v6205 = vunpack.c.l.b16 %v5584
        %v6206 = vunpack.c.h.b16 %v5584
        %v6207 = vunpack.c.l.b16 %v5585
        %v6208 = vunpack.c.h.b16 %v5585
        %v6209 = vunpack.c.l.b16 %v5586
        %v6210 = vunpack.c.h.b16 %v5586
        %v6211 = vunpack.c.l.b16 %v5587
        %v6212 = vpack.c.b16 %v5933, %v5924
        %v6213 = vpack.c.b16 %v5934, %v5925
        %v6214 = vpack.c.b16 %v5935, %v5926
        %v6215 = vpack.c.b16 %v5936, %v5927
        %v6216 = vpack.c.b16 %v5937, %v5928
        %v6217 = vpack.c.b16 %v5938, %v5929
        %v6218 = vpack.c.b16 %v5939, %v5930
        %v6219 = vpack.c.b16 %v5940, %v5931
        %v6220 = vpack.c.b16 %v5941, %v5932
        %v6221 = vpack.c.b16 %v5951, %v5942
        %v6222 = vpack.c.b16 %v5952, %v5943
        %v6223 = vpack.c.b16 %v5953, %v5944
        %v6224 = vpack.c.b16 %v5954, %v5945
        %v6225 = vpack.c.b16 %v5955, %v5946
        %v6226 = vpack.c.b16 %v5956, %v5947
        %v6227 = vpack.c.b16 %v5957, %v5948
        %v6228 = vpack.c.b16 %v5958, %v5949
        %v6229 = vpack.c.b16 %v5959, %v5950
        %v6230 = vpack.c.b16 %v5969, %v5960
        %v6231 = vpack.c.b16 %v5970, %v5961
        %v6232 = vpack.c.b16 %v5971, %v5962
        %v6233 = vpack.c.b16 %v5972, %v5963
        %v6234 = vpack.c.b16 %v5973, %v5964
        %v6235 = vpack.c.b16 %v5974, %v5965
        %v6236 = vpack.c.b16 %v5975, %v5966
        %v6237 = vpack.c.b16 %v5976, %v5967
        %v6238 = vpack.c.b16 %v5977, %v5968
        %v6239 = vpack.c.b16 %v5987, %v5978
        %v6240 = vpack.c.b16 %v5988, %v5979
        %v6241 = vpack.c.b16 %v5989, %v5980
        %v6242 = vpack.c.b16 %v5990, %v5981
        %v6243 = vpack.c.b16 %v5991, %v5982
        %v6244 = vpack.c.b16 %v5992, %v5983
        %v6245 = vpack.c.b16 %v5993, %v5984
        %v6246 = vpack.c.b16 %v5994, %v5985
        %v6247 = vpack.c.b16 %v5995, %v5986
        %v6248 = vpack.c.b16 %v6005, %v5996
        %v6249 = vpack.c.b16 %v6006, %v5997
        %v6250 = vpack.c.b16 %v6007, %v5998
        %v6251 = vpack.c.b16 %v6008, %v5999
        %v6252 = vpack.c.b16 %v6009, %v6000
        %v6253 = vpack.c.b16 %v6010, %v6001
        %v6254 = vpack.c.b16 %v6011, %v6002
        %v6255 = vpack.c.b16 %v6012, %v6003
        %v6256 = vpack.c.b16 %v6013, %v6004
        %v6257 = vpack.c.b16 %v6023, %v6014
        %v6258 = vpack.c.b16 %v6024, %v6015
        %v6259 = vpack.c.b16 %v6025, %v6016
        %v6260 = vpack.c.b16 %v6026, %v6017
        %v6261 = vpack.c.b16 %v6027, %v6018
        %v6262 = vpack.c.b16 %v6028, %v6019
        %v6263 = vpack.c.b16 %v6029, %v6020
        %v6264 = vpack.c.b16 %v6030, %v6021
        %v6265 = vpack.c.b16 %v6031, %v6022
        %v6266 = vpack.c.b16 %v6041, %v6032
        %v6267 = vpack.c.b16 %v6042, %v6033
        %v6268 = vpack.c.b16 %v6043, %v6034
        %v6269 = vpack.c.b16 %v6044, %v6035
        %v6270 = vpack.c.b16 %v6045, %v6036
        %v6271 = vpack.c.b16 %v6046, %v6037
        %v6272 = vpack.c.b16 %v6047, %v6038
        %v6273 = vpack.c.b16 %v6048, %v6039
        %v6274 = vpack.c.b16 %v6049, %v6040
        %v6275 = vpack.c.b16 %v6059, %v6050
        %v6276 = vpack.c.b16 %v6060, %v6051
        %v6277 = vpack.c.b16 %v6061, %v6052
        %v6278 = vpack.c.b16 %v6062, %v6053
        %v6279 = vpack.c.b16 %v6063, %v6054
        %v6280 = vpack.c.b16 %v6064, %v6055
        %v6281 = vpack.c.b16 %v6065, %v6056
        %v6282 = vpack.c.b16 %v6066, %v6057
        %v6283 = vpack.c.b16 %v6067, %v6058
        %v6284 = vpack.c.b16 %v6077, %v6068
        %v6285 = vpack.c.b16 %v6078, %v6069
        %v6286 = vpack.c.b16 %v6079, %v6070
        %v6287 = vpack.c.b16 %v6080, %v6071
        %v6288 = vpack.c.b16 %v6081, %v6072
        %v6289 = vpack.c.b16 %v6082, %v6073
        %v6290 = vpack.c.b16 %v6083, %v6074
        %v6291 = vpack.c.b16 %v6084, %v6075
        %v6292 = vpack.c.b16 %v6085, %v6076
        %v6293 = vpack.c.b16 %v6095, %v6086
        %v6294 = vpack.c.b16 %v6096, %v6087
        %v6295 = vpack.c.b16 %v6097, %v6088
        %v6296 = vpack.c.b16 %v6098, %v6089
        %v6297 = vpack.c.b16 %v6099, %v6090
        %v6298 = vpack.c.b16 %v6100, %v6091
        %v6299 = vpack.c.b16 %v6101, %v6092
        %v6300 = vpack.c.b16 %v6102, %v6093
        %v6301 = vpack.c.b16 %v6103, %v6094
        %v6302 = vpack.c.b16 %v6113, %v6104
        %v6303 = vpack.c.b16 %v6114, %v6105
        %v6304 = vpack.c.b16 %v6115, %v6106
        %v6305 = vpack.c.b16 %v6116, %v6107
        %v6306 = vpack.c.b16 %v6117, %v6108
        %v6307 = vpack.c.b16 %v6118, %v6109
        %v6308 = vpack.c.b16 %v6119, %v6110
        %v6309 = vpack.c.b16 %v6120, %v6111
        %v6310 = vpack.c.b16 %v6121, %v6112
        %v6311 = vpack.c.b16 %v6131, %v6122
        %v6312 = vpack.c.b16 %v6132, %v6123
        %v6313 = vpack.c.b16 %v6133, %v6124
        %v6314 = vpack.c.b16 %v6134, %v6125
        %v6315 = vpack.c.b16 %v6135, %v6126
        %v6316 = vpack.c.b16 %v6136, %v6127
        %v6317 = vpack.c.b16 %v6137, %v6128
        %v6318 = vpack.c.b16 %v6138, %v6129
        %v6319 = vpack.c.b16 %v6139, %v6130
        %v6320 = vpack.c.b16 %v6149, %v6140
        %v6321 = vpack.c.b16 %v6150, %v6141
        %v6322 = vpack.c.b16 %v6151, %v6142
        %v6323 = vpack.c.b16 %v6152, %v6143
        %v6324 = vpack.c.b16 %v6153, %v6144
        %v6325 = vpack.c.b16 %v6154, %v6145
        %v6326 = vpack.c.b16 %v6155, %v6146
        %v6327 = vpack.c.b16 %v6156, %v6147
        %v6328 = vpack.c.b16 %v6157, %v6148
        %v6329 = vpack.c.b16 %v6167, %v6158
        %v6330 = vpack.c.b16 %v6168, %v6159
        %v6331 = vpack.c.b16 %v6169, %v6160
        %v6332 = vpack.c.b16 %v6170, %v6161
        %v6333 = vpack.c.b16 %v6171, %v6162
        %v6334 = vpack.c.b16 %v6172, %v6163
        %v6335 = vpack.c.b16 %v6173, %v6164
        %v6336 = vpack.c.b16 %v6174, %v6165
        %v6337 = vpack.c.b16 %v6175, %v6166
        %v6338 = vpack.c.b16 %v6185, %v6176
        %v6339 = vpack.c.b16 %v6186, %v6177
        %v6340 = vpack.c.b16 %v6187, %v6178
        %v6341 = vpack.c.b16 %v6188, %v6179
        %v6342 = vpack.c.b16 %v6189, %v6180
        %v6343 = vpack.c.b16 %v6190, %v6181
        %v6344 = vpack.c.b16 %v6191, %v6182
        %v6345 = vpack.c.b16 %v6192, %v6183
        %v6346 = vpack.c.b16 %v6193, %v6184
        %v6347 = vpack.c.b16 %v6203, %v6194
        %v6348 = vpack.c.b16 %v6204, %v6195
        %v6349 = vpack.c.b16 %v6205, %v6196
        %v6350 = vpack.c.b16 %v6206, %v6197
        %v6351 = vpack.c.b16 %v6207, %v6198
        %v6352 = vpack.c.b16 %v6208, %v6199
        %v6353 = vpack.c.b16 %v6209, %v6200
        %v6354 = vpack.c.b16 %v6210, %v6201
        %v6355 = vpack.c.b16 %v6211, %v6202
        %v6644 = vunpack.c.l.b16 %v5588
        %v6645 = vunpack.c.l.b16 %v5589
        %v6646 = vunpack.c.l.b16 %v5590
        %v6647 = vunpack.c.l.b16 %v5591
        %v6648 = vunpack.c.l.b16 %v5592
        %v6649 = vunpack.c.l.b16 %v5593
        %v6650 = vunpack.c.l.b16 %v5594
        %v6651 = vunpack.c.l.b16 %v5595
        %v6652 = vunpack.c.l.b16 %v5596
        %v6653 = vunpack.c.l.b16 %v5597
        %v6654 = vunpack.c.l.b16 %v5598
        %v6655 = vunpack.c.l.b16 %v5599
        %v6656 = vunpack.c.l.b16 %v5600
        %v6657 = vunpack.c.l.b16 %v5601
        %v6658 = vunpack.c.l.b16 %v5602
        %v6659 = vunpack.c.l.b16 %v5603
        %v6660 = vunpack.c.l.b16 %v5604
        %v6661 = vunpack.c.l.b16 %v5605
        %v6662 = vunpack.c.l.b16 %v5606
        %v6663 = vunpack.c.l.b16 %v5607
        %v6664 = vunpack.c.l.b16 %v5608
        %v6665 = vunpack.c.l.b16 %v5609
        %v6666 = vunpack.c.l.b16 %v5610
        %v6667 = vunpack.c.l.b16 %v5611
        %v6668 = vunpack.c.l.b16 %v5612
        %v6669 = vunpack.c.l.b16 %v5613
        %v6670 = vunpack.c.l.b16 %v5614
        %v6671 = vunpack.c.l.b16 %v5615
        %v6672 = vunpack.c.l.b16 %v5616
        %v6673 = vunpack.c.l.b16 %v5617
        %v6674 = vunpack.c.l.b16 %v5618
        %v6675 = vunpack.c.l.b16 %v5619
        %v6676 = vunpack.c.l.b16 %v5620
        %v6677 = vunpack.c.l.b16 %v5621
        %v6678 = vunpack.c.l.b16 %v5622
        %v6679 = vunpack.c.l.b16 %v5623
        %v6680 = vunpack.c.l.b16 %v5624
        %v6681 = vunpack.c.l.b16 %v5625
        %v6682 = vunpack.c.l.b16 %v5626
        %v6683 = vunpack.c.l.b16 %v5627
        %v6684 = vunpack.c.l.b16 %v5628
        %v6685 = vunpack.c.l.b16 %v5629
        %v6686 = vunpack.c.l.b16 %v5630
        %v6687 = vunpack.c.l.b16 %v5631
        %v6688 = vunpack.c.l.b16 %v5632
        %v6689 = vunpack.c.l.b16 %v5633
        %v6690 = vunpack.c.l.b16 %v5634
        %v6691 = vunpack.c.l.b16 %v5635
        %v6692 = vunpack.c.l.b16 %v5636
        %v6693 = vunpack.c.l.b16 %v5637
        %v6694 = vunpack.c.l.b16 %v5638
        %v6695 = vunpack.c.l.b16 %v5639
        %v6696 = vunpack.c.l.b16 %v5640
        %v6697 = vunpack.c.l.b16 %v5641
        %v6698 = vunpack.c.l.b16 %v5642
        %v6699 = vunpack.c.l.b16 %v5643
        %v6700 = vunpack.c.l.b16 %v5644
        %v6701 = vunpack.c.l.b16 %v5645
        %v6702 = vunpack.c.l.b16 %v5646
        %v6703 = vunpack.c.l.b16 %v5647
        %v6704 = vunpack.c.l.b16 %v5648
        %v6705 = vunpack.c.l.b16 %v5649
        %v6706 = vunpack.c.l.b16 %v5650
        %v6707 = vunpack.c.l.b16 %v5651
        %v6708 = vunpack.c.l.b16 %v5652
        %v6709 = vunpack.c.l.b16 %v5653
        %v6710 = vunpack.c.l.b16 %v5654
        %v6711 = vunpack.c.l.b16 %v5655
        %v6712 = vunpack.c.l.b16 %v5656
        %v6713 = vunpack.c.l.b16 %v5657
        %v6714 = vunpack.c.l.b16 %v5658
        %v6715 = vunpack.c.l.b16 %v5659
        %v6716 = vunpack.c.l.b16 %v5660
        %v6717 = vunpack.c.l.b16 %v5661
        %v6718 = vunpack.c.l.b16 %v5662
        %v6719 = vunpack.c.l.b16 %v5663
        %v6720 = vunpack.c.l.b16 %v5664
        %v6721 = vunpack.c.l.b16 %v5665
        %v6722 = vunpack.c.l.b16 %v5666
        %v6723 = vunpack.c.l.b16 %v5667
        %v6724 = vunpack.c.l.b16 %v5668
        %v6725 = vunpack.c.l.b16 %v5669
        %v6726 = vunpack.c.l.b16 %v5670
        %v6727 = vunpack.c.l.b16 %v5671
        %v6728 = vunpack.c.l.b16 %v5672
        %v6729 = vunpack.c.l.b16 %v5673
        %v6730 = vunpack.c.l.b16 %v5674
        %v6731 = vunpack.c.l.b16 %v5675
        %v6732 = vunpack.c.l.b16 %v5676
        %v6733 = vunpack.c.l.b16 %v5677
        %v6734 = vunpack.c.l.b16 %v5678
        %v6735 = vunpack.c.l.b16 %v5679
        %v6736 = vunpack.c.l.b16 %v5680
        %v6737 = vunpack.c.l.b16 %v5681
        %v6738 = vunpack.c.l.b16 %v5682
        %v6739 = vunpack.c.l.b16 %v5683
        %v6740 = vunpack.c.l.b16 %v5684
        %v6741 = vunpack.c.l.b16 %v5685
        %v6742 = vunpack.c.l.b16 %v5686
        %v6743 = vunpack.c.l.b16 %v5687
        %v6744 = vunpack.c.l.b16 %v5688
        %v6745 = vunpack.c.l.b16 %v5689
        %v6746 = vunpack.c.l.b16 %v5690
        %v6747 = vunpack.c.l.b16 %v5691
        %v6748 = vunpack.c.l.b16 %v5692
        %v6749 = vunpack.c.l.b16 %v5693
        %v6750 = vunpack.c.l.b16 %v5694
        %v6751 = vunpack.c.l.b16 %v5695
        %v6752 = vunpack.c.l.b16 %v5696
        %v6753 = vunpack.c.l.b16 %v5697
        %v6754 = vunpack.c.l.b16 %v5698
        %v6755 = vunpack.c.l.b16 %v5699
        %v6756 = vunpack.c.l.b16 %v5700
        %v6757 = vunpack.c.l.b16 %v5701
        %v6758 = vunpack.c.l.b16 %v5702
        %v6759 = vunpack.c.l.b16 %v5703
        %v6760 = vunpack.c.l.b16 %v5704
        %v6761 = vunpack.c.l.b16 %v5705
        %v6762 = vunpack.c.l.b16 %v5706
        %v6763 = vunpack.c.l.b16 %v5707
        %v6764 = vunpack.c.l.b16 %v5708
        %v6765 = vunpack.c.l.b16 %v5709
        %v6766 = vunpack.c.l.b16 %v5710
        %v6767 = vunpack.c.l.b16 %v5711
        %v6768 = vunpack.c.l.b16 %v5712
        %v6769 = vunpack.c.l.b16 %v5713
        %v6770 = vunpack.c.l.b16 %v5714
        %v6771 = vunpack.c.l.b16 %v5715
        %v6772 = vunpack.c.l.b16 %v5716
        %v6773 = vunpack.c.l.b16 %v5717
        %v6774 = vunpack.c.l.b16 %v5718
        %v6775 = vunpack.c.l.b16 %v5719
        %v6776 = vunpack.c.l.b16 %v5720
        %v6777 = vunpack.c.l.b16 %v5721
        %v6778 = vunpack.c.l.b16 %v5722
        %v6779 = vunpack.c.l.b16 %v5723
        %v6780 = vunpack.c.l.b16 %v5724
        %v6781 = vunpack.c.l.b16 %v5725
        %v6782 = vunpack.c.l.b16 %v5726
        %v6783 = vunpack.c.l.b16 %v5727
        %v6784 = vunpack.c.l.b16 %v5728
        %v6785 = vunpack.c.l.b16 %v5729
        %v6786 = vunpack.c.l.b16 %v5730
        %v6787 = vunpack.c.l.b16 %v5731
        %v6788 = vpack.c.b16 %v6645, %v6644
        %v6789 = vpack.c.b16 %v6647, %v6646
        %v6790 = vpack.c.b16 %v6649, %v6648
        %v6791 = vpack.c.b16 %v6651, %v6650
        %v6792 = vpack.c.b16 %v6653, %v6652
        %v6793 = vpack.c.b16 %v6655, %v6654
        %v6794 = vpack.c.b16 %v6657, %v6656
        %v6795 = vpack.c.b16 %v6659, %v6658
        %v6796 = vpack.c.b16 %v6661, %v6660
        %v6797 = vpack.c.b16 %v6663, %v6662
        %v6798 = vpack.c.b16 %v6665, %v6664
        %v6799 = vpack.c.b16 %v6667, %v6666
        %v6800 = vpack.c.b16 %v6669, %v6668
        %v6801 = vpack.c.b16 %v6671, %v6670
        %v6802 = vpack.c.b16 %v6673, %v6672
        %v6803 = vpack.c.b16 %v6675, %v6674
        %v6804 = vpack.c.b16 %v6677, %v6676
        %v6805 = vpack.c.b16 %v6679, %v6678
        %v6806 = vpack.c.b16 %v6681, %v6680
        %v6807 = vpack.c.b16 %v6683, %v6682
        %v6808 = vpack.c.b16 %v6685, %v6684
        %v6809 = vpack.c.b16 %v6687, %v6686
        %v6810 = vpack.c.b16 %v6689, %v6688
        %v6811 = vpack.c.b16 %v6691, %v6690
        %v6812 = vpack.c.b16 %v6693, %v6692
        %v6813 = vpack.c.b16 %v6695, %v6694
        %v6814 = vpack.c.b16 %v6697, %v6696
        %v6815 = vpack.c.b16 %v6699, %v6698
        %v6816 = vpack.c.b16 %v6701, %v6700
        %v6817 = vpack.c.b16 %v6703, %v6702
        %v6818 = vpack.c.b16 %v6705, %v6704
        %v6819 = vpack.c.b16 %v6707, %v6706
        %v6820 = vpack.c.b16 %v6709, %v6708
        %v6821 = vpack.c.b16 %v6711, %v6710
        %v6822 = vpack.c.b16 %v6713, %v6712
        %v6823 = vpack.c.b16 %v6715, %v6714
        %v6824 = vpack.c.b16 %v6717, %v6716
        %v6825 = vpack.c.b16 %v6719, %v6718
        %v6826 = vpack.c.b16 %v6721, %v6720
        %v6827 = vpack.c.b16 %v6723, %v6722
        %v6828 = vpack.c.b16 %v6725, %v6724
        %v6829 = vpack.c.b16 %v6727, %v6726
        %v6830 = vpack.c.b16 %v6729, %v6728
        %v6831 = vpack.c.b16 %v6731, %v6730
        %v6832 = vpack.c.b16 %v6733, %v6732
        %v6833 = vpack.c.b16 %v6735, %v6734
        %v6834 = vpack.c.b16 %v6737, %v6736
        %v6835 = vpack.c.b16 %v6739, %v6738
        %v6836 = vpack.c.b16 %v6741, %v6740
        %v6837 = vpack.c.b16 %v6743, %v6742
        %v6838 = vpack.c.b16 %v6745, %v6744
        %v6839 = vpack.c.b16 %v6747, %v6746
        %v6840 = vpack.c.b16 %v6749, %v6748
        %v6841 = vpack.c.b16 %v6751, %v6750
        %v6842 = vpack.c.b16 %v6753, %v6752
        %v6843 = vpack.c.b16 %v6755, %v6754
        %v6844 = vpack.c.b16 %v6757, %v6756
        %v6845 = vpack.c.b16 %v6759, %v6758
        %v6846 = vpack.c.b16 %v6761, %v6760
        %v6847 = vpack.c.b16 %v6763, %v6762
        %v6848 = vpack.c.b16 %v6765, %v6764
        %v6849 = vpack.c.b16 %v6767, %v6766
        %v6850 = vpack.c.b16 %v6769, %v6768
        %v6851 = vpack.c.b16 %v6771, %v6770
        %v6852 = vpack.c.b16 %v6773, %v6772
        %v6853 = vpack.c.b16 %v6775, %v6774
        %v6854 = vpack.c.b16 %v6777, %v6776
        %v6855 = vpack.c.b16 %v6779, %v6778
        %v6856 = vpack.c.b16 %v6781, %v6780
        %v6857 = vpack.c.b16 %v6783, %v6782
        %v6858 = vpack.c.b16 %v6785, %v6784
        %v6859 = vpack.c.b16 %v6787, %v6786
        %6932 = vmatpush.bf16.msra.mxu0 %v6795
        %6933 = vmatpush.bf16.msra.mxu0 %v6794
        %6934 = vmatpush.bf16.msra.mxu0 %v6793
        %6935 = vmatpush.bf16.msra.mxu0 %v6792
        %6936 = vmatpush.bf16.msra.mxu0 %v6791
        %6937 = vmatpush.bf16.msra.mxu0 %v6790
        %6938 = vmatpush.bf16.msra.mxu0 %v6789
        %6939 = vmatpush.bf16.msra.mxu0 %v6788
        %6940 = vmatmul.bf16.gmra.mxu0 %v6212
        %v6941 = vpop.f32.mrf.mxu0
        %v6942 = vadd.f32 %v5732, %v6941
        %v6943 = vpop.f32.mrf.mxu0
        %v6944 = vadd.f32 %v5733, %v6943
        %6945 = vmatmul.bf16.gmra.mxu0 %v6221
        %v6946 = vpop.f32.mrf.mxu0
        %v6947 = vadd.f32 %v5734, %v6946
        %v6948 = vpop.f32.mrf.mxu0
        %v6949 = vadd.f32 %v5735, %v6948
        %6950 = vmatmul.bf16.gmra.mxu0 %v6230
        %v6951 = vpop.f32.mrf.mxu0
        %v6952 = vadd.f32 %v5736, %v6951
        %v6953 = vpop.f32.mrf.mxu0
        %v6954 = vadd.f32 %v5737, %v6953
        %6955 = vmatmul.bf16.gmra.mxu0 %v6239
        %v6956 = vpop.f32.mrf.mxu0
        %v6957 = vadd.f32 %v5738, %v6956
        %v6958 = vpop.f32.mrf.mxu0
        %v6959 = vadd.f32 %v5739, %v6958
        %6960 = vmatmul.bf16.gmra.mxu0 %v6248
        %v6961 = vpop.f32.mrf.mxu0
        %v6962 = vadd.f32 %v5740, %v6961
        %v6963 = vpop.f32.mrf.mxu0
        %v6964 = vadd.f32 %v5741, %v6963
        %6965 = vmatmul.bf16.gmra.mxu0 %v6257
        %v6966 = vpop.f32.mrf.mxu0
        %v6967 = vadd.f32 %v5742, %v6966
        %v6968 = vpop.f32.mrf.mxu0
        %v6969 = vadd.f32 %v5743, %v6968
        %6970 = vmatmul.bf16.gmra.mxu0 %v6266
        %v6971 = vpop.f32.mrf.mxu0
        %v6972 = vadd.f32 %v5744, %v6971
        %v6973 = vpop.f32.mrf.mxu0
        %v6974 = vadd.f32 %v5745, %v6973
        %6975 = vmatmul.bf16.gmra.mxu0 %v6275
        %v6976 = vpop.f32.mrf.mxu0
        %v6977 = vadd.f32 %v5746, %v6976
        %v6978 = vpop.f32.mrf.mxu0
        %v6979 = vadd.f32 %v5747, %v6978
        %6980 = vmatmul.bf16.gmra.mxu0 %v6284
        %v6981 = vpop.f32.mrf.mxu0
        %v6982 = vadd.f32 %v5748, %v6981
        %v6983 = vpop.f32.mrf.mxu0
        %v6984 = vadd.f32 %v5749, %v6983
        %6985 = vmatmul.bf16.gmra.mxu0 %v6293
        %v6986 = vpop.f32.mrf.mxu0
        %v6987 = vadd.f32 %v5750, %v6986
        %v6988 = vpop.f32.mrf.mxu0
        %v6989 = vadd.f32 %v5751, %v6988
        %6990 = vmatmul.bf16.gmra.mxu0 %v6302
        %v6991 = vpop.f32.mrf.mxu0
        %v6992 = vadd.f32 %v5752, %v6991
        %v6993 = vpop.f32.mrf.mxu0
        %v6994 = vadd.f32 %v5753, %v6993
        %6995 = vmatmul.bf16.gmra.mxu0 %v6311
        %v6996 = vpop.f32.mrf.mxu0
        %v6997 = vadd.f32 %v5754, %v6996
        %v6998 = vpop.f32.mrf.mxu0
        %v6999 = vadd.f32 %v5755, %v6998
        %7000 = vmatmul.bf16.gmra.mxu0 %v6320
        %v7001 = vpop.f32.mrf.mxu0
        %v7002 = vadd.f32 %v5756, %v7001
        %v7003 = vpop.f32.mrf.mxu0
        %v7004 = vadd.f32 %v5757, %v7003
        %7005 = vmatmul.bf16.gmra.mxu0 %v6329
        %v7006 = vpop.f32.mrf.mxu0
        %v7007 = vadd.f32 %v5758, %v7006
        %v7008 = vpop.f32.mrf.mxu0
        %v7009 = vadd.f32 %v5759, %v7008
        %7010 = vmatmul.bf16.gmra.mxu0 %v6338
        %v7011 = vpop.f32.mrf.mxu0
        %v7012 = vadd.f32 %v5760, %v7011
        %v7013 = vpop.f32.mrf.mxu0
        %v7014 = vadd.f32 %v5761, %v7013
        %7015 = vmatmul.bf16.gmra.mxu0 %v6347
        %v7016 = vpop.f32.mrf.mxu0
        %v7017 = vadd.f32 %v5762, %v7016
        %v7018 = vpop.f32.mrf.mxu0
        %v7019 = vadd.f32 %v5763, %v7018
        %7020 = vdwg.mxu0
        %7021 = vmatpush.bf16.msra.mxu0 %v6803
        %7022 = vmatpush.bf16.msra.mxu0 %v6802
        %7023 = vmatpush.bf16.msra.mxu0 %v6801
        %7024 = vmatpush.bf16.msra.mxu0 %v6800
        %7025 = vmatpush.bf16.msra.mxu0 %v6799
        %7026 = vmatpush.bf16.msra.mxu0 %v6798
        %7027 = vmatpush.bf16.msra.mxu0 %v6797
        %7028 = vmatpush.bf16.msra.mxu0 %v6796
        %7029 = vmatmul.bf16.gmra.mxu0 %v6213
        %v7030 = vpop.f32.mrf.mxu0
        %v7031 = vadd.f32 %v6942, %v7030
        %v7032 = vpop.f32.mrf.mxu0
        %v7033 = vadd.f32 %v6944, %v7032
        %7034 = vmatmul.bf16.gmra.mxu0 %v6222
        %v7035 = vpop.f32.mrf.mxu0
        %v7036 = vadd.f32 %v6947, %v7035
        %v7037 = vpop.f32.mrf.mxu0
        %v7038 = vadd.f32 %v6949, %v7037
        %7039 = vmatmul.bf16.gmra.mxu0 %v6231
        %v7040 = vpop.f32.mrf.mxu0
        %v7041 = vadd.f32 %v6952, %v7040
        %v7042 = vpop.f32.mrf.mxu0
        %v7043 = vadd.f32 %v6954, %v7042
        %7044 = vmatmul.bf16.gmra.mxu0 %v6240
        %v7045 = vpop.f32.mrf.mxu0
        %v7046 = vadd.f32 %v6957, %v7045
        %v7047 = vpop.f32.mrf.mxu0
        %v7048 = vadd.f32 %v6959, %v7047
        %7049 = vmatmul.bf16.gmra.mxu0 %v6249
        %v7050 = vpop.f32.mrf.mxu0
        %v7051 = vadd.f32 %v6962, %v7050
        %v7052 = vpop.f32.mrf.mxu0
        %v7053 = vadd.f32 %v6964, %v7052
        %7054 = vmatmul.bf16.gmra.mxu0 %v6258
        %v7055 = vpop.f32.mrf.mxu0
        %v7056 = vadd.f32 %v6967, %v7055
        %v7057 = vpop.f32.mrf.mxu0
        %v7058 = vadd.f32 %v6969, %v7057
        %7059 = vmatmul.bf16.gmra.mxu0 %v6267
        %v7060 = vpop.f32.mrf.mxu0
        %v7061 = vadd.f32 %v6972, %v7060
        %v7062 = vpop.f32.mrf.mxu0
        %v7063 = vadd.f32 %v6974, %v7062
        %7064 = vmatmul.bf16.gmra.mxu0 %v6276
        %v7065 = vpop.f32.mrf.mxu0
        %v7066 = vadd.f32 %v6977, %v7065
        %v7067 = vpop.f32.mrf.mxu0
        %v7068 = vadd.f32 %v6979, %v7067
        %7069 = vmatmul.bf16.gmra.mxu0 %v6285
        %v7070 = vpop.f32.mrf.mxu0
        %v7071 = vadd.f32 %v6982, %v7070
        %v7072 = vpop.f32.mrf.mxu0
        %v7073 = vadd.f32 %v6984, %v7072
        %7074 = vmatmul.bf16.gmra.mxu0 %v6294
        %v7075 = vpop.f32.mrf.mxu0
        %v7076 = vadd.f32 %v6987, %v7075
        %v7077 = vpop.f32.mrf.mxu0
        %v7078 = vadd.f32 %v6989, %v7077
        %7079 = vmatmul.bf16.gmra.mxu0 %v6303
        %v7080 = vpop.f32.mrf.mxu0
        %v7081 = vadd.f32 %v6992, %v7080
        %v7082 = vpop.f32.mrf.mxu0
        %v7083 = vadd.f32 %v6994, %v7082
        %7084 = vmatmul.bf16.gmra.mxu0 %v6312
        %v7085 = vpop.f32.mrf.mxu0
        %v7086 = vadd.f32 %v6997, %v7085
        %v7087 = vpop.f32.mrf.mxu0
        %v7088 = vadd.f32 %v6999, %v7087
        %7089 = vmatmul.bf16.gmra.mxu0 %v6321
        %v7090 = vpop.f32.mrf.mxu0
        %v7091 = vadd.f32 %v7002, %v7090
        %v7092 = vpop.f32.mrf.mxu0
        %v7093 = vadd.f32 %v7004, %v7092
        %7094 = vmatmul.bf16.gmra.mxu0 %v6330
        %v7095 = vpop.f32.mrf.mxu0
        %v7096 = vadd.f32 %v7007, %v7095
        %v7097 = vpop.f32.mrf.mxu0
        %v7098 = vadd.f32 %v7009, %v7097
        %7099 = vmatmul.bf16.gmra.mxu0 %v6339
        %v7100 = vpop.f32.mrf.mxu0
        %v7101 = vadd.f32 %v7012, %v7100
        %v7102 = vpop.f32.mrf.mxu0
        %v7103 = vadd.f32 %v7014, %v7102
        %7104 = vmatmul.bf16.gmra.mxu0 %v6348
        %v7105 = vpop.f32.mrf.mxu0
        %v7106 = vadd.f32 %v7017, %v7105
        %v7107 = vpop.f32.mrf.mxu0
        %v7108 = vadd.f32 %v7019, %v7107
        %7109 = vdwg.mxu0
        %7110 = vmatpush.bf16.msra.mxu0 %v6811
        %7111 = vmatpush.bf16.msra.mxu0 %v6810
        %7112 = vmatpush.bf16.msra.mxu0 %v6809
        %7113 = vmatpush.bf16.msra.mxu0 %v6808
        %7114 = vmatpush.bf16.msra.mxu0 %v6807
        %7115 = vmatpush.bf16.msra.mxu0 %v6806
        %7116 = vmatpush.bf16.msra.mxu0 %v6805
        %7117 = vmatpush.bf16.msra.mxu0 %v6804
        %7118 = vmatmul.bf16.gmra.mxu0 %v6214
        %v7119 = vpop.f32.mrf.mxu0
        %v7120 = vadd.f32 %v7031, %v7119
        %v7121 = vpop.f32.mrf.mxu0
        %v7122 = vadd.f32 %v7033, %v7121
        %7123 = vmatmul.bf16.gmra.mxu0 %v6223
        %v7124 = vpop.f32.mrf.mxu0
        %v7125 = vadd.f32 %v7036, %v7124
        %v7126 = vpop.f32.mrf.mxu0
        %v7127 = vadd.f32 %v7038, %v7126
        %7128 = vmatmul.bf16.gmra.mxu0 %v6232
        %v7129 = vpop.f32.mrf.mxu0
        %v7130 = vadd.f32 %v7041, %v7129
        %v7131 = vpop.f32.mrf.mxu0
        %v7132 = vadd.f32 %v7043, %v7131
        %7133 = vmatmul.bf16.gmra.mxu0 %v6241
        %v7134 = vpop.f32.mrf.mxu0
        %v7135 = vadd.f32 %v7046, %v7134
        %v7136 = vpop.f32.mrf.mxu0
        %v7137 = vadd.f32 %v7048, %v7136
        %7138 = vmatmul.bf16.gmra.mxu0 %v6250
        %v7139 = vpop.f32.mrf.mxu0
        %v7140 = vadd.f32 %v7051, %v7139
        %v7141 = vpop.f32.mrf.mxu0
        %v7142 = vadd.f32 %v7053, %v7141
        %7143 = vmatmul.bf16.gmra.mxu0 %v6259
        %v7144 = vpop.f32.mrf.mxu0
        %v7145 = vadd.f32 %v7056, %v7144
        %v7146 = vpop.f32.mrf.mxu0
        %v7147 = vadd.f32 %v7058, %v7146
        %7148 = vmatmul.bf16.gmra.mxu0 %v6268
        %v7149 = vpop.f32.mrf.mxu0
        %v7150 = vadd.f32 %v7061, %v7149
        %v7151 = vpop.f32.mrf.mxu0
        %v7152 = vadd.f32 %v7063, %v7151
        %7153 = vmatmul.bf16.gmra.mxu0 %v6277
        %v7154 = vpop.f32.mrf.mxu0
        %v7155 = vadd.f32 %v7066, %v7154
        %v7156 = vpop.f32.mrf.mxu0
        %v7157 = vadd.f32 %v7068, %v7156
        %7158 = vmatmul.bf16.gmra.mxu0 %v6286
        %v7159 = vpop.f32.mrf.mxu0
        %v7160 = vadd.f32 %v7071, %v7159
        %v7161 = vpop.f32.mrf.mxu0
        %v7162 = vadd.f32 %v7073, %v7161
        %7163 = vmatmul.bf16.gmra.mxu0 %v6295
        %v7164 = vpop.f32.mrf.mxu0
        %v7165 = vadd.f32 %v7076, %v7164
        %v7166 = vpop.f32.mrf.mxu0
        %v7167 = vadd.f32 %v7078, %v7166
        %7168 = vmatmul.bf16.gmra.mxu0 %v6304
        %v7169 = vpop.f32.mrf.mxu0
        %v7170 = vadd.f32 %v7081, %v7169
        %v7171 = vpop.f32.mrf.mxu0
        %v7172 = vadd.f32 %v7083, %v7171
        %7173 = vmatmul.bf16.gmra.mxu0 %v6313
        %v7174 = vpop.f32.mrf.mxu0
        %v7175 = vadd.f32 %v7086, %v7174
        %v7176 = vpop.f32.mrf.mxu0
        %v7177 = vadd.f32 %v7088, %v7176
        %7178 = vmatmul.bf16.gmra.mxu0 %v6322
        %v7179 = vpop.f32.mrf.mxu0
        %v7180 = vadd.f32 %v7091, %v7179
        %v7181 = vpop.f32.mrf.mxu0
        %v7182 = vadd.f32 %v7093, %v7181
        %7183 = vmatmul.bf16.gmra.mxu0 %v6331
        %v7184 = vpop.f32.mrf.mxu0
        %v7185 = vadd.f32 %v7096, %v7184
        %v7186 = vpop.f32.mrf.mxu0
        %v7187 = vadd.f32 %v7098, %v7186
        %7188 = vmatmul.bf16.gmra.mxu0 %v6340
        %v7189 = vpop.f32.mrf.mxu0
        %v7190 = vadd.f32 %v7101, %v7189
        %v7191 = vpop.f32.mrf.mxu0
        %v7192 = vadd.f32 %v7103, %v7191
        %7193 = vmatmul.bf16.gmra.mxu0 %v6349
        %v7194 = vpop.f32.mrf.mxu0
        %v7195 = vadd.f32 %v7106, %v7194
        %v7196 = vpop.f32.mrf.mxu0
        %v7197 = vadd.f32 %v7108, %v7196
        %7198 = vdwg.mxu0
        %7199 = vmatpush.bf16.msra.mxu0 %v6819
        %7200 = vmatpush.bf16.msra.mxu0 %v6818
        %7201 = vmatpush.bf16.msra.mxu0 %v6817
        %7202 = vmatpush.bf16.msra.mxu0 %v6816
        %7203 = vmatpush.bf16.msra.mxu0 %v6815
        %7204 = vmatpush.bf16.msra.mxu0 %v6814
        %7205 = vmatpush.bf16.msra.mxu0 %v6813
        %7206 = vmatpush.bf16.msra.mxu0 %v6812
        %7207 = vmatmul.bf16.gmra.mxu0 %v6215
        %v7208 = vpop.f32.mrf.mxu0
        %v7209 = vadd.f32 %v7120, %v7208
        %v7210 = vpop.f32.mrf.mxu0
        %v7211 = vadd.f32 %v7122, %v7210
        %7212 = vmatmul.bf16.gmra.mxu0 %v6224
        %v7213 = vpop.f32.mrf.mxu0
        %v7214 = vadd.f32 %v7125, %v7213
        %v7215 = vpop.f32.mrf.mxu0
        %v7216 = vadd.f32 %v7127, %v7215
        %7217 = vmatmul.bf16.gmra.mxu0 %v6233
        %v7218 = vpop.f32.mrf.mxu0
        %v7219 = vadd.f32 %v7130, %v7218
        %v7220 = vpop.f32.mrf.mxu0
        %v7221 = vadd.f32 %v7132, %v7220
        %7222 = vmatmul.bf16.gmra.mxu0 %v6242
        %v7223 = vpop.f32.mrf.mxu0
        %v7224 = vadd.f32 %v7135, %v7223
        %v7225 = vpop.f32.mrf.mxu0
        %v7226 = vadd.f32 %v7137, %v7225
        %7227 = vmatmul.bf16.gmra.mxu0 %v6251
        %v7228 = vpop.f32.mrf.mxu0
        %v7229 = vadd.f32 %v7140, %v7228
        %v7230 = vpop.f32.mrf.mxu0
        %v7231 = vadd.f32 %v7142, %v7230
        %7232 = vmatmul.bf16.gmra.mxu0 %v6260
        %v7233 = vpop.f32.mrf.mxu0
        %v7234 = vadd.f32 %v7145, %v7233
        %v7235 = vpop.f32.mrf.mxu0
        %v7236 = vadd.f32 %v7147, %v7235
        %7237 = vmatmul.bf16.gmra.mxu0 %v6269
        %v7238 = vpop.f32.mrf.mxu0
        %v7239 = vadd.f32 %v7150, %v7238
        %v7240 = vpop.f32.mrf.mxu0
        %v7241 = vadd.f32 %v7152, %v7240
        %7242 = vmatmul.bf16.gmra.mxu0 %v6278
        %v7243 = vpop.f32.mrf.mxu0
        %v7244 = vadd.f32 %v7155, %v7243
        %v7245 = vpop.f32.mrf.mxu0
        %v7246 = vadd.f32 %v7157, %v7245
        %7247 = vmatmul.bf16.gmra.mxu0 %v6287
        %v7248 = vpop.f32.mrf.mxu0
        %v7249 = vadd.f32 %v7160, %v7248
        %v7250 = vpop.f32.mrf.mxu0
        %v7251 = vadd.f32 %v7162, %v7250
        %7252 = vmatmul.bf16.gmra.mxu0 %v6296
        %v7253 = vpop.f32.mrf.mxu0
        %v7254 = vadd.f32 %v7165, %v7253
        %v7255 = vpop.f32.mrf.mxu0
        %v7256 = vadd.f32 %v7167, %v7255
        %7257 = vmatmul.bf16.gmra.mxu0 %v6305
        %v7258 = vpop.f32.mrf.mxu0
        %v7259 = vadd.f32 %v7170, %v7258
        %v7260 = vpop.f32.mrf.mxu0
        %v7261 = vadd.f32 %v7172, %v7260
        %7262 = vmatmul.bf16.gmra.mxu0 %v6314
        %v7263 = vpop.f32.mrf.mxu0
        %v7264 = vadd.f32 %v7175, %v7263
        %v7265 = vpop.f32.mrf.mxu0
        %v7266 = vadd.f32 %v7177, %v7265
        %7267 = vmatmul.bf16.gmra.mxu0 %v6323
        %v7268 = vpop.f32.mrf.mxu0
        %v7269 = vadd.f32 %v7180, %v7268
        %v7270 = vpop.f32.mrf.mxu0
        %v7271 = vadd.f32 %v7182, %v7270
        %7272 = vmatmul.bf16.gmra.mxu0 %v6332
        %v7273 = vpop.f32.mrf.mxu0
        %v7274 = vadd.f32 %v7185, %v7273
        %v7275 = vpop.f32.mrf.mxu0
        %v7276 = vadd.f32 %v7187, %v7275
        %7277 = vmatmul.bf16.gmra.mxu0 %v6341
        %v7278 = vpop.f32.mrf.mxu0
        %v7279 = vadd.f32 %v7190, %v7278
        %v7280 = vpop.f32.mrf.mxu0
        %v7281 = vadd.f32 %v7192, %v7280
        %7282 = vmatmul.bf16.gmra.mxu0 %v6350
        %v7283 = vpop.f32.mrf.mxu0
        %v7284 = vadd.f32 %v7195, %v7283
        %v7285 = vpop.f32.mrf.mxu0
        %v7286 = vadd.f32 %v7197, %v7285
        %7287 = vdwg.mxu0
        %7288 = vmatpush.bf16.msra.mxu0 %v6827
        %7289 = vmatpush.bf16.msra.mxu0 %v6826
        %7290 = vmatpush.bf16.msra.mxu0 %v6825
        %7291 = vmatpush.bf16.msra.mxu0 %v6824
        %7292 = vmatpush.bf16.msra.mxu0 %v6823
        %7293 = vmatpush.bf16.msra.mxu0 %v6822
        %7294 = vmatpush.bf16.msra.mxu0 %v6821
        %7295 = vmatpush.bf16.msra.mxu0 %v6820
        %7296 = vmatmul.bf16.gmra.mxu0 %v6216
        %v7297 = vpop.f32.mrf.mxu0
        %v7298 = vadd.f32 %v7209, %v7297
        %v7299 = vpop.f32.mrf.mxu0
        %v7300 = vadd.f32 %v7211, %v7299
        %7301 = vmatmul.bf16.gmra.mxu0 %v6225
        %v7302 = vpop.f32.mrf.mxu0
        %v7303 = vadd.f32 %v7214, %v7302
        %v7304 = vpop.f32.mrf.mxu0
        %v7305 = vadd.f32 %v7216, %v7304
        %7306 = vmatmul.bf16.gmra.mxu0 %v6234
        %v7307 = vpop.f32.mrf.mxu0
        %v7308 = vadd.f32 %v7219, %v7307
        %v7309 = vpop.f32.mrf.mxu0
        %v7310 = vadd.f32 %v7221, %v7309
        %7311 = vmatmul.bf16.gmra.mxu0 %v6243
        %v7312 = vpop.f32.mrf.mxu0
        %v7313 = vadd.f32 %v7224, %v7312
        %v7314 = vpop.f32.mrf.mxu0
        %v7315 = vadd.f32 %v7226, %v7314
        %7316 = vmatmul.bf16.gmra.mxu0 %v6252
        %v7317 = vpop.f32.mrf.mxu0
        %v7318 = vadd.f32 %v7229, %v7317
        %v7319 = vpop.f32.mrf.mxu0
        %v7320 = vadd.f32 %v7231, %v7319
        %7321 = vmatmul.bf16.gmra.mxu0 %v6261
        %v7322 = vpop.f32.mrf.mxu0
        %v7323 = vadd.f32 %v7234, %v7322
        %v7324 = vpop.f32.mrf.mxu0
        %v7325 = vadd.f32 %v7236, %v7324
        %7326 = vmatmul.bf16.gmra.mxu0 %v6270
        %v7327 = vpop.f32.mrf.mxu0
        %v7328 = vadd.f32 %v7239, %v7327
        %v7329 = vpop.f32.mrf.mxu0
        %v7330 = vadd.f32 %v7241, %v7329
        %7331 = vmatmul.bf16.gmra.mxu0 %v6279
        %v7332 = vpop.f32.mrf.mxu0
        %v7333 = vadd.f32 %v7244, %v7332
        %v7334 = vpop.f32.mrf.mxu0
        %v7335 = vadd.f32 %v7246, %v7334
        %7336 = vmatmul.bf16.gmra.mxu0 %v6288
        %v7337 = vpop.f32.mrf.mxu0
        %v7338 = vadd.f32 %v7249, %v7337
        %v7339 = vpop.f32.mrf.mxu0
        %v7340 = vadd.f32 %v7251, %v7339
        %7341 = vmatmul.bf16.gmra.mxu0 %v6297
        %v7342 = vpop.f32.mrf.mxu0
        %v7343 = vadd.f32 %v7254, %v7342
        %v7344 = vpop.f32.mrf.mxu0
        %v7345 = vadd.f32 %v7256, %v7344
        %7346 = vmatmul.bf16.gmra.mxu0 %v6306
        %v7347 = vpop.f32.mrf.mxu0
        %v7348 = vadd.f32 %v7259, %v7347
        %v7349 = vpop.f32.mrf.mxu0
        %v7350 = vadd.f32 %v7261, %v7349
        %7351 = vmatmul.bf16.gmra.mxu0 %v6315
        %v7352 = vpop.f32.mrf.mxu0
        %v7353 = vadd.f32 %v7264, %v7352
        %v7354 = vpop.f32.mrf.mxu0
        %v7355 = vadd.f32 %v7266, %v7354
        %7356 = vmatmul.bf16.gmra.mxu0 %v6324
        %v7357 = vpop.f32.mrf.mxu0
        %v7358 = vadd.f32 %v7269, %v7357
        %v7359 = vpop.f32.mrf.mxu0
        %v7360 = vadd.f32 %v7271, %v7359
        %7361 = vmatmul.bf16.gmra.mxu0 %v6333
        %v7362 = vpop.f32.mrf.mxu0
        %v7363 = vadd.f32 %v7274, %v7362
        %v7364 = vpop.f32.mrf.mxu0
        %v7365 = vadd.f32 %v7276, %v7364
        %7366 = vmatmul.bf16.gmra.mxu0 %v6342
        %v7367 = vpop.f32.mrf.mxu0
        %v7368 = vadd.f32 %v7279, %v7367
        %v7369 = vpop.f32.mrf.mxu0
        %v7370 = vadd.f32 %v7281, %v7369
        %7371 = vmatmul.bf16.gmra.mxu0 %v6351
        %v7372 = vpop.f32.mrf.mxu0
        %v7373 = vadd.f32 %v7284, %v7372
        %v7374 = vpop.f32.mrf.mxu0
        %v7375 = vadd.f32 %v7286, %v7374
        %7376 = vdwg.mxu0
        %7377 = vmatpush.bf16.msra.mxu0 %v6835
        %7378 = vmatpush.bf16.msra.mxu0 %v6834
        %7379 = vmatpush.bf16.msra.mxu0 %v6833
        %7380 = vmatpush.bf16.msra.mxu0 %v6832
        %7381 = vmatpush.bf16.msra.mxu0 %v6831
        %7382 = vmatpush.bf16.msra.mxu0 %v6830
        %7383 = vmatpush.bf16.msra.mxu0 %v6829
        %7384 = vmatpush.bf16.msra.mxu0 %v6828
        %7385 = vmatmul.bf16.gmra.mxu0 %v6217
        %v7386 = vpop.f32.mrf.mxu0
        %v7387 = vadd.f32 %v7298, %v7386
        %v7388 = vpop.f32.mrf.mxu0
        %v7389 = vadd.f32 %v7300, %v7388
        %7390 = vmatmul.bf16.gmra.mxu0 %v6226
        %v7391 = vpop.f32.mrf.mxu0
        %v7392 = vadd.f32 %v7303, %v7391
        %v7393 = vpop.f32.mrf.mxu0
        %v7394 = vadd.f32 %v7305, %v7393
        %7395 = vmatmul.bf16.gmra.mxu0 %v6235
        %v7396 = vpop.f32.mrf.mxu0
        %v7397 = vadd.f32 %v7308, %v7396
        %v7398 = vpop.f32.mrf.mxu0
        %v7399 = vadd.f32 %v7310, %v7398
        %7400 = vmatmul.bf16.gmra.mxu0 %v6244
        %v7401 = vpop.f32.mrf.mxu0
        %v7402 = vadd.f32 %v7313, %v7401
        %v7403 = vpop.f32.mrf.mxu0
        %v7404 = vadd.f32 %v7315, %v7403
        %7405 = vmatmul.bf16.gmra.mxu0 %v6253
        %v7406 = vpop.f32.mrf.mxu0
        %v7407 = vadd.f32 %v7318, %v7406
        %v7408 = vpop.f32.mrf.mxu0
        %v7409 = vadd.f32 %v7320, %v7408
        %7410 = vmatmul.bf16.gmra.mxu0 %v6262
        %v7411 = vpop.f32.mrf.mxu0
        %v7412 = vadd.f32 %v7323, %v7411
        %v7413 = vpop.f32.mrf.mxu0
        %v7414 = vadd.f32 %v7325, %v7413
        %7415 = vmatmul.bf16.gmra.mxu0 %v6271
        %v7416 = vpop.f32.mrf.mxu0
        %v7417 = vadd.f32 %v7328, %v7416
        %v7418 = vpop.f32.mrf.mxu0
        %v7419 = vadd.f32 %v7330, %v7418
        %7420 = vmatmul.bf16.gmra.mxu0 %v6280
        %v7421 = vpop.f32.mrf.mxu0
        %v7422 = vadd.f32 %v7333, %v7421
        %v7423 = vpop.f32.mrf.mxu0
        %v7424 = vadd.f32 %v7335, %v7423
        %7425 = vmatmul.bf16.gmra.mxu0 %v6289
        %v7426 = vpop.f32.mrf.mxu0
        %v7427 = vadd.f32 %v7338, %v7426
        %v7428 = vpop.f32.mrf.mxu0
        %v7429 = vadd.f32 %v7340, %v7428
        %7430 = vmatmul.bf16.gmra.mxu0 %v6298
        %v7431 = vpop.f32.mrf.mxu0
        %v7432 = vadd.f32 %v7343, %v7431
        %v7433 = vpop.f32.mrf.mxu0
        %v7434 = vadd.f32 %v7345, %v7433
        %7435 = vmatmul.bf16.gmra.mxu0 %v6307
        %v7436 = vpop.f32.mrf.mxu0
        %v7437 = vadd.f32 %v7348, %v7436
        %v7438 = vpop.f32.mrf.mxu0
        %v7439 = vadd.f32 %v7350, %v7438
        %7440 = vmatmul.bf16.gmra.mxu0 %v6316
        %v7441 = vpop.f32.mrf.mxu0
        %v7442 = vadd.f32 %v7353, %v7441
        %v7443 = vpop.f32.mrf.mxu0
        %v7444 = vadd.f32 %v7355, %v7443
        %7445 = vmatmul.bf16.gmra.mxu0 %v6325
        %v7446 = vpop.f32.mrf.mxu0
        %v7447 = vadd.f32 %v7358, %v7446
        %v7448 = vpop.f32.mrf.mxu0
        %v7449 = vadd.f32 %v7360, %v7448
        %7450 = vmatmul.bf16.gmra.mxu0 %v6334
        %v7451 = vpop.f32.mrf.mxu0
        %v7452 = vadd.f32 %v7363, %v7451
        %v7453 = vpop.f32.mrf.mxu0
        %v7454 = vadd.f32 %v7365, %v7453
        %7455 = vmatmul.bf16.gmra.mxu0 %v6343
        %v7456 = vpop.f32.mrf.mxu0
        %v7457 = vadd.f32 %v7368, %v7456
        %v7458 = vpop.f32.mrf.mxu0
        %v7459 = vadd.f32 %v7370, %v7458
        %7460 = vmatmul.bf16.gmra.mxu0 %v6352
        %v7461 = vpop.f32.mrf.mxu0
        %v7462 = vadd.f32 %v7373, %v7461
        %v7463 = vpop.f32.mrf.mxu0
        %v7464 = vadd.f32 %v7375, %v7463
        %7465 = vdwg.mxu0
        %7466 = vmatpush.bf16.msra.mxu0 %v6843
        %7467 = vmatpush.bf16.msra.mxu0 %v6842
        %7468 = vmatpush.bf16.msra.mxu0 %v6841
        %7469 = vmatpush.bf16.msra.mxu0 %v6840
        %7470 = vmatpush.bf16.msra.mxu0 %v6839
        %7471 = vmatpush.bf16.msra.mxu0 %v6838
        %7472 = vmatpush.bf16.msra.mxu0 %v6837
        %7473 = vmatpush.bf16.msra.mxu0 %v6836
        %7474 = vmatmul.bf16.gmra.mxu0 %v6218
        %v7475 = vpop.f32.mrf.mxu0
        %v7476 = vadd.f32 %v7387, %v7475
        %v7477 = vpop.f32.mrf.mxu0
        %v7478 = vadd.f32 %v7389, %v7477
        %7479 = vmatmul.bf16.gmra.mxu0 %v6227
        %v7480 = vpop.f32.mrf.mxu0
        %v7481 = vadd.f32 %v7392, %v7480
        %v7482 = vpop.f32.mrf.mxu0
        %v7483 = vadd.f32 %v7394, %v7482
        %7484 = vmatmul.bf16.gmra.mxu0 %v6236
        %v7485 = vpop.f32.mrf.mxu0
        %v7486 = vadd.f32 %v7397, %v7485
        %v7487 = vpop.f32.mrf.mxu0
        %v7488 = vadd.f32 %v7399, %v7487
        %7489 = vmatmul.bf16.gmra.mxu0 %v6245
        %v7490 = vpop.f32.mrf.mxu0
        %v7491 = vadd.f32 %v7402, %v7490
        %v7492 = vpop.f32.mrf.mxu0
        %v7493 = vadd.f32 %v7404, %v7492
        %7494 = vmatmul.bf16.gmra.mxu0 %v6254
        %v7495 = vpop.f32.mrf.mxu0
        %v7496 = vadd.f32 %v7407, %v7495
        %v7497 = vpop.f32.mrf.mxu0
        %v7498 = vadd.f32 %v7409, %v7497
        %7499 = vmatmul.bf16.gmra.mxu0 %v6263
        %v7500 = vpop.f32.mrf.mxu0
        %v7501 = vadd.f32 %v7412, %v7500
        %v7502 = vpop.f32.mrf.mxu0
        %v7503 = vadd.f32 %v7414, %v7502
        %7504 = vmatmul.bf16.gmra.mxu0 %v6272
        %v7505 = vpop.f32.mrf.mxu0
        %v7506 = vadd.f32 %v7417, %v7505
        %v7507 = vpop.f32.mrf.mxu0
        %v7508 = vadd.f32 %v7419, %v7507
        %7509 = vmatmul.bf16.gmra.mxu0 %v6281
        %v7510 = vpop.f32.mrf.mxu0
        %v7511 = vadd.f32 %v7422, %v7510
        %v7512 = vpop.f32.mrf.mxu0
        %v7513 = vadd.f32 %v7424, %v7512
        %7514 = vmatmul.bf16.gmra.mxu0 %v6290
        %v7515 = vpop.f32.mrf.mxu0
        %v7516 = vadd.f32 %v7427, %v7515
        %v7517 = vpop.f32.mrf.mxu0
        %v7518 = vadd.f32 %v7429, %v7517
        %7519 = vmatmul.bf16.gmra.mxu0 %v6299
        %v7520 = vpop.f32.mrf.mxu0
        %v7521 = vadd.f32 %v7432, %v7520
        %v7522 = vpop.f32.mrf.mxu0
        %v7523 = vadd.f32 %v7434, %v7522
        %7524 = vmatmul.bf16.gmra.mxu0 %v6308
        %v7525 = vpop.f32.mrf.mxu0
        %v7526 = vadd.f32 %v7437, %v7525
        %v7527 = vpop.f32.mrf.mxu0
        %v7528 = vadd.f32 %v7439, %v7527
        %7529 = vmatmul.bf16.gmra.mxu0 %v6317
        %v7530 = vpop.f32.mrf.mxu0
        %v7531 = vadd.f32 %v7442, %v7530
        %v7532 = vpop.f32.mrf.mxu0
        %v7533 = vadd.f32 %v7444, %v7532
        %7534 = vmatmul.bf16.gmra.mxu0 %v6326
        %v7535 = vpop.f32.mrf.mxu0
        %v7536 = vadd.f32 %v7447, %v7535
        %v7537 = vpop.f32.mrf.mxu0
        %v7538 = vadd.f32 %v7449, %v7537
        %7539 = vmatmul.bf16.gmra.mxu0 %v6335
        %v7540 = vpop.f32.mrf.mxu0
        %v7541 = vadd.f32 %v7452, %v7540
        %v7542 = vpop.f32.mrf.mxu0
        %v7543 = vadd.f32 %v7454, %v7542
        %7544 = vmatmul.bf16.gmra.mxu0 %v6344
        %v7545 = vpop.f32.mrf.mxu0
        %v7546 = vadd.f32 %v7457, %v7545
        %v7547 = vpop.f32.mrf.mxu0
        %v7548 = vadd.f32 %v7459, %v7547
        %7549 = vmatmul.bf16.gmra.mxu0 %v6353
        %v7550 = vpop.f32.mrf.mxu0
        %v7551 = vadd.f32 %v7462, %v7550
        %v7552 = vpop.f32.mrf.mxu0
        %v7553 = vadd.f32 %v7464, %v7552
        %7554 = vdwg.mxu0
        %7555 = vmatpush.bf16.msra.mxu0 %v6851
        %7556 = vmatpush.bf16.msra.mxu0 %v6850
        %7557 = vmatpush.bf16.msra.mxu0 %v6849
        %7558 = vmatpush.bf16.msra.mxu0 %v6848
        %7559 = vmatpush.bf16.msra.mxu0 %v6847
        %7560 = vmatpush.bf16.msra.mxu0 %v6846
        %7561 = vmatpush.bf16.msra.mxu0 %v6845
        %7562 = vmatpush.bf16.msra.mxu0 %v6844
        %7563 = vmatmul.bf16.gmra.mxu0 %v6219
        %v7564 = vpop.f32.mrf.mxu0
        %v7565 = vadd.f32 %v7476, %v7564
        %v7566 = vpop.f32.mrf.mxu0
        %v7567 = vadd.f32 %v7478, %v7566
        %7568 = vmatmul.bf16.gmra.mxu0 %v6228
        %v7569 = vpop.f32.mrf.mxu0
        %v7570 = vadd.f32 %v7481, %v7569
        %v7571 = vpop.f32.mrf.mxu0
        %v7572 = vadd.f32 %v7483, %v7571
        %7573 = vmatmul.bf16.gmra.mxu0 %v6237
        %v7574 = vpop.f32.mrf.mxu0
        %v7575 = vadd.f32 %v7486, %v7574
        %v7576 = vpop.f32.mrf.mxu0
        %v7577 = vadd.f32 %v7488, %v7576
        %7578 = vmatmul.bf16.gmra.mxu0 %v6246
        %v7579 = vpop.f32.mrf.mxu0
        %v7580 = vadd.f32 %v7491, %v7579
        %v7581 = vpop.f32.mrf.mxu0
        %v7582 = vadd.f32 %v7493, %v7581
        %7583 = vmatmul.bf16.gmra.mxu0 %v6255
        %v7584 = vpop.f32.mrf.mxu0
        %v7585 = vadd.f32 %v7496, %v7584
        %v7586 = vpop.f32.mrf.mxu0
        %v7587 = vadd.f32 %v7498, %v7586
        %7588 = vmatmul.bf16.gmra.mxu0 %v6264
        %v7589 = vpop.f32.mrf.mxu0
        %v7590 = vadd.f32 %v7501, %v7589
        %v7591 = vpop.f32.mrf.mxu0
        %v7592 = vadd.f32 %v7503, %v7591
        %7593 = vmatmul.bf16.gmra.mxu0 %v6273
        %v7594 = vpop.f32.mrf.mxu0
        %v7595 = vadd.f32 %v7506, %v7594
        %v7596 = vpop.f32.mrf.mxu0
        %v7597 = vadd.f32 %v7508, %v7596
        %7598 = vmatmul.bf16.gmra.mxu0 %v6282
        %v7599 = vpop.f32.mrf.mxu0
        %v7600 = vadd.f32 %v7511, %v7599
        %v7601 = vpop.f32.mrf.mxu0
        %v7602 = vadd.f32 %v7513, %v7601
        %7603 = vmatmul.bf16.gmra.mxu0 %v6291
        %v7604 = vpop.f32.mrf.mxu0
        %v7605 = vadd.f32 %v7516, %v7604
        %v7606 = vpop.f32.mrf.mxu0
        %v7607 = vadd.f32 %v7518, %v7606
        %7608 = vmatmul.bf16.gmra.mxu0 %v6300
        %v7609 = vpop.f32.mrf.mxu0
        %v7610 = vadd.f32 %v7521, %v7609
        %v7611 = vpop.f32.mrf.mxu0
        %v7612 = vadd.f32 %v7523, %v7611
        %7613 = vmatmul.bf16.gmra.mxu0 %v6309
        %v7614 = vpop.f32.mrf.mxu0
        %v7615 = vadd.f32 %v7526, %v7614
        %v7616 = vpop.f32.mrf.mxu0
        %v7617 = vadd.f32 %v7528, %v7616
        %7618 = vmatmul.bf16.gmra.mxu0 %v6318
        %v7619 = vpop.f32.mrf.mxu0
        %v7620 = vadd.f32 %v7531, %v7619
        %v7621 = vpop.f32.mrf.mxu0
        %v7622 = vadd.f32 %v7533, %v7621
        %7623 = vmatmul.bf16.gmra.mxu0 %v6327
        %v7624 = vpop.f32.mrf.mxu0
        %v7625 = vadd.f32 %v7536, %v7624
        %v7626 = vpop.f32.mrf.mxu0
        %v7627 = vadd.f32 %v7538, %v7626
        %7628 = vmatmul.bf16.gmra.mxu0 %v6336
        %v7629 = vpop.f32.mrf.mxu0
        %v7630 = vadd.f32 %v7541, %v7629
        %v7631 = vpop.f32.mrf.mxu0
        %v7632 = vadd.f32 %v7543, %v7631
        %7633 = vmatmul.bf16.gmra.mxu0 %v6345
        %v7634 = vpop.f32.mrf.mxu0
        %v7635 = vadd.f32 %v7546, %v7634
        %v7636 = vpop.f32.mrf.mxu0
        %v7637 = vadd.f32 %v7548, %v7636
        %7638 = vmatmul.bf16.gmra.mxu0 %v6354
        %v7639 = vpop.f32.mrf.mxu0
        %v7640 = vadd.f32 %v7551, %v7639
        %v7641 = vpop.f32.mrf.mxu0
        %v7642 = vadd.f32 %v7553, %v7641
        %7643 = vdwg.mxu0
        %7644 = vmatpush.bf16.msra.mxu0 %v6859
        %7645 = vmatpush.bf16.msra.mxu0 %v6858
        %7646 = vmatpush.bf16.msra.mxu0 %v6857
        %7647 = vmatpush.bf16.msra.mxu0 %v6856
        %7648 = vmatpush.bf16.msra.mxu0 %v6855
        %7649 = vmatpush.bf16.msra.mxu0 %v6854
        %7650 = vmatpush.bf16.msra.mxu0 %v6853
        %7651 = vmatpush.bf16.msra.mxu0 %v6852
        %7652 = vmatmul.bf16.gmra.mxu0 %v6220
        %v7653 = vpop.f32.mrf.mxu0
        %v7654 = vadd.f32 %v7565, %v7653
        %v7655 = vpop.f32.mrf.mxu0
        %v7656 = vadd.f32 %v7567, %v7655
        %7657 = vmatmul.bf16.gmra.mxu0 %v6229
        %v7658 = vpop.f32.mrf.mxu0
        %v7659 = vadd.f32 %v7570, %v7658
        %v7660 = vpop.f32.mrf.mxu0
        %v7661 = vadd.f32 %v7572, %v7660
        %7662 = vmatmul.bf16.gmra.mxu0 %v6238
        %v7663 = vpop.f32.mrf.mxu0
        %v7664 = vadd.f32 %v7575, %v7663
        %v7665 = vpop.f32.mrf.mxu0
        %v7666 = vadd.f32 %v7577, %v7665
        %7667 = vmatmul.bf16.gmra.mxu0 %v6247
        %v7668 = vpop.f32.mrf.mxu0
        %v7669 = vadd.f32 %v7580, %v7668
        %v7670 = vpop.f32.mrf.mxu0
        %v7671 = vadd.f32 %v7582, %v7670
        %7672 = vmatmul.bf16.gmra.mxu0 %v6256
        %v7673 = vpop.f32.mrf.mxu0
        %v7674 = vadd.f32 %v7585, %v7673
        %v7675 = vpop.f32.mrf.mxu0
        %v7676 = vadd.f32 %v7587, %v7675
        %7677 = vmatmul.bf16.gmra.mxu0 %v6265
        %v7678 = vpop.f32.mrf.mxu0
        %v7679 = vadd.f32 %v7590, %v7678
        %v7680 = vpop.f32.mrf.mxu0
        %v7681 = vadd.f32 %v7592, %v7680
        %7682 = vmatmul.bf16.gmra.mxu0 %v6274
        %v7683 = vpop.f32.mrf.mxu0
        %v7684 = vadd.f32 %v7595, %v7683
        %v7685 = vpop.f32.mrf.mxu0
        %v7686 = vadd.f32 %v7597, %v7685
        %7687 = vmatmul.bf16.gmra.mxu0 %v6283
        %v7688 = vpop.f32.mrf.mxu0
        %v7689 = vadd.f32 %v7600, %v7688
        %v7690 = vpop.f32.mrf.mxu0
        %v7691 = vadd.f32 %v7602, %v7690
        %7692 = vmatmul.bf16.gmra.mxu0 %v6292
        %v7693 = vpop.f32.mrf.mxu0
        %v7694 = vadd.f32 %v7605, %v7693
        %v7695 = vpop.f32.mrf.mxu0
        %v7696 = vadd.f32 %v7607, %v7695
        %7697 = vmatmul.bf16.gmra.mxu0 %v6301
        %v7698 = vpop.f32.mrf.mxu0
        %v7699 = vadd.f32 %v7610, %v7698
        %v7700 = vpop.f32.mrf.mxu0
        %v7701 = vadd.f32 %v7612, %v7700
        %7702 = vmatmul.bf16.gmra.mxu0 %v6310
        %v7703 = vpop.f32.mrf.mxu0
        %v7704 = vadd.f32 %v7615, %v7703
        %v7705 = vpop.f32.mrf.mxu0
        %v7706 = vadd.f32 %v7617, %v7705
        %7707 = vmatmul.bf16.gmra.mxu0 %v6319
        %v7708 = vpop.f32.mrf.mxu0
        %v7709 = vadd.f32 %v7620, %v7708
        %v7710 = vpop.f32.mrf.mxu0
        %v7711 = vadd.f32 %v7622, %v7710
        %7712 = vmatmul.bf16.gmra.mxu0 %v6328
        %v7713 = vpop.f32.mrf.mxu0
        %v7714 = vadd.f32 %v7625, %v7713
        %v7715 = vpop.f32.mrf.mxu0
        %v7716 = vadd.f32 %v7627, %v7715
        %7717 = vmatmul.bf16.gmra.mxu0 %v6337
        %v7718 = vpop.f32.mrf.mxu0
        %v7719 = vadd.f32 %v7630, %v7718
        %v7720 = vpop.f32.mrf.mxu0
        %v7721 = vadd.f32 %v7632, %v7720
        %7722 = vmatmul.bf16.gmra.mxu0 %v6346
        %v7723 = vpop.f32.mrf.mxu0
        %v7724 = vadd.f32 %v7635, %v7723
        %v7725 = vpop.f32.mrf.mxu0
        %v7726 = vadd.f32 %v7637, %v7725
        %7727 = vmatmul.bf16.gmra.mxu0 %v6355
        %v7728 = vpop.f32.mrf.mxu0
        %v7729 = vadd.f32 %v7640, %v7728
        %v7730 = vpop.f32.mrf.mxu0
        %v7731 = vadd.f32 %v7642, %v7730
        %7732 = vdwg.mxu0
        %7733 = vst [vmem:[%s319] sm:$0xff] %v7654
        %7734 = vst [vmem:[%s319 + $0x8] sm:$0xff] %v7656
        %7735 = vst [vmem:[%s319 + $0x10] sm:$0xff] %v7659
        %7736 = vst [vmem:[%s319 + $0x18] sm:$0xff] %v7661
        %7737 = vst [vmem:[%s319 + $0x20] sm:$0xff] %v7664
        %7738 = vst [vmem:[%s319 + $0x28] sm:$0xff] %v7666
        %7739 = vst [vmem:[%s319 + $0x30] sm:$0xff] %v7669
        %7740 = vst [vmem:[%s319 + $0x38] sm:$0xff] %v7671
        %7741 = vst [vmem:[%s319 + $0x40] sm:$0xff] %v7674
        %7742 = vst [vmem:[%s319 + $0x48] sm:$0xff] %v7676
        %7743 = vst [vmem:[%s319 + $0x50] sm:$0xff] %v7679
        %7744 = vst [vmem:[%s319 + $0x58] sm:$0xff] %v7681
        %7745 = vst [vmem:[%s319 + $0x60] sm:$0xff] %v7684
        %7746 = vst [vmem:[%s319 + $0x68] sm:$0xff] %v7686
        %7747 = vst [vmem:[%s319 + $0x70] sm:$0xff] %v7689
        %7748 = vst [vmem:[%s319 + $0x78] sm:$0xff] %v7691
        %7749 = vst [vmem:[%s319 + $0x80] sm:$0xff] %v7694
        %7750 = vst [vmem:[%s319 + $0x88] sm:$0xff] %v7696
        %7751 = vst [vmem:[%s319 + $0x90] sm:$0xff] %v7699
        %7752 = vst [vmem:[%s319 + $0x98] sm:$0xff] %v7701
        %7753 = vst [vmem:[%s319 + $0xa0] sm:$0xff] %v7704
        %7754 = vst [vmem:[%s319 + $0xa8] sm:$0xff] %v7706
        %7755 = vst [vmem:[%s319 + $0xb0] sm:$0xff] %v7709
        %7756 = vst [vmem:[%s319 + $0xb8] sm:$0xff] %v7711
        %7757 = vst [vmem:[%s319 + $0xc0] sm:$0xff] %v7714
        %7758 = vst [vmem:[%s319 + $0xc8] sm:$0xff] %v7716
        %7759 = vst [vmem:[%s319 + $0xd0] sm:$0xff] %v7719
        %7760 = vst [vmem:[%s319 + $0xd8] sm:$0xff] %v7721
        %7761 = vst [vmem:[%s319 + $0xe0] sm:$0xff] %v7724
        %7762 = vst [vmem:[%s319 + $0xe8] sm:$0xff] %v7726
        %7763 = vst [vmem:[%s319 + $0xf0] sm:$0xff] %v7729
        %7764 = vst [vmem:[%s319 + $0xf8] sm:$0xff] %v7731
        %s7765 = sand.u32 %s164, 1
        %s7766 = scalar_lea.sflag [#allocation6], %s7765
        %s7767 = sand.u32 %s164, 1
        %s7768 = smul.addr %s7767, 256
        %s7769 = scalar_lea.vmem [#allocation12], %s7768
        // Predicated region
        $region61: #{tpu_custom_call.1} parent=43 // pred_check
          %p7770 = pneg %p174
        $region62: #{tpu_custom_call.1} parent=43 // pred_check_branch
          %7772 = sbr.rel (%p7770) target = $region64
        $region63: #{tpu_custom_call.1} parent=43 // pred_region
          %7774 = vsyncadd %s7766, 0
          %s7775 = smul.addr %s25, 32
          %s7776 = smul.addr %s7775, 8
          %s7777 = scalar_lea.hbm %s6, %s7776
          %s7778 = sshll.u32 %s7769, 4
          %s7779 = int_to_ptr.vmem [resolvable:$true] %s7778
          %s7780 = sshll.u32 %s7777, 4
          %s7781 = int_to_ptr.hbm [resolvable:$true] %s7780
          %7786 = dma.vmem_to_hbm [thread:$0]  %s7779, 4096, %s7781, %s7766, 128, 128, 8
        $region64: #{tpu_custom_call.1} parent=43 // pred_fallthru
          _
      $region44: #{tpu_custom_call.1} parent=5 // pred_fallthru
        _
      %p7787 = scmp.le.s32.totalorder 2, %s20
      // Predicated region
      $region65: #{tpu_custom_call.1} parent=5 // pred_check
        %p7788 = pneg %p7787
      $region66: #{tpu_custom_call.1} parent=5 // pred_check_branch
        %7790 = sbr.rel (%p7788) target = $region68
      $region67: #{tpu_custom_call.1} parent=5 // pred_region
        %s7791 = ssub.s32 %s20, 2
        // Predicated region
        $region69: #{tpu_custom_call.1} parent=67 // pred_check
          %p7792 = pneg %p180
        $region70: #{tpu_custom_call.1} parent=67 // pred_check_branch
          %7794 = sbr.rel (%p7792) target = $region72
        $region71: #{tpu_custom_call.1} parent=67 // pred_region
          %s7795 = sand.u32 %s165, 1
          %s7796 = scalar_lea.sflag [#allocation6], %s7795
          %s7797 = sand.u32 %s165, 1
          %s7798 = smul.addr %s7797, 256
          %s7799 = scalar_lea.vmem [#allocation12], %s7798
          %7801 = dma.done %s7796, 4096
        $region72: #{tpu_custom_call.1} parent=67 // pred_fallthru
          _
      $region68: #{tpu_custom_call.1} parent=5 // pred_fallthru
        _
    $region6: #{tpu_custom_call.1} parent=1 // loop_footer
      %s24 = sadd.s32 1, %s20
    $region7: #{tpu_custom_call.1} parent=1 // loop_footer_branch
      %19 = sbr.rel target = $region3
    $region8: #{tpu_custom_call.1} parent=1 // loop_exit
      _
    %7802 = vsyncpa [#allocation5], 1
    %s7803 = scalar_lea.sflag [#allocation5], 1
    %7804 = vsyncpa %s7803, 1
    %7805 = vsyncpa [#allocation8], 1
    %7806 = vsyncpa [#allocation11], 1
    %7807 = vsyncpa [#allocation6], 1
    %s7808 = scalar_lea.sflag [#allocation6], 1
    %7809 = vsyncpa %s7808, 1

</llo_original>
